<compile_context>
chip_gen: v7x
topology: tpu7x:2x2x1
jax: 0.10.0
libtpu: 0.0.40
codegen_flags: <defaults>
</compile_context>

<pallas_src>
import numpy as np
import jax
import jax.numpy as jnp
from jax.experimental import pallas as pl
from jax.experimental.pallas import tpu as pltpu

EPS = 1e-5  # eps of nn.GroupNorm / F.layer_norm


# --------------------------- in-kernel helpers -------------------------------


def _bf16(x):
    return x.astype(jnp.bfloat16)


def _silu(x):
    # x * sigmoid(x), exact (review: approx reciprocal not needed here).
    return x * (1.0 / (1.0 + jnp.exp(-x)))


def _mish(x):
    # x * tanh(softplus(x)), numerically stable softplus, all f32.
    sp = jnp.maximum(x, 0.0) + jnp.log(1.0 + jnp.exp(-jnp.abs(x)))
    return x * jnp.tanh(sp)


def _norm_rows(y):
    # Per-row normalization over the last axis (one sample per row).
    # Two-pass variance (review correctness concern: avoid E[x^2]-E[x]^2).
    n = float(y.shape[-1])
    mu = jnp.sum(y, axis=-1, keepdims=True) / n
    yc = y - mu
    var = jnp.sum(yc * yc, axis=-1, keepdims=True) / n
    return yc * jax.lax.rsqrt(var + EPS)


def _norm_per_sample(y, bblk, hs):
    # y: (bblk*hs, n) with each sample occupying hs consecutive rows.
    # GroupNorm(1, C) / layer_norm over the whole (C, H, W) per sample.
    # Leading-dim split/merge only (tile-aligned since hs is a multiple of 8).
    m, n = y.shape
    y3 = y.reshape(bblk, hs, n)
    cnt = float(hs * n)
    mu = jnp.sum(jnp.sum(y3, axis=1, keepdims=True), axis=2, keepdims=True) / cnt
    yc = y3 - mu
    var = jnp.sum(jnp.sum(yc * yc, axis=1, keepdims=True), axis=2,
                  keepdims=True) / cnt
    return (yc * jax.lax.rsqrt(var + EPS)).reshape(m, n)


def _conv3x3(y, wcat_ref, hs):
    # 3x3 conv (padding=1) in the interleaved (rows=(b,h), cols=(w,ci)) layout
    # as ONE matmul: the dy=-1/0/+1 taps are built with sublane rolls + masks
    # (cross-sample contamination rows are exactly the masked boundary rows)
    # and concatenated along K against the banded (3*W*Ci, W*Co) weight.
    m, x = y.shape
    hrow = jax.lax.broadcasted_iota(jnp.int32, (m, x), 0) & (hs - 1)
    up = jnp.where(hrow >= 1, pltpu.roll(y, 1, 0), 0.0)          # in[h-1]
    dn = jnp.where(hrow < hs - 1, pltpu.roll(y, m - 1, 0), 0.0)  # in[h+1]
    cat = jnp.concatenate([up, y, dn], axis=1)                   # (m, 3x)
    return jnp.dot(_bf16(cat), wcat_ref[...],
                   preferred_element_type=jnp.float32)


# ----------------------- host-side weight preparation ------------------------


def _bilinear_matrix(n_in, n_out):
    # Interpolation matrix matching torch bilinear upsample, align_corners=True.
    i = np.arange(n_out, dtype=np.float64)
    src = np.zeros(n_out) if n_out == 1 else i * (n_in - 1) / (n_out - 1)
    lo = np.clip(np.floor(src).astype(np.int64), 0, n_in - 1)
    hi = np.minimum(lo + 1, n_in - 1)
    frac = src - lo
    m = np.zeros((n_out, n_in), dtype=np.float64)
    m[np.arange(n_out), lo] += 1.0 - frac
    m[np.arange(n_out), hi] += frac
    return m.astype(np.float32)


def _blockdiag_1x1(wt, w):
    # torch 1x1 conv weight (Co, Ci, 1, 1) -> kron(I_W, W^T): (W*Ci, W*Co)
    mat = np.asarray(wt, np.float32)[:, :, 0, 0].T               # (Ci, Co)
    return np.kron(np.eye(w, dtype=np.float32), mat)


def _banded_3x3_cat(wt, w):
    # torch 3x3 conv weight (Co, Ci, 3, 3), padding=1 -> single (3*W*Ci, W*Co)
    # weight with the three dy bands stacked along K (dy order: h-1, h, h+1).
    wt = np.asarray(wt, np.float32)
    co, ci = wt.shape[0], wt.shape[1]
    x = w * ci
    out = np.zeros((3 * x, w * co), np.float32)
    for dy in range(3):
        for ww in range(w):
            for dx in range(3):
                j = ww + dx - 1
                if 0 <= j < w:
                    out[dy * x + j * ci: dy * x + (j + 1) * ci,
                        ww * co:(ww + 1) * co] = wt[:, :, dy, dx].T
    return out


def _tile_affine(v, w):
    # per-channel gamma/beta (C,) -> (1, W*C) matching the interleaved layout.
    return np.tile(np.asarray(v, np.float32)[None, :], (1, w))


def _prepare_weights(params, channel_list, latent_dim):
    c0, c1, c2 = channel_list
    H1 = W1 = 8
    H2 = W2 = 16
    L = latent_dim
    bf = lambda a: jnp.asarray(np.asarray(a, np.float32), dtype=jnp.bfloat16)
    f32 = lambda a: jnp.asarray(np.asarray(a, np.float32), dtype=jnp.float32)
    q2, q3 = params['q2'], params['q3']

    # Linear: torch weight (4096, L) / bias (4096,), output index c*64+h*8+w.
    # Permute columns to (h, w, c) order, then FOLD the first 1x1 conv of
    # QuadConv #1 (no nonlinearity between Linear+Unflatten and that conv).
    lw = np.asarray(params['lin_w'], np.float32)
    lb = np.asarray(params['lin_b'], np.float32)
    lw_p = lw.reshape(c2, H1, W1, L).transpose(1, 2, 0, 3).reshape(H1 * W1 * c2, L).T
    lb_p = lb.reshape(c2, H1, W1).transpose(1, 2, 0).reshape(1, H1 * W1 * c2)
    w1a = np.asarray(q2['w1'], np.float32)[:, :, 0, 0].T         # (ci, co) = (64, 64)
    lw_f = (lw_p.reshape(L, H1 * W1, c2) @ w1a).reshape(L, H1 * W1 * c2)
    lb_f = (lb_p.reshape(1, H1 * W1, c2) @ w1a).reshape(1, H1 * W1 * c2)

    # Bilinear (align_corners=True) separable factors.
    b1 = _bilinear_matrix(W1, 2 * W1)                            # (16, 8)
    b2 = _bilinear_matrix(W2, 2 * W2)                            # (32, 16)
    # 8->16 W-stage FUSED with the first 1x1 conv of QuadConv #2
    # (per-pixel channel mixing commutes with per-channel interpolation).
    w1b = np.asarray(q3['w1'], np.float32)[:, :, 0, 0]           # (co, ci) = (c1, c1)
    u1kw = np.kron(b1.T, w1b.T)                                  # (W1*c1, 2*W1*c1)
    # 16->32 W-stage (factored; the H-stage is a tiny separate matmul).
    u2kw = np.kron(b2.T, np.eye(c0, dtype=np.float32))           # (W2*c0, 2*W2*c0)

    return dict(
        lw=bf(lw_f), lb=f32(lb_f),
        ag1=f32(np.tile(np.asarray(q2['g1'], np.float32)[None, :], (1, H1 * W1))),
        ab1=f32(np.tile(np.asarray(q2['b1'], np.float32)[None, :], (1, H1 * W1))),
        aw2=bf(_banded_3x3_cat(q2['w2'], W1)),
        ag2=f32(_tile_affine(q2['g2'], W1)), ab2=f32(_tile_affine(q2['b2'], W1)),
        aw3=bf(_banded_3x3_cat(q2['w3'], W1)),
        ag3=f32(_tile_affine(q2['g3'], W1)), ab3=f32(_tile_affine(q2['b3'], W1)),
        aw4=bf(_blockdiag_1x1(q2['w4'], W1)),
        u1kw=bf(u1kw),
        bg1=f32(_tile_affine(q3['g1'], W2)), bb1=f32(_tile_affine(q3['b1'], W2)),
        bw2=bf(_banded_3x3_cat(q3['w2'], W2)),
        bg2=f32(_tile_affine(q3['g2'], W2)), bb2=f32(_tile_affine(q3['b2'], W2)),
        bw3=bf(_banded_3x3_cat(q3['w3'], W2)),
        bg3=f32(_tile_affine(q3['g3'], W2)), bb3=f32(_tile_affine(q3['b3'], W2)),
        bw4=bf(_blockdiag_1x1(q3['w4'], W2)),
        u2kw=bf(u2kw),
    )


# ------------------------------ fused decoder --------------------------------


def build_decoder(params, channel_list, latent_dim, max_block=8):
    c0, c1, c2 = channel_list
    assert c2 == 64, "Unflatten(-1, (64, 8, 8)) requires channel_list[2] == 64"
    H1, W1 = 8, 8
    H2, W2 = 16, 16
    H3, W3 = 32, 32

    wts = _prepare_weights(params, channel_list, latent_dim)
    up1 = _bilinear_matrix(H1, 2 * H1)            # (16, 8)  H-interp 8 -> 16
    up2 = _bilinear_matrix(H2, 2 * H2)            # (32, 16) H-interp 16 -> 32

    def kernel(z_ref, lw, lb, ag1, ab1, aw2, ag2, ab2, aw3, ag3, ab3, aw4,
               u1kw, u1a, bg1, bb1, bw2, bg2, bb2, bw3, bg3, bb3, bw4,
               u2kw, u2a, out_ref, lin_scr):
        bblk = z_ref.shape[0]

        # Linear + (folded) first 1x1 conv of QuadConv #1, GroupNorm + SiLU in
        # the flat per-sample (bblk, 4096) layout (columns ordered (h, w, c)).
        h = jnp.dot(_bf16(z_ref[...]), lw[...],
                    preferred_element_type=jnp.float32) + lb[...]
        h = _silu(_norm_rows(h) * ag1[...] + ab1[...])

        # (bblk, 4096) -> (bblk*8, 512) interleaved layout via 8 aligned slice
        # stores into a tiny VMEM scratch (avoids a minor-dim-splitting reshape).
        for hh in range(H1):
            lin_scr[:, hh, :] = h[:, hh * W1 * c2:(hh + 1) * W1 * c2]
        x = lin_scr[...].reshape(bblk * H1, W1 * c2)

        # --- QuadConv #1 tail (8x8, C 64 -> 32) -------------------------------
        x = _conv3x3(x, aw2, H1)
        x = _silu(_norm_per_sample(x, bblk, H1) * ag2[...] + ab2[...])
        x = _conv3x3(x, aw3, H1)
        x = _silu(_norm_per_sample(x, bblk, H1) * ag3[...] + ab3[...])
        x = jnp.dot(_bf16(x), aw4[...], preferred_element_type=jnp.float32)
        x = _mish(_norm_per_sample(x, bblk, H1))

        # --- bilinear x2 (8 -> 16, align_corners) + folded 1x1 of QuadConv #2 -
        t = jnp.dot(_bf16(x), u1kw[...], preferred_element_type=jnp.float32)
        x = jnp.dot(u1a[...], _bf16(t), preferred_element_type=jnp.float32)

        # --- QuadConv #2 tail (16x16, C 32 -> 16) -----------------------------
        x = _silu(_norm_per_sample(x, bblk, H2) * bg1[...] + bb1[...])
        x = _conv3x3(x, bw2, H2)
        x = _silu(_norm_per_sample(x, bblk, H2) * bg2[...] + bb2[...])
        x = _conv3x3(x, bw3, H2)
        x = _silu(_norm_per_sample(x, bblk, H2) * bg3[...] + bb3[...])
        x = jnp.dot(_bf16(x), bw4[...], preferred_element_type=jnp.float32)
        x = _mish(_norm_per_sample(x, bblk, H2))

        # --- bilinear x2 (16 -> 32), factored; output stays interleaved ------
        t = jnp.dot(_bf16(x), u2kw[...], preferred_element_type=jnp.float32)
        yout = jnp.dot(u2a[...], _bf16(t), preferred_element_type=jnp.float32)
        out_ref[...] = yout.reshape(bblk, H3, W3 * c0)   # lane-dense (.., 512)

    def forward(z, y=None):
        del y                                   # Up.forward(x, y) ignores y
        B = z.shape[0]
        bblk = B if B <= max_block else max_block
        assert B % bblk == 0, "batch must be divisible by the sample block"
        nblk = B // bblk

        # Per-sample H-stage interpolation matrices, block-diagonal over the
        # samples stacked in the matmul row dimension.
        u1a = jnp.asarray(np.kron(np.eye(bblk, dtype=np.float32), up1),
                          dtype=jnp.bfloat16)
        u2a = jnp.asarray(np.kron(np.eye(bblk, dtype=np.float32), up2),
                          dtype=jnp.bfloat16)

        ops = [wts['lw'], wts['lb'], wts['ag1'], wts['ab1'], wts['aw2'],
               wts['ag2'], wts['ab2'], wts['aw3'], wts['ag3'], wts['ab3'],
               wts['aw4'], wts['u1kw'], u1a, wts['bg1'], wts['bb1'],
               wts['bw2'], wts['bg2'], wts['bb2'], wts['bw3'], wts['bg3'],
               wts['bb3'], wts['bw4'], wts['u2kw'], u2a]

        def full_spec(a):
            return pl.BlockSpec(a.shape, lambda i, _nd=a.ndim: (0,) * _nd)

        out = pl.pallas_call(
            kernel,
            out_shape=jax.ShapeDtypeStruct((B, H3, W3 * c0), jnp.float32),
            grid=(nblk,),
            in_specs=[pl.BlockSpec((bblk, latent_dim), lambda i: (i, 0))]
                     + [full_spec(a) for a in ops],
            out_specs=pl.BlockSpec((bblk, H3, W3 * c0), lambda i: (i, 0, 0)),
            scratch_shapes=[pltpu.VMEM((bblk, H1, W1 * c2), jnp.float32)],
            compiler_params=pltpu.CompilerParams(
                dimension_semantics=(("parallel",) if nblk > 1
                                     else ("arbitrary",)),
                vmem_limit_bytes=32 * 1024 * 1024),
        )(z, *ops)

        # XLA-side layout glue only: (B, Ho, Wo*C) -> NCHW (B, C, Ho, Wo).
        return out.reshape(B, H3, W3, c0).transpose(0, 3, 1, 2)

    return forward


# ------------------------------- parameters ----------------------------------


def init_params(key, latent_dim, channel_list):
    # Parameters stored in PyTorch layouts (Conv2d: (Co, Ci, kh, kw),
    # Linear: (out, in)); _prepare_weights converts them to kernel layouts.
    c0, c1, c2 = channel_list
    keys = iter(jax.random.split(key, 24))

    def nrm(shape, scale=0.1):
        return (scale * jax.random.normal(next(keys), shape)).astype(jnp.float32)

    def quad(ci, co):
        return dict(
            w1=nrm((ci, ci, 1, 1)),
            g1=1.0 + nrm((ci,), 0.05), b1=nrm((ci,), 0.05),
            w2=nrm((co, ci, 3, 3)),
            g2=1.0 + nrm((co,), 0.05), b2=nrm((co,), 0.05),
            w3=nrm((co, co, 3, 3)),
            g3=1.0 + nrm((co,), 0.05), b3=nrm((co,), 0.05),
            w4=nrm((co, co, 1, 1)),
        )

    return dict(
        lin_w=nrm((4096, latent_dim), 0.05),
        lin_b=nrm((4096,), 0.05),
        q2=quad(c2, c1),   # Up(channel_list[2] -> channel_list[1])
        q3=quad(c1, c0),   # Up(channel_list[1] -> channel_list[0])
    )


if __name__ == "__main__":
    channel_list = [16, 32, 64]   # channel_list[2] must be 64 (Unflatten -> (64,8,8))
    latent_dim = 32
    embed_dim = 8
    B = 2

    key = jax.random.PRNGKey(0)
    kp, kz, ky = jax.random.split(key, 3)
    params = init_params(kp, latent_dim, channel_list)
    z = jax.random.normal(kz, (B, latent_dim), dtype=jnp.float32)
    y = jax.random.normal(ky, (B, embed_dim), dtype=jnp.float32)   # unused, as in the module

    decoder = build_decoder(params, channel_list, latent_dim)
    out = jax.block_until_ready(decoder(z, y))

    assert out.shape == (B, channel_list[0], 32, 32), out.shape
    assert bool(jnp.all(jnp.isfinite(out)))
    print("KERNEL_OK")
</pallas_src>

<mosaic_0001>
module attributes {stable_mosaic.version = 11 : i64} {
  func.func @kernel(%arg0: i32, %arg1: memref<2x32xf32, #tpu.memory_space<vmem>>, %arg2: memref<32x4096xbf16, #tpu.memory_space<vmem>>, %arg3: memref<1x4096xf32, #tpu.memory_space<vmem>>, %arg4: memref<1x4096xf32, #tpu.memory_space<vmem>>, %arg5: memref<1x4096xf32, #tpu.memory_space<vmem>>, %arg6: memref<1536x256xbf16, #tpu.memory_space<vmem>>, %arg7: memref<1x256xf32, #tpu.memory_space<vmem>>, %arg8: memref<1x256xf32, #tpu.memory_space<vmem>>, %arg9: memref<768x256xbf16, #tpu.memory_space<vmem>>, %arg10: memref<1x256xf32, #tpu.memory_space<vmem>>, %arg11: memref<1x256xf32, #tpu.memory_space<vmem>>, %arg12: memref<256x256xbf16, #tpu.memory_space<vmem>>, %arg13: memref<256x512xbf16, #tpu.memory_space<vmem>>, %arg14: memref<32x16xbf16, #tpu.memory_space<vmem>>, %arg15: memref<1x512xf32, #tpu.memory_space<vmem>>, %arg16: memref<1x512xf32, #tpu.memory_space<vmem>>, %arg17: memref<1536x256xbf16, #tpu.memory_space<vmem>>, %arg18: memref<1x256xf32, #tpu.memory_space<vmem>>, %arg19: memref<1x256xf32, #tpu.memory_space<vmem>>, %arg20: memref<768x256xbf16, #tpu.memory_space<vmem>>, %arg21: memref<1x256xf32, #tpu.memory_space<vmem>>, %arg22: memref<1x256xf32, #tpu.memory_space<vmem>>, %arg23: memref<256x256xbf16, #tpu.memory_space<vmem>>, %arg24: memref<256x512xbf16, #tpu.memory_space<vmem>>, %arg25: memref<64x32xbf16, #tpu.memory_space<vmem>>, %arg26: memref<2x32x512xf32, #tpu.memory_space<vmem>>, %arg27: memref<2x8x512xf32, #tpu.memory_space<vmem>>) attributes {dimension_semantics = [#tpu.dimension_semantics<arbitrary>], iteration_bounds = array<i64: 1>, scalar_prefetch = 0 : i64, scratch_operands = 1 : i64, tpu.core_type = #tpu.core_type<tc>, window_params = [{transform_indices = @transform_0, window_bounds = array<i64: 2, 32>}, {pipeline_mode = #tpu.pipeline_mode<synchronous>, transform_indices = @transform_1, window_bounds = array<i64: 32, 4096>}, {pipeline_mode = #tpu.pipeline_mode<synchronous>, transform_indices = @transform_2, window_bounds = array<i64: 1, 4096>}, {pipeline_mode = #tpu.pipeline_mode<synchronous>, transform_indices = @transform_3, window_bounds = array<i64: 1, 4096>}, {pipeline_mode = #tpu.pipeline_mode<synchronous>, transform_indices = @transform_4, window_bounds = array<i64: 1, 4096>}, {pipeline_mode = #tpu.pipeline_mode<synchronous>, transform_indices = @transform_5, window_bounds = array<i64: 1536, 256>}, {pipeline_mode = #tpu.pipeline_mode<synchronous>, transform_indices = @transform_6, window_bounds = array<i64: 1, 256>}, {pipeline_mode = #tpu.pipeline_mode<synchronous>, transform_indices = @transform_7, window_bounds = array<i64: 1, 256>}, {pipeline_mode = #tpu.pipeline_mode<synchronous>, transform_indices = @transform_8, window_bounds = array<i64: 768, 256>}, {pipeline_mode = #tpu.pipeline_mode<synchronous>, transform_indices = @transform_9, window_bounds = array<i64: 1, 256>}, {pipeline_mode = #tpu.pipeline_mode<synchronous>, transform_indices = @transform_10, window_bounds = array<i64: 1, 256>}, {pipeline_mode = #tpu.pipeline_mode<synchronous>, transform_indices = @transform_11, window_bounds = array<i64: 256, 256>}, {pipeline_mode = #tpu.pipeline_mode<synchronous>, transform_indices = @transform_12, window_bounds = array<i64: 256, 512>}, {pipeline_mode = #tpu.pipeline_mode<synchronous>, transform_indices = @transform_13, window_bounds = array<i64: 32, 16>}, {pipeline_mode = #tpu.pipeline_mode<synchronous>, transform_indices = @transform_14, window_bounds = array<i64: 1, 512>}, {pipeline_mode = #tpu.pipeline_mode<synchronous>, transform_indices = @transform_15, window_bounds = array<i64: 1, 512>}, {pipeline_mode = #tpu.pipeline_mode<synchronous>, transform_indices = @transform_16, window_bounds = array<i64: 1536, 256>}, {pipeline_mode = #tpu.pipeline_mode<synchronous>, transform_indices = @transform_17, window_bounds = array<i64: 1, 256>}, {pipeline_mode = #tpu.pipeline_mode<synchronous>, transform_indices = @transform_18, window_bounds = array<i64: 1, 256>}, {pipeline_mode = #tpu.pipeline_mode<synchronous>, transform_indices = @transform_19, window_bounds = array<i64: 768, 256>}, {pipeline_mode = #tpu.pipeline_mode<synchronous>, transform_indices = @transform_20, window_bounds = array<i64: 1, 256>}, {pipeline_mode = #tpu.pipeline_mode<synchronous>, transform_indices = @transform_21, window_bounds = array<i64: 1, 256>}, {pipeline_mode = #tpu.pipeline_mode<synchronous>, transform_indices = @transform_22, window_bounds = array<i64: 256, 256>}, {pipeline_mode = #tpu.pipeline_mode<synchronous>, transform_indices = @transform_23, window_bounds = array<i64: 256, 512>}, {pipeline_mode = #tpu.pipeline_mode<synchronous>, transform_indices = @transform_24, window_bounds = array<i64: 64, 32>}, {transform_indices = @transform_25, window_bounds = array<i64: 2, 32, 512>}]} {
    %c0 = arith.constant 0 : index
    %c0_0 = arith.constant 0 : index
    %0 = vector.load %arg1[%c0, %c0_0] : memref<2x32xf32, #tpu.memory_space<vmem>>, vector<2x32xf32>
    %1 = arith.truncf %0 : vector<2x32xf32> to vector<2x32xbf16>
    %c0_1 = arith.constant 0 : index
    %c0_2 = arith.constant 0 : index
    %2 = vector.load %arg2[%c0_1, %c0_2] : memref<32x4096xbf16, #tpu.memory_space<vmem>>, vector<32x4096xbf16>
    %cst = arith.constant dense<0.000000e+00> : vector<2x4096xf32>
    %3 = tpu.matmul %1, %2, %cst {dimension_numbers = #tpu.dot_dimension_numbers<[1], [0], [0], [1], [0, 0, 1, 1], [], []>} : vector<2x32xbf16>, vector<32x4096xbf16>, vector<2x4096xf32> -> vector<2x4096xf32>
    %c0_3 = arith.constant 0 : index
    %c0_4 = arith.constant 0 : index
    %4 = vector.load %arg3[%c0_3, %c0_4] : memref<1x4096xf32, #tpu.memory_space<vmem>>, vector<1x4096xf32>
    %5 = vector.broadcast %4 : vector<1x4096xf32> to vector<2x4096xf32>
    %6 = arith.addf %3, %5 : vector<2x4096xf32>
    %cst_5 = arith.constant dense<0.000000e+00> : vector<2xf32>
    %7 = vector.multi_reduction <add>, %6, %cst_5 [1] : vector<2x4096xf32> to vector<2xf32>
    %8 = vector.shape_cast %7 : vector<2xf32> to vector<2x1xf32>
    %cst_6 = arith.constant 4.096000e+03 : f32
    %9 = vector.broadcast %cst_6 : f32 to vector<2x1xf32>
    %10 = arith.divf %8, %9 : vector<2x1xf32>
    %11 = vector.broadcast %10 : vector<2x1xf32> to vector<2x4096xf32>
    %12 = arith.subf %6, %11 : vector<2x4096xf32>
    %13 = arith.mulf %12, %12 : vector<2x4096xf32>
    %cst_7 = arith.constant dense<0.000000e+00> : vector<2xf32>
    %14 = vector.multi_reduction <add>, %13, %cst_7 [1] : vector<2x4096xf32> to vector<2xf32>
    %15 = vector.shape_cast %14 : vector<2xf32> to vector<2x1xf32>
    %cst_8 = arith.constant 4.096000e+03 : f32
    %16 = vector.broadcast %cst_8 : f32 to vector<2x1xf32>
    %17 = arith.divf %15, %16 : vector<2x1xf32>
    %cst_9 = arith.constant 9.99999974E-6 : f32
    %18 = vector.broadcast %cst_9 : f32 to vector<2x1xf32>
    %19 = arith.addf %17, %18 : vector<2x1xf32>
    %20 = math.rsqrt %19 : vector<2x1xf32>
    %21 = vector.broadcast %20 : vector<2x1xf32> to vector<2x4096xf32>
    %22 = arith.mulf %12, %21 : vector<2x4096xf32>
    %c0_10 = arith.constant 0 : index
    %c0_11 = arith.constant 0 : index
    %23 = vector.load %arg4[%c0_10, %c0_11] : memref<1x4096xf32, #tpu.memory_space<vmem>>, vector<1x4096xf32>
    %24 = vector.broadcast %23 : vector<1x4096xf32> to vector<2x4096xf32>
    %25 = arith.mulf %22, %24 : vector<2x4096xf32>
    %c0_12 = arith.constant 0 : index
    %c0_13 = arith.constant 0 : index
    %26 = vector.load %arg5[%c0_12, %c0_13] : memref<1x4096xf32, #tpu.memory_space<vmem>>, vector<1x4096xf32>
    %27 = vector.broadcast %26 : vector<1x4096xf32> to vector<2x4096xf32>
    %28 = arith.addf %25, %27 : vector<2x4096xf32>
    %cst_14 = arith.constant 0.000000e+00 : f32
    %29 = vector.broadcast %cst_14 : f32 to vector<2x4096xf32>
    %30 = arith.subf %29, %28 : vector<2x4096xf32>
    %31 = math.exp %30 : vector<2x4096xf32>
    %cst_15 = arith.constant 1.000000e+00 : f32
    %32 = vector.broadcast %cst_15 : f32 to vector<2x4096xf32>
    %33 = arith.addf %32, %31 : vector<2x4096xf32>
    %cst_16 = arith.constant 1.000000e+00 : f32
    %34 = vector.broadcast %cst_16 : f32 to vector<2x4096xf32>
    %35 = arith.divf %34, %33 : vector<2x4096xf32>
    %36 = arith.mulf %28, %35 : vector<2x4096xf32>
    %37 = vector.extract_strided_slice %36 {offsets = [0, 0], sizes = [2, 512], strides = [1, 1]} : vector<2x4096xf32> to vector<2x512xf32>
    %c0_17 = arith.constant 0 : index
    %c0_18 = arith.constant 0 : index
    %c0_19 = arith.constant 0 : index
    %38 = vector.load %arg27[%c0_17, %c0_18, %c0_19] : memref<2x8x512xf32, #tpu.memory_space<vmem>>, vector<2x1x512xf32>
    %39 = vector.shape_cast %38 : vector<2x1x512xf32> to vector<2x512xf32>
    %40 = vector.shape_cast %37 : vector<2x512xf32> to vector<2x1x512xf32>
    tpu.vector_store %arg27[%c0_17, %c0_18, %c0_19], %40 {strides = array<i32>} : memref<2x8x512xf32, #tpu.memory_space<vmem>>, vector<2x1x512xf32>,
    %41 = vector.extract_strided_slice %36 {offsets = [0, 512], sizes = [2, 512], strides = [1, 1]} : vector<2x4096xf32> to vector<2x512xf32>
    %c0_20 = arith.constant 0 : index
    %c1 = arith.constant 1 : index
    %c0_21 = arith.constant 0 : index
    %42 = vector.load %arg27[%c0_20, %c1, %c0_21] : memref<2x8x512xf32, #tpu.memory_space<vmem>>, vector<2x1x512xf32>
    %43 = vector.shape_cast %42 : vector<2x1x512xf32> to vector<2x512xf32>
    %44 = vector.shape_cast %41 : vector<2x512xf32> to vector<2x1x512xf32>
    tpu.vector_store %arg27[%c0_20, %c1, %c0_21], %44 {strides = array<i32>} : memref<2x8x512xf32, #tpu.memory_space<vmem>>, vector<2x1x512xf32>,
    %45 = vector.extract_strided_slice %36 {offsets = [0, 1024], sizes = [2, 512], strides = [1, 1]} : vector<2x4096xf32> to vector<2x512xf32>
    %c0_22 = arith.constant 0 : index
    %c2 = arith.constant 2 : index
    %c0_23 = arith.constant 0 : index
    %46 = vector.load %arg27[%c0_22, %c2, %c0_23] : memref<2x8x512xf32, #tpu.memory_space<vmem>>, vector<2x1x512xf32>
    %47 = vector.shape_cast %46 : vector<2x1x512xf32> to vector<2x512xf32>
    %48 = vector.shape_cast %45 : vector<2x512xf32> to vector<2x1x512xf32>
    tpu.vector_store %arg27[%c0_22, %c2, %c0_23], %48 {strides = array<i32>} : memref<2x8x512xf32, #tpu.memory_space<vmem>>, vector<2x1x512xf32>,
    %49 = vector.extract_strided_slice %36 {offsets = [0, 1536], sizes = [2, 512], strides = [1, 1]} : vector<2x4096xf32> to vector<2x512xf32>
    %c0_24 = arith.constant 0 : index
    %c3 = arith.constant 3 : index
    %c0_25 = arith.constant 0 : index
    %50 = vector.load %arg27[%c0_24, %c3, %c0_25] : memref<2x8x512xf32, #tpu.memory_space<vmem>>, vector<2x1x512xf32>
    %51 = vector.shape_cast %50 : vector<2x1x512xf32> to vector<2x512xf32>
    %52 = vector.shape_cast %49 : vector<2x512xf32> to vector<2x1x512xf32>
    tpu.vector_store %arg27[%c0_24, %c3, %c0_25], %52 {strides = array<i32>} : memref<2x8x512xf32, #tpu.memory_space<vmem>>, vector<2x1x512xf32>,
    %53 = vector.extract_strided_slice %36 {offsets = [0, 2048], sizes = [2, 512], strides = [1, 1]} : vector<2x4096xf32> to vector<2x512xf32>
    %c0_26 = arith.constant 0 : index
    %c4 = arith.constant 4 : index
    %c0_27 = arith.constant 0 : index
    %54 = vector.load %arg27[%c0_26, %c4, %c0_27] : memref<2x8x512xf32, #tpu.memory_space<vmem>>, vector<2x1x512xf32>
    %55 = vector.shape_cast %54 : vector<2x1x512xf32> to vector<2x512xf32>
    %56 = vector.shape_cast %53 : vector<2x512xf32> to vector<2x1x512xf32>
    tpu.vector_store %arg27[%c0_26, %c4, %c0_27], %56 {strides = array<i32>} : memref<2x8x512xf32, #tpu.memory_space<vmem>>, vector<2x1x512xf32>,
    %57 = vector.extract_strided_slice %36 {offsets = [0, 2560], sizes = [2, 512], strides = [1, 1]} : vector<2x4096xf32> to vector<2x512xf32>
    %c0_28 = arith.constant 0 : index
    %c5 = arith.constant 5 : index
    %c0_29 = arith.constant 0 : index
    %58 = vector.load %arg27[%c0_28, %c5, %c0_29] : memref<2x8x512xf32, #tpu.memory_space<vmem>>, vector<2x1x512xf32>
    %59 = vector.shape_cast %58 : vector<2x1x512xf32> to vector<2x512xf32>
    %60 = vector.shape_cast %57 : vector<2x512xf32> to vector<2x1x512xf32>
    tpu.vector_store %arg27[%c0_28, %c5, %c0_29], %60 {strides = array<i32>} : memref<2x8x512xf32, #tpu.memory_space<vmem>>, vector<2x1x512xf32>,
    %61 = vector.extract_strided_slice %36 {offsets = [0, 3072], sizes = [2, 512], strides = [1, 1]} : vector<2x4096xf32> to vector<2x512xf32>
    %c0_30 = arith.constant 0 : index
    %c6 = arith.constant 6 : index
    %c0_31 = arith.constant 0 : index
    %62 = vector.load %arg27[%c0_30, %c6, %c0_31] : memref<2x8x512xf32, #tpu.memory_space<vmem>>, vector<2x1x512xf32>
    %63 = vector.shape_cast %62 : vector<2x1x512xf32> to vector<2x512xf32>
    %64 = vector.shape_cast %61 : vector<2x512xf32> to vector<2x1x512xf32>
    tpu.vector_store %arg27[%c0_30, %c6, %c0_31], %64 {strides = array<i32>} : memref<2x8x512xf32, #tpu.memory_space<vmem>>, vector<2x1x512xf32>,
    %65 = vector.extract_strided_slice %36 {offsets = [0, 3584], sizes = [2, 512], strides = [1, 1]} : vector<2x4096xf32> to vector<2x512xf32>
    %c0_32 = arith.constant 0 : index
    %c7 = arith.constant 7 : index
    %c0_33 = arith.constant 0 : index
    %66 = vector.load %arg27[%c0_32, %c7, %c0_33] : memref<2x8x512xf32, #tpu.memory_space<vmem>>, vector<2x1x512xf32>
    %67 = vector.shape_cast %66 : vector<2x1x512xf32> to vector<2x512xf32>
    %68 = vector.shape_cast %65 : vector<2x512xf32> to vector<2x1x512xf32>
    tpu.vector_store %arg27[%c0_32, %c7, %c0_33], %68 {strides = array<i32>} : memref<2x8x512xf32, #tpu.memory_space<vmem>>, vector<2x1x512xf32>,
    %c0_34 = arith.constant 0 : index
    %c0_35 = arith.constant 0 : index
    %c0_36 = arith.constant 0 : index
    %69 = vector.load %arg27[%c0_34, %c0_35, %c0_36] : memref<2x8x512xf32, #tpu.memory_space<vmem>>, vector<2x8x512xf32>
    %70 = vector.shape_cast %69 : vector<2x8x512xf32> to vector<16x512xf32>
    %71 = tpu.iota {dimensions = array<i32: 0>} : vector<16x512xi32>
    %c7_i32 = arith.constant 7 : i32
    %72 = vector.broadcast %c7_i32 : i32 to vector<16x512xi32>
    %73 = arith.andi %71, %72 : vector<16x512xi32>
    %c1_i32 = arith.constant 1 : i32
    %74 = vector.broadcast %c1_i32 : i32 to vector<16x512xi32>
    %75 = arith.cmpi sge, %73, %74 : vector<16x512xi32>
    %c1_i32_37 = arith.constant 1 : i32
    %76 = tpu.dynamic_rotate %70 by %c1_i32_37 dim 0 : vector<16x512xf32>, i32 -> vector<16x512xf32>
    %cst_38 = arith.constant 0.000000e+00 : f32
    %77 = vector.broadcast %cst_38 : f32 to vector<16x512xf32>
    %78 = arith.select %75, %76, %77 : vector<16x512xi1>, vector<16x512xf32>
    %c7_i32_39 = arith.constant 7 : i32
    %79 = vector.broadcast %c7_i32_39 : i32 to vector<16x512xi32>
    %80 = arith.cmpi slt, %73, %79 : vector<16x512xi32>
    %c15_i32 = arith.constant 15 : i32
    %81 = tpu.dynamic_rotate %70 by %c15_i32 dim 0 : vector<16x512xf32>, i32 -> vector<16x512xf32>
    %cst_40 = arith.constant 0.000000e+00 : f32
    %82 = vector.broadcast %cst_40 : f32 to vector<16x512xf32>
    %83 = arith.select %80, %81, %82 : vector<16x512xi1>, vector<16x512xf32>
    %84 = tpu.concatenate %78, %70, %83 in 1 : vector<16x512xf32>, vector<16x512xf32>, vector<16x512xf32> -> vector<16x1536xf32>
    %85 = arith.truncf %84 : vector<16x1536xf32> to vector<16x1536xbf16>
    %c0_41 = arith.constant 0 : index
    %c0_42 = arith.constant 0 : index
    %86 = vector.load %arg6[%c0_41, %c0_42] : memref<1536x256xbf16, #tpu.memory_space<vmem>>, vector<1536x256xbf16>
    %cst_43 = arith.constant dense<0.000000e+00> : vector<16x256xf32>
    %87 = tpu.matmul %85, %86, %cst_43 {dimension_numbers = #tpu.dot_dimension_numbers<[1], [0], [0], [1], [0, 0, 1, 1], [], []>} : vector<16x1536xbf16>, vector<1536x256xbf16>, vector<16x256xf32> -> vector<16x256xf32>
    %88 = vector.shape_cast %87 : vector<16x256xf32> to vector<2x8x256xf32>
    %cst_44 = arith.constant dense<0.000000e+00> : vector<2x256xf32>
    %89 = vector.multi_reduction <add>, %88, %cst_44 [1] : vector<2x8x256xf32> to vector<2x256xf32>
    %90 = vector.shape_cast %89 : vector<2x256xf32> to vector<2x1x256xf32>
    %cst_45 = arith.constant dense<0.000000e+00> : vector<2x1xf32>
    %91 = vector.multi_reduction <add>, %90, %cst_45 [2] : vector<2x1x256xf32> to vector<2x1xf32>
    %92 = vector.shape_cast %91 : vector<2x1xf32> to vector<2x1x1xf32>
    %cst_46 = arith.constant 2.048000e+03 : f32
    %93 = vector.broadcast %cst_46 : f32 to vector<2x1x1xf32>
    %94 = arith.divf %92, %93 : vector<2x1x1xf32>
    %95 = vector.broadcast %94 : vector<2x1x1xf32> to vector<2x8x256xf32>
    %96 = arith.subf %88, %95 : vector<2x8x256xf32>
    %97 = arith.mulf %96, %96 : vector<2x8x256xf32>
    %cst_47 = arith.constant dense<0.000000e+00> : vector<2x256xf32>
    %98 = vector.multi_reduction <add>, %97, %cst_47 [1] : vector<2x8x256xf32> to vector<2x256xf32>
    %99 = vector.shape_cast %98 : vector<2x256xf32> to vector<2x1x256xf32>
    %cst_48 = arith.constant dense<0.000000e+00> : vector<2x1xf32>
    %100 = vector.multi_reduction <add>, %99, %cst_48 [2] : vector<2x1x256xf32> to vector<2x1xf32>
    %101 = vector.shape_cast %100 : vector<2x1xf32> to vector<2x1x1xf32>
    %cst_49 = arith.constant 2.048000e+03 : f32
    %102 = vector.broadcast %cst_49 : f32 to vector<2x1x1xf32>
    %103 = arith.divf %101, %102 : vector<2x1x1xf32>
    %cst_50 = arith.constant 9.99999974E-6 : f32
    %104 = vector.broadcast %cst_50 : f32 to vector<2x1x1xf32>
    %105 = arith.addf %103, %104 : vector<2x1x1xf32>
    %106 = math.rsqrt %105 : vector<2x1x1xf32>
    %107 = vector.broadcast %106 : vector<2x1x1xf32> to vector<2x8x256xf32>
    %108 = arith.mulf %96, %107 : vector<2x8x256xf32>
    %109 = vector.shape_cast %108 : vector<2x8x256xf32> to vector<16x256xf32>
    %c0_51 = arith.constant 0 : index
    %c0_52 = arith.constant 0 : index
    %110 = vector.load %arg7[%c0_51, %c0_52] : memref<1x256xf32, #tpu.memory_space<vmem>>, vector<1x256xf32>
    %111 = vector.broadcast %110 : vector<1x256xf32> to vector<16x256xf32>
    %112 = arith.mulf %109, %111 : vector<16x256xf32>
    %c0_53 = arith.constant 0 : index
    %c0_54 = arith.constant 0 : index
    %113 = vector.load %arg8[%c0_53, %c0_54] : memref<1x256xf32, #tpu.memory_space<vmem>>, vector<1x256xf32>
    %114 = vector.broadcast %113 : vector<1x256xf32> to vector<16x256xf32>
    %115 = arith.addf %112, %114 : vector<16x256xf32>
    %cst_55 = arith.constant 0.000000e+00 : f32
    %116 = vector.broadcast %cst_55 : f32 to vector<16x256xf32>
    %117 = arith.subf %116, %115 : vector<16x256xf32>
    %118 = math.exp %117 : vector<16x256xf32>
    %cst_56 = arith.constant 1.000000e+00 : f32
    %119 = vector.broadcast %cst_56 : f32 to vector<16x256xf32>
    %120 = arith.addf %119, %118 : vector<16x256xf32>
    %cst_57 = arith.constant 1.000000e+00 : f32
    %121 = vector.broadcast %cst_57 : f32 to vector<16x256xf32>
    %122 = arith.divf %121, %120 : vector<16x256xf32>
    %123 = arith.mulf %115, %122 : vector<16x256xf32>
    %124 = tpu.iota {dimensions = array<i32: 0>} : vector<16x256xi32>
    %c7_i32_58 = arith.constant 7 : i32
    %125 = vector.broadcast %c7_i32_58 : i32 to vector<16x256xi32>
    %126 = arith.andi %124, %125 : vector<16x256xi32>
    %c1_i32_59 = arith.constant 1 : i32
    %127 = vector.broadcast %c1_i32_59 : i32 to vector<16x256xi32>
    %128 = arith.cmpi sge, %126, %127 : vector<16x256xi32>
    %c1_i32_60 = arith.constant 1 : i32
    %129 = tpu.dynamic_rotate %123 by %c1_i32_60 dim 0 : vector<16x256xf32>, i32 -> vector<16x256xf32>
    %cst_61 = arith.constant 0.000000e+00 : f32
    %130 = vector.broadcast %cst_61 : f32 to vector<16x256xf32>
    %131 = arith.select %128, %129, %130 : vector<16x256xi1>, vector<16x256xf32>
    %c7_i32_62 = arith.constant 7 : i32
    %132 = vector.broadcast %c7_i32_62 : i32 to vector<16x256xi32>
    %133 = arith.cmpi slt, %126, %132 : vector<16x256xi32>
    %c15_i32_63 = arith.constant 15 : i32
    %134 = tpu.dynamic_rotate %123 by %c15_i32_63 dim 0 : vector<16x256xf32>, i32 -> vector<16x256xf32>
    %cst_64 = arith.constant 0.000000e+00 : f32
    %135 = vector.broadcast %cst_64 : f32 to vector<16x256xf32>
    %136 = arith.select %133, %134, %135 : vector<16x256xi1>, vector<16x256xf32>
    %137 = tpu.concatenate %131, %123, %136 in 1 : vector<16x256xf32>, vector<16x256xf32>, vector<16x256xf32> -> vector<16x768xf32>
    %138 = arith.truncf %137 : vector<16x768xf32> to vector<16x768xbf16>
    %c0_65 = arith.constant 0 : index
    %c0_66 = arith.constant 0 : index
    %139 = vector.load %arg9[%c0_65, %c0_66] : memref<768x256xbf16, #tpu.memory_space<vmem>>, vector<768x256xbf16>
    %cst_67 = arith.constant dense<0.000000e+00> : vector<16x256xf32>
    %140 = tpu.matmul %138, %139, %cst_67 {dimension_numbers = #tpu.dot_dimension_numbers<[1], [0], [0], [1], [0, 0, 1, 1], [], []>} : vector<16x768xbf16>, vector<768x256xbf16>, vector<16x256xf32> -> vector<16x256xf32>
    %141 = vector.shape_cast %140 : vector<16x256xf32> to vector<2x8x256xf32>
    %cst_68 = arith.constant dense<0.000000e+00> : vector<2x256xf32>
    %142 = vector.multi_reduction <add>, %141, %cst_68 [1] : vector<2x8x256xf32> to vector<2x256xf32>
    %143 = vector.shape_cast %142 : vector<2x256xf32> to vector<2x1x256xf32>
    %cst_69 = arith.constant dense<0.000000e+00> : vector<2x1xf32>
    %144 = vector.multi_reduction <add>, %143, %cst_69 [2] : vector<2x1x256xf32> to vector<2x1xf32>
    %145 = vector.shape_cast %144 : vector<2x1xf32> to vector<2x1x1xf32>
    %cst_70 = arith.constant 2.048000e+03 : f32
    %146 = vector.broadcast %cst_70 : f32 to vector<2x1x1xf32>
    %147 = arith.divf %145, %146 : vector<2x1x1xf32>
    %148 = vector.broadcast %147 : vector<2x1x1xf32> to vector<2x8x256xf32>
    %149 = arith.subf %141, %148 : vector<2x8x256xf32>
    %150 = arith.mulf %149, %149 : vector<2x8x256xf32>
    %cst_71 = arith.constant dense<0.000000e+00> : vector<2x256xf32>
    %151 = vector.multi_reduction <add>, %150, %cst_71 [1] : vector<2x8x256xf32> to vector<2x256xf32>
    %152 = vector.shape_cast %151 : vector<2x256xf32> to vector<2x1x256xf32>
    %cst_72 = arith.constant dense<0.000000e+00> : vector<2x1xf32>
    %153 = vector.multi_reduction <add>, %152, %cst_72 [2] : vector<2x1x256xf32> to vector<2x1xf32>
    %154 = vector.shape_cast %153 : vector<2x1xf32> to vector<2x1x1xf32>
    %cst_73 = arith.constant 2.048000e+03 : f32
    %155 = vector.broadcast %cst_73 : f32 to vector<2x1x1xf32>
    %156 = arith.divf %154, %155 : vector<2x1x1xf32>
    %cst_74 = arith.constant 9.99999974E-6 : f32
    %157 = vector.broadcast %cst_74 : f32 to vector<2x1x1xf32>
    %158 = arith.addf %156, %157 : vector<2x1x1xf32>
    %159 = math.rsqrt %158 : vector<2x1x1xf32>
    %160 = vector.broadcast %159 : vector<2x1x1xf32> to vector<2x8x256xf32>
    %161 = arith.mulf %149, %160 : vector<2x8x256xf32>
    %162 = vector.shape_cast %161 : vector<2x8x256xf32> to vector<16x256xf32>
    %c0_75 = arith.constant 0 : index
    %c0_76 = arith.constant 0 : index
    %163 = vector.load %arg10[%c0_75, %c0_76] : memref<1x256xf32, #tpu.memory_space<vmem>>, vector<1x256xf32>
    %164 = vector.broadcast %163 : vector<1x256xf32> to vector<16x256xf32>
    %165 = arith.mulf %162, %164 : vector<16x256xf32>
    %c0_77 = arith.constant 0 : index
    %c0_78 = arith.constant 0 : index
    %166 = vector.load %arg11[%c0_77, %c0_78] : memref<1x256xf32, #tpu.memory_space<vmem>>, vector<1x256xf32>
    %167 = vector.broadcast %166 : vector<1x256xf32> to vector<16x256xf32>
    %168 = arith.addf %165, %167 : vector<16x256xf32>
    %cst_79 = arith.constant 0.000000e+00 : f32
    %169 = vector.broadcast %cst_79 : f32 to vector<16x256xf32>
    %170 = arith.subf %169, %168 : vector<16x256xf32>
    %171 = math.exp %170 : vector<16x256xf32>
    %cst_80 = arith.constant 1.000000e+00 : f32
    %172 = vector.broadcast %cst_80 : f32 to vector<16x256xf32>
    %173 = arith.addf %172, %171 : vector<16x256xf32>
    %cst_81 = arith.constant 1.000000e+00 : f32
    %174 = vector.broadcast %cst_81 : f32 to vector<16x256xf32>
    %175 = arith.divf %174, %173 : vector<16x256xf32>
    %176 = arith.mulf %168, %175 : vector<16x256xf32>
    %177 = arith.truncf %176 : vector<16x256xf32> to vector<16x256xbf16>
    %c0_82 = arith.constant 0 : index
    %c0_83 = arith.constant 0 : index
    %178 = vector.load %arg12[%c0_82, %c0_83] : memref<256x256xbf16, #tpu.memory_space<vmem>>, vector<256x256xbf16>
    %cst_84 = arith.constant dense<0.000000e+00> : vector<16x256xf32>
    %179 = tpu.matmul %177, %178, %cst_84 {dimension_numbers = #tpu.dot_dimension_numbers<[1], [0], [0], [1], [0, 0, 1, 1], [], []>} : vector<16x256xbf16>, vector<256x256xbf16>, vector<16x256xf32> -> vector<16x256xf32>
    %180 = vector.shape_cast %179 : vector<16x256xf32> to vector<2x8x256xf32>
    %cst_85 = arith.constant dense<0.000000e+00> : vector<2x256xf32>
    %181 = vector.multi_reduction <add>, %180, %cst_85 [1] : vector<2x8x256xf32> to vector<2x256xf32>
    %182 = vector.shape_cast %181 : vector<2x256xf32> to vector<2x1x256xf32>
    %cst_86 = arith.constant dense<0.000000e+00> : vector<2x1xf32>
    %183 = vector.multi_reduction <add>, %182, %cst_86 [2] : vector<2x1x256xf32> to vector<2x1xf32>
    %184 = vector.shape_cast %183 : vector<2x1xf32> to vector<2x1x1xf32>
    %cst_87 = arith.constant 2.048000e+03 : f32
    %185 = vector.broadcast %cst_87 : f32 to vector<2x1x1xf32>
    %186 = arith.divf %184, %185 : vector<2x1x1xf32>
    %187 = vector.broadcast %186 : vector<2x1x1xf32> to vector<2x8x256xf32>
    %188 = arith.subf %180, %187 : vector<2x8x256xf32>
    %189 = arith.mulf %188, %188 : vector<2x8x256xf32>
    %cst_88 = arith.constant dense<0.000000e+00> : vector<2x256xf32>
    %190 = vector.multi_reduction <add>, %189, %cst_88 [1] : vector<2x8x256xf32> to vector<2x256xf32>
    %191 = vector.shape_cast %190 : vector<2x256xf32> to vector<2x1x256xf32>
    %cst_89 = arith.constant dense<0.000000e+00> : vector<2x1xf32>
    %192 = vector.multi_reduction <add>, %191, %cst_89 [2] : vector<2x1x256xf32> to vector<2x1xf32>
    %193 = vector.shape_cast %192 : vector<2x1xf32> to vector<2x1x1xf32>
    %cst_90 = arith.constant 2.048000e+03 : f32
    %194 = vector.broadcast %cst_90 : f32 to vector<2x1x1xf32>
    %195 = arith.divf %193, %194 : vector<2x1x1xf32>
    %cst_91 = arith.constant 9.99999974E-6 : f32
    %196 = vector.broadcast %cst_91 : f32 to vector<2x1x1xf32>
    %197 = arith.addf %195, %196 : vector<2x1x1xf32>
    %198 = math.rsqrt %197 : vector<2x1x1xf32>
    %199 = vector.broadcast %198 : vector<2x1x1xf32> to vector<2x8x256xf32>
    %200 = arith.mulf %188, %199 : vector<2x8x256xf32>
    %201 = vector.shape_cast %200 : vector<2x8x256xf32> to vector<16x256xf32>
    %cst_92 = arith.constant 0.000000e+00 : f32
    %202 = vector.broadcast %cst_92 : f32 to vector<16x256xf32>
    %203 = arith.maximumf %201, %202 : vector<16x256xf32>
    %204 = math.absf %201 : vector<16x256xf32>
    %cst_93 = arith.constant 0.000000e+00 : f32
    %205 = vector.broadcast %cst_93 : f32 to vector<16x256xf32>
    %206 = arith.subf %205, %204 : vector<16x256xf32>
    %207 = math.exp %206 : vector<16x256xf32>
    %cst_94 = arith.constant 1.000000e+00 : f32
    %208 = vector.broadcast %cst_94 : f32 to vector<16x256xf32>
    %209 = arith.addf %208, %207 : vector<16x256xf32>
    %210 = math.log %209 : vector<16x256xf32>
    %211 = arith.addf %203, %210 : vector<16x256xf32>
    %212 = math.tanh %211 : vector<16x256xf32>
    %213 = arith.mulf %201, %212 : vector<16x256xf32>
    %214 = arith.truncf %213 : vector<16x256xf32> to vector<16x256xbf16>
    %c0_95 = arith.constant 0 : index
    %c0_96 = arith.constant 0 : index
    %215 = vector.load %arg13[%c0_95, %c0_96] : memref<256x512xbf16, #tpu.memory_space<vmem>>, vector<256x512xbf16>
    %cst_97 = arith.constant dense<0.000000e+00> : vector<16x512xf32>
    %216 = tpu.matmul %214, %215, %cst_97 {dimension_numbers = #tpu.dot_dimension_numbers<[1], [0], [0], [1], [0, 0, 1, 1], [], []>} : vector<16x256xbf16>, vector<256x512xbf16>, vector<16x512xf32> -> vector<16x512xf32>
    %c0_98 = arith.constant 0 : index
    %c0_99 = arith.constant 0 : index
    %217 = vector.load %arg14[%c0_98, %c0_99] : memref<32x16xbf16, #tpu.memory_space<vmem>>, vector<32x16xbf16>
    %218 = arith.truncf %216 : vector<16x512xf32> to vector<16x512xbf16>
    %cst_100 = arith.constant dense<0.000000e+00> : vector<32x512xf32>
    %219 = tpu.matmul %217, %218, %cst_100 {dimension_numbers = #tpu.dot_dimension_numbers<[1], [0], [0], [1], [0, 0, 1, 1], [], []>} : vector<32x16xbf16>, vector<16x512xbf16>, vector<32x512xf32> -> vector<32x512xf32>
    %220 = vector.shape_cast %219 : vector<32x512xf32> to vector<2x16x512xf32>
    %cst_101 = arith.constant dense<0.000000e+00> : vector<2x512xf32>
    %221 = vector.multi_reduction <add>, %220, %cst_101 [1] : vector<2x16x512xf32> to vector<2x512xf32>
    %222 = vector.shape_cast %221 : vector<2x512xf32> to vector<2x1x512xf32>
    %cst_102 = arith.constant dense<0.000000e+00> : vector<2x1xf32>
    %223 = vector.multi_reduction <add>, %222, %cst_102 [2] : vector<2x1x512xf32> to vector<2x1xf32>
    %224 = vector.shape_cast %223 : vector<2x1xf32> to vector<2x1x1xf32>
    %cst_103 = arith.constant 8.192000e+03 : f32
    %225 = vector.broadcast %cst_103 : f32 to vector<2x1x1xf32>
    %226 = arith.divf %224, %225 : vector<2x1x1xf32>
    %227 = vector.broadcast %226 : vector<2x1x1xf32> to vector<2x16x512xf32>
    %228 = arith.subf %220, %227 : vector<2x16x512xf32>
    %229 = arith.mulf %228, %228 : vector<2x16x512xf32>
    %cst_104 = arith.constant dense<0.000000e+00> : vector<2x512xf32>
    %230 = vector.multi_reduction <add>, %229, %cst_104 [1] : vector<2x16x512xf32> to vector<2x512xf32>
    %231 = vector.shape_cast %230 : vector<2x512xf32> to vector<2x1x512xf32>
    %cst_105 = arith.constant dense<0.000000e+00> : vector<2x1xf32>
    %232 = vector.multi_reduction <add>, %231, %cst_105 [2] : vector<2x1x512xf32> to vector<2x1xf32>
    %233 = vector.shape_cast %232 : vector<2x1xf32> to vector<2x1x1xf32>
    %cst_106 = arith.constant 8.192000e+03 : f32
    %234 = vector.broadcast %cst_106 : f32 to vector<2x1x1xf32>
    %235 = arith.divf %233, %234 : vector<2x1x1xf32>
    %cst_107 = arith.constant 9.99999974E-6 : f32
    %236 = vector.broadcast %cst_107 : f32 to vector<2x1x1xf32>
    %237 = arith.addf %235, %236 : vector<2x1x1xf32>
    %238 = math.rsqrt %237 : vector<2x1x1xf32>
    %239 = vector.broadcast %238 : vector<2x1x1xf32> to vector<2x16x512xf32>
    %240 = arith.mulf %228, %239 : vector<2x16x512xf32>
    %241 = vector.shape_cast %240 : vector<2x16x512xf32> to vector<32x512xf32>
    %c0_108 = arith.constant 0 : index
    %c0_109 = arith.constant 0 : index
    %242 = vector.load %arg15[%c0_108, %c0_109] : memref<1x512xf32, #tpu.memory_space<vmem>>, vector<1x512xf32>
    %243 = vector.broadcast %242 : vector<1x512xf32> to vector<32x512xf32>
    %244 = arith.mulf %241, %243 : vector<32x512xf32>
    %c0_110 = arith.constant 0 : index
    %c0_111 = arith.constant 0 : index
    %245 = vector.load %arg16[%c0_110, %c0_111] : memref<1x512xf32, #tpu.memory_space<vmem>>, vector<1x512xf32>
    %246 = vector.broadcast %245 : vector<1x512xf32> to vector<32x512xf32>
    %247 = arith.addf %244, %246 : vector<32x512xf32>
    %cst_112 = arith.constant 0.000000e+00 : f32
    %248 = vector.broadcast %cst_112 : f32 to vector<32x512xf32>
    %249 = arith.subf %248, %247 : vector<32x512xf32>
    %250 = math.exp %249 : vector<32x512xf32>
    %cst_113 = arith.constant 1.000000e+00 : f32
    %251 = vector.broadcast %cst_113 : f32 to vector<32x512xf32>
    %252 = arith.addf %251, %250 : vector<32x512xf32>
    %cst_114 = arith.constant 1.000000e+00 : f32
    %253 = vector.broadcast %cst_114 : f32 to vector<32x512xf32>
    %254 = arith.divf %253, %252 : vector<32x512xf32>
    %255 = arith.mulf %247, %254 : vector<32x512xf32>
    %256 = tpu.iota {dimensions = array<i32: 0>} : vector<32x512xi32>
    %c15_i32_115 = arith.constant 15 : i32
    %257 = vector.broadcast %c15_i32_115 : i32 to vector<32x512xi32>
    %258 = arith.andi %256, %257 : vector<32x512xi32>
    %c1_i32_116 = arith.constant 1 : i32
    %259 = vector.broadcast %c1_i32_116 : i32 to vector<32x512xi32>
    %260 = arith.cmpi sge, %258, %259 : vector<32x512xi32>
    %c1_i32_117 = arith.constant 1 : i32
    %261 = tpu.dynamic_rotate %255 by %c1_i32_117 dim 0 : vector<32x512xf32>, i32 -> vector<32x512xf32>
    %cst_118 = arith.constant 0.000000e+00 : f32
    %262 = vector.broadcast %cst_118 : f32 to vector<32x512xf32>
    %263 = arith.select %260, %261, %262 : vector<32x512xi1>, vector<32x512xf32>
    %c15_i32_119 = arith.constant 15 : i32
    %264 = vector.broadcast %c15_i32_119 : i32 to vector<32x512xi32>
    %265 = arith.cmpi slt, %258, %264 : vector<32x512xi32>
    %c31_i32 = arith.constant 31 : i32
    %266 = tpu.dynamic_rotate %255 by %c31_i32 dim 0 : vector<32x512xf32>, i32 -> vector<32x512xf32>
    %cst_120 = arith.constant 0.000000e+00 : f32
    %267 = vector.broadcast %cst_120 : f32 to vector<32x512xf32>
    %268 = arith.select %265, %266, %267 : vector<32x512xi1>, vector<32x512xf32>
    %269 = tpu.concatenate %263, %255, %268 in 1 : vector<32x512xf32>, vector<32x512xf32>, vector<32x512xf32> -> vector<32x1536xf32>
    %270 = arith.truncf %269 : vector<32x1536xf32> to vector<32x1536xbf16>
    %c0_121 = arith.constant 0 : index
    %c0_122 = arith.constant 0 : index
    %271 = vector.load %arg17[%c0_121, %c0_122] : memref<1536x256xbf16, #tpu.memory_space<vmem>>, vector<1536x256xbf16>
    %cst_123 = arith.constant dense<0.000000e+00> : vector<32x256xf32>
    %272 = tpu.matmul %270, %271, %cst_123 {dimension_numbers = #tpu.dot_dimension_numbers<[1], [0], [0], [1], [0, 0, 1, 1], [], []>} : vector<32x1536xbf16>, vector<1536x256xbf16>, vector<32x256xf32> -> vector<32x256xf32>
    %273 = vector.shape_cast %272 : vector<32x256xf32> to vector<2x16x256xf32>
    %cst_124 = arith.constant dense<0.000000e+00> : vector<2x256xf32>
    %274 = vector.multi_reduction <add>, %273, %cst_124 [1] : vector<2x16x256xf32> to vector<2x256xf32>
    %275 = vector.shape_cast %274 : vector<2x256xf32> to vector<2x1x256xf32>
    %cst_125 = arith.constant dense<0.000000e+00> : vector<2x1xf32>
    %276 = vector.multi_reduction <add>, %275, %cst_125 [2] : vector<2x1x256xf32> to vector<2x1xf32>
    %277 = vector.shape_cast %276 : vector<2x1xf32> to vector<2x1x1xf32>
    %cst_126 = arith.constant 4.096000e+03 : f32
    %278 = vector.broadcast %cst_126 : f32 to vector<2x1x1xf32>
    %279 = arith.divf %277, %278 : vector<2x1x1xf32>
    %280 = vector.broadcast %279 : vector<2x1x1xf32> to vector<2x16x256xf32>
    %281 = arith.subf %273, %280 : vector<2x16x256xf32>
    %282 = arith.mulf %281, %281 : vector<2x16x256xf32>
    %cst_127 = arith.constant dense<0.000000e+00> : vector<2x256xf32>
    %283 = vector.multi_reduction <add>, %282, %cst_127 [1] : vector<2x16x256xf32> to vector<2x256xf32>
    %284 = vector.shape_cast %283 : vector<2x256xf32> to vector<2x1x256xf32>
    %cst_128 = arith.constant dense<0.000000e+00> : vector<2x1xf32>
    %285 = vector.multi_reduction <add>, %284, %cst_128 [2] : vector<2x1x256xf32> to vector<2x1xf32>
    %286 = vector.shape_cast %285 : vector<2x1xf32> to vector<2x1x1xf32>
    %cst_129 = arith.constant 4.096000e+03 : f32
    %287 = vector.broadcast %cst_129 : f32 to vector<2x1x1xf32>
    %288 = arith.divf %286, %287 : vector<2x1x1xf32>
    %cst_130 = arith.constant 9.99999974E-6 : f32
    %289 = vector.broadcast %cst_130 : f32 to vector<2x1x1xf32>
    %290 = arith.addf %288, %289 : vector<2x1x1xf32>
    %291 = math.rsqrt %290 : vector<2x1x1xf32>
    %292 = vector.broadcast %291 : vector<2x1x1xf32> to vector<2x16x256xf32>
    %293 = arith.mulf %281, %292 : vector<2x16x256xf32>
    %294 = vector.shape_cast %293 : vector<2x16x256xf32> to vector<32x256xf32>
    %c0_131 = arith.constant 0 : index
    %c0_132 = arith.constant 0 : index
    %295 = vector.load %arg18[%c0_131, %c0_132] : memref<1x256xf32, #tpu.memory_space<vmem>>, vector<1x256xf32>
    %296 = vector.broadcast %295 : vector<1x256xf32> to vector<32x256xf32>
    %297 = arith.mulf %294, %296 : vector<32x256xf32>
    %c0_133 = arith.constant 0 : index
    %c0_134 = arith.constant 0 : index
    %298 = vector.load %arg19[%c0_133, %c0_134] : memref<1x256xf32, #tpu.memory_space<vmem>>, vector<1x256xf32>
    %299 = vector.broadcast %298 : vector<1x256xf32> to vector<32x256xf32>
    %300 = arith.addf %297, %299 : vector<32x256xf32>
    %cst_135 = arith.constant 0.000000e+00 : f32
    %301 = vector.broadcast %cst_135 : f32 to vector<32x256xf32>
    %302 = arith.subf %301, %300 : vector<32x256xf32>
    %303 = math.exp %302 : vector<32x256xf32>
    %cst_136 = arith.constant 1.000000e+00 : f32
    %304 = vector.broadcast %cst_136 : f32 to vector<32x256xf32>
    %305 = arith.addf %304, %303 : vector<32x256xf32>
    %cst_137 = arith.constant 1.000000e+00 : f32
    %306 = vector.broadcast %cst_137 : f32 to vector<32x256xf32>
    %307 = arith.divf %306, %305 : vector<32x256xf32>
    %308 = arith.mulf %300, %307 : vector<32x256xf32>
    %309 = tpu.iota {dimensions = array<i32: 0>} : vector<32x256xi32>
    %c15_i32_138 = arith.constant 15 : i32
    %310 = vector.broadcast %c15_i32_138 : i32 to vector<32x256xi32>
    %311 = arith.andi %309, %310 : vector<32x256xi32>
    %c1_i32_139 = arith.constant 1 : i32
    %312 = vector.broadcast %c1_i32_139 : i32 to vector<32x256xi32>
    %313 = arith.cmpi sge, %311, %312 : vector<32x256xi32>
    %c1_i32_140 = arith.constant 1 : i32
    %314 = tpu.dynamic_rotate %308 by %c1_i32_140 dim 0 : vector<32x256xf32>, i32 -> vector<32x256xf32>
    %cst_141 = arith.constant 0.000000e+00 : f32
    %315 = vector.broadcast %cst_141 : f32 to vector<32x256xf32>
    %316 = arith.select %313, %314, %315 : vector<32x256xi1>, vector<32x256xf32>
    %c15_i32_142 = arith.constant 15 : i32
    %317 = vector.broadcast %c15_i32_142 : i32 to vector<32x256xi32>
    %318 = arith.cmpi slt, %311, %317 : vector<32x256xi32>
    %c31_i32_143 = arith.constant 31 : i32
    %319 = tpu.dynamic_rotate %308 by %c31_i32_143 dim 0 : vector<32x256xf32>, i32 -> vector<32x256xf32>
    %cst_144 = arith.constant 0.000000e+00 : f32
    %320 = vector.broadcast %cst_144 : f32 to vector<32x256xf32>
    %321 = arith.select %318, %319, %320 : vector<32x256xi1>, vector<32x256xf32>
    %322 = tpu.concatenate %316, %308, %321 in 1 : vector<32x256xf32>, vector<32x256xf32>, vector<32x256xf32> -> vector<32x768xf32>
    %323 = arith.truncf %322 : vector<32x768xf32> to vector<32x768xbf16>
    %c0_145 = arith.constant 0 : index
    %c0_146 = arith.constant 0 : index
    %324 = vector.load %arg20[%c0_145, %c0_146] : memref<768x256xbf16, #tpu.memory_space<vmem>>, vector<768x256xbf16>
    %cst_147 = arith.constant dense<0.000000e+00> : vector<32x256xf32>
    %325 = tpu.matmul %323, %324, %cst_147 {dimension_numbers = #tpu.dot_dimension_numbers<[1], [0], [0], [1], [0, 0, 1, 1], [], []>} : vector<32x768xbf16>, vector<768x256xbf16>, vector<32x256xf32> -> vector<32x256xf32>
    %326 = vector.shape_cast %325 : vector<32x256xf32> to vector<2x16x256xf32>
    %cst_148 = arith.constant dense<0.000000e+00> : vector<2x256xf32>
    %327 = vector.multi_reduction <add>, %326, %cst_148 [1] : vector<2x16x256xf32> to vector<2x256xf32>
    %328 = vector.shape_cast %327 : vector<2x256xf32> to vector<2x1x256xf32>
    %cst_149 = arith.constant dense<0.000000e+00> : vector<2x1xf32>
    %329 = vector.multi_reduction <add>, %328, %cst_149 [2] : vector<2x1x256xf32> to vector<2x1xf32>
    %330 = vector.shape_cast %329 : vector<2x1xf32> to vector<2x1x1xf32>
    %cst_150 = arith.constant 4.096000e+03 : f32
    %331 = vector.broadcast %cst_150 : f32 to vector<2x1x1xf32>
    %332 = arith.divf %330, %331 : vector<2x1x1xf32>
    %333 = vector.broadcast %332 : vector<2x1x1xf32> to vector<2x16x256xf32>
    %334 = arith.subf %326, %333 : vector<2x16x256xf32>
    %335 = arith.mulf %334, %334 : vector<2x16x256xf32>
    %cst_151 = arith.constant dense<0.000000e+00> : vector<2x256xf32>
    %336 = vector.multi_reduction <add>, %335, %cst_151 [1] : vector<2x16x256xf32> to vector<2x256xf32>
    %337 = vector.shape_cast %336 : vector<2x256xf32> to vector<2x1x256xf32>
    %cst_152 = arith.constant dense<0.000000e+00> : vector<2x1xf32>
    %338 = vector.multi_reduction <add>, %337, %cst_152 [2] : vector<2x1x256xf32> to vector<2x1xf32>
    %339 = vector.shape_cast %338 : vector<2x1xf32> to vector<2x1x1xf32>
    %cst_153 = arith.constant 4.096000e+03 : f32
    %340 = vector.broadcast %cst_153 : f32 to vector<2x1x1xf32>
    %341 = arith.divf %339, %340 : vector<2x1x1xf32>
    %cst_154 = arith.constant 9.99999974E-6 : f32
    %342 = vector.broadcast %cst_154 : f32 to vector<2x1x1xf32>
    %343 = arith.addf %341, %342 : vector<2x1x1xf32>
    %344 = math.rsqrt %343 : vector<2x1x1xf32>
    %345 = vector.broadcast %344 : vector<2x1x1xf32> to vector<2x16x256xf32>
    %346 = arith.mulf %334, %345 : vector<2x16x256xf32>
    %347 = vector.shape_cast %346 : vector<2x16x256xf32> to vector<32x256xf32>
    %c0_155 = arith.constant 0 : index
    %c0_156 = arith.constant 0 : index
    %348 = vector.load %arg21[%c0_155, %c0_156] : memref<1x256xf32, #tpu.memory_space<vmem>>, vector<1x256xf32>
    %349 = vector.broadcast %348 : vector<1x256xf32> to vector<32x256xf32>
    %350 = arith.mulf %347, %349 : vector<32x256xf32>
    %c0_157 = arith.constant 0 : index
    %c0_158 = arith.constant 0 : index
    %351 = vector.load %arg22[%c0_157, %c0_158] : memref<1x256xf32, #tpu.memory_space<vmem>>, vector<1x256xf32>
    %352 = vector.broadcast %351 : vector<1x256xf32> to vector<32x256xf32>
    %353 = arith.addf %350, %352 : vector<32x256xf32>
    %cst_159 = arith.constant 0.000000e+00 : f32
    %354 = vector.broadcast %cst_159 : f32 to vector<32x256xf32>
    %355 = arith.subf %354, %353 : vector<32x256xf32>
    %356 = math.exp %355 : vector<32x256xf32>
    %cst_160 = arith.constant 1.000000e+00 : f32
    %357 = vector.broadcast %cst_160 : f32 to vector<32x256xf32>
    %358 = arith.addf %357, %356 : vector<32x256xf32>
    %cst_161 = arith.constant 1.000000e+00 : f32
    %359 = vector.broadcast %cst_161 : f32 to vector<32x256xf32>
    %360 = arith.divf %359, %358 : vector<32x256xf32>
    %361 = arith.mulf %353, %360 : vector<32x256xf32>
    %362 = arith.truncf %361 : vector<32x256xf32> to vector<32x256xbf16>
    %c0_162 = arith.constant 0 : index
    %c0_163 = arith.constant 0 : index
    %363 = vector.load %arg23[%c0_162, %c0_163] : memref<256x256xbf16, #tpu.memory_space<vmem>>, vector<256x256xbf16>
    %cst_164 = arith.constant dense<0.000000e+00> : vector<32x256xf32>
    %364 = tpu.matmul %362, %363, %cst_164 {dimension_numbers = #tpu.dot_dimension_numbers<[1], [0], [0], [1], [0, 0, 1, 1], [], []>} : vector<32x256xbf16>, vector<256x256xbf16>, vector<32x256xf32> -> vector<32x256xf32>
    %365 = vector.shape_cast %364 : vector<32x256xf32> to vector<2x16x256xf32>
    %cst_165 = arith.constant dense<0.000000e+00> : vector<2x256xf32>
    %366 = vector.multi_reduction <add>, %365, %cst_165 [1] : vector<2x16x256xf32> to vector<2x256xf32>
    %367 = vector.shape_cast %366 : vector<2x256xf32> to vector<2x1x256xf32>
    %cst_166 = arith.constant dense<0.000000e+00> : vector<2x1xf32>
    %368 = vector.multi_reduction <add>, %367, %cst_166 [2] : vector<2x1x256xf32> to vector<2x1xf32>
    %369 = vector.shape_cast %368 : vector<2x1xf32> to vector<2x1x1xf32>
    %cst_167 = arith.constant 4.096000e+03 : f32
    %370 = vector.broadcast %cst_167 : f32 to vector<2x1x1xf32>
    %371 = arith.divf %369, %370 : vector<2x1x1xf32>
    %372 = vector.broadcast %371 : vector<2x1x1xf32> to vector<2x16x256xf32>
    %373 = arith.subf %365, %372 : vector<2x16x256xf32>
    %374 = arith.mulf %373, %373 : vector<2x16x256xf32>
    %cst_168 = arith.constant dense<0.000000e+00> : vector<2x256xf32>
    %375 = vector.multi_reduction <add>, %374, %cst_168 [1] : vector<2x16x256xf32> to vector<2x256xf32>
    %376 = vector.shape_cast %375 : vector<2x256xf32> to vector<2x1x256xf32>
    %cst_169 = arith.constant dense<0.000000e+00> : vector<2x1xf32>
    %377 = vector.multi_reduction <add>, %376, %cst_169 [2] : vector<2x1x256xf32> to vector<2x1xf32>
    %378 = vector.shape_cast %377 : vector<2x1xf32> to vector<2x1x1xf32>
    %cst_170 = arith.constant 4.096000e+03 : f32
    %379 = vector.broadcast %cst_170 : f32 to vector<2x1x1xf32>
    %380 = arith.divf %378, %379 : vector<2x1x1xf32>
    %cst_171 = arith.constant 9.99999974E-6 : f32
    %381 = vector.broadcast %cst_171 : f32 to vector<2x1x1xf32>
    %382 = arith.addf %380, %381 : vector<2x1x1xf32>
    %383 = math.rsqrt %382 : vector<2x1x1xf32>
    %384 = vector.broadcast %383 : vector<2x1x1xf32> to vector<2x16x256xf32>
    %385 = arith.mulf %373, %384 : vector<2x16x256xf32>
    %386 = vector.shape_cast %385 : vector<2x16x256xf32> to vector<32x256xf32>
    %cst_172 = arith.constant 0.000000e+00 : f32
    %387 = vector.broadcast %cst_172 : f32 to vector<32x256xf32>
    %388 = arith.maximumf %386, %387 : vector<32x256xf32>
    %389 = math.absf %386 : vector<32x256xf32>
    %cst_173 = arith.constant 0.000000e+00 : f32
    %390 = vector.broadcast %cst_173 : f32 to vector<32x256xf32>
    %391 = arith.subf %390, %389 : vector<32x256xf32>
    %392 = math.exp %391 : vector<32x256xf32>
    %cst_174 = arith.constant 1.000000e+00 : f32
    %393 = vector.broadcast %cst_174 : f32 to vector<32x256xf32>
    %394 = arith.addf %393, %392 : vector<32x256xf32>
    %395 = math.log %394 : vector<32x256xf32>
    %396 = arith.addf %388, %395 : vector<32x256xf32>
    %397 = math.tanh %396 : vector<32x256xf32>
    %398 = arith.mulf %386, %397 : vector<32x256xf32>
    %399 = arith.truncf %398 : vector<32x256xf32> to vector<32x256xbf16>
    %c0_175 = arith.constant 0 : index
    %c0_176 = arith.constant 0 : index
    %400 = vector.load %arg24[%c0_175, %c0_176] : memref<256x512xbf16, #tpu.memory_space<vmem>>, vector<256x512xbf16>
    %cst_177 = arith.constant dense<0.000000e+00> : vector<32x512xf32>
    %401 = tpu.matmul %399, %400, %cst_177 {dimension_numbers = #tpu.dot_dimension_numbers<[1], [0], [0], [1], [0, 0, 1, 1], [], []>} : vector<32x256xbf16>, vector<256x512xbf16>, vector<32x512xf32> -> vector<32x512xf32>
    %c0_178 = arith.constant 0 : index
    %c0_179 = arith.constant 0 : index
    %402 = vector.load %arg25[%c0_178, %c0_179] : memref<64x32xbf16, #tpu.memory_space<vmem>>, vector<64x32xbf16>
    %403 = arith.truncf %401 : vector<32x512xf32> to vector<32x512xbf16>
    %cst_180 = arith.constant dense<0.000000e+00> : vector<64x512xf32>
    %404 = tpu.matmul %402, %403, %cst_180 {dimension_numbers = #tpu.dot_dimension_numbers<[1], [0], [0], [1], [0, 0, 1, 1], [], []>} : vector<64x32xbf16>, vector<32x512xbf16>, vector<64x512xf32> -> vector<64x512xf32>
    %405 = vector.shape_cast %404 : vector<64x512xf32> to vector<2x32x512xf32>
    %c0_181 = arith.constant 0 : index
    %c0_182 = arith.constant 0 : index
    %c0_183 = arith.constant 0 : index
    %406 = vector.load %arg26[%c0_181, %c0_182, %c0_183] : memref<2x32x512xf32, #tpu.memory_space<vmem>>, vector<2x32x512xf32>
    tpu.vector_store %arg26[%c0_181, %c0_182, %c0_183], %405 {strides = array<i32>} : memref<2x32x512xf32, #tpu.memory_space<vmem>>, vector<2x32x512xf32>,
    return
  }
  func.func @transform_0(%arg0: i32) -> (i32, i32) {
    %c0_i32 = arith.constant 0 : i32
    %c0_i32_0 = arith.constant 0 : i32
    return %arg0, %c0_i32 : i32, i32
  }
  func.func @transform_1(%arg0: i32) -> (i32, i32) {
    %c0_i32 = arith.constant 0 : i32
    %c0_i32_0 = arith.constant 0 : i32
    %c0_i32_1 = arith.constant 0 : i32
    return %c0_i32, %c0_i32_0 : i32, i32
  }
  func.func @transform_2(%arg0: i32) -> (i32, i32) {
    %c0_i32 = arith.constant 0 : i32
    %c0_i32_0 = arith.constant 0 : i32
    %c0_i32_1 = arith.constant 0 : i32
    return %c0_i32, %c0_i32_0 : i32, i32
  }
  func.func @transform_3(%arg0: i32) -> (i32, i32) {
    %c0_i32 = arith.constant 0 : i32
    %c0_i32_0 = arith.constant 0 : i32
    %c0_i32_1 = arith.constant 0 : i32
    return %c0_i32, %c0_i32_0 : i32, i32
  }
  func.func @transform_4(%arg0: i32) -> (i32, i32) {
    %c0_i32 = arith.constant 0 : i32
    %c0_i32_0 = arith.constant 0 : i32
    %c0_i32_1 = arith.constant 0 : i32
    return %c0_i32, %c0_i32_0 : i32, i32
  }
  func.func @transform_5(%arg0: i32) -> (i32, i32) {
    %c0_i32 = arith.constant 0 : i32
    %c0_i32_0 = arith.constant 0 : i32
    %c0_i32_1 = arith.constant 0 : i32
    return %c0_i32, %c0_i32_0 : i32, i32
  }
  func.func @transform_6(%arg0: i32) -> (i32, i32) {
    %c0_i32 = arith.constant 0 : i32
    %c0_i32_0 = arith.constant 0 : i32
    %c0_i32_1 = arith.constant 0 : i32
    return %c0_i32, %c0_i32_0 : i32, i32
  }
  func.func @transform_7(%arg0: i32) -> (i32, i32) {
    %c0_i32 = arith.constant 0 : i32
    %c0_i32_0 = arith.constant 0 : i32
    %c0_i32_1 = arith.constant 0 : i32
    return %c0_i32, %c0_i32_0 : i32, i32
  }
  func.func @transform_8(%arg0: i32) -> (i32, i32) {
    %c0_i32 = arith.constant 0 : i32
    %c0_i32_0 = arith.constant 0 : i32
    %c0_i32_1 = arith.constant 0 : i32
    return %c0_i32, %c0_i32_0 : i32, i32
  }
  func.func @transform_9(%arg0: i32) -> (i32, i32) {
    %c0_i32 = arith.constant 0 : i32
    %c0_i32_0 = arith.constant 0 : i32
    %c0_i32_1 = arith.constant 0 : i32
    return %c0_i32, %c0_i32_0 : i32, i32
  }
  func.func @transform_10(%arg0: i32) -> (i32, i32) {
    %c0_i32 = arith.constant 0 : i32
    %c0_i32_0 = arith.constant 0 : i32
    %c0_i32_1 = arith.constant 0 : i32
    return %c0_i32, %c0_i32_0 : i32, i32
  }
  func.func @transform_11(%arg0: i32) -> (i32, i32) {
    %c0_i32 = arith.constant 0 : i32
    %c0_i32_0 = arith.constant 0 : i32
    %c0_i32_1 = arith.constant 0 : i32
    return %c0_i32, %c0_i32_0 : i32, i32
  }
  func.func @transform_12(%arg0: i32) -> (i32, i32) {
    %c0_i32 = arith.constant 0 : i32
    %c0_i32_0 = arith.constant 0 : i32
    %c0_i32_1 = arith.constant 0 : i32
    return %c0_i32, %c0_i32_0 : i32, i32
  }
  func.func @transform_13(%arg0: i32) -> (i32, i32) {
    %c0_i32 = arith.constant 0 : i32
    %c0_i32_0 = arith.constant 0 : i32
    %c0_i32_1 = arith.constant 0 : i32
    return %c0_i32, %c0_i32_0 : i32, i32
  }
  func.func @transform_14(%arg0: i32) -> (i32, i32) {
    %c0_i32 = arith.constant 0 : i32
    %c0_i32_0 = arith.constant 0 : i32
    %c0_i32_1 = arith.constant 0 : i32
    return %c0_i32, %c0_i32_0 : i32, i32
  }
  func.func @transform_15(%arg0: i32) -> (i32, i32) {
    %c0_i32 = arith.constant 0 : i32
    %c0_i32_0 = arith.constant 0 : i32
    %c0_i32_1 = arith.constant 0 : i32
    return %c0_i32, %c0_i32_0 : i32, i32
  }
  func.func @transform_16(%arg0: i32) -> (i32, i32) {
    %c0_i32 = arith.constant 0 : i32
    %c0_i32_0 = arith.constant 0 : i32
    %c0_i32_1 = arith.constant 0 : i32
    return %c0_i32, %c0_i32_0 : i32, i32
  }
  func.func @transform_17(%arg0: i32) -> (i32, i32) {
    %c0_i32 = arith.constant 0 : i32
    %c0_i32_0 = arith.constant 0 : i32
    %c0_i32_1 = arith.constant 0 : i32
    return %c0_i32, %c0_i32_0 : i32, i32
  }
  func.func @transform_18(%arg0: i32) -> (i32, i32) {
    %c0_i32 = arith.constant 0 : i32
    %c0_i32_0 = arith.constant 0 : i32
    %c0_i32_1 = arith.constant 0 : i32
    return %c0_i32, %c0_i32_0 : i32, i32
  }
  func.func @transform_19(%arg0: i32) -> (i32, i32) {
    %c0_i32 = arith.constant 0 : i32
    %c0_i32_0 = arith.constant 0 : i32
    %c0_i32_1 = arith.constant 0 : i32
    return %c0_i32, %c0_i32_0 : i32, i32
  }
  func.func @transform_20(%arg0: i32) -> (i32, i32) {
    %c0_i32 = arith.constant 0 : i32
    %c0_i32_0 = arith.constant 0 : i32
    %c0_i32_1 = arith.constant 0 : i32
    return %c0_i32, %c0_i32_0 : i32, i32
  }
  func.func @transform_21(%arg0: i32) -> (i32, i32) {
    %c0_i32 = arith.constant 0 : i32
    %c0_i32_0 = arith.constant 0 : i32
    %c0_i32_1 = arith.constant 0 : i32
    return %c0_i32, %c0_i32_0 : i32, i32
  }
  func.func @transform_22(%arg0: i32) -> (i32, i32) {
    %c0_i32 = arith.constant 0 : i32
    %c0_i32_0 = arith.constant 0 : i32
    %c0_i32_1 = arith.constant 0 : i32
    return %c0_i32, %c0_i32_0 : i32, i32
  }
  func.func @transform_23(%arg0: i32) -> (i32, i32) {
    %c0_i32 = arith.constant 0 : i32
    %c0_i32_0 = arith.constant 0 : i32
    %c0_i32_1 = arith.constant 0 : i32
    return %c0_i32, %c0_i32_0 : i32, i32
  }
  func.func @transform_24(%arg0: i32) -> (i32, i32) {
    %c0_i32 = arith.constant 0 : i32
    %c0_i32_0 = arith.constant 0 : i32
    %c0_i32_1 = arith.constant 0 : i32
    return %c0_i32, %c0_i32_0 : i32, i32
  }
  func.func @transform_25(%arg0: i32) -> (i32, i32, i32) {
    %c0_i32 = arith.constant 0 : i32
    %c0_i32_0 = arith.constant 0 : i32
    %c0_i32_1 = arith.constant 0 : i32
    return %arg0, %c0_i32, %c0_i32_0 : i32, i32, i32
  }
}

</mosaic_0001>

<llo_original>
// kernel: tpu_custom_call.1
$region0: #{tpu_custom_call.1}
  #allocation0 [shape = 'u32[]', space=smem, size = 0x4, offset = 0x4, fixed_abs, tag = 'smem constant byte address 0x4 - core index']
  #allocation1 [shape = 'u32[144,128]{1,0:T(1,128)}', space=vmem, size = 0x12000, scoped, tag = 'internal scratch']
  #allocation2 [shape = 'f32[2,8,512]{2,1,0:T(8,128)}', space=vmem, size = 0x8000, scoped, tag = 'scratch operand']
  %s0 = inlined_call_operand.vmem [shape: f32[2,32], index: 0, kind: input, shape index: {}]
  %s1 = inlined_call_operand.hbm [shape: bf16[32,4096], index: 1, kind: input, shape index: {}]
  %s2 = inlined_call_operand.vmem [shape: f32[1,4096], index: 2, kind: input, shape index: {}]
  %s3 = inlined_call_operand.vmem [shape: f32[1,4096], index: 3, kind: input, shape index: {}]
  %s4 = inlined_call_operand.hbm [shape: f32[1,4096], index: 4, kind: input, shape index: {}]
  %s5 = inlined_call_operand.hbm [shape: bf16[1536,256], index: 5, kind: input, shape index: {}]
  %s6 = inlined_call_operand.hbm [shape: f32[1,256], index: 6, kind: input, shape index: {}]
  %s7 = inlined_call_operand.hbm [shape: f32[1,256], index: 7, kind: input, shape index: {}]
  %s8 = inlined_call_operand.hbm [shape: bf16[768,256], index: 8, kind: input, shape index: {}]
  %s9 = inlined_call_operand.vmem [shape: f32[1,256], index: 9, kind: input, shape index: {}]
  %s10 = inlined_call_operand.vmem [shape: f32[1,256], index: 10, kind: input, shape index: {}]
  %s11 = inlined_call_operand.hbm [shape: bf16[256,256], index: 11, kind: input, shape index: {}]
  %s12 = inlined_call_operand.hbm [shape: bf16[256,512], index: 12, kind: input, shape index: {}]
  %s13 = inlined_call_operand.vmem [shape: bf16[32,16], index: 13, kind: input, shape index: {}]
  %s14 = inlined_call_operand.vmem [shape: f32[1,512], index: 14, kind: input, shape index: {}]
  %s15 = inlined_call_operand.vmem [shape: f32[1,512], index: 15, kind: input, shape index: {}]
  %s16 = inlined_call_operand.hbm [shape: bf16[1536,256], index: 16, kind: input, shape index: {}]
  %s17 = inlined_call_operand.vmem [shape: f32[1,256], index: 17, kind: input, shape index: {}]
  %s18 = inlined_call_operand.vmem [shape: f32[1,256], index: 18, kind: input, shape index: {}]
  %s19 = inlined_call_operand.hbm [shape: bf16[768,256], index: 19, kind: input, shape index: {}]
  %s20 = inlined_call_operand.vmem [shape: f32[1,256], index: 20, kind: input, shape index: {}]
  %s21 = inlined_call_operand.vmem [shape: f32[1,256], index: 21, kind: input, shape index: {}]
  %s22 = inlined_call_operand.hbm [shape: bf16[256,256], index: 22, kind: input, shape index: {}]
  %s23 = inlined_call_operand.hbm [shape: bf16[256,512], index: 23, kind: input, shape index: {}]
  %s24 = inlined_call_operand.vmem [shape: bf16[64,32], index: 24, kind: input, shape index: {}]
  %s25 = inlined_call_operand.hbm [shape: f32[2,32,512], index: 25, kind: output, shape index: {}]
  %s26 = sld [smem:[#allocation0]]
  $region158: #{tpu_custom_call.1} parent=0
    _
  %s28 = ssub.s32 1, %s26
  %s29 = scalar_select 0, %s28, %s26
  $region1: #{tpu_custom_call.1} parent=0
    #allocation3 [shape = 'u8[262144]{0}', space=vmem, size = 0x40000, scoped, tag = 'input window, operand 1, single buffered']
    #allocation4 [shape = 's32[1]{0}', space=sflag, size = 0x4, scoped, tag = 'scoped memory for tpu_custom_call.1']
    #allocation5 [shape = 's32[1]{0}', space=sflag, size = 0x4, scoped, tag = 'scoped memory for tpu_custom_call.1']
    #allocation6 [shape = 'u8[16384]{0}', space=vmem, size = 0x4000, scoped, tag = 'input window, operand 4, single buffered']
    #allocation7 [shape = 's32[1]{0}', space=sflag, size = 0x4, scoped, tag = 'scoped memory for tpu_custom_call.1']
    #allocation8 [shape = 'u8[786432]{0}', space=vmem, size = 0xc0000, scoped, tag = 'input window, operand 5, single buffered']
    #allocation9 [shape = 'u8[1024]{0}', space=vmem, size = 0x400, scoped, tag = 'input window, operand 6, single buffered']
    #allocation10 [shape = 's32[1]{0}', space=sflag, size = 0x4, scoped, tag = 'scoped memory for tpu_custom_call.1']
    #allocation11 [shape = 'u8[1024]{0}', space=vmem, size = 0x400, scoped, tag = 'input window, operand 7, single buffered']
    #allocation12 [shape = 'u8[393216]{0}', space=vmem, size = 0x60000, scoped, tag = 'input window, operand 8, single buffered']
    #allocation13 [shape = 's32[1]{0}', space=sflag, size = 0x4, scoped, tag = 'scoped memory for tpu_custom_call.1']
    #allocation14 [shape = 'u8[131072]{0}', space=vmem, size = 0x20000, scoped, tag = 'input window, operand 11, single buffered']
    #allocation15 [shape = 'u8[262144]{0}', space=vmem, size = 0x40000, scoped, tag = 'input window, operand 12, single buffered']
    #allocation16 [shape = 's32[1]{0}', space=sflag, size = 0x4, scoped, tag = 'scoped memory for tpu_custom_call.1']
    #allocation17 [shape = 'u8[786432]{0}', space=vmem, size = 0xc0000, scoped, tag = 'input window, operand 16, single buffered']
    #allocation18 [shape = 'u8[393216]{0}', space=vmem, size = 0x60000, scoped, tag = 'input window, operand 19, single buffered']
    #allocation19 [shape = 's32[1]{0}', space=sflag, size = 0x4, scoped, tag = 'scoped memory for tpu_custom_call.1']
    #allocation20 [shape = 'u8[131072]{0}', space=vmem, size = 0x20000, scoped, tag = 'input window, operand 22, single buffered']
    #allocation21 [shape = 'u8[262144]{0}', space=vmem, size = 0x40000, scoped, tag = 'input window, operand 23, single buffered']
    #allocation22 [shape = 's32[1]{0}', space=sflag, size = 0x4, scoped, tag = 'scoped memory for tpu_custom_call.1']
    #allocation23 [shape = 'u8[131072]{0}', space=vmem, size = 0x20000, scoped, tag = 'output window, operand 0, single buffered']
    %30 = vsyncpa [#allocation4], 0
    %31 = vsyncpa [#allocation7], 0
    %32 = vsyncpa [#allocation10], 0
    %33 = vsyncpa [#allocation13], 0
    %34 = vsyncpa [#allocation16], 0
    %35 = vsyncpa [#allocation19], 0
    %36 = vsyncpa [#allocation22], 0
    %37 = vsyncpa [#allocation5], 0
    // Predicated region
    $region2: #{tpu_custom_call.1} parent=1 // pred_check
      _
    $region3: #{tpu_custom_call.1} parent=1 // pred_check_branch
      %39 = sbr.rel (0) target = $region5
    $region4: #{tpu_custom_call.1} parent=1 // pred_region
      _
    $region5: #{tpu_custom_call.1} parent=1 // pred_fallthru
      _
    // Predicated region
    $region6: #{tpu_custom_call.1} parent=1 // pred_check
      _
    $region7: #{tpu_custom_call.1} parent=1 // pred_check_branch
      %41 = sbr.rel (0) target = $region9
    $region8: #{tpu_custom_call.1} parent=1 // pred_region
      %s43 = ssub.s32 8192, 8192
      %44 = vsyncadd [#allocation4], %s43
      %s45 = sshll.u32 [#allocation3], 4
      %s46 = int_to_ptr.vmem [resolvable:$true] %s45
      %51 = dma.hbm_to_vmem [thread:$0]  %s1, 8192, %s46, [#allocation4], 2048, 2048, 128
    $region9: #{tpu_custom_call.1} parent=1 // pred_fallthru
      _
    // Predicated region
    $region10: #{tpu_custom_call.1} parent=1 // pred_check
      _
    $region11: #{tpu_custom_call.1} parent=1 // pred_check_branch
      %53 = sbr.rel (0) target = $region13
    $region12: #{tpu_custom_call.1} parent=1 // pred_region
      _
    $region13: #{tpu_custom_call.1} parent=1 // pred_fallthru
      _
    // Predicated region
    $region14: #{tpu_custom_call.1} parent=1 // pred_check
      _
    $region15: #{tpu_custom_call.1} parent=1 // pred_check_branch
      %55 = sbr.rel (0) target = $region17
    $region16: #{tpu_custom_call.1} parent=1 // pred_region
      _
    $region17: #{tpu_custom_call.1} parent=1 // pred_fallthru
      _
    // Predicated region
    $region18: #{tpu_custom_call.1} parent=1 // pred_check
      _
    $region19: #{tpu_custom_call.1} parent=1 // pred_check_branch
      %57 = sbr.rel (0) target = $region21
    $region20: #{tpu_custom_call.1} parent=1 // pred_region
      %s59 = ssub.s32 512, 512
      %60 = vsyncadd [#allocation7], %s59
      %s62 = sshll.u32 [#allocation6], 4
      %s63 = int_to_ptr.vmem [resolvable:$true] %s62
      %65 = dma.hbm_to_vmem [thread:$0]  %s4, 512, %s63, [#allocation7]
    $region21: #{tpu_custom_call.1} parent=1 // pred_fallthru
      _
    // Predicated region
    $region22: #{tpu_custom_call.1} parent=1 // pred_check
      _
    $region23: #{tpu_custom_call.1} parent=1 // pred_check_branch
      %67 = sbr.rel (0) target = $region25
    $region24: #{tpu_custom_call.1} parent=1 // pred_region
      %s69 = ssub.s32 24576, 24576
      %70 = vsyncadd [#allocation7], %s69
      %s71 = sshll.u32 [#allocation8], 4
      %s72 = int_to_ptr.vmem [resolvable:$true] %s71
      %77 = dma.hbm_to_vmem [thread:$0]  %s5, 24576, %s72, [#allocation7], 128, 128, 8
    $region25: #{tpu_custom_call.1} parent=1 // pred_fallthru
      _
    // Predicated region
    $region26: #{tpu_custom_call.1} parent=1 // pred_check
      _
    $region27: #{tpu_custom_call.1} parent=1 // pred_check_branch
      %79 = sbr.rel (0) target = $region29
    $region28: #{tpu_custom_call.1} parent=1 // pred_region
      %s81 = ssub.s32 32, 32
      %82 = vsyncadd [#allocation10], %s81
      %s84 = sshll.u32 [#allocation9], 4
      %s85 = int_to_ptr.vmem [resolvable:$true] %s84
      %87 = dma.hbm_to_vmem [thread:$0]  %s6, 32, %s85, [#allocation10]
    $region29: #{tpu_custom_call.1} parent=1 // pred_fallthru
      _
    // Predicated region
    $region30: #{tpu_custom_call.1} parent=1 // pred_check
      _
    $region31: #{tpu_custom_call.1} parent=1 // pred_check_branch
      %89 = sbr.rel (0) target = $region33
    $region32: #{tpu_custom_call.1} parent=1 // pred_region
      %s91 = ssub.s32 32, 32
      %92 = vsyncadd [#allocation10], %s91
      %s94 = sshll.u32 [#allocation11], 4
      %s95 = int_to_ptr.vmem [resolvable:$true] %s94
      %97 = dma.hbm_to_vmem [thread:$0]  %s7, 32, %s95, [#allocation10]
    $region33: #{tpu_custom_call.1} parent=1 // pred_fallthru
      _
    // Predicated region
    $region34: #{tpu_custom_call.1} parent=1 // pred_check
      _
    $region35: #{tpu_custom_call.1} parent=1 // pred_check_branch
      %99 = sbr.rel (0) target = $region37
    $region36: #{tpu_custom_call.1} parent=1 // pred_region
      %s101 = ssub.s32 12288, 12288
      %102 = vsyncadd [#allocation13], %s101
      %s103 = sshll.u32 [#allocation12], 4
      %s104 = int_to_ptr.vmem [resolvable:$true] %s103
      %109 = dma.hbm_to_vmem [thread:$0]  %s8, 12288, %s104, [#allocation13], 128, 128, 8
    $region37: #{tpu_custom_call.1} parent=1 // pred_fallthru
      _
    // Predicated region
    $region38: #{tpu_custom_call.1} parent=1 // pred_check
      _
    $region39: #{tpu_custom_call.1} parent=1 // pred_check_branch
      %111 = sbr.rel (0) target = $region41
    $region40: #{tpu_custom_call.1} parent=1 // pred_region
      _
    $region41: #{tpu_custom_call.1} parent=1 // pred_fallthru
      _
    // Predicated region
    $region42: #{tpu_custom_call.1} parent=1 // pred_check
      _
    $region43: #{tpu_custom_call.1} parent=1 // pred_check_branch
      %113 = sbr.rel (0) target = $region45
    $region44: #{tpu_custom_call.1} parent=1 // pred_region
      _
    $region45: #{tpu_custom_call.1} parent=1 // pred_fallthru
      _
    // Predicated region
    $region46: #{tpu_custom_call.1} parent=1 // pred_check
      _
    $region47: #{tpu_custom_call.1} parent=1 // pred_check_branch
      %115 = sbr.rel (0) target = $region49
    $region48: #{tpu_custom_call.1} parent=1 // pred_region
      %s117 = ssub.s32 4096, 4096
      %118 = vsyncadd [#allocation13], %s117
      %s119 = sshll.u32 [#allocation14], 4
      %s120 = int_to_ptr.vmem [resolvable:$true] %s119
      %125 = dma.hbm_to_vmem [thread:$0]  %s11, 4096, %s120, [#allocation13], 128, 128, 8
    $region49: #{tpu_custom_call.1} parent=1 // pred_fallthru
      _
    // Predicated region
    $region50: #{tpu_custom_call.1} parent=1 // pred_check
      _
    $region51: #{tpu_custom_call.1} parent=1 // pred_check_branch
      %127 = sbr.rel (0) target = $region53
    $region52: #{tpu_custom_call.1} parent=1 // pred_region
      %s129 = ssub.s32 8192, 8192
      %130 = vsyncadd [#allocation16], %s129
      %s131 = sshll.u32 [#allocation15], 4
      %s132 = int_to_ptr.vmem [resolvable:$true] %s131
      %137 = dma.hbm_to_vmem [thread:$0]  %s12, 8192, %s132, [#allocation16], 256, 256, 16
    $region53: #{tpu_custom_call.1} parent=1 // pred_fallthru
      _
    // Predicated region
    $region54: #{tpu_custom_call.1} parent=1 // pred_check
      _
    $region55: #{tpu_custom_call.1} parent=1 // pred_check_branch
      %139 = sbr.rel (0) target = $region57
    $region56: #{tpu_custom_call.1} parent=1 // pred_region
      _
    $region57: #{tpu_custom_call.1} parent=1 // pred_fallthru
      _
    // Predicated region
    $region58: #{tpu_custom_call.1} parent=1 // pred_check
      _
    $region59: #{tpu_custom_call.1} parent=1 // pred_check_branch
      %141 = sbr.rel (0) target = $region61
    $region60: #{tpu_custom_call.1} parent=1 // pred_region
      _
    $region61: #{tpu_custom_call.1} parent=1 // pred_fallthru
      _
    // Predicated region
    $region62: #{tpu_custom_call.1} parent=1 // pred_check
      _
    $region63: #{tpu_custom_call.1} parent=1 // pred_check_branch
      %143 = sbr.rel (0) target = $region65
    $region64: #{tpu_custom_call.1} parent=1 // pred_region
      _
    $region65: #{tpu_custom_call.1} parent=1 // pred_fallthru
      _
    // Predicated region
    $region66: #{tpu_custom_call.1} parent=1 // pred_check
      _
    $region67: #{tpu_custom_call.1} parent=1 // pred_check_branch
      %145 = sbr.rel (0) target = $region69
    $region68: #{tpu_custom_call.1} parent=1 // pred_region
      %s147 = ssub.s32 24576, 24576
      %148 = vsyncadd [#allocation16], %s147
      %s149 = sshll.u32 [#allocation17], 4
      %s150 = int_to_ptr.vmem [resolvable:$true] %s149
      %155 = dma.hbm_to_vmem [thread:$0]  %s16, 24576, %s150, [#allocation16], 128, 128, 8
    $region69: #{tpu_custom_call.1} parent=1 // pred_fallthru
      _
    // Predicated region
    $region70: #{tpu_custom_call.1} parent=1 // pred_check
      _
    $region71: #{tpu_custom_call.1} parent=1 // pred_check_branch
      %157 = sbr.rel (0) target = $region73
    $region72: #{tpu_custom_call.1} parent=1 // pred_region
      _
    $region73: #{tpu_custom_call.1} parent=1 // pred_fallthru
      _
    // Predicated region
    $region74: #{tpu_custom_call.1} parent=1 // pred_check
      _
    $region75: #{tpu_custom_call.1} parent=1 // pred_check_branch
      %159 = sbr.rel (0) target = $region77
    $region76: #{tpu_custom_call.1} parent=1 // pred_region
      _
    $region77: #{tpu_custom_call.1} parent=1 // pred_fallthru
      _
    // Predicated region
    $region78: #{tpu_custom_call.1} parent=1 // pred_check
      _
    $region79: #{tpu_custom_call.1} parent=1 // pred_check_branch
      %161 = sbr.rel (0) target = $region81
    $region80: #{tpu_custom_call.1} parent=1 // pred_region
      %s163 = ssub.s32 12288, 12288
      %164 = vsyncadd [#allocation19], %s163
      %s165 = sshll.u32 [#allocation18], 4
      %s166 = int_to_ptr.vmem [resolvable:$true] %s165
      %171 = dma.hbm_to_vmem [thread:$0]  %s19, 12288, %s166, [#allocation19], 128, 128, 8
    $region81: #{tpu_custom_call.1} parent=1 // pred_fallthru
      _
    // Predicated region
    $region82: #{tpu_custom_call.1} parent=1 // pred_check
      _
    $region83: #{tpu_custom_call.1} parent=1 // pred_check_branch
      %173 = sbr.rel (0) target = $region85
    $region84: #{tpu_custom_call.1} parent=1 // pred_region
      _
    $region85: #{tpu_custom_call.1} parent=1 // pred_fallthru
      _
    // Predicated region
    $region86: #{tpu_custom_call.1} parent=1 // pred_check
      _
    $region87: #{tpu_custom_call.1} parent=1 // pred_check_branch
      %175 = sbr.rel (0) target = $region89
    $region88: #{tpu_custom_call.1} parent=1 // pred_region
      _
    $region89: #{tpu_custom_call.1} parent=1 // pred_fallthru
      _
    // Predicated region
    $region90: #{tpu_custom_call.1} parent=1 // pred_check
      _
    $region91: #{tpu_custom_call.1} parent=1 // pred_check_branch
      %177 = sbr.rel (0) target = $region93
    $region92: #{tpu_custom_call.1} parent=1 // pred_region
      %s179 = ssub.s32 4096, 4096
      %180 = vsyncadd [#allocation19], %s179
      %s181 = sshll.u32 [#allocation20], 4
      %s182 = int_to_ptr.vmem [resolvable:$true] %s181
      %187 = dma.hbm_to_vmem [thread:$0]  %s22, 4096, %s182, [#allocation19], 128, 128, 8
    $region93: #{tpu_custom_call.1} parent=1 // pred_fallthru
      _
    // Predicated region
    $region94: #{tpu_custom_call.1} parent=1 // pred_check
      _
    $region95: #{tpu_custom_call.1} parent=1 // pred_check_branch
      %189 = sbr.rel (0) target = $region97
    $region96: #{tpu_custom_call.1} parent=1 // pred_region
      %s191 = ssub.s32 8192, 8192
      %192 = vsyncadd [#allocation22], %s191
      %s193 = sshll.u32 [#allocation21], 4
      %s194 = int_to_ptr.vmem [resolvable:$true] %s193
      %199 = dma.hbm_to_vmem [thread:$0]  %s23, 8192, %s194, [#allocation22], 256, 256, 16
    $region97: #{tpu_custom_call.1} parent=1 // pred_fallthru
      _
    // Predicated region
    $region98: #{tpu_custom_call.1} parent=1 // pred_check
      _
    $region99: #{tpu_custom_call.1} parent=1 // pred_check_branch
      %201 = sbr.rel (0) target = $region101
    $region100: #{tpu_custom_call.1} parent=1 // pred_region
      _
    $region101: #{tpu_custom_call.1} parent=1 // pred_fallthru
      _
    // Predicated region
    $region102: #{tpu_custom_call.1} parent=1 // pred_check
      _
    $region103: #{tpu_custom_call.1} parent=1 // pred_check_branch
      %203 = sbr.rel (0) target = $region105
    $region104: #{tpu_custom_call.1} parent=1 // pred_region
      %204 = dma.done [#allocation4], 8192
    $region105: #{tpu_custom_call.1} parent=1 // pred_fallthru
      _
    // Predicated region
    $region106: #{tpu_custom_call.1} parent=1 // pred_check
      _
    $region107: #{tpu_custom_call.1} parent=1 // pred_check_branch
      %206 = sbr.rel (0) target = $region109
    $region108: #{tpu_custom_call.1} parent=1 // pred_region
      %207 = dma.done [#allocation7], 512
    $region109: #{tpu_custom_call.1} parent=1 // pred_fallthru
      _
    // Predicated region
    $region110: #{tpu_custom_call.1} parent=1 // pred_check
      _
    $region111: #{tpu_custom_call.1} parent=1 // pred_check_branch
      %209 = sbr.rel (0) target = $region113
    $region112: #{tpu_custom_call.1} parent=1 // pred_region
      %210 = dma.done [#allocation7], 24576
    $region113: #{tpu_custom_call.1} parent=1 // pred_fallthru
      _
    // Predicated region
    $region114: #{tpu_custom_call.1} parent=1 // pred_check
      _
    $region115: #{tpu_custom_call.1} parent=1 // pred_check_branch
      %212 = sbr.rel (0) target = $region117
    $region116: #{tpu_custom_call.1} parent=1 // pred_region
      %213 = dma.done [#allocation10], 32
    $region117: #{tpu_custom_call.1} parent=1 // pred_fallthru
      _
    // Predicated region
    $region118: #{tpu_custom_call.1} parent=1 // pred_check
      _
    $region119: #{tpu_custom_call.1} parent=1 // pred_check_branch
      %215 = sbr.rel (0) target = $region121
    $region120: #{tpu_custom_call.1} parent=1 // pred_region
      %216 = dma.done [#allocation10], 32
    $region121: #{tpu_custom_call.1} parent=1 // pred_fallthru
      _
    // Predicated region
    $region122: #{tpu_custom_call.1} parent=1 // pred_check
      _
    $region123: #{tpu_custom_call.1} parent=1 // pred_check_branch
      %218 = sbr.rel (0) target = $region125
    $region124: #{tpu_custom_call.1} parent=1 // pred_region
      %219 = dma.done [#allocation13], 12288
    $region125: #{tpu_custom_call.1} parent=1 // pred_fallthru
      _
    // Predicated region
    $region126: #{tpu_custom_call.1} parent=1 // pred_check
      _
    $region127: #{tpu_custom_call.1} parent=1 // pred_check_branch
      %221 = sbr.rel (0) target = $region129
    $region128: #{tpu_custom_call.1} parent=1 // pred_region
      %222 = dma.done [#allocation13], 4096
    $region129: #{tpu_custom_call.1} parent=1 // pred_fallthru
      _
    // Predicated region
    $region130: #{tpu_custom_call.1} parent=1 // pred_check
      _
    $region131: #{tpu_custom_call.1} parent=1 // pred_check_branch
      %224 = sbr.rel (0) target = $region133
    $region132: #{tpu_custom_call.1} parent=1 // pred_region
      %225 = dma.done [#allocation16], 8192
    $region133: #{tpu_custom_call.1} parent=1 // pred_fallthru
      _
    // Predicated region
    $region134: #{tpu_custom_call.1} parent=1 // pred_check
      _
    $region135: #{tpu_custom_call.1} parent=1 // pred_check_branch
      %227 = sbr.rel (0) target = $region137
    $region136: #{tpu_custom_call.1} parent=1 // pred_region
      %228 = dma.done [#allocation16], 24576
    $region137: #{tpu_custom_call.1} parent=1 // pred_fallthru
      _
    // Predicated region
    $region138: #{tpu_custom_call.1} parent=1 // pred_check
      _
    $region139: #{tpu_custom_call.1} parent=1 // pred_check_branch
      %230 = sbr.rel (0) target = $region141
    $region140: #{tpu_custom_call.1} parent=1 // pred_region
      %231 = dma.done [#allocation19], 12288
    $region141: #{tpu_custom_call.1} parent=1 // pred_fallthru
      _
    // Predicated region
    $region142: #{tpu_custom_call.1} parent=1 // pred_check
      _
    $region143: #{tpu_custom_call.1} parent=1 // pred_check_branch
      %233 = sbr.rel (0) target = $region145
    $region144: #{tpu_custom_call.1} parent=1 // pred_region
      %234 = dma.done [#allocation19], 4096
    $region145: #{tpu_custom_call.1} parent=1 // pred_fallthru
      _
    // Predicated region
    $region146: #{tpu_custom_call.1} parent=1 // pred_check
      _
    $region147: #{tpu_custom_call.1} parent=1 // pred_check_branch
      %236 = sbr.rel (0) target = $region149
    $region148: #{tpu_custom_call.1} parent=1 // pred_region
      %237 = dma.done [#allocation22], 8192
    $region149: #{tpu_custom_call.1} parent=1 // pred_fallthru
      _
    %v239 = vld [vmem:[%s0] sm:$0x3]
    %v240 = vpack.c.bf16 %v239, %v239
    %v241 = vld [vmem:[#allocation3] sm:$0xff]
    %v242 = vld [vmem:[#allocation3 + $0x8] sm:$0xff]
    %v243 = vld [vmem:[#allocation3 + $0x10] sm:$0xff]
    %v244 = vld [vmem:[#allocation3 + $0x18] sm:$0xff]
    %v245 = vld [vmem:[#allocation3 + $0x20] sm:$0xff]
    %v246 = vld [vmem:[#allocation3 + $0x28] sm:$0xff]
    %v247 = vld [vmem:[#allocation3 + $0x30] sm:$0xff]
    %v248 = vld [vmem:[#allocation3 + $0x38] sm:$0xff]
    %v249 = vld [vmem:[#allocation3 + $0x40] sm:$0xff]
    %v250 = vld [vmem:[#allocation3 + $0x48] sm:$0xff]
    %v251 = vld [vmem:[#allocation3 + $0x50] sm:$0xff]
    %v252 = vld [vmem:[#allocation3 + $0x58] sm:$0xff]
    %v253 = vld [vmem:[#allocation3 + $0x60] sm:$0xff]
    %v254 = vld [vmem:[#allocation3 + $0x68] sm:$0xff]
    %v255 = vld [vmem:[#allocation3 + $0x70] sm:$0xff]
    %v256 = vld [vmem:[#allocation3 + $0x78] sm:$0xff]
    %v257 = vld [vmem:[#allocation3 + $0x80] sm:$0xff]
    %v258 = vld [vmem:[#allocation3 + $0x88] sm:$0xff]
    %v259 = vld [vmem:[#allocation3 + $0x90] sm:$0xff]
    %v260 = vld [vmem:[#allocation3 + $0x98] sm:$0xff]
    %v261 = vld [vmem:[#allocation3 + $0xa0] sm:$0xff]
    %v262 = vld [vmem:[#allocation3 + $0xa8] sm:$0xff]
    %v263 = vld [vmem:[#allocation3 + $0xb0] sm:$0xff]
    %v264 = vld [vmem:[#allocation3 + $0xb8] sm:$0xff]
    %v265 = vld [vmem:[#allocation3 + $0xc0] sm:$0xff]
    %v266 = vld [vmem:[#allocation3 + $0xc8] sm:$0xff]
    %v267 = vld [vmem:[#allocation3 + $0xd0] sm:$0xff]
    %v268 = vld [vmem:[#allocation3 + $0xd8] sm:$0xff]
    %v269 = vld [vmem:[#allocation3 + $0xe0] sm:$0xff]
    %v270 = vld [vmem:[#allocation3 + $0xe8] sm:$0xff]
    %v271 = vld [vmem:[#allocation3 + $0xf0] sm:$0xff]
    %v272 = vld [vmem:[#allocation3 + $0xf8] sm:$0xff]
    %v273 = vld [vmem:[#allocation3 + $0x100] sm:$0xff]
    %v274 = vld [vmem:[#allocation3 + $0x108] sm:$0xff]
    %v275 = vld [vmem:[#allocation3 + $0x110] sm:$0xff]
    %v276 = vld [vmem:[#allocation3 + $0x118] sm:$0xff]
    %v277 = vld [vmem:[#allocation3 + $0x120] sm:$0xff]
    %v278 = vld [vmem:[#allocation3 + $0x128] sm:$0xff]
    %v279 = vld [vmem:[#allocation3 + $0x130] sm:$0xff]
    %v280 = vld [vmem:[#allocation3 + $0x138] sm:$0xff]
    %v281 = vld [vmem:[#allocation3 + $0x140] sm:$0xff]
    %v282 = vld [vmem:[#allocation3 + $0x148] sm:$0xff]
    %v283 = vld [vmem:[#allocation3 + $0x150] sm:$0xff]
    %v284 = vld [vmem:[#allocation3 + $0x158] sm:$0xff]
    %v285 = vld [vmem:[#allocation3 + $0x160] sm:$0xff]
    %v286 = vld [vmem:[#allocation3 + $0x168] sm:$0xff]
    %v287 = vld [vmem:[#allocation3 + $0x170] sm:$0xff]
    %v288 = vld [vmem:[#allocation3 + $0x178] sm:$0xff]
    %v289 = vld [vmem:[#allocation3 + $0x180] sm:$0xff]
    %v290 = vld [vmem:[#allocation3 + $0x188] sm:$0xff]
    %v291 = vld [vmem:[#allocation3 + $0x190] sm:$0xff]
    %v292 = vld [vmem:[#allocation3 + $0x198] sm:$0xff]
    %v293 = vld [vmem:[#allocation3 + $0x1a0] sm:$0xff]
    %v294 = vld [vmem:[#allocation3 + $0x1a8] sm:$0xff]
    %v295 = vld [vmem:[#allocation3 + $0x1b0] sm:$0xff]
    %v296 = vld [vmem:[#allocation3 + $0x1b8] sm:$0xff]
    %v297 = vld [vmem:[#allocation3 + $0x1c0] sm:$0xff]
    %v298 = vld [vmem:[#allocation3 + $0x1c8] sm:$0xff]
    %v299 = vld [vmem:[#allocation3 + $0x1d0] sm:$0xff]
    %v300 = vld [vmem:[#allocation3 + $0x1d8] sm:$0xff]
    %v301 = vld [vmem:[#allocation3 + $0x1e0] sm:$0xff]
    %v302 = vld [vmem:[#allocation3 + $0x1e8] sm:$0xff]
    %v303 = vld [vmem:[#allocation3 + $0x1f0] sm:$0xff]
    %v304 = vld [vmem:[#allocation3 + $0x1f8] sm:$0xff]
    %v305 = vld [vmem:[%s2] sm:$0xff]
    %v306 = vld [vmem:[%s2 + $0x8] sm:$0xff]
    %v307 = vld [vmem:[%s2 + $0x10] sm:$0xff]
    %v308 = vld [vmem:[%s2 + $0x18] sm:$0xff]
    %v313 = vlaneseq
    %v314 = vshrl.u32 %v313, 7
    %v315 = vsub.s32 0, %v314
    %v316 = vrot.slane %v305, %v315
    %v317 = vlaneseq
    %v318 = vshrl.u32 %v317, 7
    %v319 = vsub.s32 1, %v318
    %v320 = vrot.slane %v305, %v319
    %v321 = vlaneseq
    %v322 = vshrl.u32 %v321, 7
    %v323 = vsub.s32 2, %v322
    %v324 = vrot.slane %v305, %v323
    %v325 = vlaneseq
    %v326 = vshrl.u32 %v325, 7
    %v327 = vsub.s32 3, %v326
    %v328 = vrot.slane %v305, %v327
    %v329 = vlaneseq
    %v330 = vshrl.u32 %v329, 7
    %v331 = vsub.s32 4, %v330
    %v332 = vrot.slane %v305, %v331
    %v333 = vlaneseq
    %v334 = vshrl.u32 %v333, 7
    %v335 = vsub.s32 5, %v334
    %v336 = vrot.slane %v305, %v335
    %v337 = vlaneseq
    %v338 = vshrl.u32 %v337, 7
    %v339 = vsub.s32 6, %v338
    %v340 = vrot.slane %v305, %v339
    %v341 = vlaneseq
    %v342 = vshrl.u32 %v341, 7
    %v343 = vsub.s32 7, %v342
    %v344 = vrot.slane %v305, %v343
    %v345 = vlaneseq
    %v346 = vshrl.u32 %v345, 7
    %v347 = vsub.s32 0, %v346
    %v348 = vrot.slane %v306, %v347
    %v349 = vlaneseq
    %v350 = vshrl.u32 %v349, 7
    %v351 = vsub.s32 1, %v350
    %v352 = vrot.slane %v306, %v351
    %v353 = vlaneseq
    %v354 = vshrl.u32 %v353, 7
    %v355 = vsub.s32 2, %v354
    %v356 = vrot.slane %v306, %v355
    %v357 = vlaneseq
    %v358 = vshrl.u32 %v357, 7
    %v359 = vsub.s32 3, %v358
    %v360 = vrot.slane %v306, %v359
    %v361 = vlaneseq
    %v362 = vshrl.u32 %v361, 7
    %v363 = vsub.s32 4, %v362
    %v364 = vrot.slane %v306, %v363
    %v365 = vlaneseq
    %v366 = vshrl.u32 %v365, 7
    %v367 = vsub.s32 5, %v366
    %v368 = vrot.slane %v306, %v367
    %v369 = vlaneseq
    %v370 = vshrl.u32 %v369, 7
    %v371 = vsub.s32 6, %v370
    %v372 = vrot.slane %v306, %v371
    %v373 = vlaneseq
    %v374 = vshrl.u32 %v373, 7
    %v375 = vsub.s32 7, %v374
    %v376 = vrot.slane %v306, %v375
    %v377 = vlaneseq
    %v378 = vshrl.u32 %v377, 7
    %v379 = vsub.s32 0, %v378
    %v380 = vrot.slane %v307, %v379
    %v381 = vlaneseq
    %v382 = vshrl.u32 %v381, 7
    %v383 = vsub.s32 1, %v382
    %v384 = vrot.slane %v307, %v383
    %v385 = vlaneseq
    %v386 = vshrl.u32 %v385, 7
    %v387 = vsub.s32 2, %v386
    %v388 = vrot.slane %v307, %v387
    %v389 = vlaneseq
    %v390 = vshrl.u32 %v389, 7
    %v391 = vsub.s32 3, %v390
    %v392 = vrot.slane %v307, %v391
    %v393 = vlaneseq
    %v394 = vshrl.u32 %v393, 7
    %v395 = vsub.s32 4, %v394
    %v396 = vrot.slane %v307, %v395
    %v397 = vlaneseq
    %v398 = vshrl.u32 %v397, 7
    %v399 = vsub.s32 5, %v398
    %v400 = vrot.slane %v307, %v399
    %v401 = vlaneseq
    %v402 = vshrl.u32 %v401, 7
    %v403 = vsub.s32 6, %v402
    %v404 = vrot.slane %v307, %v403
    %v405 = vlaneseq
    %v406 = vshrl.u32 %v405, 7
    %v407 = vsub.s32 7, %v406
    %v408 = vrot.slane %v307, %v407
    %v409 = vlaneseq
    %v410 = vshrl.u32 %v409, 7
    %v411 = vsub.s32 0, %v410
    %v412 = vrot.slane %v308, %v411
    %v413 = vlaneseq
    %v414 = vshrl.u32 %v413, 7
    %v415 = vsub.s32 1, %v414
    %v416 = vrot.slane %v308, %v415
    %v417 = vlaneseq
    %v418 = vshrl.u32 %v417, 7
    %v419 = vsub.s32 2, %v418
    %v420 = vrot.slane %v308, %v419
    %v421 = vlaneseq
    %v422 = vshrl.u32 %v421, 7
    %v423 = vsub.s32 3, %v422
    %v424 = vrot.slane %v308, %v423
    %v425 = vlaneseq
    %v426 = vshrl.u32 %v425, 7
    %v427 = vsub.s32 4, %v426
    %v428 = vrot.slane %v308, %v427
    %v429 = vlaneseq
    %v430 = vshrl.u32 %v429, 7
    %v431 = vsub.s32 5, %v430
    %v432 = vrot.slane %v308, %v431
    %v433 = vlaneseq
    %v434 = vshrl.u32 %v433, 7
    %v435 = vsub.s32 6, %v434
    %v436 = vrot.slane %v308, %v435
    %v437 = vlaneseq
    %v438 = vshrl.u32 %v437, 7
    %v439 = vsub.s32 7, %v438
    %v440 = vrot.slane %v308, %v439
    %v537 = vunpack.c.l.b16 %v241
    %v538 = vunpack.c.h.b16 %v241
    %v539 = vunpack.c.l.b16 %v242
    %v540 = vunpack.c.h.b16 %v242
    %v541 = vunpack.c.l.b16 %v243
    %v542 = vunpack.c.h.b16 %v243
    %v543 = vunpack.c.l.b16 %v244
    %v544 = vunpack.c.h.b16 %v244
    %v545 = vunpack.c.l.b16 %v245
    %v546 = vunpack.c.h.b16 %v245
    %v547 = vunpack.c.l.b16 %v246
    %v548 = vunpack.c.h.b16 %v246
    %v549 = vunpack.c.l.b16 %v247
    %v550 = vunpack.c.h.b16 %v247
    %v551 = vunpack.c.l.b16 %v248
    %v552 = vunpack.c.h.b16 %v248
    %v553 = vunpack.c.l.b16 %v249
    %v554 = vunpack.c.h.b16 %v249
    %v555 = vunpack.c.l.b16 %v250
    %v556 = vunpack.c.h.b16 %v250
    %v557 = vunpack.c.l.b16 %v251
    %v558 = vunpack.c.h.b16 %v251
    %v559 = vunpack.c.l.b16 %v252
    %v560 = vunpack.c.h.b16 %v252
    %v561 = vunpack.c.l.b16 %v253
    %v562 = vunpack.c.h.b16 %v253
    %v563 = vunpack.c.l.b16 %v254
    %v564 = vunpack.c.h.b16 %v254
    %v565 = vunpack.c.l.b16 %v255
    %v566 = vunpack.c.h.b16 %v255
    %v567 = vunpack.c.l.b16 %v256
    %v568 = vunpack.c.h.b16 %v256
    %v569 = vunpack.c.l.b16 %v257
    %v570 = vunpack.c.h.b16 %v257
    %v571 = vunpack.c.l.b16 %v258
    %v572 = vunpack.c.h.b16 %v258
    %v573 = vunpack.c.l.b16 %v259
    %v574 = vunpack.c.h.b16 %v259
    %v575 = vunpack.c.l.b16 %v260
    %v576 = vunpack.c.h.b16 %v260
    %v577 = vunpack.c.l.b16 %v261
    %v578 = vunpack.c.h.b16 %v261
    %v579 = vunpack.c.l.b16 %v262
    %v580 = vunpack.c.h.b16 %v262
    %v581 = vunpack.c.l.b16 %v263
    %v582 = vunpack.c.h.b16 %v263
    %v583 = vunpack.c.l.b16 %v264
    %v584 = vunpack.c.h.b16 %v264
    %v585 = vunpack.c.l.b16 %v265
    %v586 = vunpack.c.h.b16 %v265
    %v587 = vunpack.c.l.b16 %v266
    %v588 = vunpack.c.h.b16 %v266
    %v589 = vunpack.c.l.b16 %v267
    %v590 = vunpack.c.h.b16 %v267
    %v591 = vunpack.c.l.b16 %v268
    %v592 = vunpack.c.h.b16 %v268
    %v593 = vunpack.c.l.b16 %v269
    %v594 = vunpack.c.h.b16 %v269
    %v595 = vunpack.c.l.b16 %v270
    %v596 = vunpack.c.h.b16 %v270
    %v597 = vunpack.c.l.b16 %v271
    %v598 = vunpack.c.h.b16 %v271
    %v599 = vunpack.c.l.b16 %v272
    %v600 = vunpack.c.h.b16 %v272
    %v601 = vunpack.c.l.b16 %v273
    %v602 = vunpack.c.h.b16 %v273
    %v603 = vunpack.c.l.b16 %v274
    %v604 = vunpack.c.h.b16 %v274
    %v605 = vunpack.c.l.b16 %v275
    %v606 = vunpack.c.h.b16 %v275
    %v607 = vunpack.c.l.b16 %v276
    %v608 = vunpack.c.h.b16 %v276
    %v609 = vunpack.c.l.b16 %v277
    %v610 = vunpack.c.h.b16 %v277
    %v611 = vunpack.c.l.b16 %v278
    %v612 = vunpack.c.h.b16 %v278
    %v613 = vunpack.c.l.b16 %v279
    %v614 = vunpack.c.h.b16 %v279
    %v615 = vunpack.c.l.b16 %v280
    %v616 = vunpack.c.h.b16 %v280
    %v617 = vunpack.c.l.b16 %v281
    %v618 = vunpack.c.h.b16 %v281
    %v619 = vunpack.c.l.b16 %v282
    %v620 = vunpack.c.h.b16 %v282
    %v621 = vunpack.c.l.b16 %v283
    %v622 = vunpack.c.h.b16 %v283
    %v623 = vunpack.c.l.b16 %v284
    %v624 = vunpack.c.h.b16 %v284
    %v625 = vunpack.c.l.b16 %v285
    %v626 = vunpack.c.h.b16 %v285
    %v627 = vunpack.c.l.b16 %v286
    %v628 = vunpack.c.h.b16 %v286
    %v629 = vunpack.c.l.b16 %v287
    %v630 = vunpack.c.h.b16 %v287
    %v631 = vunpack.c.l.b16 %v288
    %v632 = vunpack.c.h.b16 %v288
    %v633 = vunpack.c.l.b16 %v289
    %v634 = vunpack.c.h.b16 %v289
    %v635 = vunpack.c.l.b16 %v290
    %v636 = vunpack.c.h.b16 %v290
    %v637 = vunpack.c.l.b16 %v291
    %v638 = vunpack.c.h.b16 %v291
    %v639 = vunpack.c.l.b16 %v292
    %v640 = vunpack.c.h.b16 %v292
    %v641 = vunpack.c.l.b16 %v293
    %v642 = vunpack.c.h.b16 %v293
    %v643 = vunpack.c.l.b16 %v294
    %v644 = vunpack.c.h.b16 %v294
    %v645 = vunpack.c.l.b16 %v295
    %v646 = vunpack.c.h.b16 %v295
    %v647 = vunpack.c.l.b16 %v296
    %v648 = vunpack.c.h.b16 %v296
    %v649 = vunpack.c.l.b16 %v297
    %v650 = vunpack.c.h.b16 %v297
    %v651 = vunpack.c.l.b16 %v298
    %v652 = vunpack.c.h.b16 %v298
    %v653 = vunpack.c.l.b16 %v299
    %v654 = vunpack.c.h.b16 %v299
    %v655 = vunpack.c.l.b16 %v300
    %v656 = vunpack.c.h.b16 %v300
    %v657 = vunpack.c.l.b16 %v301
    %v658 = vunpack.c.h.b16 %v301
    %v659 = vunpack.c.l.b16 %v302
    %v660 = vunpack.c.h.b16 %v302
    %v661 = vunpack.c.l.b16 %v303
    %v662 = vunpack.c.h.b16 %v303
    %v663 = vunpack.c.l.b16 %v304
    %v664 = vunpack.c.h.b16 %v304
    %v665 = vpack.c.b16 %v569, %v537
    %v666 = vpack.c.b16 %v570, %v538
    %v667 = vpack.c.b16 %v571, %v539
    %v668 = vpack.c.b16 %v572, %v540
    %v669 = vpack.c.b16 %v573, %v541
    %v670 = vpack.c.b16 %v574, %v542
    %v671 = vpack.c.b16 %v575, %v543
    %v672 = vpack.c.b16 %v576, %v544
    %v673 = vpack.c.b16 %v577, %v545
    %v674 = vpack.c.b16 %v578, %v546
    %v675 = vpack.c.b16 %v579, %v547
    %v676 = vpack.c.b16 %v580, %v548
    %v677 = vpack.c.b16 %v581, %v549
    %v678 = vpack.c.b16 %v582, %v550
    %v679 = vpack.c.b16 %v583, %v551
    %v680 = vpack.c.b16 %v584, %v552
    %v681 = vpack.c.b16 %v585, %v553
    %v682 = vpack.c.b16 %v586, %v554
    %v683 = vpack.c.b16 %v587, %v555
    %v684 = vpack.c.b16 %v588, %v556
    %v685 = vpack.c.b16 %v589, %v557
    %v686 = vpack.c.b16 %v590, %v558
    %v687 = vpack.c.b16 %v591, %v559
    %v688 = vpack.c.b16 %v592, %v560
    %v689 = vpack.c.b16 %v593, %v561
    %v690 = vpack.c.b16 %v594, %v562
    %v691 = vpack.c.b16 %v595, %v563
    %v692 = vpack.c.b16 %v596, %v564
    %v693 = vpack.c.b16 %v597, %v565
    %v694 = vpack.c.b16 %v598, %v566
    %v695 = vpack.c.b16 %v599, %v567
    %v696 = vpack.c.b16 %v600, %v568
    %v697 = vpack.c.b16 %v633, %v601
    %v698 = vpack.c.b16 %v634, %v602
    %v699 = vpack.c.b16 %v635, %v603
    %v700 = vpack.c.b16 %v636, %v604
    %v701 = vpack.c.b16 %v637, %v605
    %v702 = vpack.c.b16 %v638, %v606
    %v703 = vpack.c.b16 %v639, %v607
    %v704 = vpack.c.b16 %v640, %v608
    %v705 = vpack.c.b16 %v641, %v609
    %v706 = vpack.c.b16 %v642, %v610
    %v707 = vpack.c.b16 %v643, %v611
    %v708 = vpack.c.b16 %v644, %v612
    %v709 = vpack.c.b16 %v645, %v613
    %v710 = vpack.c.b16 %v646, %v614
    %v711 = vpack.c.b16 %v647, %v615
    %v712 = vpack.c.b16 %v648, %v616
    %v713 = vpack.c.b16 %v649, %v617
    %v714 = vpack.c.b16 %v650, %v618
    %v715 = vpack.c.b16 %v651, %v619
    %v716 = vpack.c.b16 %v652, %v620
    %v717 = vpack.c.b16 %v653, %v621
    %v718 = vpack.c.b16 %v654, %v622
    %v719 = vpack.c.b16 %v655, %v623
    %v720 = vpack.c.b16 %v656, %v624
    %v721 = vpack.c.b16 %v657, %v625
    %v722 = vpack.c.b16 %v658, %v626
    %v723 = vpack.c.b16 %v659, %v627
    %v724 = vpack.c.b16 %v660, %v628
    %v725 = vpack.c.b16 %v661, %v629
    %v726 = vpack.c.b16 %v662, %v630
    %v727 = vpack.c.b16 %v663, %v631
    %v728 = vpack.c.b16 %v664, %v632
    %vm793 = vcmask 261120
    %v795 = vsel %vm793, %v240, 0
    %797 = vmatprep.subr.bf16.mxu0 %v666
    %798 = vmatpush1.bf16.msra.mxu0 %v665
    %799 = vmatprep.subr.bf16.mxu0 %v698
    %800 = vmatpush1.bf16.msra.mxu0 %v697
    %801 = vmatprep.subr.bf16.mxu0 0
    %802 = vmatpush1.bf16.msra.mxu0 0
    %803 = vmatprep.subr.bf16.mxu0 0
    %804 = vmatpush1.bf16.msra.mxu0 0
    %805 = vmatprep.subr.bf16.mxu0 0
    %806 = vmatpush1.bf16.msra.mxu0 0
    %807 = vmatprep.subr.bf16.mxu0 0
    %808 = vmatpush1.bf16.msra.mxu0 0
    %809 = vmatprep.subr.bf16.mxu0 0
    %810 = vmatpush1.bf16.msra.mxu0 0
    %811 = vmatprep.subr.bf16.mxu0 0
    %812 = vmatpush1.bf16.msra.mxu0 0
    %813 = vmatprep.subr.bf16.mxu0 0
    %814 = vmatpush1.bf16.msra.mxu0 0
    %815 = vmatprep.subr.bf16.mxu0 0
    %816 = vmatpush1.bf16.msra.mxu0 0
    %817 = vmatprep.subr.bf16.mxu0 0
    %818 = vmatpush1.bf16.msra.mxu0 0
    %819 = vmatprep.subr.bf16.mxu0 0
    %820 = vmatpush1.bf16.msra.mxu0 0
    %821 = vmatprep.subr.bf16.mxu0 0
    %822 = vmatpush1.bf16.msra.mxu0 0
    %823 = vmatprep.subr.bf16.mxu0 0
    %824 = vmatpush1.bf16.msra.mxu0 0
    %825 = vmatprep.subr.bf16.mxu0 0
    %826 = vmatpush1.bf16.msra.mxu0 0
    %827 = vmatprep.subr.bf16.mxu0 0
    %828 = vmatpush1.bf16.msra.mxu0 0
    %829 = vmatprep.mubr.bf16.mxu0 0
    %830 = vmatmul.mubr.bf16.gmra.mrb[0].mxu0 %v795
    %v831 = vpop.f32.mrb[0].mxu0
    %v832 = vadd.f32 %v316, %v831
    %v833 = vpop.f32.mrb[0].mxu0
    %v834 = vadd.f32 %v320, %v833
    %v835 = vpop.f32.mrb[0].mxu0
    %v836 = vpop.f32.mrb[0].mxu0
    %837 = vdwg.mxu0
    %838 = vmatprep.subr.bf16.mxu0 %v668
    %839 = vmatpush1.bf16.msra.mxu0 %v667
    %840 = vmatprep.subr.bf16.mxu0 %v700
    %841 = vmatpush1.bf16.msra.mxu0 %v699
    %842 = vmatprep.subr.bf16.mxu0 0
    %843 = vmatpush1.bf16.msra.mxu0 0
    %844 = vmatprep.subr.bf16.mxu0 0
    %845 = vmatpush1.bf16.msra.mxu0 0
    %846 = vmatprep.subr.bf16.mxu0 0
    %847 = vmatpush1.bf16.msra.mxu0 0
    %848 = vmatprep.subr.bf16.mxu0 0
    %849 = vmatpush1.bf16.msra.mxu0 0
    %850 = vmatprep.subr.bf16.mxu0 0
    %851 = vmatpush1.bf16.msra.mxu0 0
    %852 = vmatprep.subr.bf16.mxu0 0
    %853 = vmatpush1.bf16.msra.mxu0 0
    %854 = vmatprep.subr.bf16.mxu0 0
    %855 = vmatpush1.bf16.msra.mxu0 0
    %856 = vmatprep.subr.bf16.mxu0 0
    %857 = vmatpush1.bf16.msra.mxu0 0
    %858 = vmatprep.subr.bf16.mxu0 0
    %859 = vmatpush1.bf16.msra.mxu0 0
    %860 = vmatprep.subr.bf16.mxu0 0
    %861 = vmatpush1.bf16.msra.mxu0 0
    %862 = vmatprep.subr.bf16.mxu0 0
    %863 = vmatpush1.bf16.msra.mxu0 0
    %864 = vmatprep.subr.bf16.mxu0 0
    %865 = vmatpush1.bf16.msra.mxu0 0
    %866 = vmatprep.subr.bf16.mxu0 0
    %867 = vmatpush1.bf16.msra.mxu0 0
    %868 = vmatprep.subr.bf16.mxu0 0
    %869 = vmatpush1.bf16.msra.mxu0 0
    %870 = vmatprep.mubr.bf16.mxu0 0
    %871 = vmatmul.mubr.bf16.gmra.mrb[0].mxu0 %v795
    %v872 = vpop.f32.mrb[0].mxu0
    %v873 = vadd.f32 %v324, %v872
    %v874 = vpop.f32.mrb[0].mxu0
    %v875 = vadd.f32 %v328, %v874
    %v876 = vpop.f32.mrb[0].mxu0
    %v877 = vpop.f32.mrb[0].mxu0
    %878 = vdwg.mxu0
    %879 = vmatprep.subr.bf16.mxu0 %v670
    %880 = vmatpush1.bf16.msra.mxu0 %v669
    %881 = vmatprep.subr.bf16.mxu0 %v702
    %882 = vmatpush1.bf16.msra.mxu0 %v701
    %883 = vmatprep.subr.bf16.mxu0 0
    %884 = vmatpush1.bf16.msra.mxu0 0
    %885 = vmatprep.subr.bf16.mxu0 0
    %886 = vmatpush1.bf16.msra.mxu0 0
    %887 = vmatprep.subr.bf16.mxu0 0
    %888 = vmatpush1.bf16.msra.mxu0 0
    %889 = vmatprep.subr.bf16.mxu0 0
    %890 = vmatpush1.bf16.msra.mxu0 0
    %891 = vmatprep.subr.bf16.mxu0 0
    %892 = vmatpush1.bf16.msra.mxu0 0
    %893 = vmatprep.subr.bf16.mxu0 0
    %894 = vmatpush1.bf16.msra.mxu0 0
    %895 = vmatprep.subr.bf16.mxu0 0
    %896 = vmatpush1.bf16.msra.mxu0 0
    %897 = vmatprep.subr.bf16.mxu0 0
    %898 = vmatpush1.bf16.msra.mxu0 0
    %899 = vmatprep.subr.bf16.mxu0 0
    %900 = vmatpush1.bf16.msra.mxu0 0
    %901 = vmatprep.subr.bf16.mxu0 0
    %902 = vmatpush1.bf16.msra.mxu0 0
    %903 = vmatprep.subr.bf16.mxu0 0
    %904 = vmatpush1.bf16.msra.mxu0 0
    %905 = vmatprep.subr.bf16.mxu0 0
    %906 = vmatpush1.bf16.msra.mxu0 0
    %907 = vmatprep.subr.bf16.mxu0 0
    %908 = vmatpush1.bf16.msra.mxu0 0
    %909 = vmatprep.subr.bf16.mxu0 0
    %910 = vmatpush1.bf16.msra.mxu0 0
    %911 = vmatprep.mubr.bf16.mxu0 0
    %912 = vmatmul.mubr.bf16.gmra.mrb[0].mxu0 %v795
    %v913 = vpop.f32.mrb[0].mxu0
    %v914 = vadd.f32 %v332, %v913
    %v915 = vpop.f32.mrb[0].mxu0
    %v916 = vadd.f32 %v336, %v915
    %v917 = vpop.f32.mrb[0].mxu0
    %v918 = vpop.f32.mrb[0].mxu0
    %919 = vdwg.mxu0
    %920 = vmatprep.subr.bf16.mxu0 %v672
    %921 = vmatpush1.bf16.msra.mxu0 %v671
    %922 = vmatprep.subr.bf16.mxu0 %v704
    %923 = vmatpush1.bf16.msra.mxu0 %v703
    %924 = vmatprep.subr.bf16.mxu0 0
    %925 = vmatpush1.bf16.msra.mxu0 0
    %926 = vmatprep.subr.bf16.mxu0 0
    %927 = vmatpush1.bf16.msra.mxu0 0
    %928 = vmatprep.subr.bf16.mxu0 0
    %929 = vmatpush1.bf16.msra.mxu0 0
    %930 = vmatprep.subr.bf16.mxu0 0
    %931 = vmatpush1.bf16.msra.mxu0 0
    %932 = vmatprep.subr.bf16.mxu0 0
    %933 = vmatpush1.bf16.msra.mxu0 0
    %934 = vmatprep.subr.bf16.mxu0 0
    %935 = vmatpush1.bf16.msra.mxu0 0
    %936 = vmatprep.subr.bf16.mxu0 0
    %937 = vmatpush1.bf16.msra.mxu0 0
    %938 = vmatprep.subr.bf16.mxu0 0
    %939 = vmatpush1.bf16.msra.mxu0 0
    %940 = vmatprep.subr.bf16.mxu0 0
    %941 = vmatpush1.bf16.msra.mxu0 0
    %942 = vmatprep.subr.bf16.mxu0 0
    %943 = vmatpush1.bf16.msra.mxu0 0
    %944 = vmatprep.subr.bf16.mxu0 0
    %945 = vmatpush1.bf16.msra.mxu0 0
    %946 = vmatprep.subr.bf16.mxu0 0
    %947 = vmatpush1.bf16.msra.mxu0 0
    %948 = vmatprep.subr.bf16.mxu0 0
    %949 = vmatpush1.bf16.msra.mxu0 0
    %950 = vmatprep.subr.bf16.mxu0 0
    %951 = vmatpush1.bf16.msra.mxu0 0
    %952 = vmatprep.mubr.bf16.mxu0 0
    %953 = vmatmul.mubr.bf16.gmra.mrb[0].mxu0 %v795
    %v954 = vpop.f32.mrb[0].mxu0
    %v955 = vadd.f32 %v340, %v954
    %v956 = vpop.f32.mrb[0].mxu0
    %v957 = vadd.f32 %v344, %v956
    %v958 = vpop.f32.mrb[0].mxu0
    %v959 = vpop.f32.mrb[0].mxu0
    %960 = vdwg.mxu0
    %961 = vmatprep.subr.bf16.mxu0 %v674
    %962 = vmatpush1.bf16.msra.mxu0 %v673
    %963 = vmatprep.subr.bf16.mxu0 %v706
    %964 = vmatpush1.bf16.msra.mxu0 %v705
    %965 = vmatprep.subr.bf16.mxu0 0
    %966 = vmatpush1.bf16.msra.mxu0 0
    %967 = vmatprep.subr.bf16.mxu0 0
    %968 = vmatpush1.bf16.msra.mxu0 0
    %969 = vmatprep.subr.bf16.mxu0 0
    %970 = vmatpush1.bf16.msra.mxu0 0
    %971 = vmatprep.subr.bf16.mxu0 0
    %972 = vmatpush1.bf16.msra.mxu0 0
    %973 = vmatprep.subr.bf16.mxu0 0
    %974 = vmatpush1.bf16.msra.mxu0 0
    %975 = vmatprep.subr.bf16.mxu0 0
    %976 = vmatpush1.bf16.msra.mxu0 0
    %977 = vmatprep.subr.bf16.mxu0 0
    %978 = vmatpush1.bf16.msra.mxu0 0
    %979 = vmatprep.subr.bf16.mxu0 0
    %980 = vmatpush1.bf16.msra.mxu0 0
    %981 = vmatprep.subr.bf16.mxu0 0
    %982 = vmatpush1.bf16.msra.mxu0 0
    %983 = vmatprep.subr.bf16.mxu0 0
    %984 = vmatpush1.bf16.msra.mxu0 0
    %985 = vmatprep.subr.bf16.mxu0 0
    %986 = vmatpush1.bf16.msra.mxu0 0
    %987 = vmatprep.subr.bf16.mxu0 0
    %988 = vmatpush1.bf16.msra.mxu0 0
    %989 = vmatprep.subr.bf16.mxu0 0
    %990 = vmatpush1.bf16.msra.mxu0 0
    %991 = vmatprep.subr.bf16.mxu0 0
    %992 = vmatpush1.bf16.msra.mxu0 0
    %993 = vmatprep.mubr.bf16.mxu0 0
    %994 = vmatmul.mubr.bf16.gmra.mrb[0].mxu0 %v795
    %v995 = vpop.f32.mrb[0].mxu0
    %v996 = vadd.f32 %v348, %v995
    %v997 = vpop.f32.mrb[0].mxu0
    %v998 = vadd.f32 %v352, %v997
    %v999 = vpop.f32.mrb[0].mxu0
    %v1000 = vpop.f32.mrb[0].mxu0
    %1001 = vdwg.mxu0
    %1002 = vmatprep.subr.bf16.mxu0 %v676
    %1003 = vmatpush1.bf16.msra.mxu0 %v675
    %1004 = vmatprep.subr.bf16.mxu0 %v708
    %1005 = vmatpush1.bf16.msra.mxu0 %v707
    %1006 = vmatprep.subr.bf16.mxu0 0
    %1007 = vmatpush1.bf16.msra.mxu0 0
    %1008 = vmatprep.subr.bf16.mxu0 0
    %1009 = vmatpush1.bf16.msra.mxu0 0
    %1010 = vmatprep.subr.bf16.mxu0 0
    %1011 = vmatpush1.bf16.msra.mxu0 0
    %1012 = vmatprep.subr.bf16.mxu0 0
    %1013 = vmatpush1.bf16.msra.mxu0 0
    %1014 = vmatprep.subr.bf16.mxu0 0
    %1015 = vmatpush1.bf16.msra.mxu0 0
    %1016 = vmatprep.subr.bf16.mxu0 0
    %1017 = vmatpush1.bf16.msra.mxu0 0
    %1018 = vmatprep.subr.bf16.mxu0 0
    %1019 = vmatpush1.bf16.msra.mxu0 0
    %1020 = vmatprep.subr.bf16.mxu0 0
    %1021 = vmatpush1.bf16.msra.mxu0 0
    %1022 = vmatprep.subr.bf16.mxu0 0
    %1023 = vmatpush1.bf16.msra.mxu0 0
    %1024 = vmatprep.subr.bf16.mxu0 0
    %1025 = vmatpush1.bf16.msra.mxu0 0
    %1026 = vmatprep.subr.bf16.mxu0 0
    %1027 = vmatpush1.bf16.msra.mxu0 0
    %1028 = vmatprep.subr.bf16.mxu0 0
    %1029 = vmatpush1.bf16.msra.mxu0 0
    %1030 = vmatprep.subr.bf16.mxu0 0
    %1031 = vmatpush1.bf16.msra.mxu0 0
    %1032 = vmatprep.subr.bf16.mxu0 0
    %1033 = vmatpush1.bf16.msra.mxu0 0
    %1034 = vmatprep.mubr.bf16.mxu0 0
    %1035 = vmatmul.mubr.bf16.gmra.mrb[0].mxu0 %v795
    %v1036 = vpop.f32.mrb[0].mxu0
    %v1037 = vadd.f32 %v356, %v1036
    %v1038 = vpop.f32.mrb[0].mxu0
    %v1039 = vadd.f32 %v360, %v1038
    %v1040 = vpop.f32.mrb[0].mxu0
    %v1041 = vpop.f32.mrb[0].mxu0
    %1042 = vdwg.mxu0
    %1043 = vmatprep.subr.bf16.mxu0 %v678
    %1044 = vmatpush1.bf16.msra.mxu0 %v677
    %1045 = vmatprep.subr.bf16.mxu0 %v710
    %1046 = vmatpush1.bf16.msra.mxu0 %v709
    %1047 = vmatprep.subr.bf16.mxu0 0
    %1048 = vmatpush1.bf16.msra.mxu0 0
    %1049 = vmatprep.subr.bf16.mxu0 0
    %1050 = vmatpush1.bf16.msra.mxu0 0
    %1051 = vmatprep.subr.bf16.mxu0 0
    %1052 = vmatpush1.bf16.msra.mxu0 0
    %1053 = vmatprep.subr.bf16.mxu0 0
    %1054 = vmatpush1.bf16.msra.mxu0 0
    %1055 = vmatprep.subr.bf16.mxu0 0
    %1056 = vmatpush1.bf16.msra.mxu0 0
    %1057 = vmatprep.subr.bf16.mxu0 0
    %1058 = vmatpush1.bf16.msra.mxu0 0
    %1059 = vmatprep.subr.bf16.mxu0 0
    %1060 = vmatpush1.bf16.msra.mxu0 0
    %1061 = vmatprep.subr.bf16.mxu0 0
    %1062 = vmatpush1.bf16.msra.mxu0 0
    %1063 = vmatprep.subr.bf16.mxu0 0
    %1064 = vmatpush1.bf16.msra.mxu0 0
    %1065 = vmatprep.subr.bf16.mxu0 0
    %1066 = vmatpush1.bf16.msra.mxu0 0
    %1067 = vmatprep.subr.bf16.mxu0 0
    %1068 = vmatpush1.bf16.msra.mxu0 0
    %1069 = vmatprep.subr.bf16.mxu0 0
    %1070 = vmatpush1.bf16.msra.mxu0 0
    %1071 = vmatprep.subr.bf16.mxu0 0
    %1072 = vmatpush1.bf16.msra.mxu0 0
    %1073 = vmatprep.subr.bf16.mxu0 0
    %1074 = vmatpush1.bf16.msra.mxu0 0
    %1075 = vmatprep.mubr.bf16.mxu0 0
    %1076 = vmatmul.mubr.bf16.gmra.mrb[0].mxu0 %v795
    %v1077 = vpop.f32.mrb[0].mxu0
    %v1078 = vadd.f32 %v364, %v1077
    %v1079 = vpop.f32.mrb[0].mxu0
    %v1080 = vadd.f32 %v368, %v1079
    %v1081 = vpop.f32.mrb[0].mxu0
    %v1082 = vpop.f32.mrb[0].mxu0
    %1083 = vdwg.mxu0
    %1084 = vmatprep.subr.bf16.mxu0 %v680
    %1085 = vmatpush1.bf16.msra.mxu0 %v679
    %1086 = vmatprep.subr.bf16.mxu0 %v712
    %1087 = vmatpush1.bf16.msra.mxu0 %v711
    %1088 = vmatprep.subr.bf16.mxu0 0
    %1089 = vmatpush1.bf16.msra.mxu0 0
    %1090 = vmatprep.subr.bf16.mxu0 0
    %1091 = vmatpush1.bf16.msra.mxu0 0
    %1092 = vmatprep.subr.bf16.mxu0 0
    %1093 = vmatpush1.bf16.msra.mxu0 0
    %1094 = vmatprep.subr.bf16.mxu0 0
    %1095 = vmatpush1.bf16.msra.mxu0 0
    %1096 = vmatprep.subr.bf16.mxu0 0
    %1097 = vmatpush1.bf16.msra.mxu0 0
    %1098 = vmatprep.subr.bf16.mxu0 0
    %1099 = vmatpush1.bf16.msra.mxu0 0
    %1100 = vmatprep.subr.bf16.mxu0 0
    %1101 = vmatpush1.bf16.msra.mxu0 0
    %1102 = vmatprep.subr.bf16.mxu0 0
    %1103 = vmatpush1.bf16.msra.mxu0 0
    %1104 = vmatprep.subr.bf16.mxu0 0
    %1105 = vmatpush1.bf16.msra.mxu0 0
    %1106 = vmatprep.subr.bf16.mxu0 0
    %1107 = vmatpush1.bf16.msra.mxu0 0
    %1108 = vmatprep.subr.bf16.mxu0 0
    %1109 = vmatpush1.bf16.msra.mxu0 0
    %1110 = vmatprep.subr.bf16.mxu0 0
    %1111 = vmatpush1.bf16.msra.mxu0 0
    %1112 = vmatprep.subr.bf16.mxu0 0
    %1113 = vmatpush1.bf16.msra.mxu0 0
    %1114 = vmatprep.subr.bf16.mxu0 0
    %1115 = vmatpush1.bf16.msra.mxu0 0
    %1116 = vmatprep.mubr.bf16.mxu0 0
    %1117 = vmatmul.mubr.bf16.gmra.mrb[0].mxu0 %v795
    %v1118 = vpop.f32.mrb[0].mxu0
    %v1119 = vadd.f32 %v372, %v1118
    %v1120 = vpop.f32.mrb[0].mxu0
    %v1121 = vadd.f32 %v376, %v1120
    %v1122 = vpop.f32.mrb[0].mxu0
    %v1123 = vpop.f32.mrb[0].mxu0
    %1124 = vdwg.mxu0
    %1125 = vmatprep.subr.bf16.mxu0 %v682
    %1126 = vmatpush1.bf16.msra.mxu0 %v681
    %1127 = vmatprep.subr.bf16.mxu0 %v714
    %1128 = vmatpush1.bf16.msra.mxu0 %v713
    %1129 = vmatprep.subr.bf16.mxu0 0
    %1130 = vmatpush1.bf16.msra.mxu0 0
    %1131 = vmatprep.subr.bf16.mxu0 0
    %1132 = vmatpush1.bf16.msra.mxu0 0
    %1133 = vmatprep.subr.bf16.mxu0 0
    %1134 = vmatpush1.bf16.msra.mxu0 0
    %1135 = vmatprep.subr.bf16.mxu0 0
    %1136 = vmatpush1.bf16.msra.mxu0 0
    %1137 = vmatprep.subr.bf16.mxu0 0
    %1138 = vmatpush1.bf16.msra.mxu0 0
    %1139 = vmatprep.subr.bf16.mxu0 0
    %1140 = vmatpush1.bf16.msra.mxu0 0
    %1141 = vmatprep.subr.bf16.mxu0 0
    %1142 = vmatpush1.bf16.msra.mxu0 0
    %1143 = vmatprep.subr.bf16.mxu0 0
    %1144 = vmatpush1.bf16.msra.mxu0 0
    %1145 = vmatprep.subr.bf16.mxu0 0
    %1146 = vmatpush1.bf16.msra.mxu0 0
    %1147 = vmatprep.subr.bf16.mxu0 0
    %1148 = vmatpush1.bf16.msra.mxu0 0
    %1149 = vmatprep.subr.bf16.mxu0 0
    %1150 = vmatpush1.bf16.msra.mxu0 0
    %1151 = vmatprep.subr.bf16.mxu0 0
    %1152 = vmatpush1.bf16.msra.mxu0 0
    %1153 = vmatprep.subr.bf16.mxu0 0
    %1154 = vmatpush1.bf16.msra.mxu0 0
    %1155 = vmatprep.subr.bf16.mxu0 0
    %1156 = vmatpush1.bf16.msra.mxu0 0
    %1157 = vmatprep.mubr.bf16.mxu0 0
    %1158 = vmatmul.mubr.bf16.gmra.mrb[0].mxu0 %v795
    %v1159 = vpop.f32.mrb[0].mxu0
    %v1160 = vadd.f32 %v380, %v1159
    %v1161 = vpop.f32.mrb[0].mxu0
    %v1162 = vadd.f32 %v384, %v1161
    %v1163 = vpop.f32.mrb[0].mxu0
    %v1164 = vpop.f32.mrb[0].mxu0
    %1165 = vdwg.mxu0
    %1166 = vmatprep.subr.bf16.mxu0 %v684
    %1167 = vmatpush1.bf16.msra.mxu0 %v683
    %1168 = vmatprep.subr.bf16.mxu0 %v716
    %1169 = vmatpush1.bf16.msra.mxu0 %v715
    %1170 = vmatprep.subr.bf16.mxu0 0
    %1171 = vmatpush1.bf16.msra.mxu0 0
    %1172 = vmatprep.subr.bf16.mxu0 0
    %1173 = vmatpush1.bf16.msra.mxu0 0
    %1174 = vmatprep.subr.bf16.mxu0 0
    %1175 = vmatpush1.bf16.msra.mxu0 0
    %1176 = vmatprep.subr.bf16.mxu0 0
    %1177 = vmatpush1.bf16.msra.mxu0 0
    %1178 = vmatprep.subr.bf16.mxu0 0
    %1179 = vmatpush1.bf16.msra.mxu0 0
    %1180 = vmatprep.subr.bf16.mxu0 0
    %1181 = vmatpush1.bf16.msra.mxu0 0
    %1182 = vmatprep.subr.bf16.mxu0 0
    %1183 = vmatpush1.bf16.msra.mxu0 0
    %1184 = vmatprep.subr.bf16.mxu0 0
    %1185 = vmatpush1.bf16.msra.mxu0 0
    %1186 = vmatprep.subr.bf16.mxu0 0
    %1187 = vmatpush1.bf16.msra.mxu0 0
    %1188 = vmatprep.subr.bf16.mxu0 0
    %1189 = vmatpush1.bf16.msra.mxu0 0
    %1190 = vmatprep.subr.bf16.mxu0 0
    %1191 = vmatpush1.bf16.msra.mxu0 0
    %1192 = vmatprep.subr.bf16.mxu0 0
    %1193 = vmatpush1.bf16.msra.mxu0 0
    %1194 = vmatprep.subr.bf16.mxu0 0
    %1195 = vmatpush1.bf16.msra.mxu0 0
    %1196 = vmatprep.subr.bf16.mxu0 0
    %1197 = vmatpush1.bf16.msra.mxu0 0
    %1198 = vmatprep.mubr.bf16.mxu0 0
    %1199 = vmatmul.mubr.bf16.gmra.mrb[0].mxu0 %v795
    %v1200 = vpop.f32.mrb[0].mxu0
    %v1201 = vadd.f32 %v388, %v1200
    %v1202 = vpop.f32.mrb[0].mxu0
    %v1203 = vadd.f32 %v392, %v1202
    %v1204 = vpop.f32.mrb[0].mxu0
    %v1205 = vpop.f32.mrb[0].mxu0
    %1206 = vdwg.mxu0
    %1207 = vmatprep.subr.bf16.mxu0 %v686
    %1208 = vmatpush1.bf16.msra.mxu0 %v685
    %1209 = vmatprep.subr.bf16.mxu0 %v718
    %1210 = vmatpush1.bf16.msra.mxu0 %v717
    %1211 = vmatprep.subr.bf16.mxu0 0
    %1212 = vmatpush1.bf16.msra.mxu0 0
    %1213 = vmatprep.subr.bf16.mxu0 0
    %1214 = vmatpush1.bf16.msra.mxu0 0
    %1215 = vmatprep.subr.bf16.mxu0 0
    %1216 = vmatpush1.bf16.msra.mxu0 0
    %1217 = vmatprep.subr.bf16.mxu0 0
    %1218 = vmatpush1.bf16.msra.mxu0 0
    %1219 = vmatprep.subr.bf16.mxu0 0
    %1220 = vmatpush1.bf16.msra.mxu0 0
    %1221 = vmatprep.subr.bf16.mxu0 0
    %1222 = vmatpush1.bf16.msra.mxu0 0
    %1223 = vmatprep.subr.bf16.mxu0 0
    %1224 = vmatpush1.bf16.msra.mxu0 0
    %1225 = vmatprep.subr.bf16.mxu0 0
    %1226 = vmatpush1.bf16.msra.mxu0 0
    %1227 = vmatprep.subr.bf16.mxu0 0
    %1228 = vmatpush1.bf16.msra.mxu0 0
    %1229 = vmatprep.subr.bf16.mxu0 0
    %1230 = vmatpush1.bf16.msra.mxu0 0
    %1231 = vmatprep.subr.bf16.mxu0 0
    %1232 = vmatpush1.bf16.msra.mxu0 0
    %1233 = vmatprep.subr.bf16.mxu0 0
    %1234 = vmatpush1.bf16.msra.mxu0 0
    %1235 = vmatprep.subr.bf16.mxu0 0
    %1236 = vmatpush1.bf16.msra.mxu0 0
    %1237 = vmatprep.subr.bf16.mxu0 0
    %1238 = vmatpush1.bf16.msra.mxu0 0
    %1239 = vmatprep.mubr.bf16.mxu0 0
    %1240 = vmatmul.mubr.bf16.gmra.mrb[0].mxu0 %v795
    %v1241 = vpop.f32.mrb[0].mxu0
    %v1242 = vadd.f32 %v396, %v1241
    %v1243 = vpop.f32.mrb[0].mxu0
    %v1244 = vadd.f32 %v400, %v1243
    %v1245 = vpop.f32.mrb[0].mxu0
    %v1246 = vpop.f32.mrb[0].mxu0
    %1247 = vdwg.mxu0
    %1248 = vmatprep.subr.bf16.mxu0 %v688
    %1249 = vmatpush1.bf16.msra.mxu0 %v687
    %1250 = vmatprep.subr.bf16.mxu0 %v720
    %1251 = vmatpush1.bf16.msra.mxu0 %v719
    %1252 = vmatprep.subr.bf16.mxu0 0
    %1253 = vmatpush1.bf16.msra.mxu0 0
    %1254 = vmatprep.subr.bf16.mxu0 0
    %1255 = vmatpush1.bf16.msra.mxu0 0
    %1256 = vmatprep.subr.bf16.mxu0 0
    %1257 = vmatpush1.bf16.msra.mxu0 0
    %1258 = vmatprep.subr.bf16.mxu0 0
    %1259 = vmatpush1.bf16.msra.mxu0 0
    %1260 = vmatprep.subr.bf16.mxu0 0
    %1261 = vmatpush1.bf16.msra.mxu0 0
    %1262 = vmatprep.subr.bf16.mxu0 0
    %1263 = vmatpush1.bf16.msra.mxu0 0
    %1264 = vmatprep.subr.bf16.mxu0 0
    %1265 = vmatpush1.bf16.msra.mxu0 0
    %1266 = vmatprep.subr.bf16.mxu0 0
    %1267 = vmatpush1.bf16.msra.mxu0 0
    %1268 = vmatprep.subr.bf16.mxu0 0
    %1269 = vmatpush1.bf16.msra.mxu0 0
    %1270 = vmatprep.subr.bf16.mxu0 0
    %1271 = vmatpush1.bf16.msra.mxu0 0
    %1272 = vmatprep.subr.bf16.mxu0 0
    %1273 = vmatpush1.bf16.msra.mxu0 0
    %1274 = vmatprep.subr.bf16.mxu0 0
    %1275 = vmatpush1.bf16.msra.mxu0 0
    %1276 = vmatprep.subr.bf16.mxu0 0
    %1277 = vmatpush1.bf16.msra.mxu0 0
    %1278 = vmatprep.subr.bf16.mxu0 0
    %1279 = vmatpush1.bf16.msra.mxu0 0
    %1280 = vmatprep.mubr.bf16.mxu0 0
    %1281 = vmatmul.mubr.bf16.gmra.mrb[0].mxu0 %v795
    %v1282 = vpop.f32.mrb[0].mxu0
    %v1283 = vadd.f32 %v404, %v1282
    %v1284 = vpop.f32.mrb[0].mxu0
    %v1285 = vadd.f32 %v408, %v1284
    %v1286 = vpop.f32.mrb[0].mxu0
    %v1287 = vpop.f32.mrb[0].mxu0
    %1288 = vdwg.mxu0
    %1289 = vmatprep.subr.bf16.mxu0 %v690
    %1290 = vmatpush1.bf16.msra.mxu0 %v689
    %1291 = vmatprep.subr.bf16.mxu0 %v722
    %1292 = vmatpush1.bf16.msra.mxu0 %v721
    %1293 = vmatprep.subr.bf16.mxu0 0
    %1294 = vmatpush1.bf16.msra.mxu0 0
    %1295 = vmatprep.subr.bf16.mxu0 0
    %1296 = vmatpush1.bf16.msra.mxu0 0
    %1297 = vmatprep.subr.bf16.mxu0 0
    %1298 = vmatpush1.bf16.msra.mxu0 0
    %1299 = vmatprep.subr.bf16.mxu0 0
    %1300 = vmatpush1.bf16.msra.mxu0 0
    %1301 = vmatprep.subr.bf16.mxu0 0
    %1302 = vmatpush1.bf16.msra.mxu0 0
    %1303 = vmatprep.subr.bf16.mxu0 0
    %1304 = vmatpush1.bf16.msra.mxu0 0
    %1305 = vmatprep.subr.bf16.mxu0 0
    %1306 = vmatpush1.bf16.msra.mxu0 0
    %1307 = vmatprep.subr.bf16.mxu0 0
    %1308 = vmatpush1.bf16.msra.mxu0 0
    %1309 = vmatprep.subr.bf16.mxu0 0
    %1310 = vmatpush1.bf16.msra.mxu0 0
    %1311 = vmatprep.subr.bf16.mxu0 0
    %1312 = vmatpush1.bf16.msra.mxu0 0
    %1313 = vmatprep.subr.bf16.mxu0 0
    %1314 = vmatpush1.bf16.msra.mxu0 0
    %1315 = vmatprep.subr.bf16.mxu0 0
    %1316 = vmatpush1.bf16.msra.mxu0 0
    %1317 = vmatprep.subr.bf16.mxu0 0
    %1318 = vmatpush1.bf16.msra.mxu0 0
    %1319 = vmatprep.subr.bf16.mxu0 0
    %1320 = vmatpush1.bf16.msra.mxu0 0
    %1321 = vmatprep.mubr.bf16.mxu0 0
    %1322 = vmatmul.mubr.bf16.gmra.mrb[0].mxu0 %v795
    %v1323 = vpop.f32.mrb[0].mxu0
    %v1324 = vadd.f32 %v412, %v1323
    %v1325 = vpop.f32.mrb[0].mxu0
    %v1326 = vadd.f32 %v416, %v1325
    %v1327 = vpop.f32.mrb[0].mxu0
    %v1328 = vpop.f32.mrb[0].mxu0
    %1329 = vdwg.mxu0
    %1330 = vmatprep.subr.bf16.mxu0 %v692
    %1331 = vmatpush1.bf16.msra.mxu0 %v691
    %1332 = vmatprep.subr.bf16.mxu0 %v724
    %1333 = vmatpush1.bf16.msra.mxu0 %v723
    %1334 = vmatprep.subr.bf16.mxu0 0
    %1335 = vmatpush1.bf16.msra.mxu0 0
    %1336 = vmatprep.subr.bf16.mxu0 0
    %1337 = vmatpush1.bf16.msra.mxu0 0
    %1338 = vmatprep.subr.bf16.mxu0 0
    %1339 = vmatpush1.bf16.msra.mxu0 0
    %1340 = vmatprep.subr.bf16.mxu0 0
    %1341 = vmatpush1.bf16.msra.mxu0 0
    %1342 = vmatprep.subr.bf16.mxu0 0
    %1343 = vmatpush1.bf16.msra.mxu0 0
    %1344 = vmatprep.subr.bf16.mxu0 0
    %1345 = vmatpush1.bf16.msra.mxu0 0
    %1346 = vmatprep.subr.bf16.mxu0 0
    %1347 = vmatpush1.bf16.msra.mxu0 0
    %1348 = vmatprep.subr.bf16.mxu0 0
    %1349 = vmatpush1.bf16.msra.mxu0 0
    %1350 = vmatprep.subr.bf16.mxu0 0
    %1351 = vmatpush1.bf16.msra.mxu0 0
    %1352 = vmatprep.subr.bf16.mxu0 0
    %1353 = vmatpush1.bf16.msra.mxu0 0
    %1354 = vmatprep.subr.bf16.mxu0 0
    %1355 = vmatpush1.bf16.msra.mxu0 0
    %1356 = vmatprep.subr.bf16.mxu0 0
    %1357 = vmatpush1.bf16.msra.mxu0 0
    %1358 = vmatprep.subr.bf16.mxu0 0
    %1359 = vmatpush1.bf16.msra.mxu0 0
    %1360 = vmatprep.subr.bf16.mxu0 0
    %1361 = vmatpush1.bf16.msra.mxu0 0
    %1362 = vmatprep.mubr.bf16.mxu0 0
    %1363 = vmatmul.mubr.bf16.gmra.mrb[0].mxu0 %v795
    %v1364 = vpop.f32.mrb[0].mxu0
    %v1365 = vadd.f32 %v420, %v1364
    %v1366 = vpop.f32.mrb[0].mxu0
    %v1367 = vadd.f32 %v424, %v1366
    %v1368 = vpop.f32.mrb[0].mxu0
    %v1369 = vpop.f32.mrb[0].mxu0
    %1370 = vdwg.mxu0
    %1371 = vmatprep.subr.bf16.mxu0 %v694
    %1372 = vmatpush1.bf16.msra.mxu0 %v693
    %1373 = vmatprep.subr.bf16.mxu0 %v726
    %1374 = vmatpush1.bf16.msra.mxu0 %v725
    %1375 = vmatprep.subr.bf16.mxu0 0
    %1376 = vmatpush1.bf16.msra.mxu0 0
    %1377 = vmatprep.subr.bf16.mxu0 0
    %1378 = vmatpush1.bf16.msra.mxu0 0
    %1379 = vmatprep.subr.bf16.mxu0 0
    %1380 = vmatpush1.bf16.msra.mxu0 0
    %1381 = vmatprep.subr.bf16.mxu0 0
    %1382 = vmatpush1.bf16.msra.mxu0 0
    %1383 = vmatprep.subr.bf16.mxu0 0
    %1384 = vmatpush1.bf16.msra.mxu0 0
    %1385 = vmatprep.subr.bf16.mxu0 0
    %1386 = vmatpush1.bf16.msra.mxu0 0
    %1387 = vmatprep.subr.bf16.mxu0 0
    %1388 = vmatpush1.bf16.msra.mxu0 0
    %1389 = vmatprep.subr.bf16.mxu0 0
    %1390 = vmatpush1.bf16.msra.mxu0 0
    %1391 = vmatprep.subr.bf16.mxu0 0
    %1392 = vmatpush1.bf16.msra.mxu0 0
    %1393 = vmatprep.subr.bf16.mxu0 0
    %1394 = vmatpush1.bf16.msra.mxu0 0
    %1395 = vmatprep.subr.bf16.mxu0 0
    %1396 = vmatpush1.bf16.msra.mxu0 0
    %1397 = vmatprep.subr.bf16.mxu0 0
    %1398 = vmatpush1.bf16.msra.mxu0 0
    %1399 = vmatprep.subr.bf16.mxu0 0
    %1400 = vmatpush1.bf16.msra.mxu0 0
    %1401 = vmatprep.subr.bf16.mxu0 0
    %1402 = vmatpush1.bf16.msra.mxu0 0
    %1403 = vmatprep.mubr.bf16.mxu0 0
    %1404 = vmatmul.mubr.bf16.gmra.mrb[0].mxu0 %v795
    %v1405 = vpop.f32.mrb[0].mxu0
    %v1406 = vadd.f32 %v428, %v1405
    %v1407 = vpop.f32.mrb[0].mxu0
    %v1408 = vadd.f32 %v432, %v1407
    %v1409 = vpop.f32.mrb[0].mxu0
    %v1410 = vpop.f32.mrb[0].mxu0
    %1411 = vdwg.mxu0
    %1412 = vmatprep.subr.bf16.mxu0 %v696
    %1413 = vmatpush1.bf16.msra.mxu0 %v695
    %1414 = vmatprep.subr.bf16.mxu0 %v728
    %1415 = vmatpush1.bf16.msra.mxu0 %v727
    %1416 = vmatprep.subr.bf16.mxu0 0
    %1417 = vmatpush1.bf16.msra.mxu0 0
    %1418 = vmatprep.subr.bf16.mxu0 0
    %1419 = vmatpush1.bf16.msra.mxu0 0
    %1420 = vmatprep.subr.bf16.mxu0 0
    %1421 = vmatpush1.bf16.msra.mxu0 0
    %1422 = vmatprep.subr.bf16.mxu0 0
    %1423 = vmatpush1.bf16.msra.mxu0 0
    %1424 = vmatprep.subr.bf16.mxu0 0
    %1425 = vmatpush1.bf16.msra.mxu0 0
    %1426 = vmatprep.subr.bf16.mxu0 0
    %1427 = vmatpush1.bf16.msra.mxu0 0
    %1428 = vmatprep.subr.bf16.mxu0 0
    %1429 = vmatpush1.bf16.msra.mxu0 0
    %1430 = vmatprep.subr.bf16.mxu0 0
    %1431 = vmatpush1.bf16.msra.mxu0 0
    %1432 = vmatprep.subr.bf16.mxu0 0
    %1433 = vmatpush1.bf16.msra.mxu0 0
    %1434 = vmatprep.subr.bf16.mxu0 0
    %1435 = vmatpush1.bf16.msra.mxu0 0
    %1436 = vmatprep.subr.bf16.mxu0 0
    %1437 = vmatpush1.bf16.msra.mxu0 0
    %1438 = vmatprep.subr.bf16.mxu0 0
    %1439 = vmatpush1.bf16.msra.mxu0 0
    %1440 = vmatprep.subr.bf16.mxu0 0
    %1441 = vmatpush1.bf16.msra.mxu0 0
    %1442 = vmatprep.subr.bf16.mxu0 0
    %1443 = vmatpush1.bf16.msra.mxu0 0
    %1444 = vmatprep.mubr.bf16.mxu0 0
    %1445 = vmatmul.mubr.bf16.gmra.mrb[0].mxu0 %v795
    %v1446 = vpop.f32.mrb[0].mxu0
    %v1447 = vadd.f32 %v436, %v1446
    %v1448 = vpop.f32.mrb[0].mxu0
    %v1449 = vadd.f32 %v440, %v1448
    %v1450 = vpop.f32.mrb[0].mxu0
    %v1451 = vpop.f32.mrb[0].mxu0
    %1452 = vdwg.mxu0
    %vm1453 = vcmask 1041408
    %v1454 = vsel %vm1453, %v832, 0.0
    %v1455 = vsel %vm1453, %v834, 0.0
    %v1456 = vadd.f32 %v1454, %v1455
    %v1457 = vsel %vm1453, %v873, 0.0
    %v1458 = vadd.f32 %v1456, %v1457
    %v1459 = vsel %vm1453, %v875, 0.0
    %v1460 = vadd.f32 %v1458, %v1459
    %v1461 = vsel %vm1453, %v914, 0.0
    %v1462 = vadd.f32 %v1460, %v1461
    %v1463 = vsel %vm1453, %v916, 0.0
    %v1464 = vadd.f32 %v1462, %v1463
    %v1465 = vsel %vm1453, %v955, 0.0
    %v1466 = vadd.f32 %v1464, %v1465
    %v1467 = vsel %vm1453, %v957, 0.0
    %v1468 = vadd.f32 %v1466, %v1467
    %v1469 = vsel %vm1453, %v996, 0.0
    %v1470 = vadd.f32 %v1468, %v1469
    %v1471 = vsel %vm1453, %v998, 0.0
    %v1472 = vadd.f32 %v1470, %v1471
    %v1473 = vsel %vm1453, %v1037, 0.0
    %v1474 = vadd.f32 %v1472, %v1473
    %v1475 = vsel %vm1453, %v1039, 0.0
    %v1476 = vadd.f32 %v1474, %v1475
    %v1477 = vsel %vm1453, %v1078, 0.0
    %v1478 = vadd.f32 %v1476, %v1477
    %v1479 = vsel %vm1453, %v1080, 0.0
    %v1480 = vadd.f32 %v1478, %v1479
    %v1481 = vsel %vm1453, %v1119, 0.0
    %v1482 = vadd.f32 %v1480, %v1481
    %v1483 = vsel %vm1453, %v1121, 0.0
    %v1484 = vadd.f32 %v1482, %v1483
    %v1485 = vsel %vm1453, %v1160, 0.0
    %v1486 = vadd.f32 %v1484, %v1485
    %v1487 = vsel %vm1453, %v1162, 0.0
    %v1488 = vadd.f32 %v1486, %v1487
    %v1489 = vsel %vm1453, %v1201, 0.0
    %v1490 = vadd.f32 %v1488, %v1489
    %v1491 = vsel %vm1453, %v1203, 0.0
    %v1492 = vadd.f32 %v1490, %v1491
    %v1493 = vsel %vm1453, %v1242, 0.0
    %v1494 = vadd.f32 %v1492, %v1493
    %v1495 = vsel %vm1453, %v1244, 0.0
    %v1496 = vadd.f32 %v1494, %v1495
    %v1497 = vsel %vm1453, %v1283, 0.0
    %v1498 = vadd.f32 %v1496, %v1497
    %v1499 = vsel %vm1453, %v1285, 0.0
    %v1500 = vadd.f32 %v1498, %v1499
    %v1501 = vsel %vm1453, %v1324, 0.0
    %v1502 = vadd.f32 %v1500, %v1501
    %v1503 = vsel %vm1453, %v1326, 0.0
    %v1504 = vadd.f32 %v1502, %v1503
    %v1505 = vsel %vm1453, %v1365, 0.0
    %v1506 = vadd.f32 %v1504, %v1505
    %v1507 = vsel %vm1453, %v1367, 0.0
    %v1508 = vadd.f32 %v1506, %v1507
    %v1509 = vsel %vm1453, %v1406, 0.0
    %v1510 = vadd.f32 %v1508, %v1509
    %v1511 = vsel %vm1453, %v1408, 0.0
    %v1512 = vadd.f32 %v1510, %v1511
    %v1513 = vsel %vm1453, %v1447, 0.0
    %v1514 = vadd.f32 %v1512, %v1513
    %v1515 = vsel %vm1453, %v1449, 0.0
    %v1516 = vadd.f32 %v1514, %v1515
    %1517 = vadd.xlane.f32.xlu0 %v1516
    %v1518 = vpop.xlane.xlu0 %1517
    %v1519 = vrcp.pop 4096.0
    %v1520 = vmul.f32 %v1518, %v1519
    %v1521 = vsub.f32 %v832, %v1520
    %v1522 = vsub.f32 %v834, %v1520
    %v1523 = vsub.f32 %v873, %v1520
    %v1524 = vsub.f32 %v875, %v1520
    %v1525 = vsub.f32 %v914, %v1520
    %v1526 = vsub.f32 %v916, %v1520
    %v1527 = vsub.f32 %v955, %v1520
    %v1528 = vsub.f32 %v957, %v1520
    %v1529 = vsub.f32 %v996, %v1520
    %v1530 = vsub.f32 %v998, %v1520
    %v1531 = vsub.f32 %v1037, %v1520
    %v1532 = vsub.f32 %v1039, %v1520
    %v1533 = vsub.f32 %v1078, %v1520
    %v1534 = vsub.f32 %v1080, %v1520
    %v1535 = vsub.f32 %v1119, %v1520
    %v1536 = vsub.f32 %v1121, %v1520
    %v1537 = vsub.f32 %v1160, %v1520
    %v1538 = vsub.f32 %v1162, %v1520
    %v1539 = vsub.f32 %v1201, %v1520
    %v1540 = vsub.f32 %v1203, %v1520
    %v1541 = vsub.f32 %v1242, %v1520
    %v1542 = vsub.f32 %v1244, %v1520
    %v1543 = vsub.f32 %v1283, %v1520
    %v1544 = vsub.f32 %v1285, %v1520
    %v1545 = vsub.f32 %v1324, %v1520
    %v1546 = vsub.f32 %v1326, %v1520
    %v1547 = vsub.f32 %v1365, %v1520
    %v1548 = vsub.f32 %v1367, %v1520
    %v1549 = vsub.f32 %v1406, %v1520
    %v1550 = vsub.f32 %v1408, %v1520
    %v1551 = vsub.f32 %v1447, %v1520
    %v1552 = vsub.f32 %v1449, %v1520
    %v1553 = vmul.f32 %v1521, %v1521
    %v1554 = vmul.f32 %v1522, %v1522
    %v1555 = vmul.f32 %v1523, %v1523
    %v1556 = vmul.f32 %v1524, %v1524
    %v1557 = vmul.f32 %v1525, %v1525
    %v1558 = vmul.f32 %v1526, %v1526
    %v1559 = vmul.f32 %v1527, %v1527
    %v1560 = vmul.f32 %v1528, %v1528
    %v1561 = vmul.f32 %v1529, %v1529
    %v1562 = vmul.f32 %v1530, %v1530
    %v1563 = vmul.f32 %v1531, %v1531
    %v1564 = vmul.f32 %v1532, %v1532
    %v1565 = vmul.f32 %v1533, %v1533
    %v1566 = vmul.f32 %v1534, %v1534
    %v1567 = vmul.f32 %v1535, %v1535
    %v1568 = vmul.f32 %v1536, %v1536
    %v1569 = vmul.f32 %v1537, %v1537
    %v1570 = vmul.f32 %v1538, %v1538
    %v1571 = vmul.f32 %v1539, %v1539
    %v1572 = vmul.f32 %v1540, %v1540
    %v1573 = vmul.f32 %v1541, %v1541
    %v1574 = vmul.f32 %v1542, %v1542
    %v1575 = vmul.f32 %v1543, %v1543
    %v1576 = vmul.f32 %v1544, %v1544
    %v1577 = vmul.f32 %v1545, %v1545
    %v1578 = vmul.f32 %v1546, %v1546
    %v1579 = vmul.f32 %v1547, %v1547
    %v1580 = vmul.f32 %v1548, %v1548
    %v1581 = vmul.f32 %v1549, %v1549
    %v1582 = vmul.f32 %v1550, %v1550
    %v1583 = vmul.f32 %v1551, %v1551
    %v1584 = vmul.f32 %v1552, %v1552
    %v1585 = vsel %vm1453, %v1553, 0.0
    %v1586 = vsel %vm1453, %v1554, 0.0
    %v1587 = vadd.f32 %v1585, %v1586
    %v1588 = vsel %vm1453, %v1555, 0.0
    %v1589 = vadd.f32 %v1587, %v1588
    %v1590 = vsel %vm1453, %v1556, 0.0
    %v1591 = vadd.f32 %v1589, %v1590
    %v1592 = vsel %vm1453, %v1557, 0.0
    %v1593 = vadd.f32 %v1591, %v1592
    %v1594 = vsel %vm1453, %v1558, 0.0
    %v1595 = vadd.f32 %v1593, %v1594
    %v1596 = vsel %vm1453, %v1559, 0.0
    %v1597 = vadd.f32 %v1595, %v1596
    %v1598 = vsel %vm1453, %v1560, 0.0
    %v1599 = vadd.f32 %v1597, %v1598
    %v1600 = vsel %vm1453, %v1561, 0.0
    %v1601 = vadd.f32 %v1599, %v1600
    %v1602 = vsel %vm1453, %v1562, 0.0
    %v1603 = vadd.f32 %v1601, %v1602
    %v1604 = vsel %vm1453, %v1563, 0.0
    %v1605 = vadd.f32 %v1603, %v1604
    %v1606 = vsel %vm1453, %v1564, 0.0
    %v1607 = vadd.f32 %v1605, %v1606
    %v1608 = vsel %vm1453, %v1565, 0.0
    %v1609 = vadd.f32 %v1607, %v1608
    %v1610 = vsel %vm1453, %v1566, 0.0
    %v1611 = vadd.f32 %v1609, %v1610
    %v1612 = vsel %vm1453, %v1567, 0.0
    %v1613 = vadd.f32 %v1611, %v1612
    %v1614 = vsel %vm1453, %v1568, 0.0
    %v1615 = vadd.f32 %v1613, %v1614
    %v1616 = vsel %vm1453, %v1569, 0.0
    %v1617 = vadd.f32 %v1615, %v1616
    %v1618 = vsel %vm1453, %v1570, 0.0
    %v1619 = vadd.f32 %v1617, %v1618
    %v1620 = vsel %vm1453, %v1571, 0.0
    %v1621 = vadd.f32 %v1619, %v1620
    %v1622 = vsel %vm1453, %v1572, 0.0
    %v1623 = vadd.f32 %v1621, %v1622
    %v1624 = vsel %vm1453, %v1573, 0.0
    %v1625 = vadd.f32 %v1623, %v1624
    %v1626 = vsel %vm1453, %v1574, 0.0
    %v1627 = vadd.f32 %v1625, %v1626
    %v1628 = vsel %vm1453, %v1575, 0.0
    %v1629 = vadd.f32 %v1627, %v1628
    %v1630 = vsel %vm1453, %v1576, 0.0
    %v1631 = vadd.f32 %v1629, %v1630
    %v1632 = vsel %vm1453, %v1577, 0.0
    %v1633 = vadd.f32 %v1631, %v1632
    %v1634 = vsel %vm1453, %v1578, 0.0
    %v1635 = vadd.f32 %v1633, %v1634
    %v1636 = vsel %vm1453, %v1579, 0.0
    %v1637 = vadd.f32 %v1635, %v1636
    %v1638 = vsel %vm1453, %v1580, 0.0
    %v1639 = vadd.f32 %v1637, %v1638
    %v1640 = vsel %vm1453, %v1581, 0.0
    %v1641 = vadd.f32 %v1639, %v1640
    %v1642 = vsel %vm1453, %v1582, 0.0
    %v1643 = vadd.f32 %v1641, %v1642
    %v1644 = vsel %vm1453, %v1583, 0.0
    %v1645 = vadd.f32 %v1643, %v1644
    %v1646 = vsel %vm1453, %v1584, 0.0
    %v1647 = vadd.f32 %v1645, %v1646
    %1648 = vadd.xlane.f32.xlu0 %v1647
    %v1649 = vpop.xlane.xlu0 %1648
    %v1650 = vmul.f32 %v1649, %v1519
    %v1651 = vadd.f32 %v1650, 1e-05
    %v1652 = vrsqrt.pop %v1651
    %v1653 = vmul.f32 %v1521, %v1652
    %v1654 = vmul.f32 %v1522, %v1652
    %v1655 = vmul.f32 %v1523, %v1652
    %v1656 = vmul.f32 %v1524, %v1652
    %v1657 = vmul.f32 %v1525, %v1652
    %v1658 = vmul.f32 %v1526, %v1652
    %v1659 = vmul.f32 %v1527, %v1652
    %v1660 = vmul.f32 %v1528, %v1652
    %v1661 = vmul.f32 %v1529, %v1652
    %v1662 = vmul.f32 %v1530, %v1652
    %v1663 = vmul.f32 %v1531, %v1652
    %v1664 = vmul.f32 %v1532, %v1652
    %v1665 = vmul.f32 %v1533, %v1652
    %v1666 = vmul.f32 %v1534, %v1652
    %v1667 = vmul.f32 %v1535, %v1652
    %v1668 = vmul.f32 %v1536, %v1652
    %v1669 = vmul.f32 %v1537, %v1652
    %v1670 = vmul.f32 %v1538, %v1652
    %v1671 = vmul.f32 %v1539, %v1652
    %v1672 = vmul.f32 %v1540, %v1652
    %v1673 = vmul.f32 %v1541, %v1652
    %v1674 = vmul.f32 %v1542, %v1652
    %v1675 = vmul.f32 %v1543, %v1652
    %v1676 = vmul.f32 %v1544, %v1652
    %v1677 = vmul.f32 %v1545, %v1652
    %v1678 = vmul.f32 %v1546, %v1652
    %v1679 = vmul.f32 %v1547, %v1652
    %v1680 = vmul.f32 %v1548, %v1652
    %v1681 = vmul.f32 %v1549, %v1652
    %v1682 = vmul.f32 %v1550, %v1652
    %v1683 = vmul.f32 %v1551, %v1652
    %v1684 = vmul.f32 %v1552, %v1652
    %v1685 = vld [vmem:[%s3] sm:$0xff]
    %v1686 = vld [vmem:[%s3 + $0x8] sm:$0xff]
    %v1687 = vld [vmem:[%s3 + $0x10] sm:$0xff]
    %v1688 = vld [vmem:[%s3 + $0x18] sm:$0xff]
    %v1693 = vlaneseq
    %v1694 = vshrl.u32 %v1693, 7
    %v1695 = vsub.s32 0, %v1694
    %v1696 = vrot.slane %v1685, %v1695
    %v1697 = vlaneseq
    %v1698 = vshrl.u32 %v1697, 7
    %v1699 = vsub.s32 1, %v1698
    %v1700 = vrot.slane %v1685, %v1699
    %v1701 = vlaneseq
    %v1702 = vshrl.u32 %v1701, 7
    %v1703 = vsub.s32 2, %v1702
    %v1704 = vrot.slane %v1685, %v1703
    %v1705 = vlaneseq
    %v1706 = vshrl.u32 %v1705, 7
    %v1707 = vsub.s32 3, %v1706
    %v1708 = vrot.slane %v1685, %v1707
    %v1709 = vlaneseq
    %v1710 = vshrl.u32 %v1709, 7
    %v1711 = vsub.s32 4, %v1710
    %v1712 = vrot.slane %v1685, %v1711
    %v1713 = vlaneseq
    %v1714 = vshrl.u32 %v1713, 7
    %v1715 = vsub.s32 5, %v1714
    %v1716 = vrot.slane %v1685, %v1715
    %v1717 = vlaneseq
    %v1718 = vshrl.u32 %v1717, 7
    %v1719 = vsub.s32 6, %v1718
    %v1720 = vrot.slane %v1685, %v1719
    %v1721 = vlaneseq
    %v1722 = vshrl.u32 %v1721, 7
    %v1723 = vsub.s32 7, %v1722
    %v1724 = vrot.slane %v1685, %v1723
    %v1725 = vlaneseq
    %v1726 = vshrl.u32 %v1725, 7
    %v1727 = vsub.s32 0, %v1726
    %v1728 = vrot.slane %v1686, %v1727
    %v1729 = vlaneseq
    %v1730 = vshrl.u32 %v1729, 7
    %v1731 = vsub.s32 1, %v1730
    %v1732 = vrot.slane %v1686, %v1731
    %v1733 = vlaneseq
    %v1734 = vshrl.u32 %v1733, 7
    %v1735 = vsub.s32 2, %v1734
    %v1736 = vrot.slane %v1686, %v1735
    %v1737 = vlaneseq
    %v1738 = vshrl.u32 %v1737, 7
    %v1739 = vsub.s32 3, %v1738
    %v1740 = vrot.slane %v1686, %v1739
    %v1741 = vlaneseq
    %v1742 = vshrl.u32 %v1741, 7
    %v1743 = vsub.s32 4, %v1742
    %v1744 = vrot.slane %v1686, %v1743
    %v1745 = vlaneseq
    %v1746 = vshrl.u32 %v1745, 7
    %v1747 = vsub.s32 5, %v1746
    %v1748 = vrot.slane %v1686, %v1747
    %v1749 = vlaneseq
    %v1750 = vshrl.u32 %v1749, 7
    %v1751 = vsub.s32 6, %v1750
    %v1752 = vrot.slane %v1686, %v1751
    %v1753 = vlaneseq
    %v1754 = vshrl.u32 %v1753, 7
    %v1755 = vsub.s32 7, %v1754
    %v1756 = vrot.slane %v1686, %v1755
    %v1757 = vlaneseq
    %v1758 = vshrl.u32 %v1757, 7
    %v1759 = vsub.s32 0, %v1758
    %v1760 = vrot.slane %v1687, %v1759
    %v1761 = vlaneseq
    %v1762 = vshrl.u32 %v1761, 7
    %v1763 = vsub.s32 1, %v1762
    %v1764 = vrot.slane %v1687, %v1763
    %v1765 = vlaneseq
    %v1766 = vshrl.u32 %v1765, 7
    %v1767 = vsub.s32 2, %v1766
    %v1768 = vrot.slane %v1687, %v1767
    %v1769 = vlaneseq
    %v1770 = vshrl.u32 %v1769, 7
    %v1771 = vsub.s32 3, %v1770
    %v1772 = vrot.slane %v1687, %v1771
    %v1773 = vlaneseq
    %v1774 = vshrl.u32 %v1773, 7
    %v1775 = vsub.s32 4, %v1774
    %v1776 = vrot.slane %v1687, %v1775
    %v1777 = vlaneseq
    %v1778 = vshrl.u32 %v1777, 7
    %v1779 = vsub.s32 5, %v1778
    %v1780 = vrot.slane %v1687, %v1779
    %v1781 = vlaneseq
    %v1782 = vshrl.u32 %v1781, 7
    %v1783 = vsub.s32 6, %v1782
    %v1784 = vrot.slane %v1687, %v1783
    %v1785 = vlaneseq
    %v1786 = vshrl.u32 %v1785, 7
    %v1787 = vsub.s32 7, %v1786
    %v1788 = vrot.slane %v1687, %v1787
    %v1789 = vlaneseq
    %v1790 = vshrl.u32 %v1789, 7
    %v1791 = vsub.s32 0, %v1790
    %v1792 = vrot.slane %v1688, %v1791
    %v1793 = vlaneseq
    %v1794 = vshrl.u32 %v1793, 7
    %v1795 = vsub.s32 1, %v1794
    %v1796 = vrot.slane %v1688, %v1795
    %v1797 = vlaneseq
    %v1798 = vshrl.u32 %v1797, 7
    %v1799 = vsub.s32 2, %v1798
    %v1800 = vrot.slane %v1688, %v1799
    %v1801 = vlaneseq
    %v1802 = vshrl.u32 %v1801, 7
    %v1803 = vsub.s32 3, %v1802
    %v1804 = vrot.slane %v1688, %v1803
    %v1805 = vlaneseq
    %v1806 = vshrl.u32 %v1805, 7
    %v1807 = vsub.s32 4, %v1806
    %v1808 = vrot.slane %v1688, %v1807
    %v1809 = vlaneseq
    %v1810 = vshrl.u32 %v1809, 7
    %v1811 = vsub.s32 5, %v1810
    %v1812 = vrot.slane %v1688, %v1811
    %v1813 = vlaneseq
    %v1814 = vshrl.u32 %v1813, 7
    %v1815 = vsub.s32 6, %v1814
    %v1816 = vrot.slane %v1688, %v1815
    %v1817 = vlaneseq
    %v1818 = vshrl.u32 %v1817, 7
    %v1819 = vsub.s32 7, %v1818
    %v1820 = vrot.slane %v1688, %v1819
    %v1853 = vmul.f32 %v1653, %v1696
    %v1854 = vmul.f32 %v1654, %v1700
    %v1855 = vmul.f32 %v1655, %v1704
    %v1856 = vmul.f32 %v1656, %v1708
    %v1857 = vmul.f32 %v1657, %v1712
    %v1858 = vmul.f32 %v1658, %v1716
    %v1859 = vmul.f32 %v1659, %v1720
    %v1860 = vmul.f32 %v1660, %v1724
    %v1861 = vmul.f32 %v1661, %v1728
    %v1862 = vmul.f32 %v1662, %v1732
    %v1863 = vmul.f32 %v1663, %v1736
    %v1864 = vmul.f32 %v1664, %v1740
    %v1865 = vmul.f32 %v1665, %v1744
    %v1866 = vmul.f32 %v1666, %v1748
    %v1867 = vmul.f32 %v1667, %v1752
    %v1868 = vmul.f32 %v1668, %v1756
    %v1869 = vmul.f32 %v1669, %v1760
    %v1870 = vmul.f32 %v1670, %v1764
    %v1871 = vmul.f32 %v1671, %v1768
    %v1872 = vmul.f32 %v1672, %v1772
    %v1873 = vmul.f32 %v1673, %v1776
    %v1874 = vmul.f32 %v1674, %v1780
    %v1875 = vmul.f32 %v1675, %v1784
    %v1876 = vmul.f32 %v1676, %v1788
    %v1877 = vmul.f32 %v1677, %v1792
    %v1878 = vmul.f32 %v1678, %v1796
    %v1879 = vmul.f32 %v1679, %v1800
    %v1880 = vmul.f32 %v1680, %v1804
    %v1881 = vmul.f32 %v1681, %v1808
    %v1882 = vmul.f32 %v1682, %v1812
    %v1883 = vmul.f32 %v1683, %v1816
    %v1884 = vmul.f32 %v1684, %v1820
    %v1885 = vld [vmem:[#allocation6] sm:$0xff]
    %v1886 = vld [vmem:[#allocation6 + $0x8] sm:$0xff]
    %v1887 = vld [vmem:[#allocation6 + $0x10] sm:$0xff]
    %v1888 = vld [vmem:[#allocation6 + $0x18] sm:$0xff]
    %v1893 = vlaneseq
    %v1894 = vshrl.u32 %v1893, 7
    %v1895 = vsub.s32 0, %v1894
    %v1896 = vrot.slane %v1885, %v1895
    %v1897 = vlaneseq
    %v1898 = vshrl.u32 %v1897, 7
    %v1899 = vsub.s32 1, %v1898
    %v1900 = vrot.slane %v1885, %v1899
    %v1901 = vlaneseq
    %v1902 = vshrl.u32 %v1901, 7
    %v1903 = vsub.s32 2, %v1902
    %v1904 = vrot.slane %v1885, %v1903
    %v1905 = vlaneseq
    %v1906 = vshrl.u32 %v1905, 7
    %v1907 = vsub.s32 3, %v1906
    %v1908 = vrot.slane %v1885, %v1907
    %v1909 = vlaneseq
    %v1910 = vshrl.u32 %v1909, 7
    %v1911 = vsub.s32 4, %v1910
    %v1912 = vrot.slane %v1885, %v1911
    %v1913 = vlaneseq
    %v1914 = vshrl.u32 %v1913, 7
    %v1915 = vsub.s32 5, %v1914
    %v1916 = vrot.slane %v1885, %v1915
    %v1917 = vlaneseq
    %v1918 = vshrl.u32 %v1917, 7
    %v1919 = vsub.s32 6, %v1918
    %v1920 = vrot.slane %v1885, %v1919
    %v1921 = vlaneseq
    %v1922 = vshrl.u32 %v1921, 7
    %v1923 = vsub.s32 7, %v1922
    %v1924 = vrot.slane %v1885, %v1923
    %v1925 = vlaneseq
    %v1926 = vshrl.u32 %v1925, 7
    %v1927 = vsub.s32 0, %v1926
    %v1928 = vrot.slane %v1886, %v1927
    %v1929 = vlaneseq
    %v1930 = vshrl.u32 %v1929, 7
    %v1931 = vsub.s32 1, %v1930
    %v1932 = vrot.slane %v1886, %v1931
    %v1933 = vlaneseq
    %v1934 = vshrl.u32 %v1933, 7
    %v1935 = vsub.s32 2, %v1934
    %v1936 = vrot.slane %v1886, %v1935
    %v1937 = vlaneseq
    %v1938 = vshrl.u32 %v1937, 7
    %v1939 = vsub.s32 3, %v1938
    %v1940 = vrot.slane %v1886, %v1939
    %v1941 = vlaneseq
    %v1942 = vshrl.u32 %v1941, 7
    %v1943 = vsub.s32 4, %v1942
    %v1944 = vrot.slane %v1886, %v1943
    %v1945 = vlaneseq
    %v1946 = vshrl.u32 %v1945, 7
    %v1947 = vsub.s32 5, %v1946
    %v1948 = vrot.slane %v1886, %v1947
    %v1949 = vlaneseq
    %v1950 = vshrl.u32 %v1949, 7
    %v1951 = vsub.s32 6, %v1950
    %v1952 = vrot.slane %v1886, %v1951
    %v1953 = vlaneseq
    %v1954 = vshrl.u32 %v1953, 7
    %v1955 = vsub.s32 7, %v1954
    %v1956 = vrot.slane %v1886, %v1955
    %v1957 = vlaneseq
    %v1958 = vshrl.u32 %v1957, 7
    %v1959 = vsub.s32 0, %v1958
    %v1960 = vrot.slane %v1887, %v1959
    %v1961 = vlaneseq
    %v1962 = vshrl.u32 %v1961, 7
    %v1963 = vsub.s32 1, %v1962
    %v1964 = vrot.slane %v1887, %v1963
    %v1965 = vlaneseq
    %v1966 = vshrl.u32 %v1965, 7
    %v1967 = vsub.s32 2, %v1966
    %v1968 = vrot.slane %v1887, %v1967
    %v1969 = vlaneseq
    %v1970 = vshrl.u32 %v1969, 7
    %v1971 = vsub.s32 3, %v1970
    %v1972 = vrot.slane %v1887, %v1971
    %v1973 = vlaneseq
    %v1974 = vshrl.u32 %v1973, 7
    %v1975 = vsub.s32 4, %v1974
    %v1976 = vrot.slane %v1887, %v1975
    %v1977 = vlaneseq
    %v1978 = vshrl.u32 %v1977, 7
    %v1979 = vsub.s32 5, %v1978
    %v1980 = vrot.slane %v1887, %v1979
    %v1981 = vlaneseq
    %v1982 = vshrl.u32 %v1981, 7
    %v1983 = vsub.s32 6, %v1982
    %v1984 = vrot.slane %v1887, %v1983
    %v1985 = vlaneseq
    %v1986 = vshrl.u32 %v1985, 7
    %v1987 = vsub.s32 7, %v1986
    %v1988 = vrot.slane %v1887, %v1987
    %v1989 = vlaneseq
    %v1990 = vshrl.u32 %v1989, 7
    %v1991 = vsub.s32 0, %v1990
    %v1992 = vrot.slane %v1888, %v1991
    %v1993 = vlaneseq
    %v1994 = vshrl.u32 %v1993, 7
    %v1995 = vsub.s32 1, %v1994
    %v1996 = vrot.slane %v1888, %v1995
    %v1997 = vlaneseq
    %v1998 = vshrl.u32 %v1997, 7
    %v1999 = vsub.s32 2, %v1998
    %v2000 = vrot.slane %v1888, %v1999
    %v2001 = vlaneseq
    %v2002 = vshrl.u32 %v2001, 7
    %v2003 = vsub.s32 3, %v2002
    %v2004 = vrot.slane %v1888, %v2003
    %v2005 = vlaneseq
    %v2006 = vshrl.u32 %v2005, 7
    %v2007 = vsub.s32 4, %v2006
    %v2008 = vrot.slane %v1888, %v2007
    %v2009 = vlaneseq
    %v2010 = vshrl.u32 %v2009, 7
    %v2011 = vsub.s32 5, %v2010
    %v2012 = vrot.slane %v1888, %v2011
    %v2013 = vlaneseq
    %v2014 = vshrl.u32 %v2013, 7
    %v2015 = vsub.s32 6, %v2014
    %v2016 = vrot.slane %v1888, %v2015
    %v2017 = vlaneseq
    %v2018 = vshrl.u32 %v2017, 7
    %v2019 = vsub.s32 7, %v2018
    %v2020 = vrot.slane %v1888, %v2019
    %v2053 = vadd.f32 %v1853, %v1896
    %v2054 = vadd.f32 %v1854, %v1900
    %v2055 = vadd.f32 %v1855, %v1904
    %v2056 = vadd.f32 %v1856, %v1908
    %v2057 = vadd.f32 %v1857, %v1912
    %v2058 = vadd.f32 %v1858, %v1916
    %v2059 = vadd.f32 %v1859, %v1920
    %v2060 = vadd.f32 %v1860, %v1924
    %v2061 = vadd.f32 %v1861, %v1928
    %v2062 = vadd.f32 %v1862, %v1932
    %v2063 = vadd.f32 %v1863, %v1936
    %v2064 = vadd.f32 %v1864, %v1940
    %v2065 = vadd.f32 %v1865, %v1944
    %v2066 = vadd.f32 %v1866, %v1948
    %v2067 = vadd.f32 %v1867, %v1952
    %v2068 = vadd.f32 %v1868, %v1956
    %v2069 = vadd.f32 %v1869, %v1960
    %v2070 = vadd.f32 %v1870, %v1964
    %v2071 = vadd.f32 %v1871, %v1968
    %v2072 = vadd.f32 %v1872, %v1972
    %v2073 = vadd.f32 %v1873, %v1976
    %v2074 = vadd.f32 %v1874, %v1980
    %v2075 = vadd.f32 %v1875, %v1984
    %v2076 = vadd.f32 %v1876, %v1988
    %v2077 = vadd.f32 %v1877, %v1992
    %v2078 = vadd.f32 %v1878, %v1996
    %v2079 = vadd.f32 %v1879, %v2000
    %v2080 = vadd.f32 %v1880, %v2004
    %v2081 = vadd.f32 %v1881, %v2008
    %v2082 = vadd.f32 %v1882, %v2012
    %v2083 = vadd.f32 %v1883, %v2016
    %v2084 = vadd.f32 %v1884, %v2020
    %v2085 = vsub.f32 0.0, %v2053
    %v2086 = vsub.f32 0.0, %v2054
    %v2087 = vsub.f32 0.0, %v2055
    %v2088 = vsub.f32 0.0, %v2056
    %v2089 = vsub.f32 0.0, %v2057
    %v2090 = vsub.f32 0.0, %v2058
    %v2091 = vsub.f32 0.0, %v2059
    %v2092 = vsub.f32 0.0, %v2060
    %v2093 = vsub.f32 0.0, %v2061
    %v2094 = vsub.f32 0.0, %v2062
    %v2095 = vsub.f32 0.0, %v2063
    %v2096 = vsub.f32 0.0, %v2064
    %v2097 = vsub.f32 0.0, %v2065
    %v2098 = vsub.f32 0.0, %v2066
    %v2099 = vsub.f32 0.0, %v2067
    %v2100 = vsub.f32 0.0, %v2068
    %v2101 = vsub.f32 0.0, %v2069
    %v2102 = vsub.f32 0.0, %v2070
    %v2103 = vsub.f32 0.0, %v2071
    %v2104 = vsub.f32 0.0, %v2072
    %v2105 = vsub.f32 0.0, %v2073
    %v2106 = vsub.f32 0.0, %v2074
    %v2107 = vsub.f32 0.0, %v2075
    %v2108 = vsub.f32 0.0, %v2076
    %v2109 = vsub.f32 0.0, %v2077
    %v2110 = vsub.f32 0.0, %v2078
    %v2111 = vsub.f32 0.0, %v2079
    %v2112 = vsub.f32 0.0, %v2080
    %v2113 = vsub.f32 0.0, %v2081
    %v2114 = vsub.f32 0.0, %v2082
    %v2115 = vsub.f32 0.0, %v2083
    %v2116 = vsub.f32 0.0, %v2084
    %v2117 = vmul.f32 %v2085, 1.442695
    %v2118 = vpow.pop %v2117
    %v2119 = vmul.f32 %v2086, 1.442695
    %v2120 = vpow.pop %v2119
    %v2121 = vmul.f32 %v2087, 1.442695
    %v2122 = vpow.pop %v2121
    %v2123 = vmul.f32 %v2088, 1.442695
    %v2124 = vpow.pop %v2123
    %v2125 = vmul.f32 %v2089, 1.442695
    %v2126 = vpow.pop %v2125
    %v2127 = vmul.f32 %v2090, 1.442695
    %v2128 = vpow.pop %v2127
    %v2129 = vmul.f32 %v2091, 1.442695
    %v2130 = vpow.pop %v2129
    %v2131 = vmul.f32 %v2092, 1.442695
    %v2132 = vpow.pop %v2131
    %v2133 = vmul.f32 %v2093, 1.442695
    %v2134 = vpow.pop %v2133
    %v2135 = vmul.f32 %v2094, 1.442695
    %v2136 = vpow.pop %v2135
    %v2137 = vmul.f32 %v2095, 1.442695
    %v2138 = vpow.pop %v2137
    %v2139 = vmul.f32 %v2096, 1.442695
    %v2140 = vpow.pop %v2139
    %v2141 = vmul.f32 %v2097, 1.442695
    %v2142 = vpow.pop %v2141
    %v2143 = vmul.f32 %v2098, 1.442695
    %v2144 = vpow.pop %v2143
    %v2145 = vmul.f32 %v2099, 1.442695
    %v2146 = vpow.pop %v2145
    %v2147 = vmul.f32 %v2100, 1.442695
    %v2148 = vpow.pop %v2147
    %v2149 = vmul.f32 %v2101, 1.442695
    %v2150 = vpow.pop %v2149
    %v2151 = vmul.f32 %v2102, 1.442695
    %v2152 = vpow.pop %v2151
    %v2153 = vmul.f32 %v2103, 1.442695
    %v2154 = vpow.pop %v2153
    %v2155 = vmul.f32 %v2104, 1.442695
    %v2156 = vpow.pop %v2155
    %v2157 = vmul.f32 %v2105, 1.442695
    %v2158 = vpow.pop %v2157
    %v2159 = vmul.f32 %v2106, 1.442695
    %v2160 = vpow.pop %v2159
    %v2161 = vmul.f32 %v2107, 1.442695
    %v2162 = vpow.pop %v2161
    %v2163 = vmul.f32 %v2108, 1.442695
    %v2164 = vpow.pop %v2163
    %v2165 = vmul.f32 %v2109, 1.442695
    %v2166 = vpow.pop %v2165
    %v2167 = vmul.f32 %v2110, 1.442695
    %v2168 = vpow.pop %v2167
    %v2169 = vmul.f32 %v2111, 1.442695
    %v2170 = vpow.pop %v2169
    %v2171 = vmul.f32 %v2112, 1.442695
    %v2172 = vpow.pop %v2171
    %v2173 = vmul.f32 %v2113, 1.442695
    %v2174 = vpow.pop %v2173
    %v2175 = vmul.f32 %v2114, 1.442695
    %v2176 = vpow.pop %v2175
    %v2177 = vmul.f32 %v2115, 1.442695
    %v2178 = vpow.pop %v2177
    %v2179 = vmul.f32 %v2116, 1.442695
    %v2180 = vpow.pop %v2179
    %v2181 = vadd.f32 %v2118, 1.0
    %v2182 = vadd.f32 %v2120, 1.0
    %v2183 = vadd.f32 %v2122, 1.0
    %v2184 = vadd.f32 %v2124, 1.0
    %v2185 = vadd.f32 %v2126, 1.0
    %v2186 = vadd.f32 %v2128, 1.0
    %v2187 = vadd.f32 %v2130, 1.0
    %v2188 = vadd.f32 %v2132, 1.0
    %v2189 = vadd.f32 %v2134, 1.0
    %v2190 = vadd.f32 %v2136, 1.0
    %v2191 = vadd.f32 %v2138, 1.0
    %v2192 = vadd.f32 %v2140, 1.0
    %v2193 = vadd.f32 %v2142, 1.0
    %v2194 = vadd.f32 %v2144, 1.0
    %v2195 = vadd.f32 %v2146, 1.0
    %v2196 = vadd.f32 %v2148, 1.0
    %v2197 = vadd.f32 %v2150, 1.0
    %v2198 = vadd.f32 %v2152, 1.0
    %v2199 = vadd.f32 %v2154, 1.0
    %v2200 = vadd.f32 %v2156, 1.0
    %v2201 = vadd.f32 %v2158, 1.0
    %v2202 = vadd.f32 %v2160, 1.0
    %v2203 = vadd.f32 %v2162, 1.0
    %v2204 = vadd.f32 %v2164, 1.0
    %v2205 = vadd.f32 %v2166, 1.0
    %v2206 = vadd.f32 %v2168, 1.0
    %v2207 = vadd.f32 %v2170, 1.0
    %v2208 = vadd.f32 %v2172, 1.0
    %v2209 = vadd.f32 %v2174, 1.0
    %v2210 = vadd.f32 %v2176, 1.0
    %v2211 = vadd.f32 %v2178, 1.0
    %v2212 = vadd.f32 %v2180, 1.0
    %v2213 = vrcp.pop %v2181
    %v2214 = vmul.f32 1.0, %v2213
    %v2215 = vrcp.pop %v2182
    %v2216 = vmul.f32 1.0, %v2215
    %v2217 = vrcp.pop %v2183
    %v2218 = vmul.f32 1.0, %v2217
    %v2219 = vrcp.pop %v2184
    %v2220 = vmul.f32 1.0, %v2219
    %v2221 = vrcp.pop %v2185
    %v2222 = vmul.f32 1.0, %v2221
    %v2223 = vrcp.pop %v2186
    %v2224 = vmul.f32 1.0, %v2223
    %v2225 = vrcp.pop %v2187
    %v2226 = vmul.f32 1.0, %v2225
    %v2227 = vrcp.pop %v2188
    %v2228 = vmul.f32 1.0, %v2227
    %v2229 = vrcp.pop %v2189
    %v2230 = vmul.f32 1.0, %v2229
    %v2231 = vrcp.pop %v2190
    %v2232 = vmul.f32 1.0, %v2231
    %v2233 = vrcp.pop %v2191
    %v2234 = vmul.f32 1.0, %v2233
    %v2235 = vrcp.pop %v2192
    %v2236 = vmul.f32 1.0, %v2235
    %v2237 = vrcp.pop %v2193
    %v2238 = vmul.f32 1.0, %v2237
    %v2239 = vrcp.pop %v2194
    %v2240 = vmul.f32 1.0, %v2239
    %v2241 = vrcp.pop %v2195
    %v2242 = vmul.f32 1.0, %v2241
    %v2243 = vrcp.pop %v2196
    %v2244 = vmul.f32 1.0, %v2243
    %v2245 = vrcp.pop %v2197
    %v2246 = vmul.f32 1.0, %v2245
    %v2247 = vrcp.pop %v2198
    %v2248 = vmul.f32 1.0, %v2247
    %v2249 = vrcp.pop %v2199
    %v2250 = vmul.f32 1.0, %v2249
    %v2251 = vrcp.pop %v2200
    %v2252 = vmul.f32 1.0, %v2251
    %v2253 = vrcp.pop %v2201
    %v2254 = vmul.f32 1.0, %v2253
    %v2255 = vrcp.pop %v2202
    %v2256 = vmul.f32 1.0, %v2255
    %v2257 = vrcp.pop %v2203
    %v2258 = vmul.f32 1.0, %v2257
    %v2259 = vrcp.pop %v2204
    %v2260 = vmul.f32 1.0, %v2259
    %v2261 = vrcp.pop %v2205
    %v2262 = vmul.f32 1.0, %v2261
    %v2263 = vrcp.pop %v2206
    %v2264 = vmul.f32 1.0, %v2263
    %v2265 = vrcp.pop %v2207
    %v2266 = vmul.f32 1.0, %v2265
    %v2267 = vrcp.pop %v2208
    %v2268 = vmul.f32 1.0, %v2267
    %v2269 = vrcp.pop %v2209
    %v2270 = vmul.f32 1.0, %v2269
    %v2271 = vrcp.pop %v2210
    %v2272 = vmul.f32 1.0, %v2271
    %v2273 = vrcp.pop %v2211
    %v2274 = vmul.f32 1.0, %v2273
    %v2275 = vrcp.pop %v2212
    %v2276 = vmul.f32 1.0, %v2275
    %v2277 = vmul.f32 %v2053, %v2214
    %v2278 = vmul.f32 %v2054, %v2216
    %v2279 = vmul.f32 %v2055, %v2218
    %v2280 = vmul.f32 %v2056, %v2220
    %v2281 = vmul.f32 %v2057, %v2222
    %v2282 = vmul.f32 %v2058, %v2224
    %v2283 = vmul.f32 %v2059, %v2226
    %v2284 = vmul.f32 %v2060, %v2228
    %v2285 = vmul.f32 %v2061, %v2230
    %v2286 = vmul.f32 %v2062, %v2232
    %v2287 = vmul.f32 %v2063, %v2234
    %v2288 = vmul.f32 %v2064, %v2236
    %v2289 = vmul.f32 %v2065, %v2238
    %v2290 = vmul.f32 %v2066, %v2240
    %v2291 = vmul.f32 %v2067, %v2242
    %v2292 = vmul.f32 %v2068, %v2244
    %v2293 = vmul.f32 %v2069, %v2246
    %v2294 = vmul.f32 %v2070, %v2248
    %v2295 = vmul.f32 %v2071, %v2250
    %v2296 = vmul.f32 %v2072, %v2252
    %v2297 = vmul.f32 %v2073, %v2254
    %v2298 = vmul.f32 %v2074, %v2256
    %v2299 = vmul.f32 %v2075, %v2258
    %v2300 = vmul.f32 %v2076, %v2260
    %v2301 = vmul.f32 %v2077, %v2262
    %v2302 = vmul.f32 %v2078, %v2264
    %v2303 = vmul.f32 %v2079, %v2266
    %v2304 = vmul.f32 %v2080, %v2268
    %v2305 = vmul.f32 %v2081, %v2270
    %v2306 = vmul.f32 %v2082, %v2272
    %v2307 = vmul.f32 %v2083, %v2274
    %v2308 = vmul.f32 %v2084, %v2276
    %v2313 = vcombine.low %v2277, %v2278
    %v2314 = vcombine.low %v2279, %v2280
    %v2316 = vunpack.c.l.s4 1966171168
    %v2317 = vunpack.c.0.s8 %v2316
    %v2318 = vlaneseq
    %v2319 = vshrl.u32 %v2318, 7
    %v2320 = vsub.s32 %v2317, %v2319
    %v2321 = vrot.slane %v2313, %v2320
    %v2323 = vunpack.c.l.s4 1966171168
    %v2324 = vunpack.c.0.s8 %v2323
    %v2325 = vlaneseq
    %v2326 = vshrl.u32 %v2325, 7
    %v2327 = vsub.s32 %v2324, %v2326
    %v2328 = vrot.slane %v2314, %v2327
    %v2329 = vcombine.low %v2321, %v2328
    %v2330 = vcombine.high %v2321, %v2328
    %v2332 = vunpack.c.l.s4 1966171168
    %v2333 = vunpack.c.0.s8 %v2332
    %v2334 = vlaneseq
    %v2335 = vshrl.u32 %v2334, 7
    %v2336 = vsub.s32 %v2333, %v2335
    %v2337 = vrot.slane %v2329, %v2336
    %v2339 = vunpack.c.l.s4 1966171168
    %v2340 = vunpack.c.0.s8 %v2339
    %v2341 = vlaneseq
    %v2342 = vshrl.u32 %v2341, 7
    %v2343 = vsub.s32 %v2340, %v2342
    %v2344 = vrot.slane %v2330, %v2343
    %v2347 = vlaneseq
    %vm2348 = vcmp.ge.s32.totalorder %v2347, 0
    %vm2349 = vcmp.lt.s32.totalorder %v2347, 512
    %vm2350 = vmand %vm2348, %vm2349
    %2351 = vst.msk [vmem:[#allocation2] ss:$8 sm:$0xf] %vm2350, %v2337
    %2352 = vst.msk [vmem:[#allocation2] ss:$8 sm:$0x0] %vm2350, %v2337
    %s2353 = scalar_lea.vmem [#allocation2], 32
    %2354 = vst.msk [vmem:[%s2353] ss:$8 sm:$0xf] %vm2350, %v2344
    %2355 = vst.msk [vmem:[%s2353] ss:$8 sm:$0x0] %vm2350, %v2344
    %v2360 = vcombine.low %v2281, %v2282
    %v2361 = vcombine.low %v2283, %v2284
    %v2363 = vunpack.c.l.s4 1966171168
    %v2364 = vunpack.c.0.s8 %v2363
    %v2365 = vlaneseq
    %v2366 = vshrl.u32 %v2365, 7
    %v2367 = vsub.s32 %v2364, %v2366
    %v2368 = vrot.slane %v2360, %v2367
    %v2370 = vunpack.c.l.s4 1966171168
    %v2371 = vunpack.c.0.s8 %v2370
    %v2372 = vlaneseq
    %v2373 = vshrl.u32 %v2372, 7
    %v2374 = vsub.s32 %v2371, %v2373
    %v2375 = vrot.slane %v2361, %v2374
    %v2376 = vcombine.low %v2368, %v2375
    %v2377 = vcombine.high %v2368, %v2375
    %v2379 = vunpack.c.l.s4 1966171168
    %v2380 = vunpack.c.0.s8 %v2379
    %v2381 = vlaneseq
    %v2382 = vshrl.u32 %v2381, 7
    %v2383 = vsub.s32 %v2380, %v2382
    %v2384 = vrot.slane %v2376, %v2383
    %v2386 = vunpack.c.l.s4 1966171168
    %v2387 = vunpack.c.0.s8 %v2386
    %v2388 = vlaneseq
    %v2389 = vshrl.u32 %v2388, 7
    %v2390 = vsub.s32 %v2387, %v2389
    %v2391 = vrot.slane %v2377, %v2390
    %s2394 = scalar_lea.vmem [#allocation2], 1
    %2395 = vst.msk [vmem:[%s2394] ss:$8 sm:$0xf] %vm2350, %v2384
    %2396 = vst.msk [vmem:[%s2394] ss:$8 sm:$0x0] %vm2350, %v2384
    %s2397 = scalar_lea.vmem [#allocation2], 33
    %2398 = vst.msk [vmem:[%s2397] ss:$8 sm:$0xf] %vm2350, %v2391
    %2399 = vst.msk [vmem:[%s2397] ss:$8 sm:$0x0] %vm2350, %v2391
    %v2404 = vcombine.low %v2285, %v2286
    %v2405 = vcombine.low %v2287, %v2288
    %v2407 = vunpack.c.l.s4 1966171168
    %v2408 = vunpack.c.0.s8 %v2407
    %v2409 = vlaneseq
    %v2410 = vshrl.u32 %v2409, 7
    %v2411 = vsub.s32 %v2408, %v2410
    %v2412 = vrot.slane %v2404, %v2411
    %v2414 = vunpack.c.l.s4 1966171168
    %v2415 = vunpack.c.0.s8 %v2414
    %v2416 = vlaneseq
    %v2417 = vshrl.u32 %v2416, 7
    %v2418 = vsub.s32 %v2415, %v2417
    %v2419 = vrot.slane %v2405, %v2418
    %v2420 = vcombine.low %v2412, %v2419
    %v2421 = vcombine.high %v2412, %v2419
    %v2423 = vunpack.c.l.s4 1966171168
    %v2424 = vunpack.c.0.s8 %v2423
    %v2425 = vlaneseq
    %v2426 = vshrl.u32 %v2425, 7
    %v2427 = vsub.s32 %v2424, %v2426
    %v2428 = vrot.slane %v2420, %v2427
    %v2430 = vunpack.c.l.s4 1966171168
    %v2431 = vunpack.c.0.s8 %v2430
    %v2432 = vlaneseq
    %v2433 = vshrl.u32 %v2432, 7
    %v2434 = vsub.s32 %v2431, %v2433
    %v2435 = vrot.slane %v2421, %v2434
    %s2438 = scalar_lea.vmem [#allocation2], 2
    %2439 = vst.msk [vmem:[%s2438] ss:$8 sm:$0xf] %vm2350, %v2428
    %2440 = vst.msk [vmem:[%s2438] ss:$8 sm:$0x0] %vm2350, %v2428
    %s2441 = scalar_lea.vmem [#allocation2], 34
    %2442 = vst.msk [vmem:[%s2441] ss:$8 sm:$0xf] %vm2350, %v2435
    %2443 = vst.msk [vmem:[%s2441] ss:$8 sm:$0x0] %vm2350, %v2435
    %v2448 = vcombine.low %v2289, %v2290
    %v2449 = vcombine.low %v2291, %v2292
    %v2451 = vunpack.c.l.s4 1966171168
    %v2452 = vunpack.c.0.s8 %v2451
    %v2453 = vlaneseq
    %v2454 = vshrl.u32 %v2453, 7
    %v2455 = vsub.s32 %v2452, %v2454
    %v2456 = vrot.slane %v2448, %v2455
    %v2458 = vunpack.c.l.s4 1966171168
    %v2459 = vunpack.c.0.s8 %v2458
    %v2460 = vlaneseq
    %v2461 = vshrl.u32 %v2460, 7
    %v2462 = vsub.s32 %v2459, %v2461
    %v2463 = vrot.slane %v2449, %v2462
    %v2464 = vcombine.low %v2456, %v2463
    %v2465 = vcombine.high %v2456, %v2463
    %v2467 = vunpack.c.l.s4 1966171168
    %v2468 = vunpack.c.0.s8 %v2467
    %v2469 = vlaneseq
    %v2470 = vshrl.u32 %v2469, 7
    %v2471 = vsub.s32 %v2468, %v2470
    %v2472 = vrot.slane %v2464, %v2471
    %v2474 = vunpack.c.l.s4 1966171168
    %v2475 = vunpack.c.0.s8 %v2474
    %v2476 = vlaneseq
    %v2477 = vshrl.u32 %v2476, 7
    %v2478 = vsub.s32 %v2475, %v2477
    %v2479 = vrot.slane %v2465, %v2478
    %s2482 = scalar_lea.vmem [#allocation2], 3
    %2483 = vst.msk [vmem:[%s2482] ss:$8 sm:$0xf] %vm2350, %v2472
    %2484 = vst.msk [vmem:[%s2482] ss:$8 sm:$0x0] %vm2350, %v2472
    %s2485 = scalar_lea.vmem [#allocation2], 35
    %2486 = vst.msk [vmem:[%s2485] ss:$8 sm:$0xf] %vm2350, %v2479
    %2487 = vst.msk [vmem:[%s2485] ss:$8 sm:$0x0] %vm2350, %v2479
    %v2492 = vcombine.low %v2293, %v2294
    %v2493 = vcombine.low %v2295, %v2296
    %v2495 = vunpack.c.l.s4 1966171168
    %v2496 = vunpack.c.0.s8 %v2495
    %v2497 = vlaneseq
    %v2498 = vshrl.u32 %v2497, 7
    %v2499 = vsub.s32 %v2496, %v2498
    %v2500 = vrot.slane %v2492, %v2499
    %v2502 = vunpack.c.l.s4 1966171168
    %v2503 = vunpack.c.0.s8 %v2502
    %v2504 = vlaneseq
    %v2505 = vshrl.u32 %v2504, 7
    %v2506 = vsub.s32 %v2503, %v2505
    %v2507 = vrot.slane %v2493, %v2506
    %v2508 = vcombine.low %v2500, %v2507
    %v2509 = vcombine.high %v2500, %v2507
    %v2511 = vunpack.c.l.s4 1966171168
    %v2512 = vunpack.c.0.s8 %v2511
    %v2513 = vlaneseq
    %v2514 = vshrl.u32 %v2513, 7
    %v2515 = vsub.s32 %v2512, %v2514
    %v2516 = vrot.slane %v2508, %v2515
    %v2518 = vunpack.c.l.s4 1966171168
    %v2519 = vunpack.c.0.s8 %v2518
    %v2520 = vlaneseq
    %v2521 = vshrl.u32 %v2520, 7
    %v2522 = vsub.s32 %v2519, %v2521
    %v2523 = vrot.slane %v2509, %v2522
    %s2526 = scalar_lea.vmem [#allocation2], 4
    %2527 = vst.msk [vmem:[%s2526] ss:$8 sm:$0xf] %vm2350, %v2516
    %2528 = vst.msk [vmem:[%s2526] ss:$8 sm:$0x0] %vm2350, %v2516
    %s2529 = scalar_lea.vmem [#allocation2], 36
    %2530 = vst.msk [vmem:[%s2529] ss:$8 sm:$0xf] %vm2350, %v2523
    %2531 = vst.msk [vmem:[%s2529] ss:$8 sm:$0x0] %vm2350, %v2523
    %v2536 = vcombine.low %v2297, %v2298
    %v2537 = vcombine.low %v2299, %v2300
    %v2539 = vunpack.c.l.s4 1966171168
    %v2540 = vunpack.c.0.s8 %v2539
    %v2541 = vlaneseq
    %v2542 = vshrl.u32 %v2541, 7
    %v2543 = vsub.s32 %v2540, %v2542
    %v2544 = vrot.slane %v2536, %v2543
    %v2546 = vunpack.c.l.s4 1966171168
    %v2547 = vunpack.c.0.s8 %v2546
    %v2548 = vlaneseq
    %v2549 = vshrl.u32 %v2548, 7
    %v2550 = vsub.s32 %v2547, %v2549
    %v2551 = vrot.slane %v2537, %v2550
    %v2552 = vcombine.low %v2544, %v2551
    %v2553 = vcombine.high %v2544, %v2551
    %v2555 = vunpack.c.l.s4 1966171168
    %v2556 = vunpack.c.0.s8 %v2555
    %v2557 = vlaneseq
    %v2558 = vshrl.u32 %v2557, 7
    %v2559 = vsub.s32 %v2556, %v2558
    %v2560 = vrot.slane %v2552, %v2559
    %v2562 = vunpack.c.l.s4 1966171168
    %v2563 = vunpack.c.0.s8 %v2562
    %v2564 = vlaneseq
    %v2565 = vshrl.u32 %v2564, 7
    %v2566 = vsub.s32 %v2563, %v2565
    %v2567 = vrot.slane %v2553, %v2566
    %s2570 = scalar_lea.vmem [#allocation2], 5
    %2571 = vst.msk [vmem:[%s2570] ss:$8 sm:$0xf] %vm2350, %v2560
    %2572 = vst.msk [vmem:[%s2570] ss:$8 sm:$0x0] %vm2350, %v2560
    %s2573 = scalar_lea.vmem [#allocation2], 37
    %2574 = vst.msk [vmem:[%s2573] ss:$8 sm:$0xf] %vm2350, %v2567
    %2575 = vst.msk [vmem:[%s2573] ss:$8 sm:$0x0] %vm2350, %v2567
    %v2580 = vcombine.low %v2301, %v2302
    %v2581 = vcombine.low %v2303, %v2304
    %v2583 = vunpack.c.l.s4 1966171168
    %v2584 = vunpack.c.0.s8 %v2583
    %v2585 = vlaneseq
    %v2586 = vshrl.u32 %v2585, 7
    %v2587 = vsub.s32 %v2584, %v2586
    %v2588 = vrot.slane %v2580, %v2587
    %v2590 = vunpack.c.l.s4 1966171168
    %v2591 = vunpack.c.0.s8 %v2590
    %v2592 = vlaneseq
    %v2593 = vshrl.u32 %v2592, 7
    %v2594 = vsub.s32 %v2591, %v2593
    %v2595 = vrot.slane %v2581, %v2594
    %v2596 = vcombine.low %v2588, %v2595
    %v2597 = vcombine.high %v2588, %v2595
    %v2599 = vunpack.c.l.s4 1966171168
    %v2600 = vunpack.c.0.s8 %v2599
    %v2601 = vlaneseq
    %v2602 = vshrl.u32 %v2601, 7
    %v2603 = vsub.s32 %v2600, %v2602
    %v2604 = vrot.slane %v2596, %v2603
    %v2606 = vunpack.c.l.s4 1966171168
    %v2607 = vunpack.c.0.s8 %v2606
    %v2608 = vlaneseq
    %v2609 = vshrl.u32 %v2608, 7
    %v2610 = vsub.s32 %v2607, %v2609
    %v2611 = vrot.slane %v2597, %v2610
    %s2614 = scalar_lea.vmem [#allocation2], 6
    %2615 = vst.msk [vmem:[%s2614] ss:$8 sm:$0xf] %vm2350, %v2604
    %2616 = vst.msk [vmem:[%s2614] ss:$8 sm:$0x0] %vm2350, %v2604
    %s2617 = scalar_lea.vmem [#allocation2], 38
    %2618 = vst.msk [vmem:[%s2617] ss:$8 sm:$0xf] %vm2350, %v2611
    %2619 = vst.msk [vmem:[%s2617] ss:$8 sm:$0x0] %vm2350, %v2611
    %v2624 = vcombine.low %v2305, %v2306
    %v2625 = vcombine.low %v2307, %v2308
    %v2627 = vunpack.c.l.s4 1966171168
    %v2628 = vunpack.c.0.s8 %v2627
    %v2629 = vlaneseq
    %v2630 = vshrl.u32 %v2629, 7
    %v2631 = vsub.s32 %v2628, %v2630
    %v2632 = vrot.slane %v2624, %v2631
    %v2634 = vunpack.c.l.s4 1966171168
    %v2635 = vunpack.c.0.s8 %v2634
    %v2636 = vlaneseq
    %v2637 = vshrl.u32 %v2636, 7
    %v2638 = vsub.s32 %v2635, %v2637
    %v2639 = vrot.slane %v2625, %v2638
    %v2640 = vcombine.low %v2632, %v2639
    %v2641 = vcombine.high %v2632, %v2639
    %v2643 = vunpack.c.l.s4 1966171168
    %v2644 = vunpack.c.0.s8 %v2643
    %v2645 = vlaneseq
    %v2646 = vshrl.u32 %v2645, 7
    %v2647 = vsub.s32 %v2644, %v2646
    %v2648 = vrot.slane %v2640, %v2647
    %v2650 = vunpack.c.l.s4 1966171168
    %v2651 = vunpack.c.0.s8 %v2650
    %v2652 = vlaneseq
    %v2653 = vshrl.u32 %v2652, 7
    %v2654 = vsub.s32 %v2651, %v2653
    %v2655 = vrot.slane %v2641, %v2654
    %s2658 = scalar_lea.vmem [#allocation2], 7
    %2659 = vst.msk [vmem:[%s2658] ss:$8 sm:$0xf] %vm2350, %v2648
    %2660 = vst.msk [vmem:[%s2658] ss:$8 sm:$0x0] %vm2350, %v2648
    %s2661 = scalar_lea.vmem [#allocation2], 39
    %2662 = vst.msk [vmem:[%s2661] ss:$8 sm:$0xf] %vm2350, %v2655
    %2663 = vst.msk [vmem:[%s2661] ss:$8 sm:$0x0] %vm2350, %v2655
    %v2664 = vld [vmem:[#allocation2] sm:$0xff]
    %v2665 = vld [vmem:[#allocation2 + $0x8] sm:$0xff]
    %v2666 = vld [vmem:[#allocation2 + $0x10] sm:$0xff]
    %v2667 = vld [vmem:[#allocation2 + $0x18] sm:$0xff]
    %v2668 = vld [vmem:[#allocation2 + $0x20] sm:$0xff]
    %v2669 = vld [vmem:[#allocation2 + $0x28] sm:$0xff]
    %v2670 = vld [vmem:[#allocation2 + $0x30] sm:$0xff]
    %v2671 = vld [vmem:[#allocation2 + $0x38] sm:$0xff]
    %v2672 = vlaneseq
    %v2673 = vshrl.u32 %v2672, 7
    %v2674 = vadd.s32 %v2673, 8
    %v2675 = vand.u32 %v2673, 7
    %v2676 = vand.u32 %v2674, 7
    %vm2677 = vcmp.ge.s32.totalorder %v2675, 1
    %vm2678 = vcmp.ge.s32.totalorder %v2676, 1
    %v2679 = vrot.slane %v2664, 7
    %v2680 = vrot.slane %v2665, 7
    %v2681 = vrot.slane %v2666, 7
    %v2682 = vrot.slane %v2667, 7
    %v2683 = vrot.slane %v2668, 7
    %v2684 = vrot.slane %v2669, 7
    %v2685 = vrot.slane %v2670, 7
    %v2686 = vrot.slane %v2671, 7
    %vm2687 = vcmp.lt.s32.totalorder %v2673, 1
    %v2688 = vsel %vm2687, %v2679, %v2683
    %v2689 = vsel %vm2687, %v2680, %v2684
    %v2690 = vsel %vm2687, %v2681, %v2685
    %v2691 = vsel %vm2687, %v2682, %v2686
    %v2692 = vsel %vm2687, %v2683, %v2679
    %v2693 = vsel %vm2687, %v2684, %v2680
    %v2694 = vsel %vm2687, %v2685, %v2681
    %v2695 = vsel %vm2687, %v2686, %v2682
    %v2696 = vsel %vm2677, %v2692, 0.0
    %v2697 = vsel %vm2677, %v2693, 0.0
    %v2698 = vsel %vm2677, %v2694, 0.0
    %v2699 = vsel %vm2677, %v2695, 0.0
    %v2700 = vsel %vm2678, %v2688, 0.0
    %v2701 = vsel %vm2678, %v2689, 0.0
    %v2702 = vsel %vm2678, %v2690, 0.0
    %v2703 = vsel %vm2678, %v2691, 0.0
    %vm2704 = vcmp.lt.s32.totalorder %v2675, 7
    %vm2705 = vcmp.lt.s32.totalorder %v2676, 7
    %v2706 = vrot.slane %v2664, 1
    %v2707 = vrot.slane %v2665, 1
    %v2708 = vrot.slane %v2666, 1
    %v2709 = vrot.slane %v2667, 1
    %v2710 = vrot.slane %v2668, 1
    %v2711 = vrot.slane %v2669, 1
    %v2712 = vrot.slane %v2670, 1
    %v2713 = vrot.slane %v2671, 1
    %vm2714 = vcmp.lt.s32.totalorder %v2673, 7
    %v2715 = vsel %vm2714, %v2706, %v2710
    %v2716 = vsel %vm2714, %v2707, %v2711
    %v2717 = vsel %vm2714, %v2708, %v2712
    %v2718 = vsel %vm2714, %v2709, %v2713
    %v2719 = vsel %vm2714, %v2710, %v2706
    %v2720 = vsel %vm2714, %v2711, %v2707
    %v2721 = vsel %vm2714, %v2712, %v2708
    %v2722 = vsel %vm2714, %v2713, %v2709
    %v2723 = vsel %vm2704, %v2715, 0.0
    %v2724 = vsel %vm2704, %v2716, 0.0
    %v2725 = vsel %vm2704, %v2717, 0.0
    %v2726 = vsel %vm2704, %v2718, 0.0
    %v2727 = vsel %vm2705, %v2719, 0.0
    %v2728 = vsel %vm2705, %v2720, 0.0
    %v2729 = vsel %vm2705, %v2721, 0.0
    %v2730 = vsel %vm2705, %v2722, 0.0
    %v2731 = vpack.c.bf16 %v2700, %v2696
    %v2732 = vpack.c.bf16 %v2701, %v2697
    %v2733 = vpack.c.bf16 %v2702, %v2698
    %v2734 = vpack.c.bf16 %v2703, %v2699
    %v2735 = vpack.c.bf16 %v2668, %v2664
    %v2736 = vpack.c.bf16 %v2669, %v2665
    %v2737 = vpack.c.bf16 %v2670, %v2666
    %v2738 = vpack.c.bf16 %v2671, %v2667
    %v2739 = vpack.c.bf16 %v2727, %v2723
    %v2740 = vpack.c.bf16 %v2728, %v2724
    %v2741 = vpack.c.bf16 %v2729, %v2725
    %v2742 = vpack.c.bf16 %v2730, %v2726
    %v2743 = vld [vmem:[#allocation8] sm:$0xff]
    %v2744 = vld [vmem:[#allocation8 + $0x8] sm:$0xff]
    %v2745 = vld [vmem:[#allocation8 + $0x10] sm:$0xff]
    %v2746 = vld [vmem:[#allocation8 + $0x18] sm:$0xff]
    %v2747 = vld [vmem:[#allocation8 + $0x20] sm:$0xff]
    %v2748 = vld [vmem:[#allocation8 + $0x28] sm:$0xff]
    %v2749 = vld [vmem:[#allocation8 + $0x30] sm:$0xff]
    %v2750 = vld [vmem:[#allocation8 + $0x38] sm:$0xff]
    %v2751 = vld [vmem:[#allocation8 + $0x40] sm:$0xff]
    %v2752 = vld [vmem:[#allocation8 + $0x48] sm:$0xff]
    %v2753 = vld [vmem:[#allocation8 + $0x50] sm:$0xff]
    %v2754 = vld [vmem:[#allocation8 + $0x58] sm:$0xff]
    %v2755 = vld [vmem:[#allocation8 + $0x60] sm:$0xff]
    %v2756 = vld [vmem:[#allocation8 + $0x68] sm:$0xff]
    %v2757 = vld [vmem:[#allocation8 + $0x70] sm:$0xff]
    %v2758 = vld [vmem:[#allocation8 + $0x78] sm:$0xff]
    %v2759 = vld [vmem:[#allocation8 + $0x80] sm:$0xff]
    %v2760 = vld [vmem:[#allocation8 + $0x88] sm:$0xff]
    %v2761 = vld [vmem:[#allocation8 + $0x90] sm:$0xff]
    %v2762 = vld [vmem:[#allocation8 + $0x98] sm:$0xff]
    %v2763 = vld [vmem:[#allocation8 + $0xa0] sm:$0xff]
    %v2764 = vld [vmem:[#allocation8 + $0xa8] sm:$0xff]
    %v2765 = vld [vmem:[#allocation8 + $0xb0] sm:$0xff]
    %v2766 = vld [vmem:[#allocation8 + $0xb8] sm:$0xff]
    %v2767 = vld [vmem:[#allocation8 + $0xc0] sm:$0xff]
    %v2768 = vld [vmem:[#allocation8 + $0xc8] sm:$0xff]
    %v2769 = vld [vmem:[#allocation8 + $0xd0] sm:$0xff]
    %v2770 = vld [vmem:[#allocation8 + $0xd8] sm:$0xff]
    %v2771 = vld [vmem:[#allocation8 + $0xe0] sm:$0xff]
    %v2772 = vld [vmem:[#allocation8 + $0xe8] sm:$0xff]
    %v2773 = vld [vmem:[#allocation8 + $0xf0] sm:$0xff]
    %v2774 = vld [vmem:[#allocation8 + $0xf8] sm:$0xff]
    %v2775 = vld [vmem:[#allocation8 + $0x100] sm:$0xff]
    %v2776 = vld [vmem:[#allocation8 + $0x108] sm:$0xff]
    %v2777 = vld [vmem:[#allocation8 + $0x110] sm:$0xff]
    %v2778 = vld [vmem:[#allocation8 + $0x118] sm:$0xff]
    %v2779 = vld [vmem:[#allocation8 + $0x120] sm:$0xff]
    %v2780 = vld [vmem:[#allocation8 + $0x128] sm:$0xff]
    %v2781 = vld [vmem:[#allocation8 + $0x130] sm:$0xff]
    %v2782 = vld [vmem:[#allocation8 + $0x138] sm:$0xff]
    %v2783 = vld [vmem:[#allocation8 + $0x140] sm:$0xff]
    %v2784 = vld [vmem:[#allocation8 + $0x148] sm:$0xff]
    %v2785 = vld [vmem:[#allocation8 + $0x150] sm:$0xff]
    %v2786 = vld [vmem:[#allocation8 + $0x158] sm:$0xff]
    %v2787 = vld [vmem:[#allocation8 + $0x160] sm:$0xff]
    %v2788 = vld [vmem:[#allocation8 + $0x168] sm:$0xff]
    %v2789 = vld [vmem:[#allocation8 + $0x170] sm:$0xff]
    %v2790 = vld [vmem:[#allocation8 + $0x178] sm:$0xff]
    %v2791 = vld [vmem:[#allocation8 + $0x180] sm:$0xff]
    %v2792 = vld [vmem:[#allocation8 + $0x188] sm:$0xff]
    %v2793 = vld [vmem:[#allocation8 + $0x190] sm:$0xff]
    %v2794 = vld [vmem:[#allocation8 + $0x198] sm:$0xff]
    %v2795 = vld [vmem:[#allocation8 + $0x1a0] sm:$0xff]
    %v2796 = vld [vmem:[#allocation8 + $0x1a8] sm:$0xff]
    %v2797 = vld [vmem:[#allocation8 + $0x1b0] sm:$0xff]
    %v2798 = vld [vmem:[#allocation8 + $0x1b8] sm:$0xff]
    %v2799 = vld [vmem:[#allocation8 + $0x1c0] sm:$0xff]
    %v2800 = vld [vmem:[#allocation8 + $0x1c8] sm:$0xff]
    %v2801 = vld [vmem:[#allocation8 + $0x1d0] sm:$0xff]
    %v2802 = vld [vmem:[#allocation8 + $0x1d8] sm:$0xff]
    %v2803 = vld [vmem:[#allocation8 + $0x1e0] sm:$0xff]
    %v2804 = vld [vmem:[#allocation8 + $0x1e8] sm:$0xff]
    %v2805 = vld [vmem:[#allocation8 + $0x1f0] sm:$0xff]
    %v2806 = vld [vmem:[#allocation8 + $0x1f8] sm:$0xff]
    %v2807 = vld [vmem:[#allocation8 + $0x200] sm:$0xff]
    %v2808 = vld [vmem:[#allocation8 + $0x208] sm:$0xff]
    %v2809 = vld [vmem:[#allocation8 + $0x210] sm:$0xff]
    %v2810 = vld [vmem:[#allocation8 + $0x218] sm:$0xff]
    %v2811 = vld [vmem:[#allocation8 + $0x220] sm:$0xff]
    %v2812 = vld [vmem:[#allocation8 + $0x228] sm:$0xff]
    %v2813 = vld [vmem:[#allocation8 + $0x230] sm:$0xff]
    %v2814 = vld [vmem:[#allocation8 + $0x238] sm:$0xff]
    %v2815 = vld [vmem:[#allocation8 + $0x240] sm:$0xff]
    %v2816 = vld [vmem:[#allocation8 + $0x248] sm:$0xff]
    %v2817 = vld [vmem:[#allocation8 + $0x250] sm:$0xff]
    %v2818 = vld [vmem:[#allocation8 + $0x258] sm:$0xff]
    %v2819 = vld [vmem:[#allocation8 + $0x260] sm:$0xff]
    %v2820 = vld [vmem:[#allocation8 + $0x268] sm:$0xff]
    %v2821 = vld [vmem:[#allocation8 + $0x270] sm:$0xff]
    %v2822 = vld [vmem:[#allocation8 + $0x278] sm:$0xff]
    %v2823 = vld [vmem:[#allocation8 + $0x280] sm:$0xff]
    %v2824 = vld [vmem:[#allocation8 + $0x288] sm:$0xff]
    %v2825 = vld [vmem:[#allocation8 + $0x290] sm:$0xff]
    %v2826 = vld [vmem:[#allocation8 + $0x298] sm:$0xff]
    %v2827 = vld [vmem:[#allocation8 + $0x2a0] sm:$0xff]
    %v2828 = vld [vmem:[#allocation8 + $0x2a8] sm:$0xff]
    %v2829 = vld [vmem:[#allocation8 + $0x2b0] sm:$0xff]
    %v2830 = vld [vmem:[#allocation8 + $0x2b8] sm:$0xff]
    %v2831 = vld [vmem:[#allocation8 + $0x2c0] sm:$0xff]
    %v2832 = vld [vmem:[#allocation8 + $0x2c8] sm:$0xff]
    %v2833 = vld [vmem:[#allocation8 + $0x2d0] sm:$0xff]
    %v2834 = vld [vmem:[#allocation8 + $0x2d8] sm:$0xff]
    %v2835 = vld [vmem:[#allocation8 + $0x2e0] sm:$0xff]
    %v2836 = vld [vmem:[#allocation8 + $0x2e8] sm:$0xff]
    %v2837 = vld [vmem:[#allocation8 + $0x2f0] sm:$0xff]
    %v2838 = vld [vmem:[#allocation8 + $0x2f8] sm:$0xff]
    %v2839 = vld [vmem:[#allocation8 + $0x300] sm:$0xff]
    %v2840 = vld [vmem:[#allocation8 + $0x308] sm:$0xff]
    %v2841 = vld [vmem:[#allocation8 + $0x310] sm:$0xff]
    %v2842 = vld [vmem:[#allocation8 + $0x318] sm:$0xff]
    %v2843 = vld [vmem:[#allocation8 + $0x320] sm:$0xff]
    %v2844 = vld [vmem:[#allocation8 + $0x328] sm:$0xff]
    %v2845 = vld [vmem:[#allocation8 + $0x330] sm:$0xff]
    %v2846 = vld [vmem:[#allocation8 + $0x338] sm:$0xff]
    %v2847 = vld [vmem:[#allocation8 + $0x340] sm:$0xff]
    %v2848 = vld [vmem:[#allocation8 + $0x348] sm:$0xff]
    %v2849 = vld [vmem:[#allocation8 + $0x350] sm:$0xff]
    %v2850 = vld [vmem:[#allocation8 + $0x358] sm:$0xff]
    %v2851 = vld [vmem:[#allocation8 + $0x360] sm:$0xff]
    %v2852 = vld [vmem:[#allocation8 + $0x368] sm:$0xff]
    %v2853 = vld [vmem:[#allocation8 + $0x370] sm:$0xff]
    %v2854 = vld [vmem:[#allocation8 + $0x378] sm:$0xff]
    %v2855 = vld [vmem:[#allocation8 + $0x380] sm:$0xff]
    %v2856 = vld [vmem:[#allocation8 + $0x388] sm:$0xff]
    %v2857 = vld [vmem:[#allocation8 + $0x390] sm:$0xff]
    %v2858 = vld [vmem:[#allocation8 + $0x398] sm:$0xff]
    %v2859 = vld [vmem:[#allocation8 + $0x3a0] sm:$0xff]
    %v2860 = vld [vmem:[#allocation8 + $0x3a8] sm:$0xff]
    %v2861 = vld [vmem:[#allocation8 + $0x3b0] sm:$0xff]
    %v2862 = vld [vmem:[#allocation8 + $0x3b8] sm:$0xff]
    %v2863 = vld [vmem:[#allocation8 + $0x3c0] sm:$0xff]
    %v2864 = vld [vmem:[#allocation8 + $0x3c8] sm:$0xff]
    %v2865 = vld [vmem:[#allocation8 + $0x3d0] sm:$0xff]
    %v2866 = vld [vmem:[#allocation8 + $0x3d8] sm:$0xff]
    %v2867 = vld [vmem:[#allocation8 + $0x3e0] sm:$0xff]
    %v2868 = vld [vmem:[#allocation8 + $0x3e8] sm:$0xff]
    %v2869 = vld [vmem:[#allocation8 + $0x3f0] sm:$0xff]
    %v2870 = vld [vmem:[#allocation8 + $0x3f8] sm:$0xff]
    %v2871 = vld [vmem:[#allocation8 + $0x400] sm:$0xff]
    %v2872 = vld [vmem:[#allocation8 + $0x408] sm:$0xff]
    %v2873 = vld [vmem:[#allocation8 + $0x410] sm:$0xff]
    %v2874 = vld [vmem:[#allocation8 + $0x418] sm:$0xff]
    %v2875 = vld [vmem:[#allocation8 + $0x420] sm:$0xff]
    %v2876 = vld [vmem:[#allocation8 + $0x428] sm:$0xff]
    %v2877 = vld [vmem:[#allocation8 + $0x430] sm:$0xff]
    %v2878 = vld [vmem:[#allocation8 + $0x438] sm:$0xff]
    %v2879 = vld [vmem:[#allocation8 + $0x440] sm:$0xff]
    %v2880 = vld [vmem:[#allocation8 + $0x448] sm:$0xff]
    %v2881 = vld [vmem:[#allocation8 + $0x450] sm:$0xff]
    %v2882 = vld [vmem:[#allocation8 + $0x458] sm:$0xff]
    %v2883 = vld [vmem:[#allocation8 + $0x460] sm:$0xff]
    %v2884 = vld [vmem:[#allocation8 + $0x468] sm:$0xff]
    %v2885 = vld [vmem:[#allocation8 + $0x470] sm:$0xff]
    %v2886 = vld [vmem:[#allocation8 + $0x478] sm:$0xff]
    %v2887 = vld [vmem:[#allocation8 + $0x480] sm:$0xff]
    %v2888 = vld [vmem:[#allocation8 + $0x488] sm:$0xff]
    %v2889 = vld [vmem:[#allocation8 + $0x490] sm:$0xff]
    %v2890 = vld [vmem:[#allocation8 + $0x498] sm:$0xff]
    %v2891 = vld [vmem:[#allocation8 + $0x4a0] sm:$0xff]
    %v2892 = vld [vmem:[#allocation8 + $0x4a8] sm:$0xff]
    %v2893 = vld [vmem:[#allocation8 + $0x4b0] sm:$0xff]
    %v2894 = vld [vmem:[#allocation8 + $0x4b8] sm:$0xff]
    %v2895 = vld [vmem:[#allocation8 + $0x4c0] sm:$0xff]
    %v2896 = vld [vmem:[#allocation8 + $0x4c8] sm:$0xff]
    %v2897 = vld [vmem:[#allocation8 + $0x4d0] sm:$0xff]
    %v2898 = vld [vmem:[#allocation8 + $0x4d8] sm:$0xff]
    %v2899 = vld [vmem:[#allocation8 + $0x4e0] sm:$0xff]
    %v2900 = vld [vmem:[#allocation8 + $0x4e8] sm:$0xff]
    %v2901 = vld [vmem:[#allocation8 + $0x4f0] sm:$0xff]
    %v2902 = vld [vmem:[#allocation8 + $0x4f8] sm:$0xff]
    %v2903 = vld [vmem:[#allocation8 + $0x500] sm:$0xff]
    %v2904 = vld [vmem:[#allocation8 + $0x508] sm:$0xff]
    %v2905 = vld [vmem:[#allocation8 + $0x510] sm:$0xff]
    %v2906 = vld [vmem:[#allocation8 + $0x518] sm:$0xff]
    %v2907 = vld [vmem:[#allocation8 + $0x520] sm:$0xff]
    %v2908 = vld [vmem:[#allocation8 + $0x528] sm:$0xff]
    %v2909 = vld [vmem:[#allocation8 + $0x530] sm:$0xff]
    %v2910 = vld [vmem:[#allocation8 + $0x538] sm:$0xff]
    %v2911 = vld [vmem:[#allocation8 + $0x540] sm:$0xff]
    %v2912 = vld [vmem:[#allocation8 + $0x548] sm:$0xff]
    %v2913 = vld [vmem:[#allocation8 + $0x550] sm:$0xff]
    %v2914 = vld [vmem:[#allocation8 + $0x558] sm:$0xff]
    %v2915 = vld [vmem:[#allocation8 + $0x560] sm:$0xff]
    %v2916 = vld [vmem:[#allocation8 + $0x568] sm:$0xff]
    %v2917 = vld [vmem:[#allocation8 + $0x570] sm:$0xff]
    %v2918 = vld [vmem:[#allocation8 + $0x578] sm:$0xff]
    %v2919 = vld [vmem:[#allocation8 + $0x580] sm:$0xff]
    %v2920 = vld [vmem:[#allocation8 + $0x588] sm:$0xff]
    %v2921 = vld [vmem:[#allocation8 + $0x590] sm:$0xff]
    %v2922 = vld [vmem:[#allocation8 + $0x598] sm:$0xff]
    %v2923 = vld [vmem:[#allocation8 + $0x5a0] sm:$0xff]
    %v2924 = vld [vmem:[#allocation8 + $0x5a8] sm:$0xff]
    %v2925 = vld [vmem:[#allocation8 + $0x5b0] sm:$0xff]
    %v2926 = vld [vmem:[#allocation8 + $0x5b8] sm:$0xff]
    %v2927 = vld [vmem:[#allocation8 + $0x5c0] sm:$0xff]
    %v2928 = vld [vmem:[#allocation8 + $0x5c8] sm:$0xff]
    %v2929 = vld [vmem:[#allocation8 + $0x5d0] sm:$0xff]
    %v2930 = vld [vmem:[#allocation8 + $0x5d8] sm:$0xff]
    %v2931 = vld [vmem:[#allocation8 + $0x5e0] sm:$0xff]
    %v2932 = vld [vmem:[#allocation8 + $0x5e8] sm:$0xff]
    %v2933 = vld [vmem:[#allocation8 + $0x5f0] sm:$0xff]
    %v2934 = vld [vmem:[#allocation8 + $0x5f8] sm:$0xff]
    %v3127 = vunpack.c.l.b16 %v2743
    %v3128 = vunpack.c.h.b16 %v2743
    %v3129 = vunpack.c.l.b16 %v2744
    %v3130 = vunpack.c.h.b16 %v2744
    %v3131 = vunpack.c.l.b16 %v2745
    %v3132 = vunpack.c.h.b16 %v2745
    %v3133 = vunpack.c.l.b16 %v2746
    %v3134 = vunpack.c.h.b16 %v2746
    %v3135 = vunpack.c.l.b16 %v2747
    %v3136 = vunpack.c.h.b16 %v2747
    %v3137 = vunpack.c.l.b16 %v2748
    %v3138 = vunpack.c.h.b16 %v2748
    %v3139 = vunpack.c.l.b16 %v2749
    %v3140 = vunpack.c.h.b16 %v2749
    %v3141 = vunpack.c.l.b16 %v2750
    %v3142 = vunpack.c.h.b16 %v2750
    %v3143 = vunpack.c.l.b16 %v2751
    %v3144 = vunpack.c.h.b16 %v2751
    %v3145 = vunpack.c.l.b16 %v2752
    %v3146 = vunpack.c.h.b16 %v2752
    %v3147 = vunpack.c.l.b16 %v2753
    %v3148 = vunpack.c.h.b16 %v2753
    %v3149 = vunpack.c.l.b16 %v2754
    %v3150 = vunpack.c.h.b16 %v2754
    %v3151 = vunpack.c.l.b16 %v2755
    %v3152 = vunpack.c.h.b16 %v2755
    %v3153 = vunpack.c.l.b16 %v2756
    %v3154 = vunpack.c.h.b16 %v2756
    %v3155 = vunpack.c.l.b16 %v2757
    %v3156 = vunpack.c.h.b16 %v2757
    %v3157 = vunpack.c.l.b16 %v2758
    %v3158 = vunpack.c.h.b16 %v2758
    %v3159 = vunpack.c.l.b16 %v2759
    %v3160 = vunpack.c.h.b16 %v2759
    %v3161 = vunpack.c.l.b16 %v2760
    %v3162 = vunpack.c.h.b16 %v2760
    %v3163 = vunpack.c.l.b16 %v2761
    %v3164 = vunpack.c.h.b16 %v2761
    %v3165 = vunpack.c.l.b16 %v2762
    %v3166 = vunpack.c.h.b16 %v2762
    %v3167 = vunpack.c.l.b16 %v2763
    %v3168 = vunpack.c.h.b16 %v2763
    %v3169 = vunpack.c.l.b16 %v2764
    %v3170 = vunpack.c.h.b16 %v2764
    %v3171 = vunpack.c.l.b16 %v2765
    %v3172 = vunpack.c.h.b16 %v2765
    %v3173 = vunpack.c.l.b16 %v2766
    %v3174 = vunpack.c.h.b16 %v2766
    %v3175 = vunpack.c.l.b16 %v2767
    %v3176 = vunpack.c.h.b16 %v2767
    %v3177 = vunpack.c.l.b16 %v2768
    %v3178 = vunpack.c.h.b16 %v2768
    %v3179 = vunpack.c.l.b16 %v2769
    %v3180 = vunpack.c.h.b16 %v2769
    %v3181 = vunpack.c.l.b16 %v2770
    %v3182 = vunpack.c.h.b16 %v2770
    %v3183 = vunpack.c.l.b16 %v2771
    %v3184 = vunpack.c.h.b16 %v2771
    %v3185 = vunpack.c.l.b16 %v2772
    %v3186 = vunpack.c.h.b16 %v2772
    %v3187 = vunpack.c.l.b16 %v2773
    %v3188 = vunpack.c.h.b16 %v2773
    %v3189 = vunpack.c.l.b16 %v2774
    %v3190 = vunpack.c.h.b16 %v2774
    %v3191 = vunpack.c.l.b16 %v2775
    %v3192 = vunpack.c.h.b16 %v2775
    %v3193 = vunpack.c.l.b16 %v2776
    %v3194 = vunpack.c.h.b16 %v2776
    %v3195 = vunpack.c.l.b16 %v2777
    %v3196 = vunpack.c.h.b16 %v2777
    %v3197 = vunpack.c.l.b16 %v2778
    %v3198 = vunpack.c.h.b16 %v2778
    %v3199 = vunpack.c.l.b16 %v2779
    %v3200 = vunpack.c.h.b16 %v2779
    %v3201 = vunpack.c.l.b16 %v2780
    %v3202 = vunpack.c.h.b16 %v2780
    %v3203 = vunpack.c.l.b16 %v2781
    %v3204 = vunpack.c.h.b16 %v2781
    %v3205 = vunpack.c.l.b16 %v2782
    %v3206 = vunpack.c.h.b16 %v2782
    %v3207 = vunpack.c.l.b16 %v2783
    %v3208 = vunpack.c.h.b16 %v2783
    %v3209 = vunpack.c.l.b16 %v2784
    %v3210 = vunpack.c.h.b16 %v2784
    %v3211 = vunpack.c.l.b16 %v2785
    %v3212 = vunpack.c.h.b16 %v2785
    %v3213 = vunpack.c.l.b16 %v2786
    %v3214 = vunpack.c.h.b16 %v2786
    %v3215 = vunpack.c.l.b16 %v2787
    %v3216 = vunpack.c.h.b16 %v2787
    %v3217 = vunpack.c.l.b16 %v2788
    %v3218 = vunpack.c.h.b16 %v2788
    %v3219 = vunpack.c.l.b16 %v2789
    %v3220 = vunpack.c.h.b16 %v2789
    %v3221 = vunpack.c.l.b16 %v2790
    %v3222 = vunpack.c.h.b16 %v2790
    %v3223 = vunpack.c.l.b16 %v2791
    %v3224 = vunpack.c.h.b16 %v2791
    %v3225 = vunpack.c.l.b16 %v2792
    %v3226 = vunpack.c.h.b16 %v2792
    %v3227 = vunpack.c.l.b16 %v2793
    %v3228 = vunpack.c.h.b16 %v2793
    %v3229 = vunpack.c.l.b16 %v2794
    %v3230 = vunpack.c.h.b16 %v2794
    %v3231 = vunpack.c.l.b16 %v2795
    %v3232 = vunpack.c.h.b16 %v2795
    %v3233 = vunpack.c.l.b16 %v2796
    %v3234 = vunpack.c.h.b16 %v2796
    %v3235 = vunpack.c.l.b16 %v2797
    %v3236 = vunpack.c.h.b16 %v2797
    %v3237 = vunpack.c.l.b16 %v2798
    %v3238 = vunpack.c.h.b16 %v2798
    %v3239 = vunpack.c.l.b16 %v2799
    %v3240 = vunpack.c.h.b16 %v2799
    %v3241 = vunpack.c.l.b16 %v2800
    %v3242 = vunpack.c.h.b16 %v2800
    %v3243 = vunpack.c.l.b16 %v2801
    %v3244 = vunpack.c.h.b16 %v2801
    %v3245 = vunpack.c.l.b16 %v2802
    %v3246 = vunpack.c.h.b16 %v2802
    %v3247 = vunpack.c.l.b16 %v2803
    %v3248 = vunpack.c.h.b16 %v2803
    %v3249 = vunpack.c.l.b16 %v2804
    %v3250 = vunpack.c.h.b16 %v2804
    %v3251 = vunpack.c.l.b16 %v2805
    %v3252 = vunpack.c.h.b16 %v2805
    %v3253 = vunpack.c.l.b16 %v2806
    %v3254 = vunpack.c.h.b16 %v2806
    %v3255 = vunpack.c.l.b16 %v2807
    %v3256 = vunpack.c.h.b16 %v2807
    %v3257 = vunpack.c.l.b16 %v2808
    %v3258 = vunpack.c.h.b16 %v2808
    %v3259 = vunpack.c.l.b16 %v2809
    %v3260 = vunpack.c.h.b16 %v2809
    %v3261 = vunpack.c.l.b16 %v2810
    %v3262 = vunpack.c.h.b16 %v2810
    %v3263 = vunpack.c.l.b16 %v2811
    %v3264 = vunpack.c.h.b16 %v2811
    %v3265 = vunpack.c.l.b16 %v2812
    %v3266 = vunpack.c.h.b16 %v2812
    %v3267 = vunpack.c.l.b16 %v2813
    %v3268 = vunpack.c.h.b16 %v2813
    %v3269 = vunpack.c.l.b16 %v2814
    %v3270 = vunpack.c.h.b16 %v2814
    %v3271 = vunpack.c.l.b16 %v2815
    %v3272 = vunpack.c.h.b16 %v2815
    %v3273 = vunpack.c.l.b16 %v2816
    %v3274 = vunpack.c.h.b16 %v2816
    %v3275 = vunpack.c.l.b16 %v2817
    %v3276 = vunpack.c.h.b16 %v2817
    %v3277 = vunpack.c.l.b16 %v2818
    %v3278 = vunpack.c.h.b16 %v2818
    %v3279 = vunpack.c.l.b16 %v2819
    %v3280 = vunpack.c.h.b16 %v2819
    %v3281 = vunpack.c.l.b16 %v2820
    %v3282 = vunpack.c.h.b16 %v2820
    %v3283 = vunpack.c.l.b16 %v2821
    %v3284 = vunpack.c.h.b16 %v2821
    %v3285 = vunpack.c.l.b16 %v2822
    %v3286 = vunpack.c.h.b16 %v2822
    %v3287 = vunpack.c.l.b16 %v2823
    %v3288 = vunpack.c.h.b16 %v2823
    %v3289 = vunpack.c.l.b16 %v2824
    %v3290 = vunpack.c.h.b16 %v2824
    %v3291 = vunpack.c.l.b16 %v2825
    %v3292 = vunpack.c.h.b16 %v2825
    %v3293 = vunpack.c.l.b16 %v2826
    %v3294 = vunpack.c.h.b16 %v2826
    %v3295 = vunpack.c.l.b16 %v2827
    %v3296 = vunpack.c.h.b16 %v2827
    %v3297 = vunpack.c.l.b16 %v2828
    %v3298 = vunpack.c.h.b16 %v2828
    %v3299 = vunpack.c.l.b16 %v2829
    %v3300 = vunpack.c.h.b16 %v2829
    %v3301 = vunpack.c.l.b16 %v2830
    %v3302 = vunpack.c.h.b16 %v2830
    %v3303 = vunpack.c.l.b16 %v2831
    %v3304 = vunpack.c.h.b16 %v2831
    %v3305 = vunpack.c.l.b16 %v2832
    %v3306 = vunpack.c.h.b16 %v2832
    %v3307 = vunpack.c.l.b16 %v2833
    %v3308 = vunpack.c.h.b16 %v2833
    %v3309 = vunpack.c.l.b16 %v2834
    %v3310 = vunpack.c.h.b16 %v2834
    %v3311 = vunpack.c.l.b16 %v2835
    %v3312 = vunpack.c.h.b16 %v2835
    %v3313 = vunpack.c.l.b16 %v2836
    %v3314 = vunpack.c.h.b16 %v2836
    %v3315 = vunpack.c.l.b16 %v2837
    %v3316 = vunpack.c.h.b16 %v2837
    %v3317 = vunpack.c.l.b16 %v2838
    %v3318 = vunpack.c.h.b16 %v2838
    %v3319 = vunpack.c.l.b16 %v2839
    %v3320 = vunpack.c.h.b16 %v2839
    %v3321 = vunpack.c.l.b16 %v2840
    %v3322 = vunpack.c.h.b16 %v2840
    %v3323 = vunpack.c.l.b16 %v2841
    %v3324 = vunpack.c.h.b16 %v2841
    %v3325 = vunpack.c.l.b16 %v2842
    %v3326 = vunpack.c.h.b16 %v2842
    %v3327 = vunpack.c.l.b16 %v2843
    %v3328 = vunpack.c.h.b16 %v2843
    %v3329 = vunpack.c.l.b16 %v2844
    %v3330 = vunpack.c.h.b16 %v2844
    %v3331 = vunpack.c.l.b16 %v2845
    %v3332 = vunpack.c.h.b16 %v2845
    %v3333 = vunpack.c.l.b16 %v2846
    %v3334 = vunpack.c.h.b16 %v2846
    %v3335 = vunpack.c.l.b16 %v2847
    %v3336 = vunpack.c.h.b16 %v2847
    %v3337 = vunpack.c.l.b16 %v2848
    %v3338 = vunpack.c.h.b16 %v2848
    %v3339 = vunpack.c.l.b16 %v2849
    %v3340 = vunpack.c.h.b16 %v2849
    %v3341 = vunpack.c.l.b16 %v2850
    %v3342 = vunpack.c.h.b16 %v2850
    %v3343 = vunpack.c.l.b16 %v2851
    %v3344 = vunpack.c.h.b16 %v2851
    %v3345 = vunpack.c.l.b16 %v2852
    %v3346 = vunpack.c.h.b16 %v2852
    %v3347 = vunpack.c.l.b16 %v2853
    %v3348 = vunpack.c.h.b16 %v2853
    %v3349 = vunpack.c.l.b16 %v2854
    %v3350 = vunpack.c.h.b16 %v2854
    %v3351 = vunpack.c.l.b16 %v2855
    %v3352 = vunpack.c.h.b16 %v2855
    %v3353 = vunpack.c.l.b16 %v2856
    %v3354 = vunpack.c.h.b16 %v2856
    %v3355 = vunpack.c.l.b16 %v2857
    %v3356 = vunpack.c.h.b16 %v2857
    %v3357 = vunpack.c.l.b16 %v2858
    %v3358 = vunpack.c.h.b16 %v2858
    %v3359 = vunpack.c.l.b16 %v2859
    %v3360 = vunpack.c.h.b16 %v2859
    %v3361 = vunpack.c.l.b16 %v2860
    %v3362 = vunpack.c.h.b16 %v2860
    %v3363 = vunpack.c.l.b16 %v2861
    %v3364 = vunpack.c.h.b16 %v2861
    %v3365 = vunpack.c.l.b16 %v2862
    %v3366 = vunpack.c.h.b16 %v2862
    %v3367 = vunpack.c.l.b16 %v2863
    %v3368 = vunpack.c.h.b16 %v2863
    %v3369 = vunpack.c.l.b16 %v2864
    %v3370 = vunpack.c.h.b16 %v2864
    %v3371 = vunpack.c.l.b16 %v2865
    %v3372 = vunpack.c.h.b16 %v2865
    %v3373 = vunpack.c.l.b16 %v2866
    %v3374 = vunpack.c.h.b16 %v2866
    %v3375 = vunpack.c.l.b16 %v2867
    %v3376 = vunpack.c.h.b16 %v2867
    %v3377 = vunpack.c.l.b16 %v2868
    %v3378 = vunpack.c.h.b16 %v2868
    %v3379 = vunpack.c.l.b16 %v2869
    %v3380 = vunpack.c.h.b16 %v2869
    %v3381 = vunpack.c.l.b16 %v2870
    %v3382 = vunpack.c.h.b16 %v2870
    %v3383 = vunpack.c.l.b16 %v2871
    %v3384 = vunpack.c.h.b16 %v2871
    %v3385 = vunpack.c.l.b16 %v2872
    %v3386 = vunpack.c.h.b16 %v2872
    %v3387 = vunpack.c.l.b16 %v2873
    %v3388 = vunpack.c.h.b16 %v2873
    %v3389 = vunpack.c.l.b16 %v2874
    %v3390 = vunpack.c.h.b16 %v2874
    %v3391 = vunpack.c.l.b16 %v2875
    %v3392 = vunpack.c.h.b16 %v2875
    %v3393 = vunpack.c.l.b16 %v2876
    %v3394 = vunpack.c.h.b16 %v2876
    %v3395 = vunpack.c.l.b16 %v2877
    %v3396 = vunpack.c.h.b16 %v2877
    %v3397 = vunpack.c.l.b16 %v2878
    %v3398 = vunpack.c.h.b16 %v2878
    %v3399 = vunpack.c.l.b16 %v2879
    %v3400 = vunpack.c.h.b16 %v2879
    %v3401 = vunpack.c.l.b16 %v2880
    %v3402 = vunpack.c.h.b16 %v2880
    %v3403 = vunpack.c.l.b16 %v2881
    %v3404 = vunpack.c.h.b16 %v2881
    %v3405 = vunpack.c.l.b16 %v2882
    %v3406 = vunpack.c.h.b16 %v2882
    %v3407 = vunpack.c.l.b16 %v2883
    %v3408 = vunpack.c.h.b16 %v2883
    %v3409 = vunpack.c.l.b16 %v2884
    %v3410 = vunpack.c.h.b16 %v2884
    %v3411 = vunpack.c.l.b16 %v2885
    %v3412 = vunpack.c.h.b16 %v2885
    %v3413 = vunpack.c.l.b16 %v2886
    %v3414 = vunpack.c.h.b16 %v2886
    %v3415 = vunpack.c.l.b16 %v2887
    %v3416 = vunpack.c.h.b16 %v2887
    %v3417 = vunpack.c.l.b16 %v2888
    %v3418 = vunpack.c.h.b16 %v2888
    %v3419 = vunpack.c.l.b16 %v2889
    %v3420 = vunpack.c.h.b16 %v2889
    %v3421 = vunpack.c.l.b16 %v2890
    %v3422 = vunpack.c.h.b16 %v2890
    %v3423 = vunpack.c.l.b16 %v2891
    %v3424 = vunpack.c.h.b16 %v2891
    %v3425 = vunpack.c.l.b16 %v2892
    %v3426 = vunpack.c.h.b16 %v2892
    %v3427 = vunpack.c.l.b16 %v2893
    %v3428 = vunpack.c.h.b16 %v2893
    %v3429 = vunpack.c.l.b16 %v2894
    %v3430 = vunpack.c.h.b16 %v2894
    %v3431 = vunpack.c.l.b16 %v2895
    %v3432 = vunpack.c.h.b16 %v2895
    %v3433 = vunpack.c.l.b16 %v2896
    %v3434 = vunpack.c.h.b16 %v2896
    %v3435 = vunpack.c.l.b16 %v2897
    %v3436 = vunpack.c.h.b16 %v2897
    %v3437 = vunpack.c.l.b16 %v2898
    %v3438 = vunpack.c.h.b16 %v2898
    %v3439 = vunpack.c.l.b16 %v2899
    %v3440 = vunpack.c.h.b16 %v2899
    %v3441 = vunpack.c.l.b16 %v2900
    %v3442 = vunpack.c.h.b16 %v2900
    %v3443 = vunpack.c.l.b16 %v2901
    %v3444 = vunpack.c.h.b16 %v2901
    %v3445 = vunpack.c.l.b16 %v2902
    %v3446 = vunpack.c.h.b16 %v2902
    %v3447 = vunpack.c.l.b16 %v2903
    %v3448 = vunpack.c.h.b16 %v2903
    %v3449 = vunpack.c.l.b16 %v2904
    %v3450 = vunpack.c.h.b16 %v2904
    %v3451 = vunpack.c.l.b16 %v2905
    %v3452 = vunpack.c.h.b16 %v2905
    %v3453 = vunpack.c.l.b16 %v2906
    %v3454 = vunpack.c.h.b16 %v2906
    %v3455 = vunpack.c.l.b16 %v2907
    %v3456 = vunpack.c.h.b16 %v2907
    %v3457 = vunpack.c.l.b16 %v2908
    %v3458 = vunpack.c.h.b16 %v2908
    %v3459 = vunpack.c.l.b16 %v2909
    %v3460 = vunpack.c.h.b16 %v2909
    %v3461 = vunpack.c.l.b16 %v2910
    %v3462 = vunpack.c.h.b16 %v2910
    %v3463 = vunpack.c.l.b16 %v2911
    %v3464 = vunpack.c.h.b16 %v2911
    %v3465 = vunpack.c.l.b16 %v2912
    %v3466 = vunpack.c.h.b16 %v2912
    %v3467 = vunpack.c.l.b16 %v2913
    %v3468 = vunpack.c.h.b16 %v2913
    %v3469 = vunpack.c.l.b16 %v2914
    %v3470 = vunpack.c.h.b16 %v2914
    %v3471 = vunpack.c.l.b16 %v2915
    %v3472 = vunpack.c.h.b16 %v2915
    %v3473 = vunpack.c.l.b16 %v2916
    %v3474 = vunpack.c.h.b16 %v2916
    %v3475 = vunpack.c.l.b16 %v2917
    %v3476 = vunpack.c.h.b16 %v2917
    %v3477 = vunpack.c.l.b16 %v2918
    %v3478 = vunpack.c.h.b16 %v2918
    %v3479 = vunpack.c.l.b16 %v2919
    %v3480 = vunpack.c.h.b16 %v2919
    %v3481 = vunpack.c.l.b16 %v2920
    %v3482 = vunpack.c.h.b16 %v2920
    %v3483 = vunpack.c.l.b16 %v2921
    %v3484 = vunpack.c.h.b16 %v2921
    %v3485 = vunpack.c.l.b16 %v2922
    %v3486 = vunpack.c.h.b16 %v2922
    %v3487 = vunpack.c.l.b16 %v2923
    %v3488 = vunpack.c.h.b16 %v2923
    %v3489 = vunpack.c.l.b16 %v2924
    %v3490 = vunpack.c.h.b16 %v2924
    %v3491 = vunpack.c.l.b16 %v2925
    %v3492 = vunpack.c.h.b16 %v2925
    %v3493 = vunpack.c.l.b16 %v2926
    %v3494 = vunpack.c.h.b16 %v2926
    %v3495 = vunpack.c.l.b16 %v2927
    %v3496 = vunpack.c.h.b16 %v2927
    %v3497 = vunpack.c.l.b16 %v2928
    %v3498 = vunpack.c.h.b16 %v2928
    %v3499 = vunpack.c.l.b16 %v2929
    %v3500 = vunpack.c.h.b16 %v2929
    %v3501 = vunpack.c.l.b16 %v2930
    %v3502 = vunpack.c.h.b16 %v2930
    %v3503 = vunpack.c.l.b16 %v2931
    %v3504 = vunpack.c.h.b16 %v2931
    %v3505 = vunpack.c.l.b16 %v2932
    %v3506 = vunpack.c.h.b16 %v2932
    %v3507 = vunpack.c.l.b16 %v2933
    %v3508 = vunpack.c.h.b16 %v2933
    %v3509 = vunpack.c.l.b16 %v2934
    %v3510 = vunpack.c.h.b16 %v2934
    %v3511 = vpack.c.b16 %v3129, %v3127
    %v3512 = vpack.c.b16 %v3130, %v3128
    %v3513 = vpack.c.b16 %v3133, %v3131
    %v3514 = vpack.c.b16 %v3134, %v3132
    %v3515 = vpack.c.b16 %v3137, %v3135
    %v3516 = vpack.c.b16 %v3138, %v3136
    %v3517 = vpack.c.b16 %v3141, %v3139
    %v3518 = vpack.c.b16 %v3142, %v3140
    %v3519 = vpack.c.b16 %v3145, %v3143
    %v3520 = vpack.c.b16 %v3146, %v3144
    %v3521 = vpack.c.b16 %v3149, %v3147
    %v3522 = vpack.c.b16 %v3150, %v3148
    %v3523 = vpack.c.b16 %v3153, %v3151
    %v3524 = vpack.c.b16 %v3154, %v3152
    %v3525 = vpack.c.b16 %v3157, %v3155
    %v3526 = vpack.c.b16 %v3158, %v3156
    %v3527 = vpack.c.b16 %v3161, %v3159
    %v3528 = vpack.c.b16 %v3162, %v3160
    %v3529 = vpack.c.b16 %v3165, %v3163
    %v3530 = vpack.c.b16 %v3166, %v3164
    %v3531 = vpack.c.b16 %v3169, %v3167
    %v3532 = vpack.c.b16 %v3170, %v3168
    %v3533 = vpack.c.b16 %v3173, %v3171
    %v3534 = vpack.c.b16 %v3174, %v3172
    %v3535 = vpack.c.b16 %v3177, %v3175
    %v3536 = vpack.c.b16 %v3178, %v3176
    %v3537 = vpack.c.b16 %v3181, %v3179
    %v3538 = vpack.c.b16 %v3182, %v3180
    %v3539 = vpack.c.b16 %v3185, %v3183
    %v3540 = vpack.c.b16 %v3186, %v3184
    %v3541 = vpack.c.b16 %v3189, %v3187
    %v3542 = vpack.c.b16 %v3190, %v3188
    %v3543 = vpack.c.b16 %v3193, %v3191
    %v3544 = vpack.c.b16 %v3194, %v3192
    %v3545 = vpack.c.b16 %v3197, %v3195
    %v3546 = vpack.c.b16 %v3198, %v3196
    %v3547 = vpack.c.b16 %v3201, %v3199
    %v3548 = vpack.c.b16 %v3202, %v3200
    %v3549 = vpack.c.b16 %v3205, %v3203
    %v3550 = vpack.c.b16 %v3206, %v3204
    %v3551 = vpack.c.b16 %v3209, %v3207
    %v3552 = vpack.c.b16 %v3210, %v3208
    %v3553 = vpack.c.b16 %v3213, %v3211
    %v3554 = vpack.c.b16 %v3214, %v3212
    %v3555 = vpack.c.b16 %v3217, %v3215
    %v3556 = vpack.c.b16 %v3218, %v3216
    %v3557 = vpack.c.b16 %v3221, %v3219
    %v3558 = vpack.c.b16 %v3222, %v3220
    %v3559 = vpack.c.b16 %v3225, %v3223
    %v3560 = vpack.c.b16 %v3226, %v3224
    %v3561 = vpack.c.b16 %v3229, %v3227
    %v3562 = vpack.c.b16 %v3230, %v3228
    %v3563 = vpack.c.b16 %v3233, %v3231
    %v3564 = vpack.c.b16 %v3234, %v3232
    %v3565 = vpack.c.b16 %v3237, %v3235
    %v3566 = vpack.c.b16 %v3238, %v3236
    %v3567 = vpack.c.b16 %v3241, %v3239
    %v3568 = vpack.c.b16 %v3242, %v3240
    %v3569 = vpack.c.b16 %v3245, %v3243
    %v3570 = vpack.c.b16 %v3246, %v3244
    %v3571 = vpack.c.b16 %v3249, %v3247
    %v3572 = vpack.c.b16 %v3250, %v3248
    %v3573 = vpack.c.b16 %v3253, %v3251
    %v3574 = vpack.c.b16 %v3254, %v3252
    %v3575 = vpack.c.b16 %v3257, %v3255
    %v3576 = vpack.c.b16 %v3258, %v3256
    %v3577 = vpack.c.b16 %v3261, %v3259
    %v3578 = vpack.c.b16 %v3262, %v3260
    %v3579 = vpack.c.b16 %v3265, %v3263
    %v3580 = vpack.c.b16 %v3266, %v3264
    %v3581 = vpack.c.b16 %v3269, %v3267
    %v3582 = vpack.c.b16 %v3270, %v3268
    %v3583 = vpack.c.b16 %v3273, %v3271
    %v3584 = vpack.c.b16 %v3274, %v3272
    %v3585 = vpack.c.b16 %v3277, %v3275
    %v3586 = vpack.c.b16 %v3278, %v3276
    %v3587 = vpack.c.b16 %v3281, %v3279
    %v3588 = vpack.c.b16 %v3282, %v3280
    %v3589 = vpack.c.b16 %v3285, %v3283
    %v3590 = vpack.c.b16 %v3286, %v3284
    %v3591 = vpack.c.b16 %v3289, %v3287
    %v3592 = vpack.c.b16 %v3290, %v3288
    %v3593 = vpack.c.b16 %v3293, %v3291
    %v3594 = vpack.c.b16 %v3294, %v3292
    %v3595 = vpack.c.b16 %v3297, %v3295
    %v3596 = vpack.c.b16 %v3298, %v3296
    %v3597 = vpack.c.b16 %v3301, %v3299
    %v3598 = vpack.c.b16 %v3302, %v3300
    %v3599 = vpack.c.b16 %v3305, %v3303
    %v3600 = vpack.c.b16 %v3306, %v3304
    %v3601 = vpack.c.b16 %v3309, %v3307
    %v3602 = vpack.c.b16 %v3310, %v3308
    %v3603 = vpack.c.b16 %v3313, %v3311
    %v3604 = vpack.c.b16 %v3314, %v3312
    %v3605 = vpack.c.b16 %v3317, %v3315
    %v3606 = vpack.c.b16 %v3318, %v3316
    %v3607 = vpack.c.b16 %v3321, %v3319
    %v3608 = vpack.c.b16 %v3322, %v3320
    %v3609 = vpack.c.b16 %v3325, %v3323
    %v3610 = vpack.c.b16 %v3326, %v3324
    %v3611 = vpack.c.b16 %v3329, %v3327
    %v3612 = vpack.c.b16 %v3330, %v3328
    %v3613 = vpack.c.b16 %v3333, %v3331
    %v3614 = vpack.c.b16 %v3334, %v3332
    %v3615 = vpack.c.b16 %v3337, %v3335
    %v3616 = vpack.c.b16 %v3338, %v3336
    %v3617 = vpack.c.b16 %v3341, %v3339
    %v3618 = vpack.c.b16 %v3342, %v3340
    %v3619 = vpack.c.b16 %v3345, %v3343
    %v3620 = vpack.c.b16 %v3346, %v3344
    %v3621 = vpack.c.b16 %v3349, %v3347
    %v3622 = vpack.c.b16 %v3350, %v3348
    %v3623 = vpack.c.b16 %v3353, %v3351
    %v3624 = vpack.c.b16 %v3354, %v3352
    %v3625 = vpack.c.b16 %v3357, %v3355
    %v3626 = vpack.c.b16 %v3358, %v3356
    %v3627 = vpack.c.b16 %v3361, %v3359
    %v3628 = vpack.c.b16 %v3362, %v3360
    %v3629 = vpack.c.b16 %v3365, %v3363
    %v3630 = vpack.c.b16 %v3366, %v3364
    %v3631 = vpack.c.b16 %v3369, %v3367
    %v3632 = vpack.c.b16 %v3370, %v3368
    %v3633 = vpack.c.b16 %v3373, %v3371
    %v3634 = vpack.c.b16 %v3374, %v3372
    %v3635 = vpack.c.b16 %v3377, %v3375
    %v3636 = vpack.c.b16 %v3378, %v3376
    %v3637 = vpack.c.b16 %v3381, %v3379
    %v3638 = vpack.c.b16 %v3382, %v3380
    %v3639 = vpack.c.b16 %v3385, %v3383
    %v3640 = vpack.c.b16 %v3386, %v3384
    %v3641 = vpack.c.b16 %v3389, %v3387
    %v3642 = vpack.c.b16 %v3390, %v3388
    %v3643 = vpack.c.b16 %v3393, %v3391
    %v3644 = vpack.c.b16 %v3394, %v3392
    %v3645 = vpack.c.b16 %v3397, %v3395
    %v3646 = vpack.c.b16 %v3398, %v3396
    %v3647 = vpack.c.b16 %v3401, %v3399
    %v3648 = vpack.c.b16 %v3402, %v3400
    %v3649 = vpack.c.b16 %v3405, %v3403
    %v3650 = vpack.c.b16 %v3406, %v3404
    %v3651 = vpack.c.b16 %v3409, %v3407
    %v3652 = vpack.c.b16 %v3410, %v3408
    %v3653 = vpack.c.b16 %v3413, %v3411
    %v3654 = vpack.c.b16 %v3414, %v3412
    %v3655 = vpack.c.b16 %v3417, %v3415
    %v3656 = vpack.c.b16 %v3418, %v3416
    %v3657 = vpack.c.b16 %v3421, %v3419
    %v3658 = vpack.c.b16 %v3422, %v3420
    %v3659 = vpack.c.b16 %v3425, %v3423
    %v3660 = vpack.c.b16 %v3426, %v3424
    %v3661 = vpack.c.b16 %v3429, %v3427
    %v3662 = vpack.c.b16 %v3430, %v3428
    %v3663 = vpack.c.b16 %v3433, %v3431
    %v3664 = vpack.c.b16 %v3434, %v3432
    %v3665 = vpack.c.b16 %v3437, %v3435
    %v3666 = vpack.c.b16 %v3438, %v3436
    %v3667 = vpack.c.b16 %v3441, %v3439
    %v3668 = vpack.c.b16 %v3442, %v3440
    %v3669 = vpack.c.b16 %v3445, %v3443
    %v3670 = vpack.c.b16 %v3446, %v3444
    %v3671 = vpack.c.b16 %v3449, %v3447
    %v3672 = vpack.c.b16 %v3450, %v3448
    %v3673 = vpack.c.b16 %v3453, %v3451
    %v3674 = vpack.c.b16 %v3454, %v3452
    %v3675 = vpack.c.b16 %v3457, %v3455
    %v3676 = vpack.c.b16 %v3458, %v3456
    %v3677 = vpack.c.b16 %v3461, %v3459
    %v3678 = vpack.c.b16 %v3462, %v3460
    %v3679 = vpack.c.b16 %v3465, %v3463
    %v3680 = vpack.c.b16 %v3466, %v3464
    %v3681 = vpack.c.b16 %v3469, %v3467
    %v3682 = vpack.c.b16 %v3470, %v3468
    %v3683 = vpack.c.b16 %v3473, %v3471
    %v3684 = vpack.c.b16 %v3474, %v3472
    %v3685 = vpack.c.b16 %v3477, %v3475
    %v3686 = vpack.c.b16 %v3478, %v3476
    %v3687 = vpack.c.b16 %v3481, %v3479
    %v3688 = vpack.c.b16 %v3482, %v3480
    %v3689 = vpack.c.b16 %v3485, %v3483
    %v3690 = vpack.c.b16 %v3486, %v3484
    %v3691 = vpack.c.b16 %v3489, %v3487
    %v3692 = vpack.c.b16 %v3490, %v3488
    %v3693 = vpack.c.b16 %v3493, %v3491
    %v3694 = vpack.c.b16 %v3494, %v3492
    %v3695 = vpack.c.b16 %v3497, %v3495
    %v3696 = vpack.c.b16 %v3498, %v3496
    %v3697 = vpack.c.b16 %v3501, %v3499
    %v3698 = vpack.c.b16 %v3502, %v3500
    %v3699 = vpack.c.b16 %v3505, %v3503
    %v3700 = vpack.c.b16 %v3506, %v3504
    %v3701 = vpack.c.b16 %v3509, %v3507
    %v3702 = vpack.c.b16 %v3510, %v3508
    %3895 = vmatprep.subr.bf16.mxu0 %v3512
    %3896 = vmatpush1.bf16.msra.mxu0 %v3511
    %3897 = vmatprep.subr.bf16.mxu0 %v3514
    %3898 = vmatpush1.bf16.msra.mxu0 %v3513
    %3899 = vmatprep.subr.bf16.mxu0 %v3516
    %3900 = vmatpush1.bf16.msra.mxu0 %v3515
    %3901 = vmatprep.subr.bf16.mxu0 %v3518
    %3902 = vmatpush1.bf16.msra.mxu0 %v3517
    %3903 = vmatprep.subr.bf16.mxu0 %v3520
    %3904 = vmatpush1.bf16.msra.mxu0 %v3519
    %3905 = vmatprep.subr.bf16.mxu0 %v3522
    %3906 = vmatpush1.bf16.msra.mxu0 %v3521
    %3907 = vmatprep.subr.bf16.mxu0 %v3524
    %3908 = vmatpush1.bf16.msra.mxu0 %v3523
    %3909 = vmatprep.subr.bf16.mxu0 %v3526
    %3910 = vmatpush1.bf16.msra.mxu0 %v3525
    %3911 = vmatprep.subr.bf16.mxu0 %v3528
    %3912 = vmatpush1.bf16.msra.mxu0 %v3527
    %3913 = vmatprep.subr.bf16.mxu0 %v3530
    %3914 = vmatpush1.bf16.msra.mxu0 %v3529
    %3915 = vmatprep.subr.bf16.mxu0 %v3532
    %3916 = vmatpush1.bf16.msra.mxu0 %v3531
    %3917 = vmatprep.subr.bf16.mxu0 %v3534
    %3918 = vmatpush1.bf16.msra.mxu0 %v3533
    %3919 = vmatprep.subr.bf16.mxu0 %v3536
    %3920 = vmatpush1.bf16.msra.mxu0 %v3535
    %3921 = vmatprep.subr.bf16.mxu0 %v3538
    %3922 = vmatpush1.bf16.msra.mxu0 %v3537
    %3923 = vmatprep.subr.bf16.mxu0 %v3540
    %3924 = vmatpush1.bf16.msra.mxu0 %v3539
    %3925 = vmatprep.subr.bf16.mxu0 %v3542
    %3926 = vmatpush1.bf16.msra.mxu0 %v3541
    %3927 = vmatprep.mubr.bf16.mxu0 %v2732
    %3928 = vmatmul.mubr.bf16.gmra.mrb[0].mxu0 %v2731
    %v3929 = vpop.f32.mrb[0].mxu0
    %v3930 = vadd.f32 0.0, %v3929
    %v3931 = vpop.f32.mrb[0].mxu0
    %v3932 = vadd.f32 0.0, %v3931
    %v3933 = vpop.f32.mrb[0].mxu0
    %v3934 = vadd.f32 0.0, %v3933
    %v3935 = vpop.f32.mrb[0].mxu0
    %v3936 = vadd.f32 0.0, %v3935
    %3937 = vdwg.mxu0
    %3938 = vmatprep.subr.bf16.mxu0 %v3544
    %3939 = vmatpush1.bf16.msra.mxu0 %v3543
    %3940 = vmatprep.subr.bf16.mxu0 %v3546
    %3941 = vmatpush1.bf16.msra.mxu0 %v3545
    %3942 = vmatprep.subr.bf16.mxu0 %v3548
    %3943 = vmatpush1.bf16.msra.mxu0 %v3547
    %3944 = vmatprep.subr.bf16.mxu0 %v3550
    %3945 = vmatpush1.bf16.msra.mxu0 %v3549
    %3946 = vmatprep.subr.bf16.mxu0 %v3552
    %3947 = vmatpush1.bf16.msra.mxu0 %v3551
    %3948 = vmatprep.subr.bf16.mxu0 %v3554
    %3949 = vmatpush1.bf16.msra.mxu0 %v3553
    %3950 = vmatprep.subr.bf16.mxu0 %v3556
    %3951 = vmatpush1.bf16.msra.mxu0 %v3555
    %3952 = vmatprep.subr.bf16.mxu0 %v3558
    %3953 = vmatpush1.bf16.msra.mxu0 %v3557
    %3954 = vmatprep.subr.bf16.mxu0 %v3560
    %3955 = vmatpush1.bf16.msra.mxu0 %v3559
    %3956 = vmatprep.subr.bf16.mxu0 %v3562
    %3957 = vmatpush1.bf16.msra.mxu0 %v3561
    %3958 = vmatprep.subr.bf16.mxu0 %v3564
    %3959 = vmatpush1.bf16.msra.mxu0 %v3563
    %3960 = vmatprep.subr.bf16.mxu0 %v3566
    %3961 = vmatpush1.bf16.msra.mxu0 %v3565
    %3962 = vmatprep.subr.bf16.mxu0 %v3568
    %3963 = vmatpush1.bf16.msra.mxu0 %v3567
    %3964 = vmatprep.subr.bf16.mxu0 %v3570
    %3965 = vmatpush1.bf16.msra.mxu0 %v3569
    %3966 = vmatprep.subr.bf16.mxu0 %v3572
    %3967 = vmatpush1.bf16.msra.mxu0 %v3571
    %3968 = vmatprep.subr.bf16.mxu0 %v3574
    %3969 = vmatpush1.bf16.msra.mxu0 %v3573
    %3970 = vmatprep.mubr.bf16.mxu0 %v2734
    %3971 = vmatmul.mubr.bf16.gmra.mrb[0].mxu0 %v2733
    %v3972 = vpop.f32.mrb[0].mxu0
    %v3973 = vadd.f32 %v3930, %v3972
    %v3974 = vpop.f32.mrb[0].mxu0
    %v3975 = vadd.f32 %v3932, %v3974
    %v3976 = vpop.f32.mrb[0].mxu0
    %v3977 = vadd.f32 %v3934, %v3976
    %v3978 = vpop.f32.mrb[0].mxu0
    %v3979 = vadd.f32 %v3936, %v3978
    %3980 = vdwg.mxu0
    %3981 = vmatprep.subr.bf16.mxu0 %v3576
    %3982 = vmatpush1.bf16.msra.mxu0 %v3575
    %3983 = vmatprep.subr.bf16.mxu0 %v3578
    %3984 = vmatpush1.bf16.msra.mxu0 %v3577
    %3985 = vmatprep.subr.bf16.mxu0 %v3580
    %3986 = vmatpush1.bf16.msra.mxu0 %v3579
    %3987 = vmatprep.subr.bf16.mxu0 %v3582
    %3988 = vmatpush1.bf16.msra.mxu0 %v3581
    %3989 = vmatprep.subr.bf16.mxu0 %v3584
    %3990 = vmatpush1.bf16.msra.mxu0 %v3583
    %3991 = vmatprep.subr.bf16.mxu0 %v3586
    %3992 = vmatpush1.bf16.msra.mxu0 %v3585
    %3993 = vmatprep.subr.bf16.mxu0 %v3588
    %3994 = vmatpush1.bf16.msra.mxu0 %v3587
    %3995 = vmatprep.subr.bf16.mxu0 %v3590
    %3996 = vmatpush1.bf16.msra.mxu0 %v3589
    %3997 = vmatprep.subr.bf16.mxu0 %v3592
    %3998 = vmatpush1.bf16.msra.mxu0 %v3591
    %3999 = vmatprep.subr.bf16.mxu0 %v3594
    %4000 = vmatpush1.bf16.msra.mxu0 %v3593
    %4001 = vmatprep.subr.bf16.mxu0 %v3596
    %4002 = vmatpush1.bf16.msra.mxu0 %v3595
    %4003 = vmatprep.subr.bf16.mxu0 %v3598
    %4004 = vmatpush1.bf16.msra.mxu0 %v3597
    %4005 = vmatprep.subr.bf16.mxu0 %v3600
    %4006 = vmatpush1.bf16.msra.mxu0 %v3599
    %4007 = vmatprep.subr.bf16.mxu0 %v3602
    %4008 = vmatpush1.bf16.msra.mxu0 %v3601
    %4009 = vmatprep.subr.bf16.mxu0 %v3604
    %4010 = vmatpush1.bf16.msra.mxu0 %v3603
    %4011 = vmatprep.subr.bf16.mxu0 %v3606
    %4012 = vmatpush1.bf16.msra.mxu0 %v3605
    %4013 = vmatprep.mubr.bf16.mxu0 %v2736
    %4014 = vmatmul.mubr.bf16.gmra.mrb[0].mxu0 %v2735
    %v4015 = vpop.f32.mrb[0].mxu0
    %v4016 = vadd.f32 %v3973, %v4015
    %v4017 = vpop.f32.mrb[0].mxu0
    %v4018 = vadd.f32 %v3975, %v4017
    %v4019 = vpop.f32.mrb[0].mxu0
    %v4020 = vadd.f32 %v3977, %v4019
    %v4021 = vpop.f32.mrb[0].mxu0
    %v4022 = vadd.f32 %v3979, %v4021
    %4023 = vdwg.mxu0
    %4024 = vmatprep.subr.bf16.mxu0 %v3608
    %4025 = vmatpush1.bf16.msra.mxu0 %v3607
    %4026 = vmatprep.subr.bf16.mxu0 %v3610
    %4027 = vmatpush1.bf16.msra.mxu0 %v3609
    %4028 = vmatprep.subr.bf16.mxu0 %v3612
    %4029 = vmatpush1.bf16.msra.mxu0 %v3611
    %4030 = vmatprep.subr.bf16.mxu0 %v3614
    %4031 = vmatpush1.bf16.msra.mxu0 %v3613
    %4032 = vmatprep.subr.bf16.mxu0 %v3616
    %4033 = vmatpush1.bf16.msra.mxu0 %v3615
    %4034 = vmatprep.subr.bf16.mxu0 %v3618
    %4035 = vmatpush1.bf16.msra.mxu0 %v3617
    %4036 = vmatprep.subr.bf16.mxu0 %v3620
    %4037 = vmatpush1.bf16.msra.mxu0 %v3619
    %4038 = vmatprep.subr.bf16.mxu0 %v3622
    %4039 = vmatpush1.bf16.msra.mxu0 %v3621
    %4040 = vmatprep.subr.bf16.mxu0 %v3624
    %4041 = vmatpush1.bf16.msra.mxu0 %v3623
    %4042 = vmatprep.subr.bf16.mxu0 %v3626
    %4043 = vmatpush1.bf16.msra.mxu0 %v3625
    %4044 = vmatprep.subr.bf16.mxu0 %v3628
    %4045 = vmatpush1.bf16.msra.mxu0 %v3627
    %4046 = vmatprep.subr.bf16.mxu0 %v3630
    %4047 = vmatpush1.bf16.msra.mxu0 %v3629
    %4048 = vmatprep.subr.bf16.mxu0 %v3632
    %4049 = vmatpush1.bf16.msra.mxu0 %v3631
    %4050 = vmatprep.subr.bf16.mxu0 %v3634
    %4051 = vmatpush1.bf16.msra.mxu0 %v3633
    %4052 = vmatprep.subr.bf16.mxu0 %v3636
    %4053 = vmatpush1.bf16.msra.mxu0 %v3635
    %4054 = vmatprep.subr.bf16.mxu0 %v3638
    %4055 = vmatpush1.bf16.msra.mxu0 %v3637
    %4056 = vmatprep.mubr.bf16.mxu0 %v2738
    %4057 = vmatmul.mubr.bf16.gmra.mrb[0].mxu0 %v2737
    %v4058 = vpop.f32.mrb[0].mxu0
    %v4059 = vadd.f32 %v4016, %v4058
    %v4060 = vpop.f32.mrb[0].mxu0
    %v4061 = vadd.f32 %v4018, %v4060
    %v4062 = vpop.f32.mrb[0].mxu0
    %v4063 = vadd.f32 %v4020, %v4062
    %v4064 = vpop.f32.mrb[0].mxu0
    %v4065 = vadd.f32 %v4022, %v4064
    %4066 = vdwg.mxu0
    %4067 = vmatprep.subr.bf16.mxu0 %v3640
    %4068 = vmatpush1.bf16.msra.mxu0 %v3639
    %4069 = vmatprep.subr.bf16.mxu0 %v3642
    %4070 = vmatpush1.bf16.msra.mxu0 %v3641
    %4071 = vmatprep.subr.bf16.mxu0 %v3644
    %4072 = vmatpush1.bf16.msra.mxu0 %v3643
    %4073 = vmatprep.subr.bf16.mxu0 %v3646
    %4074 = vmatpush1.bf16.msra.mxu0 %v3645
    %4075 = vmatprep.subr.bf16.mxu0 %v3648
    %4076 = vmatpush1.bf16.msra.mxu0 %v3647
    %4077 = vmatprep.subr.bf16.mxu0 %v3650
    %4078 = vmatpush1.bf16.msra.mxu0 %v3649
    %4079 = vmatprep.subr.bf16.mxu0 %v3652
    %4080 = vmatpush1.bf16.msra.mxu0 %v3651
    %4081 = vmatprep.subr.bf16.mxu0 %v3654
    %4082 = vmatpush1.bf16.msra.mxu0 %v3653
    %4083 = vmatprep.subr.bf16.mxu0 %v3656
    %4084 = vmatpush1.bf16.msra.mxu0 %v3655
    %4085 = vmatprep.subr.bf16.mxu0 %v3658
    %4086 = vmatpush1.bf16.msra.mxu0 %v3657
    %4087 = vmatprep.subr.bf16.mxu0 %v3660
    %4088 = vmatpush1.bf16.msra.mxu0 %v3659
    %4089 = vmatprep.subr.bf16.mxu0 %v3662
    %4090 = vmatpush1.bf16.msra.mxu0 %v3661
    %4091 = vmatprep.subr.bf16.mxu0 %v3664
    %4092 = vmatpush1.bf16.msra.mxu0 %v3663
    %4093 = vmatprep.subr.bf16.mxu0 %v3666
    %4094 = vmatpush1.bf16.msra.mxu0 %v3665
    %4095 = vmatprep.subr.bf16.mxu0 %v3668
    %4096 = vmatpush1.bf16.msra.mxu0 %v3667
    %4097 = vmatprep.subr.bf16.mxu0 %v3670
    %4098 = vmatpush1.bf16.msra.mxu0 %v3669
    %4099 = vmatprep.mubr.bf16.mxu0 %v2740
    %4100 = vmatmul.mubr.bf16.gmra.mrb[0].mxu0 %v2739
    %v4101 = vpop.f32.mrb[0].mxu0
    %v4102 = vadd.f32 %v4059, %v4101
    %v4103 = vpop.f32.mrb[0].mxu0
    %v4104 = vadd.f32 %v4061, %v4103
    %v4105 = vpop.f32.mrb[0].mxu0
    %v4106 = vadd.f32 %v4063, %v4105
    %v4107 = vpop.f32.mrb[0].mxu0
    %v4108 = vadd.f32 %v4065, %v4107
    %4109 = vdwg.mxu0
    %4110 = vmatprep.subr.bf16.mxu0 %v3672
    %4111 = vmatpush1.bf16.msra.mxu0 %v3671
    %4112 = vmatprep.subr.bf16.mxu0 %v3674
    %4113 = vmatpush1.bf16.msra.mxu0 %v3673
    %4114 = vmatprep.subr.bf16.mxu0 %v3676
    %4115 = vmatpush1.bf16.msra.mxu0 %v3675
    %4116 = vmatprep.subr.bf16.mxu0 %v3678
    %4117 = vmatpush1.bf16.msra.mxu0 %v3677
    %4118 = vmatprep.subr.bf16.mxu0 %v3680
    %4119 = vmatpush1.bf16.msra.mxu0 %v3679
    %4120 = vmatprep.subr.bf16.mxu0 %v3682
    %4121 = vmatpush1.bf16.msra.mxu0 %v3681
    %4122 = vmatprep.subr.bf16.mxu0 %v3684
    %4123 = vmatpush1.bf16.msra.mxu0 %v3683
    %4124 = vmatprep.subr.bf16.mxu0 %v3686
    %4125 = vmatpush1.bf16.msra.mxu0 %v3685
    %4126 = vmatprep.subr.bf16.mxu0 %v3688
    %4127 = vmatpush1.bf16.msra.mxu0 %v3687
    %4128 = vmatprep.subr.bf16.mxu0 %v3690
    %4129 = vmatpush1.bf16.msra.mxu0 %v3689
    %4130 = vmatprep.subr.bf16.mxu0 %v3692
    %4131 = vmatpush1.bf16.msra.mxu0 %v3691
    %4132 = vmatprep.subr.bf16.mxu0 %v3694
    %4133 = vmatpush1.bf16.msra.mxu0 %v3693
    %4134 = vmatprep.subr.bf16.mxu0 %v3696
    %4135 = vmatpush1.bf16.msra.mxu0 %v3695
    %4136 = vmatprep.subr.bf16.mxu0 %v3698
    %4137 = vmatpush1.bf16.msra.mxu0 %v3697
    %4138 = vmatprep.subr.bf16.mxu0 %v3700
    %4139 = vmatpush1.bf16.msra.mxu0 %v3699
    %4140 = vmatprep.subr.bf16.mxu0 %v3702
    %4141 = vmatpush1.bf16.msra.mxu0 %v3701
    %4142 = vmatprep.mubr.bf16.mxu0 %v2742
    %4143 = vmatmul.mubr.bf16.gmra.mrb[0].mxu0 %v2741
    %v4144 = vpop.f32.mrb[0].mxu0
    %v4145 = vadd.f32 %v4102, %v4144
    %v4146 = vpop.f32.mrb[0].mxu0
    %v4147 = vadd.f32 %v4104, %v4146
    %v4148 = vpop.f32.mrb[0].mxu0
    %v4149 = vadd.f32 %v4106, %v4148
    %v4150 = vpop.f32.mrb[0].mxu0
    %v4151 = vadd.f32 %v4108, %v4150
    %4152 = vdwg.mxu0
    %v4153 = vrot.slane %v4145, 4
    %v4154 = vadd.f32 %v4145, %v4153
    %v4155 = vrot.slane %v4154, 2
    %v4156 = vadd.f32 %v4154, %v4155
    %v4157 = vrot.slane %v4156, 1
    %v4158 = vadd.f32 %v4156, %v4157
    %v4159 = vrot.slane %v4147, 4
    %v4160 = vadd.f32 %v4147, %v4159
    %v4161 = vrot.slane %v4160, 2
    %v4162 = vadd.f32 %v4160, %v4161
    %v4163 = vrot.slane %v4162, 1
    %v4164 = vadd.f32 %v4162, %v4163
    %v4165 = vrot.slane %v4149, 4
    %v4166 = vadd.f32 %v4149, %v4165
    %v4167 = vrot.slane %v4166, 2
    %v4168 = vadd.f32 %v4166, %v4167
    %v4169 = vrot.slane %v4168, 1
    %v4170 = vadd.f32 %v4168, %v4169
    %v4171 = vrot.slane %v4151, 4
    %v4172 = vadd.f32 %v4151, %v4171
    %v4173 = vrot.slane %v4172, 2
    %v4174 = vadd.f32 %v4172, %v4173
    %v4175 = vrot.slane %v4174, 1
    %v4176 = vadd.f32 %v4174, %v4175
    %v4177 = vadd.f32 %v4158, %v4164
    %4178 = vadd.xlane.f32.xlu0 %v4177
    %v4179 = vpop.xlane.xlu0 %4178
    %v4180 = vadd.f32 %v4170, %v4176
    %4181 = vadd.xlane.f32.xlu0 %v4180
    %v4182 = vpop.xlane.xlu0 %4181
    %v4183 = vrcp.pop 2048.0
    %v4184 = vmul.f32 %v4179, %v4183
    %v4185 = vmul.f32 %v4182, %v4183
    %v4186 = vsub.f32 %v4145, %v4184
    %v4187 = vsub.f32 %v4147, %v4184
    %v4188 = vsub.f32 %v4149, %v4185
    %v4189 = vsub.f32 %v4151, %v4185
    %v4190 = vmul.f32 %v4186, %v4186
    %v4191 = vmul.f32 %v4187, %v4187
    %v4192 = vmul.f32 %v4188, %v4188
    %v4193 = vmul.f32 %v4189, %v4189
    %v4194 = vrot.slane %v4190, 4
    %v4195 = vadd.f32 %v4190, %v4194
    %v4196 = vrot.slane %v4195, 2
    %v4197 = vadd.f32 %v4195, %v4196
    %v4198 = vrot.slane %v4197, 1
    %v4199 = vadd.f32 %v4197, %v4198
    %v4200 = vrot.slane %v4191, 4
    %v4201 = vadd.f32 %v4191, %v4200
    %v4202 = vrot.slane %v4201, 2
    %v4203 = vadd.f32 %v4201, %v4202
    %v4204 = vrot.slane %v4203, 1
    %v4205 = vadd.f32 %v4203, %v4204
    %v4206 = vrot.slane %v4192, 4
    %v4207 = vadd.f32 %v4192, %v4206
    %v4208 = vrot.slane %v4207, 2
    %v4209 = vadd.f32 %v4207, %v4208
    %v4210 = vrot.slane %v4209, 1
    %v4211 = vadd.f32 %v4209, %v4210
    %v4212 = vrot.slane %v4193, 4
    %v4213 = vadd.f32 %v4193, %v4212
    %v4214 = vrot.slane %v4213, 2
    %v4215 = vadd.f32 %v4213, %v4214
    %v4216 = vrot.slane %v4215, 1
    %v4217 = vadd.f32 %v4215, %v4216
    %v4218 = vadd.f32 %v4199, %v4205
    %4219 = vadd.xlane.f32.xlu0 %v4218
    %v4220 = vpop.xlane.xlu0 %4219
    %v4221 = vadd.f32 %v4211, %v4217
    %4222 = vadd.xlane.f32.xlu0 %v4221
    %v4223 = vpop.xlane.xlu0 %4222
    %v4224 = vmul.f32 %v4220, %v4183
    %v4225 = vmul.f32 %v4223, %v4183
    %v4226 = vadd.f32 %v4224, 1e-05
    %v4227 = vadd.f32 %v4225, 1e-05
    %v4228 = vrsqrt.pop %v4226
    %v4229 = vrsqrt.pop %v4227
    %v4230 = vmul.f32 %v4186, %v4228
    %v4231 = vmul.f32 %v4187, %v4228
    %v4232 = vmul.f32 %v4188, %v4229
    %v4233 = vmul.f32 %v4189, %v4229
    %v4234 = vld [vmem:[#allocation9] sm:$0x3]
    %v4236 = vlaneseq
    %v4237 = vshrl.u32 %v4236, 7
    %v4238 = vsub.s32 0, %v4237
    %v4239 = vrot.slane %v4234, %v4238
    %v4240 = vlaneseq
    %v4241 = vshrl.u32 %v4240, 7
    %v4242 = vsub.s32 1, %v4241
    %v4243 = vrot.slane %v4234, %v4242
    %v4246 = vmul.f32 %v4230, %v4239
    %v4247 = vmul.f32 %v4231, %v4243
    %v4248 = vmul.f32 %v4232, %v4239
    %v4249 = vmul.f32 %v4233, %v4243
    %v4250 = vld [vmem:[#allocation11] sm:$0x3]
    %v4252 = vlaneseq
    %v4253 = vshrl.u32 %v4252, 7
    %v4254 = vsub.s32 0, %v4253
    %v4255 = vrot.slane %v4250, %v4254
    %v4256 = vlaneseq
    %v4257 = vshrl.u32 %v4256, 7
    %v4258 = vsub.s32 1, %v4257
    %v4259 = vrot.slane %v4250, %v4258
    %v4262 = vadd.f32 %v4246, %v4255
    %v4263 = vadd.f32 %v4247, %v4259
    %v4264 = vadd.f32 %v4248, %v4255
    %v4265 = vadd.f32 %v4249, %v4259
    %v4266 = vsub.f32 0.0, %v4262
    %v4267 = vsub.f32 0.0, %v4263
    %v4268 = vsub.f32 0.0, %v4264
    %v4269 = vsub.f32 0.0, %v4265
    %v4270 = vmul.f32 %v4266, 1.442695
    %v4271 = vpow.pop %v4270
    %v4272 = vmul.f32 %v4267, 1.442695
    %v4273 = vpow.pop %v4272
    %v4274 = vmul.f32 %v4268, 1.442695
    %v4275 = vpow.pop %v4274
    %v4276 = vmul.f32 %v4269, 1.442695
    %v4277 = vpow.pop %v4276
    %v4278 = vadd.f32 %v4271, 1.0
    %v4279 = vadd.f32 %v4273, 1.0
    %v4280 = vadd.f32 %v4275, 1.0
    %v4281 = vadd.f32 %v4277, 1.0
    %v4282 = vrcp.pop %v4278
    %v4283 = vmul.f32 1.0, %v4282
    %v4284 = vrcp.pop %v4279
    %v4285 = vmul.f32 1.0, %v4284
    %v4286 = vrcp.pop %v4280
    %v4287 = vmul.f32 1.0, %v4286
    %v4288 = vrcp.pop %v4281
    %v4289 = vmul.f32 1.0, %v4288
    %v4290 = vmul.f32 %v4262, %v4283
    %v4291 = vmul.f32 %v4263, %v4285
    %v4292 = vmul.f32 %v4264, %v4287
    %v4293 = vmul.f32 %v4265, %v4289
    %v4294 = vrot.slane %v4290, 7
    %v4295 = vrot.slane %v4291, 7
    %v4296 = vrot.slane %v4292, 7
    %v4297 = vrot.slane %v4293, 7
    %v4298 = vsel %vm2687, %v4294, %v4296
    %v4299 = vsel %vm2687, %v4295, %v4297
    %v4300 = vsel %vm2687, %v4296, %v4294
    %v4301 = vsel %vm2687, %v4297, %v4295
    %v4302 = vsel %vm2677, %v4300, 0.0
    %v4303 = vsel %vm2677, %v4301, 0.0
    %v4304 = vsel %vm2678, %v4298, 0.0
    %v4305 = vsel %vm2678, %v4299, 0.0
    %v4306 = vrot.slane %v4290, 1
    %v4307 = vrot.slane %v4291, 1
    %v4308 = vrot.slane %v4292, 1
    %v4309 = vrot.slane %v4293, 1
    %v4310 = vsel %vm2714, %v4306, %v4308
    %v4311 = vsel %vm2714, %v4307, %v4309
    %v4312 = vsel %vm2714, %v4308, %v4306
    %v4313 = vsel %vm2714, %v4309, %v4307
    %v4314 = vsel %vm2704, %v4310, 0.0
    %v4315 = vsel %vm2704, %v4311, 0.0
    %v4316 = vsel %vm2705, %v4312, 0.0
    %v4317 = vsel %vm2705, %v4313, 0.0
    %v4318 = vpack.c.bf16 %v4304, %v4302
    %v4319 = vpack.c.bf16 %v4305, %v4303
    %v4320 = vpack.c.bf16 %v4292, %v4290
    %v4321 = vpack.c.bf16 %v4293, %v4291
    %v4322 = vpack.c.bf16 %v4316, %v4314
    %v4323 = vpack.c.bf16 %v4317, %v4315
    %v4324 = vld [vmem:[#allocation12] sm:$0xff]
    %v4325 = vld [vmem:[#allocation12 + $0x8] sm:$0xff]
    %v4326 = vld [vmem:[#allocation12 + $0x10] sm:$0xff]
    %v4327 = vld [vmem:[#allocation12 + $0x18] sm:$0xff]
    %v4328 = vld [vmem:[#allocation12 + $0x20] sm:$0xff]
    %v4329 = vld [vmem:[#allocation12 + $0x28] sm:$0xff]
    %v4330 = vld [vmem:[#allocation12 + $0x30] sm:$0xff]
    %v4331 = vld [vmem:[#allocation12 + $0x38] sm:$0xff]
    %v4332 = vld [vmem:[#allocation12 + $0x40] sm:$0xff]
    %v4333 = vld [vmem:[#allocation12 + $0x48] sm:$0xff]
    %v4334 = vld [vmem:[#allocation12 + $0x50] sm:$0xff]
    %v4335 = vld [vmem:[#allocation12 + $0x58] sm:$0xff]
    %v4336 = vld [vmem:[#allocation12 + $0x60] sm:$0xff]
    %v4337 = vld [vmem:[#allocation12 + $0x68] sm:$0xff]
    %v4338 = vld [vmem:[#allocation12 + $0x70] sm:$0xff]
    %v4339 = vld [vmem:[#allocation12 + $0x78] sm:$0xff]
    %v4340 = vld [vmem:[#allocation12 + $0x80] sm:$0xff]
    %v4341 = vld [vmem:[#allocation12 + $0x88] sm:$0xff]
    %v4342 = vld [vmem:[#allocation12 + $0x90] sm:$0xff]
    %v4343 = vld [vmem:[#allocation12 + $0x98] sm:$0xff]
    %v4344 = vld [vmem:[#allocation12 + $0xa0] sm:$0xff]
    %v4345 = vld [vmem:[#allocation12 + $0xa8] sm:$0xff]
    %v4346 = vld [vmem:[#allocation12 + $0xb0] sm:$0xff]
    %v4347 = vld [vmem:[#allocation12 + $0xb8] sm:$0xff]
    %v4348 = vld [vmem:[#allocation12 + $0xc0] sm:$0xff]
    %v4349 = vld [vmem:[#allocation12 + $0xc8] sm:$0xff]
    %v4350 = vld [vmem:[#allocation12 + $0xd0] sm:$0xff]
    %v4351 = vld [vmem:[#allocation12 + $0xd8] sm:$0xff]
    %v4352 = vld [vmem:[#allocation12 + $0xe0] sm:$0xff]
    %v4353 = vld [vmem:[#allocation12 + $0xe8] sm:$0xff]
    %v4354 = vld [vmem:[#allocation12 + $0xf0] sm:$0xff]
    %v4355 = vld [vmem:[#allocation12 + $0xf8] sm:$0xff]
    %v4356 = vld [vmem:[#allocation12 + $0x100] sm:$0xff]
    %v4357 = vld [vmem:[#allocation12 + $0x108] sm:$0xff]
    %v4358 = vld [vmem:[#allocation12 + $0x110] sm:$0xff]
    %v4359 = vld [vmem:[#allocation12 + $0x118] sm:$0xff]
    %v4360 = vld [vmem:[#allocation12 + $0x120] sm:$0xff]
    %v4361 = vld [vmem:[#allocation12 + $0x128] sm:$0xff]
    %v4362 = vld [vmem:[#allocation12 + $0x130] sm:$0xff]
    %v4363 = vld [vmem:[#allocation12 + $0x138] sm:$0xff]
    %v4364 = vld [vmem:[#allocation12 + $0x140] sm:$0xff]
    %v4365 = vld [vmem:[#allocation12 + $0x148] sm:$0xff]
    %v4366 = vld [vmem:[#allocation12 + $0x150] sm:$0xff]
    %v4367 = vld [vmem:[#allocation12 + $0x158] sm:$0xff]
    %v4368 = vld [vmem:[#allocation12 + $0x160] sm:$0xff]
    %v4369 = vld [vmem:[#allocation12 + $0x168] sm:$0xff]
    %v4370 = vld [vmem:[#allocation12 + $0x170] sm:$0xff]
    %v4371 = vld [vmem:[#allocation12 + $0x178] sm:$0xff]
    %v4372 = vld [vmem:[#allocation12 + $0x180] sm:$0xff]
    %v4373 = vld [vmem:[#allocation12 + $0x188] sm:$0xff]
    %v4374 = vld [vmem:[#allocation12 + $0x190] sm:$0xff]
    %v4375 = vld [vmem:[#allocation12 + $0x198] sm:$0xff]
    %v4376 = vld [vmem:[#allocation12 + $0x1a0] sm:$0xff]
    %v4377 = vld [vmem:[#allocation12 + $0x1a8] sm:$0xff]
    %v4378 = vld [vmem:[#allocation12 + $0x1b0] sm:$0xff]
    %v4379 = vld [vmem:[#allocation12 + $0x1b8] sm:$0xff]
    %v4380 = vld [vmem:[#allocation12 + $0x1c0] sm:$0xff]
    %v4381 = vld [vmem:[#allocation12 + $0x1c8] sm:$0xff]
    %v4382 = vld [vmem:[#allocation12 + $0x1d0] sm:$0xff]
    %v4383 = vld [vmem:[#allocation12 + $0x1d8] sm:$0xff]
    %v4384 = vld [vmem:[#allocation12 + $0x1e0] sm:$0xff]
    %v4385 = vld [vmem:[#allocation12 + $0x1e8] sm:$0xff]
    %v4386 = vld [vmem:[#allocation12 + $0x1f0] sm:$0xff]
    %v4387 = vld [vmem:[#allocation12 + $0x1f8] sm:$0xff]
    %v4388 = vld [vmem:[#allocation12 + $0x200] sm:$0xff]
    %v4389 = vld [vmem:[#allocation12 + $0x208] sm:$0xff]
    %v4390 = vld [vmem:[#allocation12 + $0x210] sm:$0xff]
    %v4391 = vld [vmem:[#allocation12 + $0x218] sm:$0xff]
    %v4392 = vld [vmem:[#allocation12 + $0x220] sm:$0xff]
    %v4393 = vld [vmem:[#allocation12 + $0x228] sm:$0xff]
    %v4394 = vld [vmem:[#allocation12 + $0x230] sm:$0xff]
    %v4395 = vld [vmem:[#allocation12 + $0x238] sm:$0xff]
    %v4396 = vld [vmem:[#allocation12 + $0x240] sm:$0xff]
    %v4397 = vld [vmem:[#allocation12 + $0x248] sm:$0xff]
    %v4398 = vld [vmem:[#allocation12 + $0x250] sm:$0xff]
    %v4399 = vld [vmem:[#allocation12 + $0x258] sm:$0xff]
    %v4400 = vld [vmem:[#allocation12 + $0x260] sm:$0xff]
    %v4401 = vld [vmem:[#allocation12 + $0x268] sm:$0xff]
    %v4402 = vld [vmem:[#allocation12 + $0x270] sm:$0xff]
    %v4403 = vld [vmem:[#allocation12 + $0x278] sm:$0xff]
    %v4404 = vld [vmem:[#allocation12 + $0x280] sm:$0xff]
    %v4405 = vld [vmem:[#allocation12 + $0x288] sm:$0xff]
    %v4406 = vld [vmem:[#allocation12 + $0x290] sm:$0xff]
    %v4407 = vld [vmem:[#allocation12 + $0x298] sm:$0xff]
    %v4408 = vld [vmem:[#allocation12 + $0x2a0] sm:$0xff]
    %v4409 = vld [vmem:[#allocation12 + $0x2a8] sm:$0xff]
    %v4410 = vld [vmem:[#allocation12 + $0x2b0] sm:$0xff]
    %v4411 = vld [vmem:[#allocation12 + $0x2b8] sm:$0xff]
    %v4412 = vld [vmem:[#allocation12 + $0x2c0] sm:$0xff]
    %v4413 = vld [vmem:[#allocation12 + $0x2c8] sm:$0xff]
    %v4414 = vld [vmem:[#allocation12 + $0x2d0] sm:$0xff]
    %v4415 = vld [vmem:[#allocation12 + $0x2d8] sm:$0xff]
    %v4416 = vld [vmem:[#allocation12 + $0x2e0] sm:$0xff]
    %v4417 = vld [vmem:[#allocation12 + $0x2e8] sm:$0xff]
    %v4418 = vld [vmem:[#allocation12 + $0x2f0] sm:$0xff]
    %v4419 = vld [vmem:[#allocation12 + $0x2f8] sm:$0xff]
    %v4516 = vunpack.c.l.b16 %v4324
    %v4517 = vunpack.c.h.b16 %v4324
    %v4518 = vunpack.c.l.b16 %v4325
    %v4519 = vunpack.c.h.b16 %v4325
    %v4520 = vunpack.c.l.b16 %v4326
    %v4521 = vunpack.c.h.b16 %v4326
    %v4522 = vunpack.c.l.b16 %v4327
    %v4523 = vunpack.c.h.b16 %v4327
    %v4524 = vunpack.c.l.b16 %v4328
    %v4525 = vunpack.c.h.b16 %v4328
    %v4526 = vunpack.c.l.b16 %v4329
    %v4527 = vunpack.c.h.b16 %v4329
    %v4528 = vunpack.c.l.b16 %v4330
    %v4529 = vunpack.c.h.b16 %v4330
    %v4530 = vunpack.c.l.b16 %v4331
    %v4531 = vunpack.c.h.b16 %v4331
    %v4532 = vunpack.c.l.b16 %v4332
    %v4533 = vunpack.c.h.b16 %v4332
    %v4534 = vunpack.c.l.b16 %v4333
    %v4535 = vunpack.c.h.b16 %v4333
    %v4536 = vunpack.c.l.b16 %v4334
    %v4537 = vunpack.c.h.b16 %v4334
    %v4538 = vunpack.c.l.b16 %v4335
    %v4539 = vunpack.c.h.b16 %v4335
    %v4540 = vunpack.c.l.b16 %v4336
    %v4541 = vunpack.c.h.b16 %v4336
    %v4542 = vunpack.c.l.b16 %v4337
    %v4543 = vunpack.c.h.b16 %v4337
    %v4544 = vunpack.c.l.b16 %v4338
    %v4545 = vunpack.c.h.b16 %v4338
    %v4546 = vunpack.c.l.b16 %v4339
    %v4547 = vunpack.c.h.b16 %v4339
    %v4548 = vunpack.c.l.b16 %v4340
    %v4549 = vunpack.c.h.b16 %v4340
    %v4550 = vunpack.c.l.b16 %v4341
    %v4551 = vunpack.c.h.b16 %v4341
    %v4552 = vunpack.c.l.b16 %v4342
    %v4553 = vunpack.c.h.b16 %v4342
    %v4554 = vunpack.c.l.b16 %v4343
    %v4555 = vunpack.c.h.b16 %v4343
    %v4556 = vunpack.c.l.b16 %v4344
    %v4557 = vunpack.c.h.b16 %v4344
    %v4558 = vunpack.c.l.b16 %v4345
    %v4559 = vunpack.c.h.b16 %v4345
    %v4560 = vunpack.c.l.b16 %v4346
    %v4561 = vunpack.c.h.b16 %v4346
    %v4562 = vunpack.c.l.b16 %v4347
    %v4563 = vunpack.c.h.b16 %v4347
    %v4564 = vunpack.c.l.b16 %v4348
    %v4565 = vunpack.c.h.b16 %v4348
    %v4566 = vunpack.c.l.b16 %v4349
    %v4567 = vunpack.c.h.b16 %v4349
    %v4568 = vunpack.c.l.b16 %v4350
    %v4569 = vunpack.c.h.b16 %v4350
    %v4570 = vunpack.c.l.b16 %v4351
    %v4571 = vunpack.c.h.b16 %v4351
    %v4572 = vunpack.c.l.b16 %v4352
    %v4573 = vunpack.c.h.b16 %v4352
    %v4574 = vunpack.c.l.b16 %v4353
    %v4575 = vunpack.c.h.b16 %v4353
    %v4576 = vunpack.c.l.b16 %v4354
    %v4577 = vunpack.c.h.b16 %v4354
    %v4578 = vunpack.c.l.b16 %v4355
    %v4579 = vunpack.c.h.b16 %v4355
    %v4580 = vunpack.c.l.b16 %v4356
    %v4581 = vunpack.c.h.b16 %v4356
    %v4582 = vunpack.c.l.b16 %v4357
    %v4583 = vunpack.c.h.b16 %v4357
    %v4584 = vunpack.c.l.b16 %v4358
    %v4585 = vunpack.c.h.b16 %v4358
    %v4586 = vunpack.c.l.b16 %v4359
    %v4587 = vunpack.c.h.b16 %v4359
    %v4588 = vunpack.c.l.b16 %v4360
    %v4589 = vunpack.c.h.b16 %v4360
    %v4590 = vunpack.c.l.b16 %v4361
    %v4591 = vunpack.c.h.b16 %v4361
    %v4592 = vunpack.c.l.b16 %v4362
    %v4593 = vunpack.c.h.b16 %v4362
    %v4594 = vunpack.c.l.b16 %v4363
    %v4595 = vunpack.c.h.b16 %v4363
    %v4596 = vunpack.c.l.b16 %v4364
    %v4597 = vunpack.c.h.b16 %v4364
    %v4598 = vunpack.c.l.b16 %v4365
    %v4599 = vunpack.c.h.b16 %v4365
    %v4600 = vunpack.c.l.b16 %v4366
    %v4601 = vunpack.c.h.b16 %v4366
    %v4602 = vunpack.c.l.b16 %v4367
    %v4603 = vunpack.c.h.b16 %v4367
    %v4604 = vunpack.c.l.b16 %v4368
    %v4605 = vunpack.c.h.b16 %v4368
    %v4606 = vunpack.c.l.b16 %v4369
    %v4607 = vunpack.c.h.b16 %v4369
    %v4608 = vunpack.c.l.b16 %v4370
    %v4609 = vunpack.c.h.b16 %v4370
    %v4610 = vunpack.c.l.b16 %v4371
    %v4611 = vunpack.c.h.b16 %v4371
    %v4612 = vunpack.c.l.b16 %v4372
    %v4613 = vunpack.c.h.b16 %v4372
    %v4614 = vunpack.c.l.b16 %v4373
    %v4615 = vunpack.c.h.b16 %v4373
    %v4616 = vunpack.c.l.b16 %v4374
    %v4617 = vunpack.c.h.b16 %v4374
    %v4618 = vunpack.c.l.b16 %v4375
    %v4619 = vunpack.c.h.b16 %v4375
    %v4620 = vunpack.c.l.b16 %v4376
    %v4621 = vunpack.c.h.b16 %v4376
    %v4622 = vunpack.c.l.b16 %v4377
    %v4623 = vunpack.c.h.b16 %v4377
    %v4624 = vunpack.c.l.b16 %v4378
    %v4625 = vunpack.c.h.b16 %v4378
    %v4626 = vunpack.c.l.b16 %v4379
    %v4627 = vunpack.c.h.b16 %v4379
    %v4628 = vunpack.c.l.b16 %v4380
    %v4629 = vunpack.c.h.b16 %v4380
    %v4630 = vunpack.c.l.b16 %v4381
    %v4631 = vunpack.c.h.b16 %v4381
    %v4632 = vunpack.c.l.b16 %v4382
    %v4633 = vunpack.c.h.b16 %v4382
    %v4634 = vunpack.c.l.b16 %v4383
    %v4635 = vunpack.c.h.b16 %v4383
    %v4636 = vunpack.c.l.b16 %v4384
    %v4637 = vunpack.c.h.b16 %v4384
    %v4638 = vunpack.c.l.b16 %v4385
    %v4639 = vunpack.c.h.b16 %v4385
    %v4640 = vunpack.c.l.b16 %v4386
    %v4641 = vunpack.c.h.b16 %v4386
    %v4642 = vunpack.c.l.b16 %v4387
    %v4643 = vunpack.c.h.b16 %v4387
    %v4644 = vunpack.c.l.b16 %v4388
    %v4645 = vunpack.c.h.b16 %v4388
    %v4646 = vunpack.c.l.b16 %v4389
    %v4647 = vunpack.c.h.b16 %v4389
    %v4648 = vunpack.c.l.b16 %v4390
    %v4649 = vunpack.c.h.b16 %v4390
    %v4650 = vunpack.c.l.b16 %v4391
    %v4651 = vunpack.c.h.b16 %v4391
    %v4652 = vunpack.c.l.b16 %v4392
    %v4653 = vunpack.c.h.b16 %v4392
    %v4654 = vunpack.c.l.b16 %v4393
    %v4655 = vunpack.c.h.b16 %v4393
    %v4656 = vunpack.c.l.b16 %v4394
    %v4657 = vunpack.c.h.b16 %v4394
    %v4658 = vunpack.c.l.b16 %v4395
    %v4659 = vunpack.c.h.b16 %v4395
    %v4660 = vunpack.c.l.b16 %v4396
    %v4661 = vunpack.c.h.b16 %v4396
    %v4662 = vunpack.c.l.b16 %v4397
    %v4663 = vunpack.c.h.b16 %v4397
    %v4664 = vunpack.c.l.b16 %v4398
    %v4665 = vunpack.c.h.b16 %v4398
    %v4666 = vunpack.c.l.b16 %v4399
    %v4667 = vunpack.c.h.b16 %v4399
    %v4668 = vunpack.c.l.b16 %v4400
    %v4669 = vunpack.c.h.b16 %v4400
    %v4670 = vunpack.c.l.b16 %v4401
    %v4671 = vunpack.c.h.b16 %v4401
    %v4672 = vunpack.c.l.b16 %v4402
    %v4673 = vunpack.c.h.b16 %v4402
    %v4674 = vunpack.c.l.b16 %v4403
    %v4675 = vunpack.c.h.b16 %v4403
    %v4676 = vunpack.c.l.b16 %v4404
    %v4677 = vunpack.c.h.b16 %v4404
    %v4678 = vunpack.c.l.b16 %v4405
    %v4679 = vunpack.c.h.b16 %v4405
    %v4680 = vunpack.c.l.b16 %v4406
    %v4681 = vunpack.c.h.b16 %v4406
    %v4682 = vunpack.c.l.b16 %v4407
    %v4683 = vunpack.c.h.b16 %v4407
    %v4684 = vunpack.c.l.b16 %v4408
    %v4685 = vunpack.c.h.b16 %v4408
    %v4686 = vunpack.c.l.b16 %v4409
    %v4687 = vunpack.c.h.b16 %v4409
    %v4688 = vunpack.c.l.b16 %v4410
    %v4689 = vunpack.c.h.b16 %v4410
    %v4690 = vunpack.c.l.b16 %v4411
    %v4691 = vunpack.c.h.b16 %v4411
    %v4692 = vunpack.c.l.b16 %v4412
    %v4693 = vunpack.c.h.b16 %v4412
    %v4694 = vunpack.c.l.b16 %v4413
    %v4695 = vunpack.c.h.b16 %v4413
    %v4696 = vunpack.c.l.b16 %v4414
    %v4697 = vunpack.c.h.b16 %v4414
    %v4698 = vunpack.c.l.b16 %v4415
    %v4699 = vunpack.c.h.b16 %v4415
    %v4700 = vunpack.c.l.b16 %v4416
    %v4701 = vunpack.c.h.b16 %v4416
    %v4702 = vunpack.c.l.b16 %v4417
    %v4703 = vunpack.c.h.b16 %v4417
    %v4704 = vunpack.c.l.b16 %v4418
    %v4705 = vunpack.c.h.b16 %v4418
    %v4706 = vunpack.c.l.b16 %v4419
    %v4707 = vunpack.c.h.b16 %v4419
    %v4708 = vpack.c.b16 %v4518, %v4516
    %v4709 = vpack.c.b16 %v4519, %v4517
    %v4710 = vpack.c.b16 %v4522, %v4520
    %v4711 = vpack.c.b16 %v4523, %v4521
    %v4712 = vpack.c.b16 %v4526, %v4524
    %v4713 = vpack.c.b16 %v4527, %v4525
    %v4714 = vpack.c.b16 %v4530, %v4528
    %v4715 = vpack.c.b16 %v4531, %v4529
    %v4716 = vpack.c.b16 %v4534, %v4532
    %v4717 = vpack.c.b16 %v4535, %v4533
    %v4718 = vpack.c.b16 %v4538, %v4536
    %v4719 = vpack.c.b16 %v4539, %v4537
    %v4720 = vpack.c.b16 %v4542, %v4540
    %v4721 = vpack.c.b16 %v4543, %v4541
    %v4722 = vpack.c.b16 %v4546, %v4544
    %v4723 = vpack.c.b16 %v4547, %v4545
    %v4724 = vpack.c.b16 %v4550, %v4548
    %v4725 = vpack.c.b16 %v4551, %v4549
    %v4726 = vpack.c.b16 %v4554, %v4552
    %v4727 = vpack.c.b16 %v4555, %v4553
    %v4728 = vpack.c.b16 %v4558, %v4556
    %v4729 = vpack.c.b16 %v4559, %v4557
    %v4730 = vpack.c.b16 %v4562, %v4560
    %v4731 = vpack.c.b16 %v4563, %v4561
    %v4732 = vpack.c.b16 %v4566, %v4564
    %v4733 = vpack.c.b16 %v4567, %v4565
    %v4734 = vpack.c.b16 %v4570, %v4568
    %v4735 = vpack.c.b16 %v4571, %v4569
    %v4736 = vpack.c.b16 %v4574, %v4572
    %v4737 = vpack.c.b16 %v4575, %v4573
    %v4738 = vpack.c.b16 %v4578, %v4576
    %v4739 = vpack.c.b16 %v4579, %v4577
    %v4740 = vpack.c.b16 %v4582, %v4580
    %v4741 = vpack.c.b16 %v4583, %v4581
    %v4742 = vpack.c.b16 %v4586, %v4584
    %v4743 = vpack.c.b16 %v4587, %v4585
    %v4744 = vpack.c.b16 %v4590, %v4588
    %v4745 = vpack.c.b16 %v4591, %v4589
    %v4746 = vpack.c.b16 %v4594, %v4592
    %v4747 = vpack.c.b16 %v4595, %v4593
    %v4748 = vpack.c.b16 %v4598, %v4596
    %v4749 = vpack.c.b16 %v4599, %v4597
    %v4750 = vpack.c.b16 %v4602, %v4600
    %v4751 = vpack.c.b16 %v4603, %v4601
    %v4752 = vpack.c.b16 %v4606, %v4604
    %v4753 = vpack.c.b16 %v4607, %v4605
    %v4754 = vpack.c.b16 %v4610, %v4608
    %v4755 = vpack.c.b16 %v4611, %v4609
    %v4756 = vpack.c.b16 %v4614, %v4612
    %v4757 = vpack.c.b16 %v4615, %v4613
    %v4758 = vpack.c.b16 %v4618, %v4616
    %v4759 = vpack.c.b16 %v4619, %v4617
    %v4760 = vpack.c.b16 %v4622, %v4620
    %v4761 = vpack.c.b16 %v4623, %v4621
    %v4762 = vpack.c.b16 %v4626, %v4624
    %v4763 = vpack.c.b16 %v4627, %v4625
    %v4764 = vpack.c.b16 %v4630, %v4628
    %v4765 = vpack.c.b16 %v4631, %v4629
    %v4766 = vpack.c.b16 %v4634, %v4632
    %v4767 = vpack.c.b16 %v4635, %v4633
    %v4768 = vpack.c.b16 %v4638, %v4636
    %v4769 = vpack.c.b16 %v4639, %v4637
    %v4770 = vpack.c.b16 %v4642, %v4640
    %v4771 = vpack.c.b16 %v4643, %v4641
    %v4772 = vpack.c.b16 %v4646, %v4644
    %v4773 = vpack.c.b16 %v4647, %v4645
    %v4774 = vpack.c.b16 %v4650, %v4648
    %v4775 = vpack.c.b16 %v4651, %v4649
    %v4776 = vpack.c.b16 %v4654, %v4652
    %v4777 = vpack.c.b16 %v4655, %v4653
    %v4778 = vpack.c.b16 %v4658, %v4656
    %v4779 = vpack.c.b16 %v4659, %v4657
    %v4780 = vpack.c.b16 %v4662, %v4660
    %v4781 = vpack.c.b16 %v4663, %v4661
    %v4782 = vpack.c.b16 %v4666, %v4664
    %v4783 = vpack.c.b16 %v4667, %v4665
    %v4784 = vpack.c.b16 %v4670, %v4668
    %v4785 = vpack.c.b16 %v4671, %v4669
    %v4786 = vpack.c.b16 %v4674, %v4672
    %v4787 = vpack.c.b16 %v4675, %v4673
    %v4788 = vpack.c.b16 %v4678, %v4676
    %v4789 = vpack.c.b16 %v4679, %v4677
    %v4790 = vpack.c.b16 %v4682, %v4680
    %v4791 = vpack.c.b16 %v4683, %v4681
    %v4792 = vpack.c.b16 %v4686, %v4684
    %v4793 = vpack.c.b16 %v4687, %v4685
    %v4794 = vpack.c.b16 %v4690, %v4688
    %v4795 = vpack.c.b16 %v4691, %v4689
    %v4796 = vpack.c.b16 %v4694, %v4692
    %v4797 = vpack.c.b16 %v4695, %v4693
    %v4798 = vpack.c.b16 %v4698, %v4696
    %v4799 = vpack.c.b16 %v4699, %v4697
    %v4800 = vpack.c.b16 %v4702, %v4700
    %v4801 = vpack.c.b16 %v4703, %v4701
    %v4802 = vpack.c.b16 %v4706, %v4704
    %v4803 = vpack.c.b16 %v4707, %v4705
    %4900 = vmatprep.subr.bf16.mxu0 %v4709
    %4901 = vmatpush1.bf16.msra.mxu0 %v4708
    %4902 = vmatprep.subr.bf16.mxu0 %v4711
    %4903 = vmatpush1.bf16.msra.mxu0 %v4710
    %4904 = vmatprep.subr.bf16.mxu0 %v4713
    %4905 = vmatpush1.bf16.msra.mxu0 %v4712
    %4906 = vmatprep.subr.bf16.mxu0 %v4715
    %4907 = vmatpush1.bf16.msra.mxu0 %v4714
    %4908 = vmatprep.subr.bf16.mxu0 %v4717
    %4909 = vmatpush1.bf16.msra.mxu0 %v4716
    %4910 = vmatprep.subr.bf16.mxu0 %v4719
    %4911 = vmatpush1.bf16.msra.mxu0 %v4718
    %4912 = vmatprep.subr.bf16.mxu0 %v4721
    %4913 = vmatpush1.bf16.msra.mxu0 %v4720
    %4914 = vmatprep.subr.bf16.mxu0 %v4723
    %4915 = vmatpush1.bf16.msra.mxu0 %v4722
    %4916 = vmatprep.subr.bf16.mxu0 %v4725
    %4917 = vmatpush1.bf16.msra.mxu0 %v4724
    %4918 = vmatprep.subr.bf16.mxu0 %v4727
    %4919 = vmatpush1.bf16.msra.mxu0 %v4726
    %4920 = vmatprep.subr.bf16.mxu0 %v4729
    %4921 = vmatpush1.bf16.msra.mxu0 %v4728
    %4922 = vmatprep.subr.bf16.mxu0 %v4731
    %4923 = vmatpush1.bf16.msra.mxu0 %v4730
    %4924 = vmatprep.subr.bf16.mxu0 %v4733
    %4925 = vmatpush1.bf16.msra.mxu0 %v4732
    %4926 = vmatprep.subr.bf16.mxu0 %v4735
    %4927 = vmatpush1.bf16.msra.mxu0 %v4734
    %4928 = vmatprep.subr.bf16.mxu0 %v4737
    %4929 = vmatpush1.bf16.msra.mxu0 %v4736
    %4930 = vmatprep.subr.bf16.mxu0 %v4739
    %4931 = vmatpush1.bf16.msra.mxu0 %v4738
    %4932 = vmatprep.mubr.bf16.mxu0 %v4319
    %4933 = vmatmul.mubr.bf16.gmra.mrb[0].mxu0 %v4318
    %v4934 = vpop.f32.mrb[0].mxu0
    %v4935 = vadd.f32 0.0, %v4934
    %v4936 = vpop.f32.mrb[0].mxu0
    %v4937 = vadd.f32 0.0, %v4936
    %v4938 = vpop.f32.mrb[0].mxu0
    %v4939 = vadd.f32 0.0, %v4938
    %v4940 = vpop.f32.mrb[0].mxu0
    %v4941 = vadd.f32 0.0, %v4940
    %4942 = vdwg.mxu0
    %4943 = vmatprep.subr.bf16.mxu0 %v4741
    %4944 = vmatpush1.bf16.msra.mxu0 %v4740
    %4945 = vmatprep.subr.bf16.mxu0 %v4743
    %4946 = vmatpush1.bf16.msra.mxu0 %v4742
    %4947 = vmatprep.subr.bf16.mxu0 %v4745
    %4948 = vmatpush1.bf16.msra.mxu0 %v4744
    %4949 = vmatprep.subr.bf16.mxu0 %v4747
    %4950 = vmatpush1.bf16.msra.mxu0 %v4746
    %4951 = vmatprep.subr.bf16.mxu0 %v4749
    %4952 = vmatpush1.bf16.msra.mxu0 %v4748
    %4953 = vmatprep.subr.bf16.mxu0 %v4751
    %4954 = vmatpush1.bf16.msra.mxu0 %v4750
    %4955 = vmatprep.subr.bf16.mxu0 %v4753
    %4956 = vmatpush1.bf16.msra.mxu0 %v4752
    %4957 = vmatprep.subr.bf16.mxu0 %v4755
    %4958 = vmatpush1.bf16.msra.mxu0 %v4754
    %4959 = vmatprep.subr.bf16.mxu0 %v4757
    %4960 = vmatpush1.bf16.msra.mxu0 %v4756
    %4961 = vmatprep.subr.bf16.mxu0 %v4759
    %4962 = vmatpush1.bf16.msra.mxu0 %v4758
    %4963 = vmatprep.subr.bf16.mxu0 %v4761
    %4964 = vmatpush1.bf16.msra.mxu0 %v4760
    %4965 = vmatprep.subr.bf16.mxu0 %v4763
    %4966 = vmatpush1.bf16.msra.mxu0 %v4762
    %4967 = vmatprep.subr.bf16.mxu0 %v4765
    %4968 = vmatpush1.bf16.msra.mxu0 %v4764
    %4969 = vmatprep.subr.bf16.mxu0 %v4767
    %4970 = vmatpush1.bf16.msra.mxu0 %v4766
    %4971 = vmatprep.subr.bf16.mxu0 %v4769
    %4972 = vmatpush1.bf16.msra.mxu0 %v4768
    %4973 = vmatprep.subr.bf16.mxu0 %v4771
    %4974 = vmatpush1.bf16.msra.mxu0 %v4770
    %4975 = vmatprep.mubr.bf16.mxu0 %v4321
    %4976 = vmatmul.mubr.bf16.gmra.mrb[0].mxu0 %v4320
    %v4977 = vpop.f32.mrb[0].mxu0
    %v4978 = vadd.f32 %v4935, %v4977
    %v4979 = vpop.f32.mrb[0].mxu0
    %v4980 = vadd.f32 %v4937, %v4979
    %v4981 = vpop.f32.mrb[0].mxu0
    %v4982 = vadd.f32 %v4939, %v4981
    %v4983 = vpop.f32.mrb[0].mxu0
    %v4984 = vadd.f32 %v4941, %v4983
    %4985 = vdwg.mxu0
    %4986 = vmatprep.subr.bf16.mxu0 %v4773
    %4987 = vmatpush1.bf16.msra.mxu0 %v4772
    %4988 = vmatprep.subr.bf16.mxu0 %v4775
    %4989 = vmatpush1.bf16.msra.mxu0 %v4774
    %4990 = vmatprep.subr.bf16.mxu0 %v4777
    %4991 = vmatpush1.bf16.msra.mxu0 %v4776
    %4992 = vmatprep.subr.bf16.mxu0 %v4779
    %4993 = vmatpush1.bf16.msra.mxu0 %v4778
    %4994 = vmatprep.subr.bf16.mxu0 %v4781
    %4995 = vmatpush1.bf16.msra.mxu0 %v4780
    %4996 = vmatprep.subr.bf16.mxu0 %v4783
    %4997 = vmatpush1.bf16.msra.mxu0 %v4782
    %4998 = vmatprep.subr.bf16.mxu0 %v4785
    %4999 = vmatpush1.bf16.msra.mxu0 %v4784
    %5000 = vmatprep.subr.bf16.mxu0 %v4787
    %5001 = vmatpush1.bf16.msra.mxu0 %v4786
    %5002 = vmatprep.subr.bf16.mxu0 %v4789
    %5003 = vmatpush1.bf16.msra.mxu0 %v4788
    %5004 = vmatprep.subr.bf16.mxu0 %v4791
    %5005 = vmatpush1.bf16.msra.mxu0 %v4790
    %5006 = vmatprep.subr.bf16.mxu0 %v4793
    %5007 = vmatpush1.bf16.msra.mxu0 %v4792
    %5008 = vmatprep.subr.bf16.mxu0 %v4795
    %5009 = vmatpush1.bf16.msra.mxu0 %v4794
    %5010 = vmatprep.subr.bf16.mxu0 %v4797
    %5011 = vmatpush1.bf16.msra.mxu0 %v4796
    %5012 = vmatprep.subr.bf16.mxu0 %v4799
    %5013 = vmatpush1.bf16.msra.mxu0 %v4798
    %5014 = vmatprep.subr.bf16.mxu0 %v4801
    %5015 = vmatpush1.bf16.msra.mxu0 %v4800
    %5016 = vmatprep.subr.bf16.mxu0 %v4803
    %5017 = vmatpush1.bf16.msra.mxu0 %v4802
    %5018 = vmatprep.mubr.bf16.mxu0 %v4323
    %5019 = vmatmul.mubr.bf16.gmra.mrb[0].mxu0 %v4322
    %v5020 = vpop.f32.mrb[0].mxu0
    %v5021 = vadd.f32 %v4978, %v5020
    %v5022 = vpop.f32.mrb[0].mxu0
    %v5023 = vadd.f32 %v4980, %v5022
    %v5024 = vpop.f32.mrb[0].mxu0
    %v5025 = vadd.f32 %v4982, %v5024
    %v5026 = vpop.f32.mrb[0].mxu0
    %v5027 = vadd.f32 %v4984, %v5026
    %5028 = vdwg.mxu0
    %v5029 = vrot.slane %v5021, 4
    %v5030 = vadd.f32 %v5021, %v5029
    %v5031 = vrot.slane %v5030, 2
    %v5032 = vadd.f32 %v5030, %v5031
    %v5033 = vrot.slane %v5032, 1
    %v5034 = vadd.f32 %v5032, %v5033
    %v5035 = vrot.slane %v5023, 4
    %v5036 = vadd.f32 %v5023, %v5035
    %v5037 = vrot.slane %v5036, 2
    %v5038 = vadd.f32 %v5036, %v5037
    %v5039 = vrot.slane %v5038, 1
    %v5040 = vadd.f32 %v5038, %v5039
    %v5041 = vrot.slane %v5025, 4
    %v5042 = vadd.f32 %v5025, %v5041
    %v5043 = vrot.slane %v5042, 2
    %v5044 = vadd.f32 %v5042, %v5043
    %v5045 = vrot.slane %v5044, 1
    %v5046 = vadd.f32 %v5044, %v5045
    %v5047 = vrot.slane %v5027, 4
    %v5048 = vadd.f32 %v5027, %v5047
    %v5049 = vrot.slane %v5048, 2
    %v5050 = vadd.f32 %v5048, %v5049
    %v5051 = vrot.slane %v5050, 1
    %v5052 = vadd.f32 %v5050, %v5051
    %v5053 = vadd.f32 %v5034, %v5040
    %5054 = vadd.xlane.f32.xlu0 %v5053
    %v5055 = vpop.xlane.xlu0 %5054
    %v5056 = vadd.f32 %v5046, %v5052
    %5057 = vadd.xlane.f32.xlu0 %v5056
    %v5058 = vpop.xlane.xlu0 %5057
    %v5059 = vmul.f32 %v5055, %v4183
    %v5060 = vmul.f32 %v5058, %v4183
    %v5061 = vsub.f32 %v5021, %v5059
    %v5062 = vsub.f32 %v5023, %v5059
    %v5063 = vsub.f32 %v5025, %v5060
    %v5064 = vsub.f32 %v5027, %v5060
    %v5065 = vmul.f32 %v5061, %v5061
    %v5066 = vmul.f32 %v5062, %v5062
    %v5067 = vmul.f32 %v5063, %v5063
    %v5068 = vmul.f32 %v5064, %v5064
    %v5069 = vrot.slane %v5065, 4
    %v5070 = vadd.f32 %v5065, %v5069
    %v5071 = vrot.slane %v5070, 2
    %v5072 = vadd.f32 %v5070, %v5071
    %v5073 = vrot.slane %v5072, 1
    %v5074 = vadd.f32 %v5072, %v5073
    %v5075 = vrot.slane %v5066, 4
    %v5076 = vadd.f32 %v5066, %v5075
    %v5077 = vrot.slane %v5076, 2
    %v5078 = vadd.f32 %v5076, %v5077
    %v5079 = vrot.slane %v5078, 1
    %v5080 = vadd.f32 %v5078, %v5079
    %v5081 = vrot.slane %v5067, 4
    %v5082 = vadd.f32 %v5067, %v5081
    %v5083 = vrot.slane %v5082, 2
    %v5084 = vadd.f32 %v5082, %v5083
    %v5085 = vrot.slane %v5084, 1
    %v5086 = vadd.f32 %v5084, %v5085
    %v5087 = vrot.slane %v5068, 4
    %v5088 = vadd.f32 %v5068, %v5087
    %v5089 = vrot.slane %v5088, 2
    %v5090 = vadd.f32 %v5088, %v5089
    %v5091 = vrot.slane %v5090, 1
    %v5092 = vadd.f32 %v5090, %v5091
    %v5093 = vadd.f32 %v5074, %v5080
    %5094 = vadd.xlane.f32.xlu0 %v5093
    %v5095 = vpop.xlane.xlu0 %5094
    %v5096 = vadd.f32 %v5086, %v5092
    %5097 = vadd.xlane.f32.xlu0 %v5096
    %v5098 = vpop.xlane.xlu0 %5097
    %v5099 = vmul.f32 %v5095, %v4183
    %v5100 = vmul.f32 %v5098, %v4183
    %v5101 = vadd.f32 %v5099, 1e-05
    %v5102 = vadd.f32 %v5100, 1e-05
    %v5103 = vrsqrt.pop %v5101
    %v5104 = vrsqrt.pop %v5102
    %v5105 = vmul.f32 %v5061, %v5103
    %v5106 = vmul.f32 %v5062, %v5103
    %v5107 = vmul.f32 %v5063, %v5104
    %v5108 = vmul.f32 %v5064, %v5104
    %v5109 = vld [vmem:[%s9] sm:$0x3]
    %v5111 = vlaneseq
    %v5112 = vshrl.u32 %v5111, 7
    %v5113 = vsub.s32 0, %v5112
    %v5114 = vrot.slane %v5109, %v5113
    %v5115 = vlaneseq
    %v5116 = vshrl.u32 %v5115, 7
    %v5117 = vsub.s32 1, %v5116
    %v5118 = vrot.slane %v5109, %v5117
    %v5121 = vmul.f32 %v5105, %v5114
    %v5122 = vmul.f32 %v5106, %v5118
    %v5123 = vmul.f32 %v5107, %v5114
    %v5124 = vmul.f32 %v5108, %v5118
    %v5125 = vld [vmem:[%s10] sm:$0x3]
    %v5127 = vlaneseq
    %v5128 = vshrl.u32 %v5127, 7
    %v5129 = vsub.s32 0, %v5128
    %v5130 = vrot.slane %v5125, %v5129
    %v5131 = vlaneseq
    %v5132 = vshrl.u32 %v5131, 7
    %v5133 = vsub.s32 1, %v5132
    %v5134 = vrot.slane %v5125, %v5133
    %v5137 = vadd.f32 %v5121, %v5130
    %v5138 = vadd.f32 %v5122, %v5134
    %v5139 = vadd.f32 %v5123, %v5130
    %v5140 = vadd.f32 %v5124, %v5134
    %v5141 = vsub.f32 0.0, %v5137
    %v5142 = vsub.f32 0.0, %v5138
    %v5143 = vsub.f32 0.0, %v5139
    %v5144 = vsub.f32 0.0, %v5140
    %v5145 = vmul.f32 %v5141, 1.442695
    %v5146 = vpow.pop %v5145
    %v5147 = vmul.f32 %v5142, 1.442695
    %v5148 = vpow.pop %v5147
    %v5149 = vmul.f32 %v5143, 1.442695
    %v5150 = vpow.pop %v5149
    %v5151 = vmul.f32 %v5144, 1.442695
    %v5152 = vpow.pop %v5151
    %v5153 = vadd.f32 %v5146, 1.0
    %v5154 = vadd.f32 %v5148, 1.0
    %v5155 = vadd.f32 %v5150, 1.0
    %v5156 = vadd.f32 %v5152, 1.0
    %v5157 = vrcp.pop %v5153
    %v5158 = vmul.f32 1.0, %v5157
    %v5159 = vrcp.pop %v5154
    %v5160 = vmul.f32 1.0, %v5159
    %v5161 = vrcp.pop %v5155
    %v5162 = vmul.f32 1.0, %v5161
    %v5163 = vrcp.pop %v5156
    %v5164 = vmul.f32 1.0, %v5163
    %v5165 = vmul.f32 %v5137, %v5158
    %v5166 = vmul.f32 %v5138, %v5160
    %v5167 = vmul.f32 %v5139, %v5162
    %v5168 = vmul.f32 %v5140, %v5164
    %v5169 = vpack.c.bf16 %v5167, %v5165
    %v5170 = vpack.c.bf16 %v5168, %v5166
    %v5171 = vld [vmem:[#allocation14] sm:$0xff]
    %v5172 = vld [vmem:[#allocation14 + $0x8] sm:$0xff]
    %v5173 = vld [vmem:[#allocation14 + $0x10] sm:$0xff]
    %v5174 = vld [vmem:[#allocation14 + $0x18] sm:$0xff]
    %v5175 = vld [vmem:[#allocation14 + $0x20] sm:$0xff]
    %v5176 = vld [vmem:[#allocation14 + $0x28] sm:$0xff]
    %v5177 = vld [vmem:[#allocation14 + $0x30] sm:$0xff]
    %v5178 = vld [vmem:[#allocation14 + $0x38] sm:$0xff]
    %v5179 = vld [vmem:[#allocation14 + $0x40] sm:$0xff]
    %v5180 = vld [vmem:[#allocation14 + $0x48] sm:$0xff]
    %v5181 = vld [vmem:[#allocation14 + $0x50] sm:$0xff]
    %v5182 = vld [vmem:[#allocation14 + $0x58] sm:$0xff]
    %v5183 = vld [vmem:[#allocation14 + $0x60] sm:$0xff]
    %v5184 = vld [vmem:[#allocation14 + $0x68] sm:$0xff]
    %v5185 = vld [vmem:[#allocation14 + $0x70] sm:$0xff]
    %v5186 = vld [vmem:[#allocation14 + $0x78] sm:$0xff]
    %v5187 = vld [vmem:[#allocation14 + $0x80] sm:$0xff]
    %v5188 = vld [vmem:[#allocation14 + $0x88] sm:$0xff]
    %v5189 = vld [vmem:[#allocation14 + $0x90] sm:$0xff]
    %v5190 = vld [vmem:[#allocation14 + $0x98] sm:$0xff]
    %v5191 = vld [vmem:[#allocation14 + $0xa0] sm:$0xff]
    %v5192 = vld [vmem:[#allocation14 + $0xa8] sm:$0xff]
    %v5193 = vld [vmem:[#allocation14 + $0xb0] sm:$0xff]
    %v5194 = vld [vmem:[#allocation14 + $0xb8] sm:$0xff]
    %v5195 = vld [vmem:[#allocation14 + $0xc0] sm:$0xff]
    %v5196 = vld [vmem:[#allocation14 + $0xc8] sm:$0xff]
    %v5197 = vld [vmem:[#allocation14 + $0xd0] sm:$0xff]
    %v5198 = vld [vmem:[#allocation14 + $0xd8] sm:$0xff]
    %v5199 = vld [vmem:[#allocation14 + $0xe0] sm:$0xff]
    %v5200 = vld [vmem:[#allocation14 + $0xe8] sm:$0xff]
    %v5201 = vld [vmem:[#allocation14 + $0xf0] sm:$0xff]
    %v5202 = vld [vmem:[#allocation14 + $0xf8] sm:$0xff]
    %v5235 = vunpack.c.l.b16 %v5171
    %v5236 = vunpack.c.h.b16 %v5171
    %v5237 = vunpack.c.l.b16 %v5172
    %v5238 = vunpack.c.h.b16 %v5172
    %v5239 = vunpack.c.l.b16 %v5173
    %v5240 = vunpack.c.h.b16 %v5173
    %v5241 = vunpack.c.l.b16 %v5174
    %v5242 = vunpack.c.h.b16 %v5174
    %v5243 = vunpack.c.l.b16 %v5175
    %v5244 = vunpack.c.h.b16 %v5175
    %v5245 = vunpack.c.l.b16 %v5176
    %v5246 = vunpack.c.h.b16 %v5176
    %v5247 = vunpack.c.l.b16 %v5177
    %v5248 = vunpack.c.h.b16 %v5177
    %v5249 = vunpack.c.l.b16 %v5178
    %v5250 = vunpack.c.h.b16 %v5178
    %v5251 = vunpack.c.l.b16 %v5179
    %v5252 = vunpack.c.h.b16 %v5179
    %v5253 = vunpack.c.l.b16 %v5180
    %v5254 = vunpack.c.h.b16 %v5180
    %v5255 = vunpack.c.l.b16 %v5181
    %v5256 = vunpack.c.h.b16 %v5181
    %v5257 = vunpack.c.l.b16 %v5182
    %v5258 = vunpack.c.h.b16 %v5182
    %v5259 = vunpack.c.l.b16 %v5183
    %v5260 = vunpack.c.h.b16 %v5183
    %v5261 = vunpack.c.l.b16 %v5184
    %v5262 = vunpack.c.h.b16 %v5184
    %v5263 = vunpack.c.l.b16 %v5185
    %v5264 = vunpack.c.h.b16 %v5185
    %v5265 = vunpack.c.l.b16 %v5186
    %v5266 = vunpack.c.h.b16 %v5186
    %v5267 = vunpack.c.l.b16 %v5187
    %v5268 = vunpack.c.h.b16 %v5187
    %v5269 = vunpack.c.l.b16 %v5188
    %v5270 = vunpack.c.h.b16 %v5188
    %v5271 = vunpack.c.l.b16 %v5189
    %v5272 = vunpack.c.h.b16 %v5189
    %v5273 = vunpack.c.l.b16 %v5190
    %v5274 = vunpack.c.h.b16 %v5190
    %v5275 = vunpack.c.l.b16 %v5191
    %v5276 = vunpack.c.h.b16 %v5191
    %v5277 = vunpack.c.l.b16 %v5192
    %v5278 = vunpack.c.h.b16 %v5192
    %v5279 = vunpack.c.l.b16 %v5193
    %v5280 = vunpack.c.h.b16 %v5193
    %v5281 = vunpack.c.l.b16 %v5194
    %v5282 = vunpack.c.h.b16 %v5194
    %v5283 = vunpack.c.l.b16 %v5195
    %v5284 = vunpack.c.h.b16 %v5195
    %v5285 = vunpack.c.l.b16 %v5196
    %v5286 = vunpack.c.h.b16 %v5196
    %v5287 = vunpack.c.l.b16 %v5197
    %v5288 = vunpack.c.h.b16 %v5197
    %v5289 = vunpack.c.l.b16 %v5198
    %v5290 = vunpack.c.h.b16 %v5198
    %v5291 = vunpack.c.l.b16 %v5199
    %v5292 = vunpack.c.h.b16 %v5199
    %v5293 = vunpack.c.l.b16 %v5200
    %v5294 = vunpack.c.h.b16 %v5200
    %v5295 = vunpack.c.l.b16 %v5201
    %v5296 = vunpack.c.h.b16 %v5201
    %v5297 = vunpack.c.l.b16 %v5202
    %v5298 = vunpack.c.h.b16 %v5202
    %v5299 = vpack.c.b16 %v5237, %v5235
    %v5300 = vpack.c.b16 %v5238, %v5236
    %v5301 = vpack.c.b16 %v5241, %v5239
    %v5302 = vpack.c.b16 %v5242, %v5240
    %v5303 = vpack.c.b16 %v5245, %v5243
    %v5304 = vpack.c.b16 %v5246, %v5244
    %v5305 = vpack.c.b16 %v5249, %v5247
    %v5306 = vpack.c.b16 %v5250, %v5248
    %v5307 = vpack.c.b16 %v5253, %v5251
    %v5308 = vpack.c.b16 %v5254, %v5252
    %v5309 = vpack.c.b16 %v5257, %v5255
    %v5310 = vpack.c.b16 %v5258, %v5256
    %v5311 = vpack.c.b16 %v5261, %v5259
    %v5312 = vpack.c.b16 %v5262, %v5260
    %v5313 = vpack.c.b16 %v5265, %v5263
    %v5314 = vpack.c.b16 %v5266, %v5264
    %v5315 = vpack.c.b16 %v5269, %v5267
    %v5316 = vpack.c.b16 %v5270, %v5268
    %v5317 = vpack.c.b16 %v5273, %v5271
    %v5318 = vpack.c.b16 %v5274, %v5272
    %v5319 = vpack.c.b16 %v5277, %v5275
    %v5320 = vpack.c.b16 %v5278, %v5276
    %v5321 = vpack.c.b16 %v5281, %v5279
    %v5322 = vpack.c.b16 %v5282, %v5280
    %v5323 = vpack.c.b16 %v5285, %v5283
    %v5324 = vpack.c.b16 %v5286, %v5284
    %v5325 = vpack.c.b16 %v5289, %v5287
    %v5326 = vpack.c.b16 %v5290, %v5288
    %v5327 = vpack.c.b16 %v5293, %v5291
    %v5328 = vpack.c.b16 %v5294, %v5292
    %v5329 = vpack.c.b16 %v5297, %v5295
    %v5330 = vpack.c.b16 %v5298, %v5296
    %5363 = vmatprep.subr.bf16.mxu0 %v5300
    %5364 = vmatpush1.bf16.msra.mxu0 %v5299
    %5365 = vmatprep.subr.bf16.mxu0 %v5302
    %5366 = vmatpush1.bf16.msra.mxu0 %v5301
    %5367 = vmatprep.subr.bf16.mxu0 %v5304
    %5368 = vmatpush1.bf16.msra.mxu0 %v5303
    %5369 = vmatprep.subr.bf16.mxu0 %v5306
    %5370 = vmatpush1.bf16.msra.mxu0 %v5305
    %5371 = vmatprep.subr.bf16.mxu0 %v5308
    %5372 = vmatpush1.bf16.msra.mxu0 %v5307
    %5373 = vmatprep.subr.bf16.mxu0 %v5310
    %5374 = vmatpush1.bf16.msra.mxu0 %v5309
    %5375 = vmatprep.subr.bf16.mxu0 %v5312
    %5376 = vmatpush1.bf16.msra.mxu0 %v5311
    %5377 = vmatprep.subr.bf16.mxu0 %v5314
    %5378 = vmatpush1.bf16.msra.mxu0 %v5313
    %5379 = vmatprep.subr.bf16.mxu0 %v5316
    %5380 = vmatpush1.bf16.msra.mxu0 %v5315
    %5381 = vmatprep.subr.bf16.mxu0 %v5318
    %5382 = vmatpush1.bf16.msra.mxu0 %v5317
    %5383 = vmatprep.subr.bf16.mxu0 %v5320
    %5384 = vmatpush1.bf16.msra.mxu0 %v5319
    %5385 = vmatprep.subr.bf16.mxu0 %v5322
    %5386 = vmatpush1.bf16.msra.mxu0 %v5321
    %5387 = vmatprep.subr.bf16.mxu0 %v5324
    %5388 = vmatpush1.bf16.msra.mxu0 %v5323
    %5389 = vmatprep.subr.bf16.mxu0 %v5326
    %5390 = vmatpush1.bf16.msra.mxu0 %v5325
    %5391 = vmatprep.subr.bf16.mxu0 %v5328
    %5392 = vmatpush1.bf16.msra.mxu0 %v5327
    %5393 = vmatprep.subr.bf16.mxu0 %v5330
    %5394 = vmatpush1.bf16.msra.mxu0 %v5329
    %5395 = vmatprep.mubr.bf16.mxu0 %v5170
    %5396 = vmatmul.mubr.bf16.gmra.mrb[0].mxu0 %v5169
    %v5397 = vpop.f32.mrb[0].mxu0
    %v5398 = vadd.f32 0.0, %v5397
    %v5399 = vpop.f32.mrb[0].mxu0
    %v5400 = vadd.f32 0.0, %v5399
    %v5401 = vpop.f32.mrb[0].mxu0
    %v5402 = vadd.f32 0.0, %v5401
    %v5403 = vpop.f32.mrb[0].mxu0
    %v5404 = vadd.f32 0.0, %v5403
    %5405 = vdwg.mxu0
    %v5406 = vrot.slane %v5398, 4
    %v5407 = vadd.f32 %v5398, %v5406
    %v5408 = vrot.slane %v5407, 2
    %v5409 = vadd.f32 %v5407, %v5408
    %v5410 = vrot.slane %v5409, 1
    %v5411 = vadd.f32 %v5409, %v5410
    %v5412 = vrot.slane %v5400, 4
    %v5413 = vadd.f32 %v5400, %v5412
    %v5414 = vrot.slane %v5413, 2
    %v5415 = vadd.f32 %v5413, %v5414
    %v5416 = vrot.slane %v5415, 1
    %v5417 = vadd.f32 %v5415, %v5416
    %v5418 = vrot.slane %v5402, 4
    %v5419 = vadd.f32 %v5402, %v5418
    %v5420 = vrot.slane %v5419, 2
    %v5421 = vadd.f32 %v5419, %v5420
    %v5422 = vrot.slane %v5421, 1
    %v5423 = vadd.f32 %v5421, %v5422
    %v5424 = vrot.slane %v5404, 4
    %v5425 = vadd.f32 %v5404, %v5424
    %v5426 = vrot.slane %v5425, 2
    %v5427 = vadd.f32 %v5425, %v5426
    %v5428 = vrot.slane %v5427, 1
    %v5429 = vadd.f32 %v5427, %v5428
    %v5430 = vadd.f32 %v5411, %v5417
    %5431 = vadd.xlane.f32.xlu0 %v5430
    %v5432 = vpop.xlane.xlu0 %5431
    %v5433 = vadd.f32 %v5423, %v5429
    %5434 = vadd.xlane.f32.xlu0 %v5433
    %v5435 = vpop.xlane.xlu0 %5434
    %v5436 = vmul.f32 %v5432, %v4183
    %v5437 = vmul.f32 %v5435, %v4183
    %v5438 = vsub.f32 %v5398, %v5436
    %v5439 = vsub.f32 %v5400, %v5436
    %v5440 = vsub.f32 %v5402, %v5437
    %v5441 = vsub.f32 %v5404, %v5437
    %v5442 = vmul.f32 %v5438, %v5438
    %v5443 = vmul.f32 %v5439, %v5439
    %v5444 = vmul.f32 %v5440, %v5440
    %v5445 = vmul.f32 %v5441, %v5441
    %v5446 = vrot.slane %v5442, 4
    %v5447 = vadd.f32 %v5442, %v5446
    %v5448 = vrot.slane %v5447, 2
    %v5449 = vadd.f32 %v5447, %v5448
    %v5450 = vrot.slane %v5449, 1
    %v5451 = vadd.f32 %v5449, %v5450
    %v5452 = vrot.slane %v5443, 4
    %v5453 = vadd.f32 %v5443, %v5452
    %v5454 = vrot.slane %v5453, 2
    %v5455 = vadd.f32 %v5453, %v5454
    %v5456 = vrot.slane %v5455, 1
    %v5457 = vadd.f32 %v5455, %v5456
    %v5458 = vrot.slane %v5444, 4
    %v5459 = vadd.f32 %v5444, %v5458
    %v5460 = vrot.slane %v5459, 2
    %v5461 = vadd.f32 %v5459, %v5460
    %v5462 = vrot.slane %v5461, 1
    %v5463 = vadd.f32 %v5461, %v5462
    %v5464 = vrot.slane %v5445, 4
    %v5465 = vadd.f32 %v5445, %v5464
    %v5466 = vrot.slane %v5465, 2
    %v5467 = vadd.f32 %v5465, %v5466
    %v5468 = vrot.slane %v5467, 1
    %v5469 = vadd.f32 %v5467, %v5468
    %v5470 = vadd.f32 %v5451, %v5457
    %5471 = vadd.xlane.f32.xlu0 %v5470
    %v5472 = vpop.xlane.xlu0 %5471
    %v5473 = vadd.f32 %v5463, %v5469
    %5474 = vadd.xlane.f32.xlu0 %v5473
    %v5475 = vpop.xlane.xlu0 %5474
    %v5476 = vmul.f32 %v5472, %v4183
    %v5477 = vmul.f32 %v5475, %v4183
    %v5478 = vadd.f32 %v5476, 1e-05
    %v5479 = vadd.f32 %v5477, 1e-05
    %v5480 = vrsqrt.pop %v5478
    %v5481 = vrsqrt.pop %v5479
    %v5482 = vmul.f32 %v5438, %v5480
    %v5483 = vmul.f32 %v5439, %v5480
    %v5484 = vmul.f32 %v5440, %v5481
    %v5485 = vmul.f32 %v5441, %v5481
    %v5486 = vmax.f32 %v5482, 0.0
    %v5487 = vmax.f32 %v5483, 0.0
    %v5488 = vmax.f32 %v5484, 0.0
    %v5489 = vmax.f32 %v5485, 0.0
    %v5490 = vand.u32 2147483647, %v5482
    %v5491 = vand.u32 2147483647, %v5483
    %v5492 = vand.u32 2147483647, %v5484
    %v5493 = vand.u32 2147483647, %v5485
    %v5494 = vsub.f32 0.0, %v5490
    %v5495 = vsub.f32 0.0, %v5491
    %v5496 = vsub.f32 0.0, %v5492
    %v5497 = vsub.f32 0.0, %v5493
    %v5498 = vmul.f32 %v5494, 1.442695
    %v5499 = vpow.pop %v5498
    %v5500 = vmul.f32 %v5495, 1.442695
    %v5501 = vpow.pop %v5500
    %v5502 = vmul.f32 %v5496, 1.442695
    %v5503 = vpow.pop %v5502
    %v5504 = vmul.f32 %v5497, 1.442695
    %v5505 = vpow.pop %v5504
    %v5506 = vadd.f32 %v5499, 1.0
    %v5507 = vadd.f32 %v5501, 1.0
    %v5508 = vadd.f32 %v5503, 1.0
    %v5509 = vadd.f32 %v5505, 1.0
    %v5510 = vlog2.pop %v5506
    %v5511 = vmul.f32 %v5510, 0.6931472
    %v5512 = vlog2.pop %v5507
    %v5513 = vmul.f32 %v5512, 0.6931472
    %v5514 = vlog2.pop %v5508
    %v5515 = vmul.f32 %v5514, 0.6931472
    %v5516 = vlog2.pop %v5509
    %v5517 = vmul.f32 %v5516, 0.6931472
    %v5518 = vadd.f32 %v5486, %v5511
    %v5519 = vadd.f32 %v5487, %v5513
    %v5520 = vadd.f32 %v5488, %v5515
    %v5521 = vadd.f32 %v5489, %v5517
    %v5522 = vtanh.pop %v5518
    %v5523 = vtanh.pop %v5519
    %v5524 = vtanh.pop %v5520
    %v5525 = vtanh.pop %v5521
    %v5526 = vmul.f32 %v5482, %v5522
    %v5527 = vmul.f32 %v5483, %v5523
    %v5528 = vmul.f32 %v5484, %v5524
    %v5529 = vmul.f32 %v5485, %v5525
    %v5530 = vpack.c.bf16 %v5528, %v5526
    %v5531 = vpack.c.bf16 %v5529, %v5527
    %v5532 = vld [vmem:[#allocation15] sm:$0xff]
    %v5533 = vld [vmem:[#allocation15 + $0x8] sm:$0xff]
    %v5534 = vld [vmem:[#allocation15 + $0x10] sm:$0xff]
    %v5535 = vld [vmem:[#allocation15 + $0x18] sm:$0xff]
    %v5536 = vld [vmem:[#allocation15 + $0x20] sm:$0xff]
    %v5537 = vld [vmem:[#allocation15 + $0x28] sm:$0xff]
    %v5538 = vld [vmem:[#allocation15 + $0x30] sm:$0xff]
    %v5539 = vld [vmem:[#allocation15 + $0x38] sm:$0xff]
    %v5540 = vld [vmem:[#allocation15 + $0x40] sm:$0xff]
    %v5541 = vld [vmem:[#allocation15 + $0x48] sm:$0xff]
    %v5542 = vld [vmem:[#allocation15 + $0x50] sm:$0xff]
    %v5543 = vld [vmem:[#allocation15 + $0x58] sm:$0xff]
    %v5544 = vld [vmem:[#allocation15 + $0x60] sm:$0xff]
    %v5545 = vld [vmem:[#allocation15 + $0x68] sm:$0xff]
    %v5546 = vld [vmem:[#allocation15 + $0x70] sm:$0xff]
    %v5547 = vld [vmem:[#allocation15 + $0x78] sm:$0xff]
    %v5548 = vld [vmem:[#allocation15 + $0x80] sm:$0xff]
    %v5549 = vld [vmem:[#allocation15 + $0x88] sm:$0xff]
    %v5550 = vld [vmem:[#allocation15 + $0x90] sm:$0xff]
    %v5551 = vld [vmem:[#allocation15 + $0x98] sm:$0xff]
    %v5552 = vld [vmem:[#allocation15 + $0xa0] sm:$0xff]
    %v5553 = vld [vmem:[#allocation15 + $0xa8] sm:$0xff]
    %v5554 = vld [vmem:[#allocation15 + $0xb0] sm:$0xff]
    %v5555 = vld [vmem:[#allocation15 + $0xb8] sm:$0xff]
    %v5556 = vld [vmem:[#allocation15 + $0xc0] sm:$0xff]
    %v5557 = vld [vmem:[#allocation15 + $0xc8] sm:$0xff]
    %v5558 = vld [vmem:[#allocation15 + $0xd0] sm:$0xff]
    %v5559 = vld [vmem:[#allocation15 + $0xd8] sm:$0xff]
    %v5560 = vld [vmem:[#allocation15 + $0xe0] sm:$0xff]
    %v5561 = vld [vmem:[#allocation15 + $0xe8] sm:$0xff]
    %v5562 = vld [vmem:[#allocation15 + $0xf0] sm:$0xff]
    %v5563 = vld [vmem:[#allocation15 + $0xf8] sm:$0xff]
    %v5564 = vld [vmem:[#allocation15 + $0x100] sm:$0xff]
    %v5565 = vld [vmem:[#allocation15 + $0x108] sm:$0xff]
    %v5566 = vld [vmem:[#allocation15 + $0x110] sm:$0xff]
    %v5567 = vld [vmem:[#allocation15 + $0x118] sm:$0xff]
    %v5568 = vld [vmem:[#allocation15 + $0x120] sm:$0xff]
    %v5569 = vld [vmem:[#allocation15 + $0x128] sm:$0xff]
    %v5570 = vld [vmem:[#allocation15 + $0x130] sm:$0xff]
    %v5571 = vld [vmem:[#allocation15 + $0x138] sm:$0xff]
    %v5572 = vld [vmem:[#allocation15 + $0x140] sm:$0xff]
    %v5573 = vld [vmem:[#allocation15 + $0x148] sm:$0xff]
    %v5574 = vld [vmem:[#allocation15 + $0x150] sm:$0xff]
    %v5575 = vld [vmem:[#allocation15 + $0x158] sm:$0xff]
    %v5576 = vld [vmem:[#allocation15 + $0x160] sm:$0xff]
    %v5577 = vld [vmem:[#allocation15 + $0x168] sm:$0xff]
    %v5578 = vld [vmem:[#allocation15 + $0x170] sm:$0xff]
    %v5579 = vld [vmem:[#allocation15 + $0x178] sm:$0xff]
    %v5580 = vld [vmem:[#allocation15 + $0x180] sm:$0xff]
    %v5581 = vld [vmem:[#allocation15 + $0x188] sm:$0xff]
    %v5582 = vld [vmem:[#allocation15 + $0x190] sm:$0xff]
    %v5583 = vld [vmem:[#allocation15 + $0x198] sm:$0xff]
    %v5584 = vld [vmem:[#allocation15 + $0x1a0] sm:$0xff]
    %v5585 = vld [vmem:[#allocation15 + $0x1a8] sm:$0xff]
    %v5586 = vld [vmem:[#allocation15 + $0x1b0] sm:$0xff]
    %v5587 = vld [vmem:[#allocation15 + $0x1b8] sm:$0xff]
    %v5588 = vld [vmem:[#allocation15 + $0x1c0] sm:$0xff]
    %v5589 = vld [vmem:[#allocation15 + $0x1c8] sm:$0xff]
    %v5590 = vld [vmem:[#allocation15 + $0x1d0] sm:$0xff]
    %v5591 = vld [vmem:[#allocation15 + $0x1d8] sm:$0xff]
    %v5592 = vld [vmem:[#allocation15 + $0x1e0] sm:$0xff]
    %v5593 = vld [vmem:[#allocation15 + $0x1e8] sm:$0xff]
    %v5594 = vld [vmem:[#allocation15 + $0x1f0] sm:$0xff]
    %v5595 = vld [vmem:[#allocation15 + $0x1f8] sm:$0xff]
    %v5660 = vunpack.c.l.b16 %v5532
    %v5661 = vunpack.c.h.b16 %v5532
    %v5662 = vunpack.c.l.b16 %v5533
    %v5663 = vunpack.c.h.b16 %v5533
    %v5664 = vunpack.c.l.b16 %v5534
    %v5665 = vunpack.c.h.b16 %v5534
    %v5666 = vunpack.c.l.b16 %v5535
    %v5667 = vunpack.c.h.b16 %v5535
    %v5668 = vunpack.c.l.b16 %v5536
    %v5669 = vunpack.c.h.b16 %v5536
    %v5670 = vunpack.c.l.b16 %v5537
    %v5671 = vunpack.c.h.b16 %v5537
    %v5672 = vunpack.c.l.b16 %v5538
    %v5673 = vunpack.c.h.b16 %v5538
    %v5674 = vunpack.c.l.b16 %v5539
    %v5675 = vunpack.c.h.b16 %v5539
    %v5676 = vunpack.c.l.b16 %v5540
    %v5677 = vunpack.c.h.b16 %v5540
    %v5678 = vunpack.c.l.b16 %v5541
    %v5679 = vunpack.c.h.b16 %v5541
    %v5680 = vunpack.c.l.b16 %v5542
    %v5681 = vunpack.c.h.b16 %v5542
    %v5682 = vunpack.c.l.b16 %v5543
    %v5683 = vunpack.c.h.b16 %v5543
    %v5684 = vunpack.c.l.b16 %v5544
    %v5685 = vunpack.c.h.b16 %v5544
    %v5686 = vunpack.c.l.b16 %v5545
    %v5687 = vunpack.c.h.b16 %v5545
    %v5688 = vunpack.c.l.b16 %v5546
    %v5689 = vunpack.c.h.b16 %v5546
    %v5690 = vunpack.c.l.b16 %v5547
    %v5691 = vunpack.c.h.b16 %v5547
    %v5692 = vunpack.c.l.b16 %v5548
    %v5693 = vunpack.c.h.b16 %v5548
    %v5694 = vunpack.c.l.b16 %v5549
    %v5695 = vunpack.c.h.b16 %v5549
    %v5696 = vunpack.c.l.b16 %v5550
    %v5697 = vunpack.c.h.b16 %v5550
    %v5698 = vunpack.c.l.b16 %v5551
    %v5699 = vunpack.c.h.b16 %v5551
    %v5700 = vunpack.c.l.b16 %v5552
    %v5701 = vunpack.c.h.b16 %v5552
    %v5702 = vunpack.c.l.b16 %v5553
    %v5703 = vunpack.c.h.b16 %v5553
    %v5704 = vunpack.c.l.b16 %v5554
    %v5705 = vunpack.c.h.b16 %v5554
    %v5706 = vunpack.c.l.b16 %v5555
    %v5707 = vunpack.c.h.b16 %v5555
    %v5708 = vunpack.c.l.b16 %v5556
    %v5709 = vunpack.c.h.b16 %v5556
    %v5710 = vunpack.c.l.b16 %v5557
    %v5711 = vunpack.c.h.b16 %v5557
    %v5712 = vunpack.c.l.b16 %v5558
    %v5713 = vunpack.c.h.b16 %v5558
    %v5714 = vunpack.c.l.b16 %v5559
    %v5715 = vunpack.c.h.b16 %v5559
    %v5716 = vunpack.c.l.b16 %v5560
    %v5717 = vunpack.c.h.b16 %v5560
    %v5718 = vunpack.c.l.b16 %v5561
    %v5719 = vunpack.c.h.b16 %v5561
    %v5720 = vunpack.c.l.b16 %v5562
    %v5721 = vunpack.c.h.b16 %v5562
    %v5722 = vunpack.c.l.b16 %v5563
    %v5723 = vunpack.c.h.b16 %v5563
    %v5724 = vunpack.c.l.b16 %v5564
    %v5725 = vunpack.c.h.b16 %v5564
    %v5726 = vunpack.c.l.b16 %v5565
    %v5727 = vunpack.c.h.b16 %v5565
    %v5728 = vunpack.c.l.b16 %v5566
    %v5729 = vunpack.c.h.b16 %v5566
    %v5730 = vunpack.c.l.b16 %v5567
    %v5731 = vunpack.c.h.b16 %v5567
    %v5732 = vunpack.c.l.b16 %v5568
    %v5733 = vunpack.c.h.b16 %v5568
    %v5734 = vunpack.c.l.b16 %v5569
    %v5735 = vunpack.c.h.b16 %v5569
    %v5736 = vunpack.c.l.b16 %v5570
    %v5737 = vunpack.c.h.b16 %v5570
    %v5738 = vunpack.c.l.b16 %v5571
    %v5739 = vunpack.c.h.b16 %v5571
    %v5740 = vunpack.c.l.b16 %v5572
    %v5741 = vunpack.c.h.b16 %v5572
    %v5742 = vunpack.c.l.b16 %v5573
    %v5743 = vunpack.c.h.b16 %v5573
    %v5744 = vunpack.c.l.b16 %v5574
    %v5745 = vunpack.c.h.b16 %v5574
    %v5746 = vunpack.c.l.b16 %v5575
    %v5747 = vunpack.c.h.b16 %v5575
    %v5748 = vunpack.c.l.b16 %v5576
    %v5749 = vunpack.c.h.b16 %v5576
    %v5750 = vunpack.c.l.b16 %v5577
    %v5751 = vunpack.c.h.b16 %v5577
    %v5752 = vunpack.c.l.b16 %v5578
    %v5753 = vunpack.c.h.b16 %v5578
    %v5754 = vunpack.c.l.b16 %v5579
    %v5755 = vunpack.c.h.b16 %v5579
    %v5756 = vunpack.c.l.b16 %v5580
    %v5757 = vunpack.c.h.b16 %v5580
    %v5758 = vunpack.c.l.b16 %v5581
    %v5759 = vunpack.c.h.b16 %v5581
    %v5760 = vunpack.c.l.b16 %v5582
    %v5761 = vunpack.c.h.b16 %v5582
    %v5762 = vunpack.c.l.b16 %v5583
    %v5763 = vunpack.c.h.b16 %v5583
    %v5764 = vunpack.c.l.b16 %v5584
    %v5765 = vunpack.c.h.b16 %v5584
    %v5766 = vunpack.c.l.b16 %v5585
    %v5767 = vunpack.c.h.b16 %v5585
    %v5768 = vunpack.c.l.b16 %v5586
    %v5769 = vunpack.c.h.b16 %v5586
    %v5770 = vunpack.c.l.b16 %v5587
    %v5771 = vunpack.c.h.b16 %v5587
    %v5772 = vunpack.c.l.b16 %v5588
    %v5773 = vunpack.c.h.b16 %v5588
    %v5774 = vunpack.c.l.b16 %v5589
    %v5775 = vunpack.c.h.b16 %v5589
    %v5776 = vunpack.c.l.b16 %v5590
    %v5777 = vunpack.c.h.b16 %v5590
    %v5778 = vunpack.c.l.b16 %v5591
    %v5779 = vunpack.c.h.b16 %v5591
    %v5780 = vunpack.c.l.b16 %v5592
    %v5781 = vunpack.c.h.b16 %v5592
    %v5782 = vunpack.c.l.b16 %v5593
    %v5783 = vunpack.c.h.b16 %v5593
    %v5784 = vunpack.c.l.b16 %v5594
    %v5785 = vunpack.c.h.b16 %v5594
    %v5786 = vunpack.c.l.b16 %v5595
    %v5787 = vunpack.c.h.b16 %v5595
    %v5788 = vpack.c.b16 %v5664, %v5660
    %v5789 = vpack.c.b16 %v5665, %v5661
    %v5790 = vpack.c.b16 %v5666, %v5662
    %v5791 = vpack.c.b16 %v5667, %v5663
    %v5792 = vpack.c.b16 %v5672, %v5668
    %v5793 = vpack.c.b16 %v5673, %v5669
    %v5794 = vpack.c.b16 %v5674, %v5670
    %v5795 = vpack.c.b16 %v5675, %v5671
    %v5796 = vpack.c.b16 %v5680, %v5676
    %v5797 = vpack.c.b16 %v5681, %v5677
    %v5798 = vpack.c.b16 %v5682, %v5678
    %v5799 = vpack.c.b16 %v5683, %v5679
    %v5800 = vpack.c.b16 %v5688, %v5684
    %v5801 = vpack.c.b16 %v5689, %v5685
    %v5802 = vpack.c.b16 %v5690, %v5686
    %v5803 = vpack.c.b16 %v5691, %v5687
    %v5804 = vpack.c.b16 %v5696, %v5692
    %v5805 = vpack.c.b16 %v5697, %v5693
    %v5806 = vpack.c.b16 %v5698, %v5694
    %v5807 = vpack.c.b16 %v5699, %v5695
    %v5808 = vpack.c.b16 %v5704, %v5700
    %v5809 = vpack.c.b16 %v5705, %v5701
    %v5810 = vpack.c.b16 %v5706, %v5702
    %v5811 = vpack.c.b16 %v5707, %v5703
    %v5812 = vpack.c.b16 %v5712, %v5708
    %v5813 = vpack.c.b16 %v5713, %v5709
    %v5814 = vpack.c.b16 %v5714, %v5710
    %v5815 = vpack.c.b16 %v5715, %v5711
    %v5816 = vpack.c.b16 %v5720, %v5716
    %v5817 = vpack.c.b16 %v5721, %v5717
    %v5818 = vpack.c.b16 %v5722, %v5718
    %v5819 = vpack.c.b16 %v5723, %v5719
    %v5820 = vpack.c.b16 %v5728, %v5724
    %v5821 = vpack.c.b16 %v5729, %v5725
    %v5822 = vpack.c.b16 %v5730, %v5726
    %v5823 = vpack.c.b16 %v5731, %v5727
    %v5824 = vpack.c.b16 %v5736, %v5732
    %v5825 = vpack.c.b16 %v5737, %v5733
    %v5826 = vpack.c.b16 %v5738, %v5734
    %v5827 = vpack.c.b16 %v5739, %v5735
    %v5828 = vpack.c.b16 %v5744, %v5740
    %v5829 = vpack.c.b16 %v5745, %v5741
    %v5830 = vpack.c.b16 %v5746, %v5742
    %v5831 = vpack.c.b16 %v5747, %v5743
    %v5832 = vpack.c.b16 %v5752, %v5748
    %v5833 = vpack.c.b16 %v5753, %v5749
    %v5834 = vpack.c.b16 %v5754, %v5750
    %v5835 = vpack.c.b16 %v5755, %v5751
    %v5836 = vpack.c.b16 %v5760, %v5756
    %v5837 = vpack.c.b16 %v5761, %v5757
    %v5838 = vpack.c.b16 %v5762, %v5758
    %v5839 = vpack.c.b16 %v5763, %v5759
    %v5840 = vpack.c.b16 %v5768, %v5764
    %v5841 = vpack.c.b16 %v5769, %v5765
    %v5842 = vpack.c.b16 %v5770, %v5766
    %v5843 = vpack.c.b16 %v5771, %v5767
    %v5844 = vpack.c.b16 %v5776, %v5772
    %v5845 = vpack.c.b16 %v5777, %v5773
    %v5846 = vpack.c.b16 %v5778, %v5774
    %v5847 = vpack.c.b16 %v5779, %v5775
    %v5848 = vpack.c.b16 %v5784, %v5780
    %v5849 = vpack.c.b16 %v5785, %v5781
    %v5850 = vpack.c.b16 %v5786, %v5782
    %v5851 = vpack.c.b16 %v5787, %v5783
    %5916 = vmatprep.subr.bf16.mxu0 %v5789
    %5917 = vmatpush1.bf16.msra.mxu0 %v5788
    %5918 = vmatprep.subr.bf16.mxu0 %v5793
    %5919 = vmatpush1.bf16.msra.mxu0 %v5792
    %5920 = vmatprep.subr.bf16.mxu0 %v5797
    %5921 = vmatpush1.bf16.msra.mxu0 %v5796
    %5922 = vmatprep.subr.bf16.mxu0 %v5801
    %5923 = vmatpush1.bf16.msra.mxu0 %v5800
    %5924 = vmatprep.subr.bf16.mxu0 %v5805
    %5925 = vmatpush1.bf16.msra.mxu0 %v5804
    %5926 = vmatprep.subr.bf16.mxu0 %v5809
    %5927 = vmatpush1.bf16.msra.mxu0 %v5808
    %5928 = vmatprep.subr.bf16.mxu0 %v5813
    %5929 = vmatpush1.bf16.msra.mxu0 %v5812
    %5930 = vmatprep.subr.bf16.mxu0 %v5817
    %5931 = vmatpush1.bf16.msra.mxu0 %v5816
    %5932 = vmatprep.subr.bf16.mxu0 %v5821
    %5933 = vmatpush1.bf16.msra.mxu0 %v5820
    %5934 = vmatprep.subr.bf16.mxu0 %v5825
    %5935 = vmatpush1.bf16.msra.mxu0 %v5824
    %5936 = vmatprep.subr.bf16.mxu0 %v5829
    %5937 = vmatpush1.bf16.msra.mxu0 %v5828
    %5938 = vmatprep.subr.bf16.mxu0 %v5833
    %5939 = vmatpush1.bf16.msra.mxu0 %v5832
    %5940 = vmatprep.subr.bf16.mxu0 %v5837
    %5941 = vmatpush1.bf16.msra.mxu0 %v5836
    %5942 = vmatprep.subr.bf16.mxu0 %v5841
    %5943 = vmatpush1.bf16.msra.mxu0 %v5840
    %5944 = vmatprep.subr.bf16.mxu0 %v5845
    %5945 = vmatpush1.bf16.msra.mxu0 %v5844
    %5946 = vmatprep.subr.bf16.mxu0 %v5849
    %5947 = vmatpush1.bf16.msra.mxu0 %v5848
    %5948 = vmatprep.mubr.bf16.mxu0 %v5531
    %5949 = vmatmul.mubr.bf16.gmra.mrb[0].mxu0 %v5530
    %v5950 = vpop.f32.mrb[0].mxu0
    %v5951 = vadd.f32 0.0, %v5950
    %v5952 = vpop.f32.mrb[0].mxu0
    %v5953 = vadd.f32 0.0, %v5952
    %v5954 = vpop.f32.mrb[0].mxu0
    %v5955 = vadd.f32 0.0, %v5954
    %v5956 = vpop.f32.mrb[0].mxu0
    %v5957 = vadd.f32 0.0, %v5956
    %5958 = vdwg.mxu0
    %5959 = vmatprep.subr.bf16.mxu0 %v5791
    %5960 = vmatpush1.bf16.msra.mxu0 %v5790
    %5961 = vmatprep.subr.bf16.mxu0 %v5795
    %5962 = vmatpush1.bf16.msra.mxu0 %v5794
    %5963 = vmatprep.subr.bf16.mxu0 %v5799
    %5964 = vmatpush1.bf16.msra.mxu0 %v5798
    %5965 = vmatprep.subr.bf16.mxu0 %v5803
    %5966 = vmatpush1.bf16.msra.mxu0 %v5802
    %5967 = vmatprep.subr.bf16.mxu0 %v5807
    %5968 = vmatpush1.bf16.msra.mxu0 %v5806
    %5969 = vmatprep.subr.bf16.mxu0 %v5811
    %5970 = vmatpush1.bf16.msra.mxu0 %v5810
    %5971 = vmatprep.subr.bf16.mxu0 %v5815
    %5972 = vmatpush1.bf16.msra.mxu0 %v5814
    %5973 = vmatprep.subr.bf16.mxu0 %v5819
    %5974 = vmatpush1.bf16.msra.mxu0 %v5818
    %5975 = vmatprep.subr.bf16.mxu0 %v5823
    %5976 = vmatpush1.bf16.msra.mxu0 %v5822
    %5977 = vmatprep.subr.bf16.mxu0 %v5827
    %5978 = vmatpush1.bf16.msra.mxu0 %v5826
    %5979 = vmatprep.subr.bf16.mxu0 %v5831
    %5980 = vmatpush1.bf16.msra.mxu0 %v5830
    %5981 = vmatprep.subr.bf16.mxu0 %v5835
    %5982 = vmatpush1.bf16.msra.mxu0 %v5834
    %5983 = vmatprep.subr.bf16.mxu0 %v5839
    %5984 = vmatpush1.bf16.msra.mxu0 %v5838
    %5985 = vmatprep.subr.bf16.mxu0 %v5843
    %5986 = vmatpush1.bf16.msra.mxu0 %v5842
    %5987 = vmatprep.subr.bf16.mxu0 %v5847
    %5988 = vmatpush1.bf16.msra.mxu0 %v5846
    %5989 = vmatprep.subr.bf16.mxu0 %v5851
    %5990 = vmatpush1.bf16.msra.mxu0 %v5850
    %5991 = vmatprep.mubr.bf16.mxu0 %v5531
    %5992 = vmatmul.mubr.bf16.gmra.mrb[0].mxu0 %v5530
    %v5993 = vpop.f32.mrb[0].mxu0
    %v5994 = vadd.f32 0.0, %v5993
    %v5995 = vpop.f32.mrb[0].mxu0
    %v5996 = vadd.f32 0.0, %v5995
    %v5997 = vpop.f32.mrb[0].mxu0
    %v5998 = vadd.f32 0.0, %v5997
    %v5999 = vpop.f32.mrb[0].mxu0
    %v6000 = vadd.f32 0.0, %v5999
    %6001 = vdwg.mxu0
    %v6002 = vld [vmem:[%s13] sm:$0xf]
    %v6003 = vld [vmem:[%s13 + $0x4] sm:$0xf]
    %v6004 = vld [vmem:[%s13 + $0x8] sm:$0xf]
    %v6005 = vld [vmem:[%s13 + $0xc] sm:$0xf]
    %v6006 = vpack.c.bf16 %v5955, %v5951
    %v6007 = vpack.c.bf16 %v5957, %v5953
    %v6008 = vpack.c.bf16 %v5998, %v5994
    %v6009 = vpack.c.bf16 %v6000, %v5996
    %v6014 = vunpack.c.l.b16 %v6002
    %v6015 = vunpack.c.l.b16 %v6003
    %v6016 = vunpack.c.l.b16 %v6004
    %v6017 = vunpack.c.l.b16 %v6005
    %v6018 = vpack.c.b16 %v6015, %v6014
    %v6019 = vpack.c.b16 %v6017, %v6016
    %vm6020 = vcmask 130048
    %v6022 = vsel %vm6020, %v6018, 0
    %v6025 = vsel %vm6020, %v6019, 0
    %6027 = vmatprep.subr.bf16.mxu0 %v6007
    %6028 = vmatpush1.bf16.msra.mxu0 %v6006
    %6029 = vmatprep.subr.bf16.mxu0 0
    %6030 = vmatpush1.bf16.msra.mxu0 0
    %6031 = vmatprep.subr.bf16.mxu0 0
    %6032 = vmatpush1.bf16.msra.mxu0 0
    %6033 = vmatprep.subr.bf16.mxu0 0
    %6034 = vmatpush1.bf16.msra.mxu0 0
    %6035 = vmatprep.subr.bf16.mxu0 0
    %6036 = vmatpush1.bf16.msra.mxu0 0
    %6037 = vmatprep.subr.bf16.mxu0 0
    %6038 = vmatpush1.bf16.msra.mxu0 0
    %6039 = vmatprep.subr.bf16.mxu0 0
    %6040 = vmatpush1.bf16.msra.mxu0 0
    %6041 = vmatprep.subr.bf16.mxu0 0
    %6042 = vmatpush1.bf16.msra.mxu0 0
    %6043 = vmatprep.subr.bf16.mxu0 0
    %6044 = vmatpush1.bf16.msra.mxu0 0
    %6045 = vmatprep.subr.bf16.mxu0 0
    %6046 = vmatpush1.bf16.msra.mxu0 0
    %6047 = vmatprep.subr.bf16.mxu0 0
    %6048 = vmatpush1.bf16.msra.mxu0 0
    %6049 = vmatprep.subr.bf16.mxu0 0
    %6050 = vmatpush1.bf16.msra.mxu0 0
    %6051 = vmatprep.subr.bf16.mxu0 0
    %6052 = vmatpush1.bf16.msra.mxu0 0
    %6053 = vmatprep.subr.bf16.mxu0 0
    %6054 = vmatpush1.bf16.msra.mxu0 0
    %6055 = vmatprep.subr.bf16.mxu0 0
    %6056 = vmatpush1.bf16.msra.mxu0 0
    %6057 = vmatprep.subr.bf16.mxu0 0
    %6058 = vmatpush1.bf16.msra.mxu0 0
    %6059 = vmatprep.mubr.bf16.mxu0 0
    %6060 = vmatmul.mubr.bf16.gmra.mrb[0].mxu0 %v6022
    %v6061 = vpop.f32.mrb[0].mxu0
    %v6062 = vadd.f32 0.0, %v6061
    %v6063 = vpop.f32.mrb[0].mxu0
    %v6064 = vadd.f32 0.0, %v6063
    %v6065 = vpop.f32.mrb[0].mxu0
    %v6066 = vadd.f32 0.0, %v6065
    %v6067 = vpop.f32.mrb[0].mxu0
    %v6068 = vadd.f32 0.0, %v6067
    %6069 = vmatprep.mubr.bf16.mxu0 0
    %6070 = vmatmul.mubr.bf16.gmra.mrb[0].mxu0 %v6025
    %v6071 = vpop.f32.mrb[0].mxu0
    %v6072 = vadd.f32 0.0, %v6071
    %v6073 = vpop.f32.mrb[0].mxu0
    %v6074 = vadd.f32 0.0, %v6073
    %v6075 = vpop.f32.mrb[0].mxu0
    %v6076 = vadd.f32 0.0, %v6075
    %v6077 = vpop.f32.mrb[0].mxu0
    %v6078 = vadd.f32 0.0, %v6077
    %6079 = vdwg.mxu0
    %6080 = vmatprep.subr.bf16.mxu0 %v6009
    %6081 = vmatpush1.bf16.msra.mxu0 %v6008
    %6082 = vmatprep.subr.bf16.mxu0 0
    %6083 = vmatpush1.bf16.msra.mxu0 0
    %6084 = vmatprep.subr.bf16.mxu0 0
    %6085 = vmatpush1.bf16.msra.mxu0 0
    %6086 = vmatprep.subr.bf16.mxu0 0
    %6087 = vmatpush1.bf16.msra.mxu0 0
    %6088 = vmatprep.subr.bf16.mxu0 0
    %6089 = vmatpush1.bf16.msra.mxu0 0
    %6090 = vmatprep.subr.bf16.mxu0 0
    %6091 = vmatpush1.bf16.msra.mxu0 0
    %6092 = vmatprep.subr.bf16.mxu0 0
    %6093 = vmatpush1.bf16.msra.mxu0 0
    %6094 = vmatprep.subr.bf16.mxu0 0
    %6095 = vmatpush1.bf16.msra.mxu0 0
    %6096 = vmatprep.subr.bf16.mxu0 0
    %6097 = vmatpush1.bf16.msra.mxu0 0
    %6098 = vmatprep.subr.bf16.mxu0 0
    %6099 = vmatpush1.bf16.msra.mxu0 0
    %6100 = vmatprep.subr.bf16.mxu0 0
    %6101 = vmatpush1.bf16.msra.mxu0 0
    %6102 = vmatprep.subr.bf16.mxu0 0
    %6103 = vmatpush1.bf16.msra.mxu0 0
    %6104 = vmatprep.subr.bf16.mxu0 0
    %6105 = vmatpush1.bf16.msra.mxu0 0
    %6106 = vmatprep.subr.bf16.mxu0 0
    %6107 = vmatpush1.bf16.msra.mxu0 0
    %6108 = vmatprep.subr.bf16.mxu0 0
    %6109 = vmatpush1.bf16.msra.mxu0 0
    %6110 = vmatprep.subr.bf16.mxu0 0
    %6111 = vmatpush1.bf16.msra.mxu0 0
    %6112 = vmatprep.mubr.bf16.mxu0 0
    %6113 = vmatmul.mubr.bf16.gmra.mrb[0].mxu0 %v6022
    %v6114 = vpop.f32.mrb[0].mxu0
    %v6115 = vadd.f32 0.0, %v6114
    %v6116 = vpop.f32.mrb[0].mxu0
    %v6117 = vadd.f32 0.0, %v6116
    %v6118 = vpop.f32.mrb[0].mxu0
    %v6119 = vadd.f32 0.0, %v6118
    %v6120 = vpop.f32.mrb[0].mxu0
    %v6121 = vadd.f32 0.0, %v6120
    %6122 = vmatprep.mubr.bf16.mxu0 0
    %6123 = vmatmul.mubr.bf16.gmra.mrb[0].mxu0 %v6025
    %v6124 = vpop.f32.mrb[0].mxu0
    %v6125 = vadd.f32 0.0, %v6124
    %v6126 = vpop.f32.mrb[0].mxu0
    %v6127 = vadd.f32 0.0, %v6126
    %v6128 = vpop.f32.mrb[0].mxu0
    %v6129 = vadd.f32 0.0, %v6128
    %v6130 = vpop.f32.mrb[0].mxu0
    %v6131 = vadd.f32 0.0, %v6130
    %6132 = vdwg.mxu0
    %v6133 = vadd.f32 %v6062, %v6066
    %v6134 = vrot.slane %v6133, 4
    %v6135 = vadd.f32 %v6133, %v6134
    %v6136 = vrot.slane %v6135, 2
    %v6137 = vadd.f32 %v6135, %v6136
    %v6138 = vrot.slane %v6137, 1
    %v6139 = vadd.f32 %v6137, %v6138
    %v6140 = vadd.f32 %v6064, %v6068
    %v6141 = vrot.slane %v6140, 4
    %v6142 = vadd.f32 %v6140, %v6141
    %v6143 = vrot.slane %v6142, 2
    %v6144 = vadd.f32 %v6142, %v6143
    %v6145 = vrot.slane %v6144, 1
    %v6146 = vadd.f32 %v6144, %v6145
    %v6147 = vadd.f32 %v6115, %v6119
    %v6148 = vrot.slane %v6147, 4
    %v6149 = vadd.f32 %v6147, %v6148
    %v6150 = vrot.slane %v6149, 2
    %v6151 = vadd.f32 %v6149, %v6150
    %v6152 = vrot.slane %v6151, 1
    %v6153 = vadd.f32 %v6151, %v6152
    %v6154 = vadd.f32 %v6117, %v6121
    %v6155 = vrot.slane %v6154, 4
    %v6156 = vadd.f32 %v6154, %v6155
    %v6157 = vrot.slane %v6156, 2
    %v6158 = vadd.f32 %v6156, %v6157
    %v6159 = vrot.slane %v6158, 1
    %v6160 = vadd.f32 %v6158, %v6159
    %v6161 = vadd.f32 %v6072, %v6076
    %v6162 = vrot.slane %v6161, 4
    %v6163 = vadd.f32 %v6161, %v6162
    %v6164 = vrot.slane %v6163, 2
    %v6165 = vadd.f32 %v6163, %v6164
    %v6166 = vrot.slane %v6165, 1
    %v6167 = vadd.f32 %v6165, %v6166
    %v6168 = vadd.f32 %v6074, %v6078
    %v6169 = vrot.slane %v6168, 4
    %v6170 = vadd.f32 %v6168, %v6169
    %v6171 = vrot.slane %v6170, 2
    %v6172 = vadd.f32 %v6170, %v6171
    %v6173 = vrot.slane %v6172, 1
    %v6174 = vadd.f32 %v6172, %v6173
    %v6175 = vadd.f32 %v6125, %v6129
    %v6176 = vrot.slane %v6175, 4
    %v6177 = vadd.f32 %v6175, %v6176
    %v6178 = vrot.slane %v6177, 2
    %v6179 = vadd.f32 %v6177, %v6178
    %v6180 = vrot.slane %v6179, 1
    %v6181 = vadd.f32 %v6179, %v6180
    %v6182 = vadd.f32 %v6127, %v6131
    %v6183 = vrot.slane %v6182, 4
    %v6184 = vadd.f32 %v6182, %v6183
    %v6185 = vrot.slane %v6184, 2
    %v6186 = vadd.f32 %v6184, %v6185
    %v6187 = vrot.slane %v6186, 1
    %v6188 = vadd.f32 %v6186, %v6187
    %v6189 = vadd.f32 %v6139, %v6146
    %v6190 = vadd.f32 %v6189, %v6153
    %v6191 = vadd.f32 %v6190, %v6160
    %6192 = vadd.xlane.f32.xlu0 %v6191
    %v6193 = vpop.xlane.xlu0 %6192
    %v6194 = vadd.f32 %v6167, %v6174
    %v6195 = vadd.f32 %v6194, %v6181
    %v6196 = vadd.f32 %v6195, %v6188
    %6197 = vadd.xlane.f32.xlu0 %v6196
    %v6198 = vpop.xlane.xlu0 %6197
    %v6199 = vrcp.pop 8192.0
    %v6200 = vmul.f32 %v6193, %v6199
    %v6201 = vmul.f32 %v6198, %v6199
    %v6202 = vsub.f32 %v6062, %v6200
    %v6203 = vsub.f32 %v6064, %v6200
    %v6204 = vsub.f32 %v6115, %v6200
    %v6205 = vsub.f32 %v6117, %v6200
    %v6206 = vsub.f32 %v6066, %v6200
    %v6207 = vsub.f32 %v6068, %v6200
    %v6208 = vsub.f32 %v6119, %v6200
    %v6209 = vsub.f32 %v6121, %v6200
    %v6210 = vsub.f32 %v6072, %v6201
    %v6211 = vsub.f32 %v6074, %v6201
    %v6212 = vsub.f32 %v6125, %v6201
    %v6213 = vsub.f32 %v6127, %v6201
    %v6214 = vsub.f32 %v6076, %v6201
    %v6215 = vsub.f32 %v6078, %v6201
    %v6216 = vsub.f32 %v6129, %v6201
    %v6217 = vsub.f32 %v6131, %v6201
    %v6218 = vmul.f32 %v6202, %v6202
    %v6219 = vmul.f32 %v6203, %v6203
    %v6220 = vmul.f32 %v6204, %v6204
    %v6221 = vmul.f32 %v6205, %v6205
    %v6222 = vmul.f32 %v6206, %v6206
    %v6223 = vmul.f32 %v6207, %v6207
    %v6224 = vmul.f32 %v6208, %v6208
    %v6225 = vmul.f32 %v6209, %v6209
    %v6226 = vmul.f32 %v6210, %v6210
    %v6227 = vmul.f32 %v6211, %v6211
    %v6228 = vmul.f32 %v6212, %v6212
    %v6229 = vmul.f32 %v6213, %v6213
    %v6230 = vmul.f32 %v6214, %v6214
    %v6231 = vmul.f32 %v6215, %v6215
    %v6232 = vmul.f32 %v6216, %v6216
    %v6233 = vmul.f32 %v6217, %v6217
    %v6234 = vadd.f32 %v6218, %v6222
    %v6235 = vrot.slane %v6234, 4
    %v6236 = vadd.f32 %v6234, %v6235
    %v6237 = vrot.slane %v6236, 2
    %v6238 = vadd.f32 %v6236, %v6237
    %v6239 = vrot.slane %v6238, 1
    %v6240 = vadd.f32 %v6238, %v6239
    %v6241 = vadd.f32 %v6219, %v6223
    %v6242 = vrot.slane %v6241, 4
    %v6243 = vadd.f32 %v6241, %v6242
    %v6244 = vrot.slane %v6243, 2
    %v6245 = vadd.f32 %v6243, %v6244
    %v6246 = vrot.slane %v6245, 1
    %v6247 = vadd.f32 %v6245, %v6246
    %v6248 = vadd.f32 %v6220, %v6224
    %v6249 = vrot.slane %v6248, 4
    %v6250 = vadd.f32 %v6248, %v6249
    %v6251 = vrot.slane %v6250, 2
    %v6252 = vadd.f32 %v6250, %v6251
    %v6253 = vrot.slane %v6252, 1
    %v6254 = vadd.f32 %v6252, %v6253
    %v6255 = vadd.f32 %v6221, %v6225
    %v6256 = vrot.slane %v6255, 4
    %v6257 = vadd.f32 %v6255, %v6256
    %v6258 = vrot.slane %v6257, 2
    %v6259 = vadd.f32 %v6257, %v6258
    %v6260 = vrot.slane %v6259, 1
    %v6261 = vadd.f32 %v6259, %v6260
    %v6262 = vadd.f32 %v6226, %v6230
    %v6263 = vrot.slane %v6262, 4
    %v6264 = vadd.f32 %v6262, %v6263
    %v6265 = vrot.slane %v6264, 2
    %v6266 = vadd.f32 %v6264, %v6265
    %v6267 = vrot.slane %v6266, 1
    %v6268 = vadd.f32 %v6266, %v6267
    %v6269 = vadd.f32 %v6227, %v6231
    %v6270 = vrot.slane %v6269, 4
    %v6271 = vadd.f32 %v6269, %v6270
    %v6272 = vrot.slane %v6271, 2
    %v6273 = vadd.f32 %v6271, %v6272
    %v6274 = vrot.slane %v6273, 1
    %v6275 = vadd.f32 %v6273, %v6274
    %v6276 = vadd.f32 %v6228, %v6232
    %v6277 = vrot.slane %v6276, 4
    %v6278 = vadd.f32 %v6276, %v6277
    %v6279 = vrot.slane %v6278, 2
    %v6280 = vadd.f32 %v6278, %v6279
    %v6281 = vrot.slane %v6280, 1
    %v6282 = vadd.f32 %v6280, %v6281
    %v6283 = vadd.f32 %v6229, %v6233
    %v6284 = vrot.slane %v6283, 4
    %v6285 = vadd.f32 %v6283, %v6284
    %v6286 = vrot.slane %v6285, 2
    %v6287 = vadd.f32 %v6285, %v6286
    %v6288 = vrot.slane %v6287, 1
    %v6289 = vadd.f32 %v6287, %v6288
    %v6290 = vadd.f32 %v6240, %v6247
    %v6291 = vadd.f32 %v6290, %v6254
    %v6292 = vadd.f32 %v6291, %v6261
    %6293 = vadd.xlane.f32.xlu0 %v6292
    %v6294 = vpop.xlane.xlu0 %6293
    %v6295 = vadd.f32 %v6268, %v6275
    %v6296 = vadd.f32 %v6295, %v6282
    %v6297 = vadd.f32 %v6296, %v6289
    %6298 = vadd.xlane.f32.xlu0 %v6297
    %v6299 = vpop.xlane.xlu0 %6298
    %v6300 = vmul.f32 %v6294, %v6199
    %v6301 = vmul.f32 %v6299, %v6199
    %v6302 = vadd.f32 %v6300, 1e-05
    %v6303 = vadd.f32 %v6301, 1e-05
    %v6304 = vrsqrt.pop %v6302
    %v6305 = vrsqrt.pop %v6303
    %v6306 = vmul.f32 %v6202, %v6304
    %v6307 = vmul.f32 %v6203, %v6304
    %v6308 = vmul.f32 %v6204, %v6304
    %v6309 = vmul.f32 %v6205, %v6304
    %v6310 = vmul.f32 %v6206, %v6304
    %v6311 = vmul.f32 %v6207, %v6304
    %v6312 = vmul.f32 %v6208, %v6304
    %v6313 = vmul.f32 %v6209, %v6304
    %v6314 = vmul.f32 %v6210, %v6305
    %v6315 = vmul.f32 %v6211, %v6305
    %v6316 = vmul.f32 %v6212, %v6305
    %v6317 = vmul.f32 %v6213, %v6305
    %v6318 = vmul.f32 %v6214, %v6305
    %v6319 = vmul.f32 %v6215, %v6305
    %v6320 = vmul.f32 %v6216, %v6305
    %v6321 = vmul.f32 %v6217, %v6305
    %v6322 = vld [vmem:[%s14] sm:$0xf]
    %v6324 = vlaneseq
    %v6325 = vshrl.u32 %v6324, 7
    %v6326 = vsub.s32 0, %v6325
    %v6327 = vrot.slane %v6322, %v6326
    %v6328 = vlaneseq
    %v6329 = vshrl.u32 %v6328, 7
    %v6330 = vsub.s32 1, %v6329
    %v6331 = vrot.slane %v6322, %v6330
    %v6332 = vlaneseq
    %v6333 = vshrl.u32 %v6332, 7
    %v6334 = vsub.s32 2, %v6333
    %v6335 = vrot.slane %v6322, %v6334
    %v6336 = vlaneseq
    %v6337 = vshrl.u32 %v6336, 7
    %v6338 = vsub.s32 3, %v6337
    %v6339 = vrot.slane %v6322, %v6338
    %v6344 = vmul.f32 %v6306, %v6327
    %v6345 = vmul.f32 %v6307, %v6331
    %v6346 = vmul.f32 %v6308, %v6335
    %v6347 = vmul.f32 %v6309, %v6339
    %v6348 = vmul.f32 %v6310, %v6327
    %v6349 = vmul.f32 %v6311, %v6331
    %v6350 = vmul.f32 %v6312, %v6335
    %v6351 = vmul.f32 %v6313, %v6339
    %v6352 = vmul.f32 %v6314, %v6327
    %v6353 = vmul.f32 %v6315, %v6331
    %v6354 = vmul.f32 %v6316, %v6335
    %v6355 = vmul.f32 %v6317, %v6339
    %v6356 = vmul.f32 %v6318, %v6327
    %v6357 = vmul.f32 %v6319, %v6331
    %v6358 = vmul.f32 %v6320, %v6335
    %v6359 = vmul.f32 %v6321, %v6339
    %v6360 = vld [vmem:[%s15] sm:$0xf]
    %v6362 = vlaneseq
    %v6363 = vshrl.u32 %v6362, 7
    %v6364 = vsub.s32 0, %v6363
    %v6365 = vrot.slane %v6360, %v6364
    %v6366 = vlaneseq
    %v6367 = vshrl.u32 %v6366, 7
    %v6368 = vsub.s32 1, %v6367
    %v6369 = vrot.slane %v6360, %v6368
    %v6370 = vlaneseq
    %v6371 = vshrl.u32 %v6370, 7
    %v6372 = vsub.s32 2, %v6371
    %v6373 = vrot.slane %v6360, %v6372
    %v6374 = vlaneseq
    %v6375 = vshrl.u32 %v6374, 7
    %v6376 = vsub.s32 3, %v6375
    %v6377 = vrot.slane %v6360, %v6376
    %v6382 = vadd.f32 %v6344, %v6365
    %v6383 = vadd.f32 %v6345, %v6369
    %v6384 = vadd.f32 %v6346, %v6373
    %v6385 = vadd.f32 %v6347, %v6377
    %v6386 = vadd.f32 %v6348, %v6365
    %v6387 = vadd.f32 %v6349, %v6369
    %v6388 = vadd.f32 %v6350, %v6373
    %v6389 = vadd.f32 %v6351, %v6377
    %v6390 = vadd.f32 %v6352, %v6365
    %v6391 = vadd.f32 %v6353, %v6369
    %v6392 = vadd.f32 %v6354, %v6373
    %v6393 = vadd.f32 %v6355, %v6377
    %v6394 = vadd.f32 %v6356, %v6365
    %v6395 = vadd.f32 %v6357, %v6369
    %v6396 = vadd.f32 %v6358, %v6373
    %v6397 = vadd.f32 %v6359, %v6377
    %v6398 = vsub.f32 0.0, %v6382
    %v6399 = vsub.f32 0.0, %v6383
    %v6400 = vsub.f32 0.0, %v6384
    %v6401 = vsub.f32 0.0, %v6385
    %v6402 = vsub.f32 0.0, %v6386
    %v6403 = vsub.f32 0.0, %v6387
    %v6404 = vsub.f32 0.0, %v6388
    %v6405 = vsub.f32 0.0, %v6389
    %v6406 = vsub.f32 0.0, %v6390
    %v6407 = vsub.f32 0.0, %v6391
    %v6408 = vsub.f32 0.0, %v6392
    %v6409 = vsub.f32 0.0, %v6393
    %v6410 = vsub.f32 0.0, %v6394
    %v6411 = vsub.f32 0.0, %v6395
    %v6412 = vsub.f32 0.0, %v6396
    %v6413 = vsub.f32 0.0, %v6397
    %v6414 = vmul.f32 %v6398, 1.442695
    %v6415 = vpow.pop %v6414
    %v6416 = vmul.f32 %v6399, 1.442695
    %v6417 = vpow.pop %v6416
    %v6418 = vmul.f32 %v6400, 1.442695
    %v6419 = vpow.pop %v6418
    %v6420 = vmul.f32 %v6401, 1.442695
    %v6421 = vpow.pop %v6420
    %v6422 = vmul.f32 %v6402, 1.442695
    %v6423 = vpow.pop %v6422
    %v6424 = vmul.f32 %v6403, 1.442695
    %v6425 = vpow.pop %v6424
    %v6426 = vmul.f32 %v6404, 1.442695
    %v6427 = vpow.pop %v6426
    %v6428 = vmul.f32 %v6405, 1.442695
    %v6429 = vpow.pop %v6428
    %v6430 = vmul.f32 %v6406, 1.442695
    %v6431 = vpow.pop %v6430
    %v6432 = vmul.f32 %v6407, 1.442695
    %v6433 = vpow.pop %v6432
    %v6434 = vmul.f32 %v6408, 1.442695
    %v6435 = vpow.pop %v6434
    %v6436 = vmul.f32 %v6409, 1.442695
    %v6437 = vpow.pop %v6436
    %v6438 = vmul.f32 %v6410, 1.442695
    %v6439 = vpow.pop %v6438
    %v6440 = vmul.f32 %v6411, 1.442695
    %v6441 = vpow.pop %v6440
    %v6442 = vmul.f32 %v6412, 1.442695
    %v6443 = vpow.pop %v6442
    %v6444 = vmul.f32 %v6413, 1.442695
    %v6445 = vpow.pop %v6444
    %v6446 = vadd.f32 %v6415, 1.0
    %v6447 = vadd.f32 %v6417, 1.0
    %v6448 = vadd.f32 %v6419, 1.0
    %v6449 = vadd.f32 %v6421, 1.0
    %v6450 = vadd.f32 %v6423, 1.0
    %v6451 = vadd.f32 %v6425, 1.0
    %v6452 = vadd.f32 %v6427, 1.0
    %v6453 = vadd.f32 %v6429, 1.0
    %v6454 = vadd.f32 %v6431, 1.0
    %v6455 = vadd.f32 %v6433, 1.0
    %v6456 = vadd.f32 %v6435, 1.0
    %v6457 = vadd.f32 %v6437, 1.0
    %v6458 = vadd.f32 %v6439, 1.0
    %v6459 = vadd.f32 %v6441, 1.0
    %v6460 = vadd.f32 %v6443, 1.0
    %v6461 = vadd.f32 %v6445, 1.0
    %v6462 = vrcp.pop %v6446
    %v6463 = vmul.f32 1.0, %v6462
    %v6464 = vrcp.pop %v6447
    %v6465 = vmul.f32 1.0, %v6464
    %v6466 = vrcp.pop %v6448
    %v6467 = vmul.f32 1.0, %v6466
    %v6468 = vrcp.pop %v6449
    %v6469 = vmul.f32 1.0, %v6468
    %v6470 = vrcp.pop %v6450
    %v6471 = vmul.f32 1.0, %v6470
    %v6472 = vrcp.pop %v6451
    %v6473 = vmul.f32 1.0, %v6472
    %v6474 = vrcp.pop %v6452
    %v6475 = vmul.f32 1.0, %v6474
    %v6476 = vrcp.pop %v6453
    %v6477 = vmul.f32 1.0, %v6476
    %v6478 = vrcp.pop %v6454
    %v6479 = vmul.f32 1.0, %v6478
    %v6480 = vrcp.pop %v6455
    %v6481 = vmul.f32 1.0, %v6480
    %v6482 = vrcp.pop %v6456
    %v6483 = vmul.f32 1.0, %v6482
    %v6484 = vrcp.pop %v6457
    %v6485 = vmul.f32 1.0, %v6484
    %v6486 = vrcp.pop %v6458
    %v6487 = vmul.f32 1.0, %v6486
    %v6488 = vrcp.pop %v6459
    %v6489 = vmul.f32 1.0, %v6488
    %v6490 = vrcp.pop %v6460
    %v6491 = vmul.f32 1.0, %v6490
    %v6492 = vrcp.pop %v6461
    %v6493 = vmul.f32 1.0, %v6492
    %v6494 = vmul.f32 %v6382, %v6463
    %v6495 = vmul.f32 %v6383, %v6465
    %v6496 = vmul.f32 %v6384, %v6467
    %v6497 = vmul.f32 %v6385, %v6469
    %v6498 = vmul.f32 %v6386, %v6471
    %v6499 = vmul.f32 %v6387, %v6473
    %v6500 = vmul.f32 %v6388, %v6475
    %v6501 = vmul.f32 %v6389, %v6477
    %v6502 = vmul.f32 %v6390, %v6479
    %v6503 = vmul.f32 %v6391, %v6481
    %v6504 = vmul.f32 %v6392, %v6483
    %v6505 = vmul.f32 %v6393, %v6485
    %v6506 = vmul.f32 %v6394, %v6487
    %v6507 = vmul.f32 %v6395, %v6489
    %v6508 = vmul.f32 %v6396, %v6491
    %v6509 = vmul.f32 %v6397, %v6493
    %v6510 = vadd.s32 %v2673, 16
    %v6511 = vadd.s32 %v2673, 24
    %v6512 = vand.u32 %v2673, 15
    %v6513 = vand.u32 %v2674, 15
    %v6514 = vand.u32 %v6510, 15
    %v6515 = vand.u32 %v6511, 15
    %vm6516 = vcmp.ge.s32.totalorder %v6512, 1
    %vm6517 = vcmp.ge.s32.totalorder %v6513, 1
    %vm6518 = vcmp.ge.s32.totalorder %v6514, 1
    %vm6519 = vcmp.ge.s32.totalorder %v6515, 1
    %v6520 = vrot.slane %v6494, 7
    %v6521 = vrot.slane %v6495, 7
    %v6522 = vrot.slane %v6496, 7
    %v6523 = vrot.slane %v6497, 7
    %v6524 = vrot.slane %v6498, 7
    %v6525 = vrot.slane %v6499, 7
    %v6526 = vrot.slane %v6500, 7
    %v6527 = vrot.slane %v6501, 7
    %v6528 = vrot.slane %v6502, 7
    %v6529 = vrot.slane %v6503, 7
    %v6530 = vrot.slane %v6504, 7
    %v6531 = vrot.slane %v6505, 7
    %v6532 = vrot.slane %v6506, 7
    %v6533 = vrot.slane %v6507, 7
    %v6534 = vrot.slane %v6508, 7
    %v6535 = vrot.slane %v6509, 7
    %v6536 = vsel %vm2687, %v6528, %v6532
    %v6537 = vsel %vm2687, %v6529, %v6533
    %v6538 = vsel %vm2687, %v6530, %v6534
    %v6539 = vsel %vm2687, %v6531, %v6535
    %v6540 = vsel %vm2687, %v6524, %v6528
    %v6541 = vsel %vm2687, %v6525, %v6529
    %v6542 = vsel %vm2687, %v6526, %v6530
    %v6543 = vsel %vm2687, %v6527, %v6531
    %v6544 = vsel %vm2687, %v6520, %v6524
    %v6545 = vsel %vm2687, %v6521, %v6525
    %v6546 = vsel %vm2687, %v6522, %v6526
    %v6547 = vsel %vm2687, %v6523, %v6527
    %v6548 = vsel %vm2687, %v6532, %v6520
    %v6549 = vsel %vm2687, %v6533, %v6521
    %v6550 = vsel %vm2687, %v6534, %v6522
    %v6551 = vsel %vm2687, %v6535, %v6523
    %v6552 = vsel %vm6516, %v6548, 0.0
    %v6553 = vsel %vm6516, %v6549, 0.0
    %v6554 = vsel %vm6516, %v6550, 0.0
    %v6555 = vsel %vm6516, %v6551, 0.0
    %v6556 = vsel %vm6517, %v6544, 0.0
    %v6557 = vsel %vm6517, %v6545, 0.0
    %v6558 = vsel %vm6517, %v6546, 0.0
    %v6559 = vsel %vm6517, %v6547, 0.0
    %v6560 = vsel %vm6518, %v6540, 0.0
    %v6561 = vsel %vm6518, %v6541, 0.0
    %v6562 = vsel %vm6518, %v6542, 0.0
    %v6563 = vsel %vm6518, %v6543, 0.0
    %v6564 = vsel %vm6519, %v6536, 0.0
    %v6565 = vsel %vm6519, %v6537, 0.0
    %v6566 = vsel %vm6519, %v6538, 0.0
    %v6567 = vsel %vm6519, %v6539, 0.0
    %vm6568 = vcmp.lt.s32.totalorder %v6512, 15
    %vm6569 = vcmp.lt.s32.totalorder %v6513, 15
    %vm6570 = vcmp.lt.s32.totalorder %v6514, 15
    %vm6571 = vcmp.lt.s32.totalorder %v6515, 15
    %v6572 = vrot.slane %v6494, 1
    %v6573 = vrot.slane %v6495, 1
    %v6574 = vrot.slane %v6496, 1
    %v6575 = vrot.slane %v6497, 1
    %v6576 = vrot.slane %v6498, 1
    %v6577 = vrot.slane %v6499, 1
    %v6578 = vrot.slane %v6500, 1
    %v6579 = vrot.slane %v6501, 1
    %v6580 = vrot.slane %v6502, 1
    %v6581 = vrot.slane %v6503, 1
    %v6582 = vrot.slane %v6504, 1
    %v6583 = vrot.slane %v6505, 1
    %v6584 = vrot.slane %v6506, 1
    %v6585 = vrot.slane %v6507, 1
    %v6586 = vrot.slane %v6508, 1
    %v6587 = vrot.slane %v6509, 1
    %v6588 = vsel %vm2714, %v6580, %v6584
    %v6589 = vsel %vm2714, %v6581, %v6585
    %v6590 = vsel %vm2714, %v6582, %v6586
    %v6591 = vsel %vm2714, %v6583, %v6587
    %v6592 = vsel %vm2714, %v6576, %v6580
    %v6593 = vsel %vm2714, %v6577, %v6581
    %v6594 = vsel %vm2714, %v6578, %v6582
    %v6595 = vsel %vm2714, %v6579, %v6583
    %v6596 = vsel %vm2714, %v6572, %v6576
    %v6597 = vsel %vm2714, %v6573, %v6577
    %v6598 = vsel %vm2714, %v6574, %v6578
    %v6599 = vsel %vm2714, %v6575, %v6579
    %v6600 = vsel %vm2714, %v6584, %v6572
    %v6601 = vsel %vm2714, %v6585, %v6573
    %v6602 = vsel %vm2714, %v6586, %v6574
    %v6603 = vsel %vm2714, %v6587, %v6575
    %v6604 = vsel %vm6568, %v6596, 0.0
    %v6605 = vsel %vm6568, %v6597, 0.0
    %v6606 = vsel %vm6568, %v6598, 0.0
    %v6607 = vsel %vm6568, %v6599, 0.0
    %v6608 = vsel %vm6569, %v6592, 0.0
    %v6609 = vsel %vm6569, %v6593, 0.0
    %v6610 = vsel %vm6569, %v6594, 0.0
    %v6611 = vsel %vm6569, %v6595, 0.0
    %v6612 = vsel %vm6570, %v6588, 0.0
    %v6613 = vsel %vm6570, %v6589, 0.0
    %v6614 = vsel %vm6570, %v6590, 0.0
    %v6615 = vsel %vm6570, %v6591, 0.0
    %v6616 = vsel %vm6571, %v6600, 0.0
    %v6617 = vsel %vm6571, %v6601, 0.0
    %v6618 = vsel %vm6571, %v6602, 0.0
    %v6619 = vsel %vm6571, %v6603, 0.0
    %v6620 = vpack.c.bf16 %v6556, %v6552
    %v6621 = vpack.c.bf16 %v6557, %v6553
    %v6622 = vpack.c.bf16 %v6558, %v6554
    %v6623 = vpack.c.bf16 %v6559, %v6555
    %v6624 = vpack.c.bf16 %v6498, %v6494
    %v6625 = vpack.c.bf16 %v6499, %v6495
    %v6626 = vpack.c.bf16 %v6500, %v6496
    %v6627 = vpack.c.bf16 %v6501, %v6497
    %v6628 = vpack.c.bf16 %v6608, %v6604
    %v6629 = vpack.c.bf16 %v6609, %v6605
    %v6630 = vpack.c.bf16 %v6610, %v6606
    %v6631 = vpack.c.bf16 %v6611, %v6607
    %v6632 = vpack.c.bf16 %v6564, %v6560
    %v6633 = vpack.c.bf16 %v6565, %v6561
    %v6634 = vpack.c.bf16 %v6566, %v6562
    %v6635 = vpack.c.bf16 %v6567, %v6563
    %v6636 = vpack.c.bf16 %v6506, %v6502
    %v6637 = vpack.c.bf16 %v6507, %v6503
    %v6638 = vpack.c.bf16 %v6508, %v6504
    %v6639 = vpack.c.bf16 %v6509, %v6505
    %v6640 = vpack.c.bf16 %v6616, %v6612
    %v6641 = vpack.c.bf16 %v6617, %v6613
    %v6642 = vpack.c.bf16 %v6618, %v6614
    %v6643 = vpack.c.bf16 %v6619, %v6615
    %v6644 = vld [vmem:[#allocation17] sm:$0xff]
    %v6645 = vld [vmem:[#allocation17 + $0x8] sm:$0xff]
    %v6646 = vld [vmem:[#allocation17 + $0x10] sm:$0xff]
    %v6647 = vld [vmem:[#allocation17 + $0x18] sm:$0xff]
    %v6648 = vld [vmem:[#allocation17 + $0x20] sm:$0xff]
    %v6649 = vld [vmem:[#allocation17 + $0x28] sm:$0xff]
    %v6650 = vld [vmem:[#allocation17 + $0x30] sm:$0xff]
    %v6651 = vld [vmem:[#allocation17 + $0x38] sm:$0xff]
    %v6652 = vld [vmem:[#allocation17 + $0x40] sm:$0xff]
    %v6653 = vld [vmem:[#allocation17 + $0x48] sm:$0xff]
    %v6654 = vld [vmem:[#allocation17 + $0x50] sm:$0xff]
    %v6655 = vld [vmem:[#allocation17 + $0x58] sm:$0xff]
    %v6656 = vld [vmem:[#allocation17 + $0x60] sm:$0xff]
    %v6657 = vld [vmem:[#allocation17 + $0x68] sm:$0xff]
    %v6658 = vld [vmem:[#allocation17 + $0x70] sm:$0xff]
    %v6659 = vld [vmem:[#allocation17 + $0x78] sm:$0xff]
    %v6660 = vld [vmem:[#allocation17 + $0x80] sm:$0xff]
    %v6661 = vld [vmem:[#allocation17 + $0x88] sm:$0xff]
    %v6662 = vld [vmem:[#allocation17 + $0x90] sm:$0xff]
    %v6663 = vld [vmem:[#allocation17 + $0x98] sm:$0xff]
    %v6664 = vld [vmem:[#allocation17 + $0xa0] sm:$0xff]
    %v6665 = vld [vmem:[#allocation17 + $0xa8] sm:$0xff]
    %v6666 = vld [vmem:[#allocation17 + $0xb0] sm:$0xff]
    %v6667 = vld [vmem:[#allocation17 + $0xb8] sm:$0xff]
    %v6668 = vld [vmem:[#allocation17 + $0xc0] sm:$0xff]
    %v6669 = vld [vmem:[#allocation17 + $0xc8] sm:$0xff]
    %v6670 = vld [vmem:[#allocation17 + $0xd0] sm:$0xff]
    %v6671 = vld [vmem:[#allocation17 + $0xd8] sm:$0xff]
    %v6672 = vld [vmem:[#allocation17 + $0xe0] sm:$0xff]
    %v6673 = vld [vmem:[#allocation17 + $0xe8] sm:$0xff]
    %v6674 = vld [vmem:[#allocation17 + $0xf0] sm:$0xff]
    %v6675 = vld [vmem:[#allocation17 + $0xf8] sm:$0xff]
    %v6676 = vld [vmem:[#allocation17 + $0x100] sm:$0xff]
    %v6677 = vld [vmem:[#allocation17 + $0x108] sm:$0xff]
    %v6678 = vld [vmem:[#allocation17 + $0x110] sm:$0xff]
    %v6679 = vld [vmem:[#allocation17 + $0x118] sm:$0xff]
    %v6680 = vld [vmem:[#allocation17 + $0x120] sm:$0xff]
    %v6681 = vld [vmem:[#allocation17 + $0x128] sm:$0xff]
    %v6682 = vld [vmem:[#allocation17 + $0x130] sm:$0xff]
    %v6683 = vld [vmem:[#allocation17 + $0x138] sm:$0xff]
    %v6684 = vld [vmem:[#allocation17 + $0x140] sm:$0xff]
    %v6685 = vld [vmem:[#allocation17 + $0x148] sm:$0xff]
    %v6686 = vld [vmem:[#allocation17 + $0x150] sm:$0xff]
    %v6687 = vld [vmem:[#allocation17 + $0x158] sm:$0xff]
    %v6688 = vld [vmem:[#allocation17 + $0x160] sm:$0xff]
    %v6689 = vld [vmem:[#allocation17 + $0x168] sm:$0xff]
    %v6690 = vld [vmem:[#allocation17 + $0x170] sm:$0xff]
    %v6691 = vld [vmem:[#allocation17 + $0x178] sm:$0xff]
    %v6692 = vld [vmem:[#allocation17 + $0x180] sm:$0xff]
    %v6693 = vld [vmem:[#allocation17 + $0x188] sm:$0xff]
    %v6694 = vld [vmem:[#allocation17 + $0x190] sm:$0xff]
    %v6695 = vld [vmem:[#allocation17 + $0x198] sm:$0xff]
    %v6696 = vld [vmem:[#allocation17 + $0x1a0] sm:$0xff]
    %v6697 = vld [vmem:[#allocation17 + $0x1a8] sm:$0xff]
    %v6698 = vld [vmem:[#allocation17 + $0x1b0] sm:$0xff]
    %v6699 = vld [vmem:[#allocation17 + $0x1b8] sm:$0xff]
    %v6700 = vld [vmem:[#allocation17 + $0x1c0] sm:$0xff]
    %v6701 = vld [vmem:[#allocation17 + $0x1c8] sm:$0xff]
    %v6702 = vld [vmem:[#allocation17 + $0x1d0] sm:$0xff]
    %v6703 = vld [vmem:[#allocation17 + $0x1d8] sm:$0xff]
    %v6704 = vld [vmem:[#allocation17 + $0x1e0] sm:$0xff]
    %v6705 = vld [vmem:[#allocation17 + $0x1e8] sm:$0xff]
    %v6706 = vld [vmem:[#allocation17 + $0x1f0] sm:$0xff]
    %v6707 = vld [vmem:[#allocation17 + $0x1f8] sm:$0xff]
    %v6708 = vld [vmem:[#allocation17 + $0x200] sm:$0xff]
    %v6709 = vld [vmem:[#allocation17 + $0x208] sm:$0xff]
    %v6710 = vld [vmem:[#allocation17 + $0x210] sm:$0xff]
    %v6711 = vld [vmem:[#allocation17 + $0x218] sm:$0xff]
    %v6712 = vld [vmem:[#allocation17 + $0x220] sm:$0xff]
    %v6713 = vld [vmem:[#allocation17 + $0x228] sm:$0xff]
    %v6714 = vld [vmem:[#allocation17 + $0x230] sm:$0xff]
    %v6715 = vld [vmem:[#allocation17 + $0x238] sm:$0xff]
    %v6716 = vld [vmem:[#allocation17 + $0x240] sm:$0xff]
    %v6717 = vld [vmem:[#allocation17 + $0x248] sm:$0xff]
    %v6718 = vld [vmem:[#allocation17 + $0x250] sm:$0xff]
    %v6719 = vld [vmem:[#allocation17 + $0x258] sm:$0xff]
    %v6720 = vld [vmem:[#allocation17 + $0x260] sm:$0xff]
    %v6721 = vld [vmem:[#allocation17 + $0x268] sm:$0xff]
    %v6722 = vld [vmem:[#allocation17 + $0x270] sm:$0xff]
    %v6723 = vld [vmem:[#allocation17 + $0x278] sm:$0xff]
    %v6724 = vld [vmem:[#allocation17 + $0x280] sm:$0xff]
    %v6725 = vld [vmem:[#allocation17 + $0x288] sm:$0xff]
    %v6726 = vld [vmem:[#allocation17 + $0x290] sm:$0xff]
    %v6727 = vld [vmem:[#allocation17 + $0x298] sm:$0xff]
    %v6728 = vld [vmem:[#allocation17 + $0x2a0] sm:$0xff]
    %v6729 = vld [vmem:[#allocation17 + $0x2a8] sm:$0xff]
    %v6730 = vld [vmem:[#allocation17 + $0x2b0] sm:$0xff]
    %v6731 = vld [vmem:[#allocation17 + $0x2b8] sm:$0xff]
    %v6732 = vld [vmem:[#allocation17 + $0x2c0] sm:$0xff]
    %v6733 = vld [vmem:[#allocation17 + $0x2c8] sm:$0xff]
    %v6734 = vld [vmem:[#allocation17 + $0x2d0] sm:$0xff]
    %v6735 = vld [vmem:[#allocation17 + $0x2d8] sm:$0xff]
    %v6736 = vld [vmem:[#allocation17 + $0x2e0] sm:$0xff]
    %v6737 = vld [vmem:[#allocation17 + $0x2e8] sm:$0xff]
    %v6738 = vld [vmem:[#allocation17 + $0x2f0] sm:$0xff]
    %v6739 = vld [vmem:[#allocation17 + $0x2f8] sm:$0xff]
    %v6740 = vld [vmem:[#allocation17 + $0x300] sm:$0xff]
    %v6741 = vld [vmem:[#allocation17 + $0x308] sm:$0xff]
    %v6742 = vld [vmem:[#allocation17 + $0x310] sm:$0xff]
    %v6743 = vld [vmem:[#allocation17 + $0x318] sm:$0xff]
    %v6744 = vld [vmem:[#allocation17 + $0x320] sm:$0xff]
    %v6745 = vld [vmem:[#allocation17 + $0x328] sm:$0xff]
    %v6746 = vld [vmem:[#allocation17 + $0x330] sm:$0xff]
    %v6747 = vld [vmem:[#allocation17 + $0x338] sm:$0xff]
    %v6748 = vld [vmem:[#allocation17 + $0x340] sm:$0xff]
    %v6749 = vld [vmem:[#allocation17 + $0x348] sm:$0xff]
    %v6750 = vld [vmem:[#allocation17 + $0x350] sm:$0xff]
    %v6751 = vld [vmem:[#allocation17 + $0x358] sm:$0xff]
    %v6752 = vld [vmem:[#allocation17 + $0x360] sm:$0xff]
    %v6753 = vld [vmem:[#allocation17 + $0x368] sm:$0xff]
    %v6754 = vld [vmem:[#allocation17 + $0x370] sm:$0xff]
    %v6755 = vld [vmem:[#allocation17 + $0x378] sm:$0xff]
    %v6756 = vld [vmem:[#allocation17 + $0x380] sm:$0xff]
    %v6757 = vld [vmem:[#allocation17 + $0x388] sm:$0xff]
    %v6758 = vld [vmem:[#allocation17 + $0x390] sm:$0xff]
    %v6759 = vld [vmem:[#allocation17 + $0x398] sm:$0xff]
    %v6760 = vld [vmem:[#allocation17 + $0x3a0] sm:$0xff]
    %v6761 = vld [vmem:[#allocation17 + $0x3a8] sm:$0xff]
    %v6762 = vld [vmem:[#allocation17 + $0x3b0] sm:$0xff]
    %v6763 = vld [vmem:[#allocation17 + $0x3b8] sm:$0xff]
    %v6764 = vld [vmem:[#allocation17 + $0x3c0] sm:$0xff]
    %v6765 = vld [vmem:[#allocation17 + $0x3c8] sm:$0xff]
    %v6766 = vld [vmem:[#allocation17 + $0x3d0] sm:$0xff]
    %v6767 = vld [vmem:[#allocation17 + $0x3d8] sm:$0xff]
    %v6768 = vld [vmem:[#allocation17 + $0x3e0] sm:$0xff]
    %v6769 = vld [vmem:[#allocation17 + $0x3e8] sm:$0xff]
    %v6770 = vld [vmem:[#allocation17 + $0x3f0] sm:$0xff]
    %v6771 = vld [vmem:[#allocation17 + $0x3f8] sm:$0xff]
    %v6772 = vld [vmem:[#allocation17 + $0x400] sm:$0xff]
    %v6773 = vld [vmem:[#allocation17 + $0x408] sm:$0xff]
    %v6774 = vld [vmem:[#allocation17 + $0x410] sm:$0xff]
    %v6775 = vld [vmem:[#allocation17 + $0x418] sm:$0xff]
    %v6776 = vld [vmem:[#allocation17 + $0x420] sm:$0xff]
    %v6777 = vld [vmem:[#allocation17 + $0x428] sm:$0xff]
    %v6778 = vld [vmem:[#allocation17 + $0x430] sm:$0xff]
    %v6779 = vld [vmem:[#allocation17 + $0x438] sm:$0xff]
    %v6780 = vld [vmem:[#allocation17 + $0x440] sm:$0xff]
    %v6781 = vld [vmem:[#allocation17 + $0x448] sm:$0xff]
    %v6782 = vld [vmem:[#allocation17 + $0x450] sm:$0xff]
    %v6783 = vld [vmem:[#allocation17 + $0x458] sm:$0xff]
    %v6784 = vld [vmem:[#allocation17 + $0x460] sm:$0xff]
    %v6785 = vld [vmem:[#allocation17 + $0x468] sm:$0xff]
    %v6786 = vld [vmem:[#allocation17 + $0x470] sm:$0xff]
    %v6787 = vld [vmem:[#allocation17 + $0x478] sm:$0xff]
    %v6788 = vld [vmem:[#allocation17 + $0x480] sm:$0xff]
    %v6789 = vld [vmem:[#allocation17 + $0x488] sm:$0xff]
    %v6790 = vld [vmem:[#allocation17 + $0x490] sm:$0xff]
    %v6791 = vld [vmem:[#allocation17 + $0x498] sm:$0xff]
    %v6792 = vld [vmem:[#allocation17 + $0x4a0] sm:$0xff]
    %v6793 = vld [vmem:[#allocation17 + $0x4a8] sm:$0xff]
    %v6794 = vld [vmem:[#allocation17 + $0x4b0] sm:$0xff]
    %v6795 = vld [vmem:[#allocation17 + $0x4b8] sm:$0xff]
    %v6796 = vld [vmem:[#allocation17 + $0x4c0] sm:$0xff]
    %v6797 = vld [vmem:[#allocation17 + $0x4c8] sm:$0xff]
    %v6798 = vld [vmem:[#allocation17 + $0x4d0] sm:$0xff]
    %v6799 = vld [vmem:[#allocation17 + $0x4d8] sm:$0xff]
    %v6800 = vld [vmem:[#allocation17 + $0x4e0] sm:$0xff]
    %v6801 = vld [vmem:[#allocation17 + $0x4e8] sm:$0xff]
    %v6802 = vld [vmem:[#allocation17 + $0x4f0] sm:$0xff]
    %v6803 = vld [vmem:[#allocation17 + $0x4f8] sm:$0xff]
    %v6804 = vld [vmem:[#allocation17 + $0x500] sm:$0xff]
    %v6805 = vld [vmem:[#allocation17 + $0x508] sm:$0xff]
    %v6806 = vld [vmem:[#allocation17 + $0x510] sm:$0xff]
    %v6807 = vld [vmem:[#allocation17 + $0x518] sm:$0xff]
    %v6808 = vld [vmem:[#allocation17 + $0x520] sm:$0xff]
    %v6809 = vld [vmem:[#allocation17 + $0x528] sm:$0xff]
    %v6810 = vld [vmem:[#allocation17 + $0x530] sm:$0xff]
    %v6811 = vld [vmem:[#allocation17 + $0x538] sm:$0xff]
    %v6812 = vld [vmem:[#allocation17 + $0x540] sm:$0xff]
    %v6813 = vld [vmem:[#allocation17 + $0x548] sm:$0xff]
    %v6814 = vld [vmem:[#allocation17 + $0x550] sm:$0xff]
    %v6815 = vld [vmem:[#allocation17 + $0x558] sm:$0xff]
    %v6816 = vld [vmem:[#allocation17 + $0x560] sm:$0xff]
    %v6817 = vld [vmem:[#allocation17 + $0x568] sm:$0xff]
    %v6818 = vld [vmem:[#allocation17 + $0x570] sm:$0xff]
    %v6819 = vld [vmem:[#allocation17 + $0x578] sm:$0xff]
    %v6820 = vld [vmem:[#allocation17 + $0x580] sm:$0xff]
    %v6821 = vld [vmem:[#allocation17 + $0x588] sm:$0xff]
    %v6822 = vld [vmem:[#allocation17 + $0x590] sm:$0xff]
    %v6823 = vld [vmem:[#allocation17 + $0x598] sm:$0xff]
    %v6824 = vld [vmem:[#allocation17 + $0x5a0] sm:$0xff]
    %v6825 = vld [vmem:[#allocation17 + $0x5a8] sm:$0xff]
    %v6826 = vld [vmem:[#allocation17 + $0x5b0] sm:$0xff]
    %v6827 = vld [vmem:[#allocation17 + $0x5b8] sm:$0xff]
    %v6828 = vld [vmem:[#allocation17 + $0x5c0] sm:$0xff]
    %v6829 = vld [vmem:[#allocation17 + $0x5c8] sm:$0xff]
    %v6830 = vld [vmem:[#allocation17 + $0x5d0] sm:$0xff]
    %v6831 = vld [vmem:[#allocation17 + $0x5d8] sm:$0xff]
    %v6832 = vld [vmem:[#allocation17 + $0x5e0] sm:$0xff]
    %v6833 = vld [vmem:[#allocation17 + $0x5e8] sm:$0xff]
    %v6834 = vld [vmem:[#allocation17 + $0x5f0] sm:$0xff]
    %v6835 = vld [vmem:[#allocation17 + $0x5f8] sm:$0xff]
    %v7028 = vunpack.c.l.b16 %v6644
    %v7029 = vunpack.c.h.b16 %v6644
    %v7030 = vunpack.c.l.b16 %v6645
    %v7031 = vunpack.c.h.b16 %v6645
    %v7032 = vunpack.c.l.b16 %v6646
    %v7033 = vunpack.c.h.b16 %v6646
    %v7034 = vunpack.c.l.b16 %v6647
    %v7035 = vunpack.c.h.b16 %v6647
    %v7036 = vunpack.c.l.b16 %v6648
    %v7037 = vunpack.c.h.b16 %v6648
    %v7038 = vunpack.c.l.b16 %v6649
    %v7039 = vunpack.c.h.b16 %v6649
    %v7040 = vunpack.c.l.b16 %v6650
    %v7041 = vunpack.c.h.b16 %v6650
    %v7042 = vunpack.c.l.b16 %v6651
    %v7043 = vunpack.c.h.b16 %v6651
    %v7044 = vunpack.c.l.b16 %v6652
    %v7045 = vunpack.c.h.b16 %v6652
    %v7046 = vunpack.c.l.b16 %v6653
    %v7047 = vunpack.c.h.b16 %v6653
    %v7048 = vunpack.c.l.b16 %v6654
    %v7049 = vunpack.c.h.b16 %v6654
    %v7050 = vunpack.c.l.b16 %v6655
    %v7051 = vunpack.c.h.b16 %v6655
    %v7052 = vunpack.c.l.b16 %v6656
    %v7053 = vunpack.c.h.b16 %v6656
    %v7054 = vunpack.c.l.b16 %v6657
    %v7055 = vunpack.c.h.b16 %v6657
    %v7056 = vunpack.c.l.b16 %v6658
    %v7057 = vunpack.c.h.b16 %v6658
    %v7058 = vunpack.c.l.b16 %v6659
    %v7059 = vunpack.c.h.b16 %v6659
    %v7060 = vunpack.c.l.b16 %v6660
    %v7061 = vunpack.c.h.b16 %v6660
    %v7062 = vunpack.c.l.b16 %v6661
    %v7063 = vunpack.c.h.b16 %v6661
    %v7064 = vunpack.c.l.b16 %v6662
    %v7065 = vunpack.c.h.b16 %v6662
    %v7066 = vunpack.c.l.b16 %v6663
    %v7067 = vunpack.c.h.b16 %v6663
    %v7068 = vunpack.c.l.b16 %v6664
    %v7069 = vunpack.c.h.b16 %v6664
    %v7070 = vunpack.c.l.b16 %v6665
    %v7071 = vunpack.c.h.b16 %v6665
    %v7072 = vunpack.c.l.b16 %v6666
    %v7073 = vunpack.c.h.b16 %v6666
    %v7074 = vunpack.c.l.b16 %v6667
    %v7075 = vunpack.c.h.b16 %v6667
    %v7076 = vunpack.c.l.b16 %v6668
    %v7077 = vunpack.c.h.b16 %v6668
    %v7078 = vunpack.c.l.b16 %v6669
    %v7079 = vunpack.c.h.b16 %v6669
    %v7080 = vunpack.c.l.b16 %v6670
    %v7081 = vunpack.c.h.b16 %v6670
    %v7082 = vunpack.c.l.b16 %v6671
    %v7083 = vunpack.c.h.b16 %v6671
    %v7084 = vunpack.c.l.b16 %v6672
    %v7085 = vunpack.c.h.b16 %v6672
    %v7086 = vunpack.c.l.b16 %v6673
    %v7087 = vunpack.c.h.b16 %v6673
    %v7088 = vunpack.c.l.b16 %v6674
    %v7089 = vunpack.c.h.b16 %v6674
    %v7090 = vunpack.c.l.b16 %v6675
    %v7091 = vunpack.c.h.b16 %v6675
    %v7092 = vunpack.c.l.b16 %v6676
    %v7093 = vunpack.c.h.b16 %v6676
    %v7094 = vunpack.c.l.b16 %v6677
    %v7095 = vunpack.c.h.b16 %v6677
    %v7096 = vunpack.c.l.b16 %v6678
    %v7097 = vunpack.c.h.b16 %v6678
    %v7098 = vunpack.c.l.b16 %v6679
    %v7099 = vunpack.c.h.b16 %v6679
    %v7100 = vunpack.c.l.b16 %v6680
    %v7101 = vunpack.c.h.b16 %v6680
    %v7102 = vunpack.c.l.b16 %v6681
    %v7103 = vunpack.c.h.b16 %v6681
    %v7104 = vunpack.c.l.b16 %v6682
    %v7105 = vunpack.c.h.b16 %v6682
    %v7106 = vunpack.c.l.b16 %v6683
    %v7107 = vunpack.c.h.b16 %v6683
    %v7108 = vunpack.c.l.b16 %v6684
    %v7109 = vunpack.c.h.b16 %v6684
    %v7110 = vunpack.c.l.b16 %v6685
    %v7111 = vunpack.c.h.b16 %v6685
    %v7112 = vunpack.c.l.b16 %v6686
    %v7113 = vunpack.c.h.b16 %v6686
    %v7114 = vunpack.c.l.b16 %v6687
    %v7115 = vunpack.c.h.b16 %v6687
    %v7116 = vunpack.c.l.b16 %v6688
    %v7117 = vunpack.c.h.b16 %v6688
    %v7118 = vunpack.c.l.b16 %v6689
    %v7119 = vunpack.c.h.b16 %v6689
    %v7120 = vunpack.c.l.b16 %v6690
    %v7121 = vunpack.c.h.b16 %v6690
    %v7122 = vunpack.c.l.b16 %v6691
    %v7123 = vunpack.c.h.b16 %v6691
    %v7124 = vunpack.c.l.b16 %v6692
    %v7125 = vunpack.c.h.b16 %v6692
    %v7126 = vunpack.c.l.b16 %v6693
    %v7127 = vunpack.c.h.b16 %v6693
    %v7128 = vunpack.c.l.b16 %v6694
    %v7129 = vunpack.c.h.b16 %v6694
    %v7130 = vunpack.c.l.b16 %v6695
    %v7131 = vunpack.c.h.b16 %v6695
    %v7132 = vunpack.c.l.b16 %v6696
    %v7133 = vunpack.c.h.b16 %v6696
    %v7134 = vunpack.c.l.b16 %v6697
    %v7135 = vunpack.c.h.b16 %v6697
    %v7136 = vunpack.c.l.b16 %v6698
    %v7137 = vunpack.c.h.b16 %v6698
    %v7138 = vunpack.c.l.b16 %v6699
    %v7139 = vunpack.c.h.b16 %v6699
    %v7140 = vunpack.c.l.b16 %v6700
    %v7141 = vunpack.c.h.b16 %v6700
    %v7142 = vunpack.c.l.b16 %v6701
    %v7143 = vunpack.c.h.b16 %v6701
    %v7144 = vunpack.c.l.b16 %v6702
    %v7145 = vunpack.c.h.b16 %v6702
    %v7146 = vunpack.c.l.b16 %v6703
    %v7147 = vunpack.c.h.b16 %v6703
    %v7148 = vunpack.c.l.b16 %v6704
    %v7149 = vunpack.c.h.b16 %v6704
    %v7150 = vunpack.c.l.b16 %v6705
    %v7151 = vunpack.c.h.b16 %v6705
    %v7152 = vunpack.c.l.b16 %v6706
    %v7153 = vunpack.c.h.b16 %v6706
    %v7154 = vunpack.c.l.b16 %v6707
    %v7155 = vunpack.c.h.b16 %v6707
    %v7156 = vunpack.c.l.b16 %v6708
    %v7157 = vunpack.c.h.b16 %v6708
    %v7158 = vunpack.c.l.b16 %v6709
    %v7159 = vunpack.c.h.b16 %v6709
    %v7160 = vunpack.c.l.b16 %v6710
    %v7161 = vunpack.c.h.b16 %v6710
    %v7162 = vunpack.c.l.b16 %v6711
    %v7163 = vunpack.c.h.b16 %v6711
    %v7164 = vunpack.c.l.b16 %v6712
    %v7165 = vunpack.c.h.b16 %v6712
    %v7166 = vunpack.c.l.b16 %v6713
    %v7167 = vunpack.c.h.b16 %v6713
    %v7168 = vunpack.c.l.b16 %v6714
    %v7169 = vunpack.c.h.b16 %v6714
    %v7170 = vunpack.c.l.b16 %v6715
    %v7171 = vunpack.c.h.b16 %v6715
    %v7172 = vunpack.c.l.b16 %v6716
    %v7173 = vunpack.c.h.b16 %v6716
    %v7174 = vunpack.c.l.b16 %v6717
    %v7175 = vunpack.c.h.b16 %v6717
    %v7176 = vunpack.c.l.b16 %v6718
    %v7177 = vunpack.c.h.b16 %v6718
    %v7178 = vunpack.c.l.b16 %v6719
    %v7179 = vunpack.c.h.b16 %v6719
    %v7180 = vunpack.c.l.b16 %v6720
    %v7181 = vunpack.c.h.b16 %v6720
    %v7182 = vunpack.c.l.b16 %v6721
    %v7183 = vunpack.c.h.b16 %v6721
    %v7184 = vunpack.c.l.b16 %v6722
    %v7185 = vunpack.c.h.b16 %v6722
    %v7186 = vunpack.c.l.b16 %v6723
    %v7187 = vunpack.c.h.b16 %v6723
    %v7188 = vunpack.c.l.b16 %v6724
    %v7189 = vunpack.c.h.b16 %v6724
    %v7190 = vunpack.c.l.b16 %v6725
    %v7191 = vunpack.c.h.b16 %v6725
    %v7192 = vunpack.c.l.b16 %v6726
    %v7193 = vunpack.c.h.b16 %v6726
    %v7194 = vunpack.c.l.b16 %v6727
    %v7195 = vunpack.c.h.b16 %v6727
    %v7196 = vunpack.c.l.b16 %v6728
    %v7197 = vunpack.c.h.b16 %v6728
    %v7198 = vunpack.c.l.b16 %v6729
    %v7199 = vunpack.c.h.b16 %v6729
    %v7200 = vunpack.c.l.b16 %v6730
    %v7201 = vunpack.c.h.b16 %v6730
    %v7202 = vunpack.c.l.b16 %v6731
    %v7203 = vunpack.c.h.b16 %v6731
    %v7204 = vunpack.c.l.b16 %v6732
    %v7205 = vunpack.c.h.b16 %v6732
    %v7206 = vunpack.c.l.b16 %v6733
    %v7207 = vunpack.c.h.b16 %v6733
    %v7208 = vunpack.c.l.b16 %v6734
    %v7209 = vunpack.c.h.b16 %v6734
    %v7210 = vunpack.c.l.b16 %v6735
    %v7211 = vunpack.c.h.b16 %v6735
    %v7212 = vunpack.c.l.b16 %v6736
    %v7213 = vunpack.c.h.b16 %v6736
    %v7214 = vunpack.c.l.b16 %v6737
    %v7215 = vunpack.c.h.b16 %v6737
    %v7216 = vunpack.c.l.b16 %v6738
    %v7217 = vunpack.c.h.b16 %v6738
    %v7218 = vunpack.c.l.b16 %v6739
    %v7219 = vunpack.c.h.b16 %v6739
    %v7220 = vunpack.c.l.b16 %v6740
    %v7221 = vunpack.c.h.b16 %v6740
    %v7222 = vunpack.c.l.b16 %v6741
    %v7223 = vunpack.c.h.b16 %v6741
    %v7224 = vunpack.c.l.b16 %v6742
    %v7225 = vunpack.c.h.b16 %v6742
    %v7226 = vunpack.c.l.b16 %v6743
    %v7227 = vunpack.c.h.b16 %v6743
    %v7228 = vunpack.c.l.b16 %v6744
    %v7229 = vunpack.c.h.b16 %v6744
    %v7230 = vunpack.c.l.b16 %v6745
    %v7231 = vunpack.c.h.b16 %v6745
    %v7232 = vunpack.c.l.b16 %v6746
    %v7233 = vunpack.c.h.b16 %v6746
    %v7234 = vunpack.c.l.b16 %v6747
    %v7235 = vunpack.c.h.b16 %v6747
    %v7236 = vunpack.c.l.b16 %v6748
    %v7237 = vunpack.c.h.b16 %v6748
    %v7238 = vunpack.c.l.b16 %v6749
    %v7239 = vunpack.c.h.b16 %v6749
    %v7240 = vunpack.c.l.b16 %v6750
    %v7241 = vunpack.c.h.b16 %v6750
    %v7242 = vunpack.c.l.b16 %v6751
    %v7243 = vunpack.c.h.b16 %v6751
    %v7244 = vunpack.c.l.b16 %v6752
    %v7245 = vunpack.c.h.b16 %v6752
    %v7246 = vunpack.c.l.b16 %v6753
    %v7247 = vunpack.c.h.b16 %v6753
    %v7248 = vunpack.c.l.b16 %v6754
    %v7249 = vunpack.c.h.b16 %v6754
    %v7250 = vunpack.c.l.b16 %v6755
    %v7251 = vunpack.c.h.b16 %v6755
    %v7252 = vunpack.c.l.b16 %v6756
    %v7253 = vunpack.c.h.b16 %v6756
    %v7254 = vunpack.c.l.b16 %v6757
    %v7255 = vunpack.c.h.b16 %v6757
    %v7256 = vunpack.c.l.b16 %v6758
    %v7257 = vunpack.c.h.b16 %v6758
    %v7258 = vunpack.c.l.b16 %v6759
    %v7259 = vunpack.c.h.b16 %v6759
    %v7260 = vunpack.c.l.b16 %v6760
    %v7261 = vunpack.c.h.b16 %v6760
    %v7262 = vunpack.c.l.b16 %v6761
    %v7263 = vunpack.c.h.b16 %v6761
    %v7264 = vunpack.c.l.b16 %v6762
    %v7265 = vunpack.c.h.b16 %v6762
    %v7266 = vunpack.c.l.b16 %v6763
    %v7267 = vunpack.c.h.b16 %v6763
    %v7268 = vunpack.c.l.b16 %v6764
    %v7269 = vunpack.c.h.b16 %v6764
    %v7270 = vunpack.c.l.b16 %v6765
    %v7271 = vunpack.c.h.b16 %v6765
    %v7272 = vunpack.c.l.b16 %v6766
    %v7273 = vunpack.c.h.b16 %v6766
    %v7274 = vunpack.c.l.b16 %v6767
    %v7275 = vunpack.c.h.b16 %v6767
    %v7276 = vunpack.c.l.b16 %v6768
    %v7277 = vunpack.c.h.b16 %v6768
    %v7278 = vunpack.c.l.b16 %v6769
    %v7279 = vunpack.c.h.b16 %v6769
    %v7280 = vunpack.c.l.b16 %v6770
    %v7281 = vunpack.c.h.b16 %v6770
    %v7282 = vunpack.c.l.b16 %v6771
    %v7283 = vunpack.c.h.b16 %v6771
    %v7284 = vunpack.c.l.b16 %v6772
    %v7285 = vunpack.c.h.b16 %v6772
    %v7286 = vunpack.c.l.b16 %v6773
    %v7287 = vunpack.c.h.b16 %v6773
    %v7288 = vunpack.c.l.b16 %v6774
    %v7289 = vunpack.c.h.b16 %v6774
    %v7290 = vunpack.c.l.b16 %v6775
    %v7291 = vunpack.c.h.b16 %v6775
    %v7292 = vunpack.c.l.b16 %v6776
    %v7293 = vunpack.c.h.b16 %v6776
    %v7294 = vunpack.c.l.b16 %v6777
    %v7295 = vunpack.c.h.b16 %v6777
    %v7296 = vunpack.c.l.b16 %v6778
    %v7297 = vunpack.c.h.b16 %v6778
    %v7298 = vunpack.c.l.b16 %v6779
    %v7299 = vunpack.c.h.b16 %v6779
    %v7300 = vunpack.c.l.b16 %v6780
    %v7301 = vunpack.c.h.b16 %v6780
    %v7302 = vunpack.c.l.b16 %v6781
    %v7303 = vunpack.c.h.b16 %v6781
    %v7304 = vunpack.c.l.b16 %v6782
    %v7305 = vunpack.c.h.b16 %v6782
    %v7306 = vunpack.c.l.b16 %v6783
    %v7307 = vunpack.c.h.b16 %v6783
    %v7308 = vunpack.c.l.b16 %v6784
    %v7309 = vunpack.c.h.b16 %v6784
    %v7310 = vunpack.c.l.b16 %v6785
    %v7311 = vunpack.c.h.b16 %v6785
    %v7312 = vunpack.c.l.b16 %v6786
    %v7313 = vunpack.c.h.b16 %v6786
    %v7314 = vunpack.c.l.b16 %v6787
    %v7315 = vunpack.c.h.b16 %v6787
    %v7316 = vunpack.c.l.b16 %v6788
    %v7317 = vunpack.c.h.b16 %v6788
    %v7318 = vunpack.c.l.b16 %v6789
    %v7319 = vunpack.c.h.b16 %v6789
    %v7320 = vunpack.c.l.b16 %v6790
    %v7321 = vunpack.c.h.b16 %v6790
    %v7322 = vunpack.c.l.b16 %v6791
    %v7323 = vunpack.c.h.b16 %v6791
    %v7324 = vunpack.c.l.b16 %v6792
    %v7325 = vunpack.c.h.b16 %v6792
    %v7326 = vunpack.c.l.b16 %v6793
    %v7327 = vunpack.c.h.b16 %v6793
    %v7328 = vunpack.c.l.b16 %v6794
    %v7329 = vunpack.c.h.b16 %v6794
    %v7330 = vunpack.c.l.b16 %v6795
    %v7331 = vunpack.c.h.b16 %v6795
    %v7332 = vunpack.c.l.b16 %v6796
    %v7333 = vunpack.c.h.b16 %v6796
    %v7334 = vunpack.c.l.b16 %v6797
    %v7335 = vunpack.c.h.b16 %v6797
    %v7336 = vunpack.c.l.b16 %v6798
    %v7337 = vunpack.c.h.b16 %v6798
    %v7338 = vunpack.c.l.b16 %v6799
    %v7339 = vunpack.c.h.b16 %v6799
    %v7340 = vunpack.c.l.b16 %v6800
    %v7341 = vunpack.c.h.b16 %v6800
    %v7342 = vunpack.c.l.b16 %v6801
    %v7343 = vunpack.c.h.b16 %v6801
    %v7344 = vunpack.c.l.b16 %v6802
    %v7345 = vunpack.c.h.b16 %v6802
    %v7346 = vunpack.c.l.b16 %v6803
    %v7347 = vunpack.c.h.b16 %v6803
    %v7348 = vunpack.c.l.b16 %v6804
    %v7349 = vunpack.c.h.b16 %v6804
    %v7350 = vunpack.c.l.b16 %v6805
    %v7351 = vunpack.c.h.b16 %v6805
    %v7352 = vunpack.c.l.b16 %v6806
    %v7353 = vunpack.c.h.b16 %v6806
    %v7354 = vunpack.c.l.b16 %v6807
    %v7355 = vunpack.c.h.b16 %v6807
    %v7356 = vunpack.c.l.b16 %v6808
    %v7357 = vunpack.c.h.b16 %v6808
    %v7358 = vunpack.c.l.b16 %v6809
    %v7359 = vunpack.c.h.b16 %v6809
    %v7360 = vunpack.c.l.b16 %v6810
    %v7361 = vunpack.c.h.b16 %v6810
    %v7362 = vunpack.c.l.b16 %v6811
    %v7363 = vunpack.c.h.b16 %v6811
    %v7364 = vunpack.c.l.b16 %v6812
    %v7365 = vunpack.c.h.b16 %v6812
    %v7366 = vunpack.c.l.b16 %v6813
    %v7367 = vunpack.c.h.b16 %v6813
    %v7368 = vunpack.c.l.b16 %v6814
    %v7369 = vunpack.c.h.b16 %v6814
    %v7370 = vunpack.c.l.b16 %v6815
    %v7371 = vunpack.c.h.b16 %v6815
    %v7372 = vunpack.c.l.b16 %v6816
    %v7373 = vunpack.c.h.b16 %v6816
    %v7374 = vunpack.c.l.b16 %v6817
    %v7375 = vunpack.c.h.b16 %v6817
    %v7376 = vunpack.c.l.b16 %v6818
    %v7377 = vunpack.c.h.b16 %v6818
    %v7378 = vunpack.c.l.b16 %v6819
    %v7379 = vunpack.c.h.b16 %v6819
    %v7380 = vunpack.c.l.b16 %v6820
    %v7381 = vunpack.c.h.b16 %v6820
    %v7382 = vunpack.c.l.b16 %v6821
    %v7383 = vunpack.c.h.b16 %v6821
    %v7384 = vunpack.c.l.b16 %v6822
    %v7385 = vunpack.c.h.b16 %v6822
    %v7386 = vunpack.c.l.b16 %v6823
    %v7387 = vunpack.c.h.b16 %v6823
    %v7388 = vunpack.c.l.b16 %v6824
    %v7389 = vunpack.c.h.b16 %v6824
    %v7390 = vunpack.c.l.b16 %v6825
    %v7391 = vunpack.c.h.b16 %v6825
    %v7392 = vunpack.c.l.b16 %v6826
    %v7393 = vunpack.c.h.b16 %v6826
    %v7394 = vunpack.c.l.b16 %v6827
    %v7395 = vunpack.c.h.b16 %v6827
    %v7396 = vunpack.c.l.b16 %v6828
    %v7397 = vunpack.c.h.b16 %v6828
    %v7398 = vunpack.c.l.b16 %v6829
    %v7399 = vunpack.c.h.b16 %v6829
    %v7400 = vunpack.c.l.b16 %v6830
    %v7401 = vunpack.c.h.b16 %v6830
    %v7402 = vunpack.c.l.b16 %v6831
    %v7403 = vunpack.c.h.b16 %v6831
    %v7404 = vunpack.c.l.b16 %v6832
    %v7405 = vunpack.c.h.b16 %v6832
    %v7406 = vunpack.c.l.b16 %v6833
    %v7407 = vunpack.c.h.b16 %v6833
    %v7408 = vunpack.c.l.b16 %v6834
    %v7409 = vunpack.c.h.b16 %v6834
    %v7410 = vunpack.c.l.b16 %v6835
    %v7411 = vunpack.c.h.b16 %v6835
    %v7412 = vpack.c.b16 %v7030, %v7028
    %v7413 = vpack.c.b16 %v7031, %v7029
    %v7414 = vpack.c.b16 %v7034, %v7032
    %v7415 = vpack.c.b16 %v7035, %v7033
    %v7416 = vpack.c.b16 %v7038, %v7036
    %v7417 = vpack.c.b16 %v7039, %v7037
    %v7418 = vpack.c.b16 %v7042, %v7040
    %v7419 = vpack.c.b16 %v7043, %v7041
    %v7420 = vpack.c.b16 %v7046, %v7044
    %v7421 = vpack.c.b16 %v7047, %v7045
    %v7422 = vpack.c.b16 %v7050, %v7048
    %v7423 = vpack.c.b16 %v7051, %v7049
    %v7424 = vpack.c.b16 %v7054, %v7052
    %v7425 = vpack.c.b16 %v7055, %v7053
    %v7426 = vpack.c.b16 %v7058, %v7056
    %v7427 = vpack.c.b16 %v7059, %v7057
    %v7428 = vpack.c.b16 %v7062, %v7060
    %v7429 = vpack.c.b16 %v7063, %v7061
    %v7430 = vpack.c.b16 %v7066, %v7064
    %v7431 = vpack.c.b16 %v7067, %v7065
    %v7432 = vpack.c.b16 %v7070, %v7068
    %v7433 = vpack.c.b16 %v7071, %v7069
    %v7434 = vpack.c.b16 %v7074, %v7072
    %v7435 = vpack.c.b16 %v7075, %v7073
    %v7436 = vpack.c.b16 %v7078, %v7076
    %v7437 = vpack.c.b16 %v7079, %v7077
    %v7438 = vpack.c.b16 %v7082, %v7080
    %v7439 = vpack.c.b16 %v7083, %v7081
    %v7440 = vpack.c.b16 %v7086, %v7084
    %v7441 = vpack.c.b16 %v7087, %v7085
    %v7442 = vpack.c.b16 %v7090, %v7088
    %v7443 = vpack.c.b16 %v7091, %v7089
    %v7444 = vpack.c.b16 %v7094, %v7092
    %v7445 = vpack.c.b16 %v7095, %v7093
    %v7446 = vpack.c.b16 %v7098, %v7096
    %v7447 = vpack.c.b16 %v7099, %v7097
    %v7448 = vpack.c.b16 %v7102, %v7100
    %v7449 = vpack.c.b16 %v7103, %v7101
    %v7450 = vpack.c.b16 %v7106, %v7104
    %v7451 = vpack.c.b16 %v7107, %v7105
    %v7452 = vpack.c.b16 %v7110, %v7108
    %v7453 = vpack.c.b16 %v7111, %v7109
    %v7454 = vpack.c.b16 %v7114, %v7112
    %v7455 = vpack.c.b16 %v7115, %v7113
    %v7456 = vpack.c.b16 %v7118, %v7116
    %v7457 = vpack.c.b16 %v7119, %v7117
    %v7458 = vpack.c.b16 %v7122, %v7120
    %v7459 = vpack.c.b16 %v7123, %v7121
    %v7460 = vpack.c.b16 %v7126, %v7124
    %v7461 = vpack.c.b16 %v7127, %v7125
    %v7462 = vpack.c.b16 %v7130, %v7128
    %v7463 = vpack.c.b16 %v7131, %v7129
    %v7464 = vpack.c.b16 %v7134, %v7132
    %v7465 = vpack.c.b16 %v7135, %v7133
    %v7466 = vpack.c.b16 %v7138, %v7136
    %v7467 = vpack.c.b16 %v7139, %v7137
    %v7468 = vpack.c.b16 %v7142, %v7140
    %v7469 = vpack.c.b16 %v7143, %v7141
    %v7470 = vpack.c.b16 %v7146, %v7144
    %v7471 = vpack.c.b16 %v7147, %v7145
    %v7472 = vpack.c.b16 %v7150, %v7148
    %v7473 = vpack.c.b16 %v7151, %v7149
    %v7474 = vpack.c.b16 %v7154, %v7152
    %v7475 = vpack.c.b16 %v7155, %v7153
    %v7476 = vpack.c.b16 %v7158, %v7156
    %v7477 = vpack.c.b16 %v7159, %v7157
    %v7478 = vpack.c.b16 %v7162, %v7160
    %v7479 = vpack.c.b16 %v7163, %v7161
    %v7480 = vpack.c.b16 %v7166, %v7164
    %v7481 = vpack.c.b16 %v7167, %v7165
    %v7482 = vpack.c.b16 %v7170, %v7168
    %v7483 = vpack.c.b16 %v7171, %v7169
    %v7484 = vpack.c.b16 %v7174, %v7172
    %v7485 = vpack.c.b16 %v7175, %v7173
    %v7486 = vpack.c.b16 %v7178, %v7176
    %v7487 = vpack.c.b16 %v7179, %v7177
    %v7488 = vpack.c.b16 %v7182, %v7180
    %v7489 = vpack.c.b16 %v7183, %v7181
    %v7490 = vpack.c.b16 %v7186, %v7184
    %v7491 = vpack.c.b16 %v7187, %v7185
    %v7492 = vpack.c.b16 %v7190, %v7188
    %v7493 = vpack.c.b16 %v7191, %v7189
    %v7494 = vpack.c.b16 %v7194, %v7192
    %v7495 = vpack.c.b16 %v7195, %v7193
    %v7496 = vpack.c.b16 %v7198, %v7196
    %v7497 = vpack.c.b16 %v7199, %v7197
    %v7498 = vpack.c.b16 %v7202, %v7200
    %v7499 = vpack.c.b16 %v7203, %v7201
    %v7500 = vpack.c.b16 %v7206, %v7204
    %v7501 = vpack.c.b16 %v7207, %v7205
    %v7502 = vpack.c.b16 %v7210, %v7208
    %v7503 = vpack.c.b16 %v7211, %v7209
    %v7504 = vpack.c.b16 %v7214, %v7212
    %v7505 = vpack.c.b16 %v7215, %v7213
    %v7506 = vpack.c.b16 %v7218, %v7216
    %v7507 = vpack.c.b16 %v7219, %v7217
    %v7508 = vpack.c.b16 %v7222, %v7220
    %v7509 = vpack.c.b16 %v7223, %v7221
    %v7510 = vpack.c.b16 %v7226, %v7224
    %v7511 = vpack.c.b16 %v7227, %v7225
    %v7512 = vpack.c.b16 %v7230, %v7228
    %v7513 = vpack.c.b16 %v7231, %v7229
    %v7514 = vpack.c.b16 %v7234, %v7232
    %v7515 = vpack.c.b16 %v7235, %v7233
    %v7516 = vpack.c.b16 %v7238, %v7236
    %v7517 = vpack.c.b16 %v7239, %v7237
    %v7518 = vpack.c.b16 %v7242, %v7240
    %v7519 = vpack.c.b16 %v7243, %v7241
    %v7520 = vpack.c.b16 %v7246, %v7244
    %v7521 = vpack.c.b16 %v7247, %v7245
    %v7522 = vpack.c.b16 %v7250, %v7248
    %v7523 = vpack.c.b16 %v7251, %v7249
    %v7524 = vpack.c.b16 %v7254, %v7252
    %v7525 = vpack.c.b16 %v7255, %v7253
    %v7526 = vpack.c.b16 %v7258, %v7256
    %v7527 = vpack.c.b16 %v7259, %v7257
    %v7528 = vpack.c.b16 %v7262, %v7260
    %v7529 = vpack.c.b16 %v7263, %v7261
    %v7530 = vpack.c.b16 %v7266, %v7264
    %v7531 = vpack.c.b16 %v7267, %v7265
    %v7532 = vpack.c.b16 %v7270, %v7268
    %v7533 = vpack.c.b16 %v7271, %v7269
    %v7534 = vpack.c.b16 %v7274, %v7272
    %v7535 = vpack.c.b16 %v7275, %v7273
    %v7536 = vpack.c.b16 %v7278, %v7276
    %v7537 = vpack.c.b16 %v7279, %v7277
    %v7538 = vpack.c.b16 %v7282, %v7280
    %v7539 = vpack.c.b16 %v7283, %v7281
    %v7540 = vpack.c.b16 %v7286, %v7284
    %v7541 = vpack.c.b16 %v7287, %v7285
    %v7542 = vpack.c.b16 %v7290, %v7288
    %v7543 = vpack.c.b16 %v7291, %v7289
    %v7544 = vpack.c.b16 %v7294, %v7292
    %v7545 = vpack.c.b16 %v7295, %v7293
    %v7546 = vpack.c.b16 %v7298, %v7296
    %v7547 = vpack.c.b16 %v7299, %v7297
    %v7548 = vpack.c.b16 %v7302, %v7300
    %v7549 = vpack.c.b16 %v7303, %v7301
    %v7550 = vpack.c.b16 %v7306, %v7304
    %v7551 = vpack.c.b16 %v7307, %v7305
    %v7552 = vpack.c.b16 %v7310, %v7308
    %v7553 = vpack.c.b16 %v7311, %v7309
    %v7554 = vpack.c.b16 %v7314, %v7312
    %v7555 = vpack.c.b16 %v7315, %v7313
    %v7556 = vpack.c.b16 %v7318, %v7316
    %v7557 = vpack.c.b16 %v7319, %v7317
    %v7558 = vpack.c.b16 %v7322, %v7320
    %v7559 = vpack.c.b16 %v7323, %v7321
    %v7560 = vpack.c.b16 %v7326, %v7324
    %v7561 = vpack.c.b16 %v7327, %v7325
    %v7562 = vpack.c.b16 %v7330, %v7328
    %v7563 = vpack.c.b16 %v7331, %v7329
    %v7564 = vpack.c.b16 %v7334, %v7332
    %v7565 = vpack.c.b16 %v7335, %v7333
    %v7566 = vpack.c.b16 %v7338, %v7336
    %v7567 = vpack.c.b16 %v7339, %v7337
    %v7568 = vpack.c.b16 %v7342, %v7340
    %v7569 = vpack.c.b16 %v7343, %v7341
    %v7570 = vpack.c.b16 %v7346, %v7344
    %v7571 = vpack.c.b16 %v7347, %v7345
    %v7572 = vpack.c.b16 %v7350, %v7348
    %v7573 = vpack.c.b16 %v7351, %v7349
    %v7574 = vpack.c.b16 %v7354, %v7352
    %v7575 = vpack.c.b16 %v7355, %v7353
    %v7576 = vpack.c.b16 %v7358, %v7356
    %v7577 = vpack.c.b16 %v7359, %v7357
    %v7578 = vpack.c.b16 %v7362, %v7360
    %v7579 = vpack.c.b16 %v7363, %v7361
    %v7580 = vpack.c.b16 %v7366, %v7364
    %v7581 = vpack.c.b16 %v7367, %v7365
    %v7582 = vpack.c.b16 %v7370, %v7368
    %v7583 = vpack.c.b16 %v7371, %v7369
    %v7584 = vpack.c.b16 %v7374, %v7372
    %v7585 = vpack.c.b16 %v7375, %v7373
    %v7586 = vpack.c.b16 %v7378, %v7376
    %v7587 = vpack.c.b16 %v7379, %v7377
    %v7588 = vpack.c.b16 %v7382, %v7380
    %v7589 = vpack.c.b16 %v7383, %v7381
    %v7590 = vpack.c.b16 %v7386, %v7384
    %v7591 = vpack.c.b16 %v7387, %v7385
    %v7592 = vpack.c.b16 %v7390, %v7388
    %v7593 = vpack.c.b16 %v7391, %v7389
    %v7594 = vpack.c.b16 %v7394, %v7392
    %v7595 = vpack.c.b16 %v7395, %v7393
    %v7596 = vpack.c.b16 %v7398, %v7396
    %v7597 = vpack.c.b16 %v7399, %v7397
    %v7598 = vpack.c.b16 %v7402, %v7400
    %v7599 = vpack.c.b16 %v7403, %v7401
    %v7600 = vpack.c.b16 %v7406, %v7404
    %v7601 = vpack.c.b16 %v7407, %v7405
    %v7602 = vpack.c.b16 %v7410, %v7408
    %v7603 = vpack.c.b16 %v7411, %v7409
    %7796 = vmatprep.subr.bf16.mxu0 %v7413
    %7797 = vmatpush1.bf16.msra.mxu0 %v7412
    %7798 = vmatprep.subr.bf16.mxu0 %v7415
    %7799 = vmatpush1.bf16.msra.mxu0 %v7414
    %7800 = vmatprep.subr.bf16.mxu0 %v7417
    %7801 = vmatpush1.bf16.msra.mxu0 %v7416
    %7802 = vmatprep.subr.bf16.mxu0 %v7419
    %7803 = vmatpush1.bf16.msra.mxu0 %v7418
    %7804 = vmatprep.subr.bf16.mxu0 %v7421
    %7805 = vmatpush1.bf16.msra.mxu0 %v7420
    %7806 = vmatprep.subr.bf16.mxu0 %v7423
    %7807 = vmatpush1.bf16.msra.mxu0 %v7422
    %7808 = vmatprep.subr.bf16.mxu0 %v7425
    %7809 = vmatpush1.bf16.msra.mxu0 %v7424
    %7810 = vmatprep.subr.bf16.mxu0 %v7427
    %7811 = vmatpush1.bf16.msra.mxu0 %v7426
    %7812 = vmatprep.subr.bf16.mxu0 %v7429
    %7813 = vmatpush1.bf16.msra.mxu0 %v7428
    %7814 = vmatprep.subr.bf16.mxu0 %v7431
    %7815 = vmatpush1.bf16.msra.mxu0 %v7430
    %7816 = vmatprep.subr.bf16.mxu0 %v7433
    %7817 = vmatpush1.bf16.msra.mxu0 %v7432
    %7818 = vmatprep.subr.bf16.mxu0 %v7435
    %7819 = vmatpush1.bf16.msra.mxu0 %v7434
    %7820 = vmatprep.subr.bf16.mxu0 %v7437
    %7821 = vmatpush1.bf16.msra.mxu0 %v7436
    %7822 = vmatprep.subr.bf16.mxu0 %v7439
    %7823 = vmatpush1.bf16.msra.mxu0 %v7438
    %7824 = vmatprep.subr.bf16.mxu0 %v7441
    %7825 = vmatpush1.bf16.msra.mxu0 %v7440
    %7826 = vmatprep.subr.bf16.mxu0 %v7443
    %7827 = vmatpush1.bf16.msra.mxu0 %v7442
    %7828 = vmatprep.mubr.bf16.mxu0 %v6621
    %7829 = vmatmul.mubr.bf16.gmra.mrb[0].mxu0 %v6620
    %v7830 = vpop.f32.mrb[0].mxu0
    %v7831 = vadd.f32 0.0, %v7830
    %v7832 = vpop.f32.mrb[0].mxu0
    %v7833 = vadd.f32 0.0, %v7832
    %v7834 = vpop.f32.mrb[0].mxu0
    %v7835 = vadd.f32 0.0, %v7834
    %v7836 = vpop.f32.mrb[0].mxu0
    %v7837 = vadd.f32 0.0, %v7836
    %7838 = vmatprep.mubr.bf16.mxu0 %v6633
    %7839 = vmatmul.mubr.bf16.gmra.mrb[0].mxu0 %v6632
    %v7840 = vpop.f32.mrb[0].mxu0
    %v7841 = vadd.f32 0.0, %v7840
    %v7842 = vpop.f32.mrb[0].mxu0
    %v7843 = vadd.f32 0.0, %v7842
    %v7844 = vpop.f32.mrb[0].mxu0
    %v7845 = vadd.f32 0.0, %v7844
    %v7846 = vpop.f32.mrb[0].mxu0
    %v7847 = vadd.f32 0.0, %v7846
    %7848 = vdwg.mxu0
    %7849 = vmatprep.subr.bf16.mxu0 %v7445
    %7850 = vmatpush1.bf16.msra.mxu0 %v7444
    %7851 = vmatprep.subr.bf16.mxu0 %v7447
    %7852 = vmatpush1.bf16.msra.mxu0 %v7446
    %7853 = vmatprep.subr.bf16.mxu0 %v7449
    %7854 = vmatpush1.bf16.msra.mxu0 %v7448
    %7855 = vmatprep.subr.bf16.mxu0 %v7451
    %7856 = vmatpush1.bf16.msra.mxu0 %v7450
    %7857 = vmatprep.subr.bf16.mxu0 %v7453
    %7858 = vmatpush1.bf16.msra.mxu0 %v7452
    %7859 = vmatprep.subr.bf16.mxu0 %v7455
    %7860 = vmatpush1.bf16.msra.mxu0 %v7454
    %7861 = vmatprep.subr.bf16.mxu0 %v7457
    %7862 = vmatpush1.bf16.msra.mxu0 %v7456
    %7863 = vmatprep.subr.bf16.mxu0 %v7459
    %7864 = vmatpush1.bf16.msra.mxu0 %v7458
    %7865 = vmatprep.subr.bf16.mxu0 %v7461
    %7866 = vmatpush1.bf16.msra.mxu0 %v7460
    %7867 = vmatprep.subr.bf16.mxu0 %v7463
    %7868 = vmatpush1.bf16.msra.mxu0 %v7462
    %7869 = vmatprep.subr.bf16.mxu0 %v7465
    %7870 = vmatpush1.bf16.msra.mxu0 %v7464
    %7871 = vmatprep.subr.bf16.mxu0 %v7467
    %7872 = vmatpush1.bf16.msra.mxu0 %v7466
    %7873 = vmatprep.subr.bf16.mxu0 %v7469
    %7874 = vmatpush1.bf16.msra.mxu0 %v7468
    %7875 = vmatprep.subr.bf16.mxu0 %v7471
    %7876 = vmatpush1.bf16.msra.mxu0 %v7470
    %7877 = vmatprep.subr.bf16.mxu0 %v7473
    %7878 = vmatpush1.bf16.msra.mxu0 %v7472
    %7879 = vmatprep.subr.bf16.mxu0 %v7475
    %7880 = vmatpush1.bf16.msra.mxu0 %v7474
    %7881 = vmatprep.mubr.bf16.mxu0 %v6623
    %7882 = vmatmul.mubr.bf16.gmra.mrb[0].mxu0 %v6622
    %v7883 = vpop.f32.mrb[0].mxu0
    %v7884 = vadd.f32 %v7831, %v7883
    %v7885 = vpop.f32.mrb[0].mxu0
    %v7886 = vadd.f32 %v7833, %v7885
    %v7887 = vpop.f32.mrb[0].mxu0
    %v7888 = vadd.f32 %v7835, %v7887
    %v7889 = vpop.f32.mrb[0].mxu0
    %v7890 = vadd.f32 %v7837, %v7889
    %7891 = vmatprep.mubr.bf16.mxu0 %v6635
    %7892 = vmatmul.mubr.bf16.gmra.mrb[0].mxu0 %v6634
    %v7893 = vpop.f32.mrb[0].mxu0
    %v7894 = vadd.f32 %v7841, %v7893
    %v7895 = vpop.f32.mrb[0].mxu0
    %v7896 = vadd.f32 %v7843, %v7895
    %v7897 = vpop.f32.mrb[0].mxu0
    %v7898 = vadd.f32 %v7845, %v7897
    %v7899 = vpop.f32.mrb[0].mxu0
    %v7900 = vadd.f32 %v7847, %v7899
    %7901 = vdwg.mxu0
    %7902 = vmatprep.subr.bf16.mxu0 %v7477
    %7903 = vmatpush1.bf16.msra.mxu0 %v7476
    %7904 = vmatprep.subr.bf16.mxu0 %v7479
    %7905 = vmatpush1.bf16.msra.mxu0 %v7478
    %7906 = vmatprep.subr.bf16.mxu0 %v7481
    %7907 = vmatpush1.bf16.msra.mxu0 %v7480
    %7908 = vmatprep.subr.bf16.mxu0 %v7483
    %7909 = vmatpush1.bf16.msra.mxu0 %v7482
    %7910 = vmatprep.subr.bf16.mxu0 %v7485
    %7911 = vmatpush1.bf16.msra.mxu0 %v7484
    %7912 = vmatprep.subr.bf16.mxu0 %v7487
    %7913 = vmatpush1.bf16.msra.mxu0 %v7486
    %7914 = vmatprep.subr.bf16.mxu0 %v7489
    %7915 = vmatpush1.bf16.msra.mxu0 %v7488
    %7916 = vmatprep.subr.bf16.mxu0 %v7491
    %7917 = vmatpush1.bf16.msra.mxu0 %v7490
    %7918 = vmatprep.subr.bf16.mxu0 %v7493
    %7919 = vmatpush1.bf16.msra.mxu0 %v7492
    %7920 = vmatprep.subr.bf16.mxu0 %v7495
    %7921 = vmatpush1.bf16.msra.mxu0 %v7494
    %7922 = vmatprep.subr.bf16.mxu0 %v7497
    %7923 = vmatpush1.bf16.msra.mxu0 %v7496
    %7924 = vmatprep.subr.bf16.mxu0 %v7499
    %7925 = vmatpush1.bf16.msra.mxu0 %v7498
    %7926 = vmatprep.subr.bf16.mxu0 %v7501
    %7927 = vmatpush1.bf16.msra.mxu0 %v7500
    %7928 = vmatprep.subr.bf16.mxu0 %v7503
    %7929 = vmatpush1.bf16.msra.mxu0 %v7502
    %7930 = vmatprep.subr.bf16.mxu0 %v7505
    %7931 = vmatpush1.bf16.msra.mxu0 %v7504
    %7932 = vmatprep.subr.bf16.mxu0 %v7507
    %7933 = vmatpush1.bf16.msra.mxu0 %v7506
    %7934 = vmatprep.mubr.bf16.mxu0 %v6625
    %7935 = vmatmul.mubr.bf16.gmra.mrb[0].mxu0 %v6624
    %v7936 = vpop.f32.mrb[0].mxu0
    %v7937 = vadd.f32 %v7884, %v7936
    %v7938 = vpop.f32.mrb[0].mxu0
    %v7939 = vadd.f32 %v7886, %v7938
    %v7940 = vpop.f32.mrb[0].mxu0
    %v7941 = vadd.f32 %v7888, %v7940
    %v7942 = vpop.f32.mrb[0].mxu0
    %v7943 = vadd.f32 %v7890, %v7942
    %7944 = vmatprep.mubr.bf16.mxu0 %v6637
    %7945 = vmatmul.mubr.bf16.gmra.mrb[0].mxu0 %v6636
    %v7946 = vpop.f32.mrb[0].mxu0
    %v7947 = vadd.f32 %v7894, %v7946
    %v7948 = vpop.f32.mrb[0].mxu0
    %v7949 = vadd.f32 %v7896, %v7948
    %v7950 = vpop.f32.mrb[0].mxu0
    %v7951 = vadd.f32 %v7898, %v7950
    %v7952 = vpop.f32.mrb[0].mxu0
    %v7953 = vadd.f32 %v7900, %v7952
    %7954 = vdwg.mxu0
    %7955 = vmatprep.subr.bf16.mxu0 %v7509
    %7956 = vmatpush1.bf16.msra.mxu0 %v7508
    %7957 = vmatprep.subr.bf16.mxu0 %v7511
    %7958 = vmatpush1.bf16.msra.mxu0 %v7510
    %7959 = vmatprep.subr.bf16.mxu0 %v7513
    %7960 = vmatpush1.bf16.msra.mxu0 %v7512
    %7961 = vmatprep.subr.bf16.mxu0 %v7515
    %7962 = vmatpush1.bf16.msra.mxu0 %v7514
    %7963 = vmatprep.subr.bf16.mxu0 %v7517
    %7964 = vmatpush1.bf16.msra.mxu0 %v7516
    %7965 = vmatprep.subr.bf16.mxu0 %v7519
    %7966 = vmatpush1.bf16.msra.mxu0 %v7518
    %7967 = vmatprep.subr.bf16.mxu0 %v7521
    %7968 = vmatpush1.bf16.msra.mxu0 %v7520
    %7969 = vmatprep.subr.bf16.mxu0 %v7523
    %7970 = vmatpush1.bf16.msra.mxu0 %v7522
    %7971 = vmatprep.subr.bf16.mxu0 %v7525
    %7972 = vmatpush1.bf16.msra.mxu0 %v7524
    %7973 = vmatprep.subr.bf16.mxu0 %v7527
    %7974 = vmatpush1.bf16.msra.mxu0 %v7526
    %7975 = vmatprep.subr.bf16.mxu0 %v7529
    %7976 = vmatpush1.bf16.msra.mxu0 %v7528
    %7977 = vmatprep.subr.bf16.mxu0 %v7531
    %7978 = vmatpush1.bf16.msra.mxu0 %v7530
    %7979 = vmatprep.subr.bf16.mxu0 %v7533
    %7980 = vmatpush1.bf16.msra.mxu0 %v7532
    %7981 = vmatprep.subr.bf16.mxu0 %v7535
    %7982 = vmatpush1.bf16.msra.mxu0 %v7534
    %7983 = vmatprep.subr.bf16.mxu0 %v7537
    %7984 = vmatpush1.bf16.msra.mxu0 %v7536
    %7985 = vmatprep.subr.bf16.mxu0 %v7539
    %7986 = vmatpush1.bf16.msra.mxu0 %v7538
    %7987 = vmatprep.mubr.bf16.mxu0 %v6627
    %7988 = vmatmul.mubr.bf16.gmra.mrb[0].mxu0 %v6626
    %v7989 = vpop.f32.mrb[0].mxu0
    %v7990 = vadd.f32 %v7937, %v7989
    %v7991 = vpop.f32.mrb[0].mxu0
    %v7992 = vadd.f32 %v7939, %v7991
    %v7993 = vpop.f32.mrb[0].mxu0
    %v7994 = vadd.f32 %v7941, %v7993
    %v7995 = vpop.f32.mrb[0].mxu0
    %v7996 = vadd.f32 %v7943, %v7995
    %7997 = vmatprep.mubr.bf16.mxu0 %v6639
    %7998 = vmatmul.mubr.bf16.gmra.mrb[0].mxu0 %v6638
    %v7999 = vpop.f32.mrb[0].mxu0
    %v8000 = vadd.f32 %v7947, %v7999
    %v8001 = vpop.f32.mrb[0].mxu0
    %v8002 = vadd.f32 %v7949, %v8001
    %v8003 = vpop.f32.mrb[0].mxu0
    %v8004 = vadd.f32 %v7951, %v8003
    %v8005 = vpop.f32.mrb[0].mxu0
    %v8006 = vadd.f32 %v7953, %v8005
    %8007 = vdwg.mxu0
    %8008 = vmatprep.subr.bf16.mxu0 %v7541
    %8009 = vmatpush1.bf16.msra.mxu0 %v7540
    %8010 = vmatprep.subr.bf16.mxu0 %v7543
    %8011 = vmatpush1.bf16.msra.mxu0 %v7542
    %8012 = vmatprep.subr.bf16.mxu0 %v7545
    %8013 = vmatpush1.bf16.msra.mxu0 %v7544
    %8014 = vmatprep.subr.bf16.mxu0 %v7547
    %8015 = vmatpush1.bf16.msra.mxu0 %v7546
    %8016 = vmatprep.subr.bf16.mxu0 %v7549
    %8017 = vmatpush1.bf16.msra.mxu0 %v7548
    %8018 = vmatprep.subr.bf16.mxu0 %v7551
    %8019 = vmatpush1.bf16.msra.mxu0 %v7550
    %8020 = vmatprep.subr.bf16.mxu0 %v7553
    %8021 = vmatpush1.bf16.msra.mxu0 %v7552
    %8022 = vmatprep.subr.bf16.mxu0 %v7555
    %8023 = vmatpush1.bf16.msra.mxu0 %v7554
    %8024 = vmatprep.subr.bf16.mxu0 %v7557
    %8025 = vmatpush1.bf16.msra.mxu0 %v7556
    %8026 = vmatprep.subr.bf16.mxu0 %v7559
    %8027 = vmatpush1.bf16.msra.mxu0 %v7558
    %8028 = vmatprep.subr.bf16.mxu0 %v7561
    %8029 = vmatpush1.bf16.msra.mxu0 %v7560
    %8030 = vmatprep.subr.bf16.mxu0 %v7563
    %8031 = vmatpush1.bf16.msra.mxu0 %v7562
    %8032 = vmatprep.subr.bf16.mxu0 %v7565
    %8033 = vmatpush1.bf16.msra.mxu0 %v7564
    %8034 = vmatprep.subr.bf16.mxu0 %v7567
    %8035 = vmatpush1.bf16.msra.mxu0 %v7566
    %8036 = vmatprep.subr.bf16.mxu0 %v7569
    %8037 = vmatpush1.bf16.msra.mxu0 %v7568
    %8038 = vmatprep.subr.bf16.mxu0 %v7571
    %8039 = vmatpush1.bf16.msra.mxu0 %v7570
    %8040 = vmatprep.mubr.bf16.mxu0 %v6629
    %8041 = vmatmul.mubr.bf16.gmra.mrb[0].mxu0 %v6628
    %v8042 = vpop.f32.mrb[0].mxu0
    %v8043 = vadd.f32 %v7990, %v8042
    %v8044 = vpop.f32.mrb[0].mxu0
    %v8045 = vadd.f32 %v7992, %v8044
    %v8046 = vpop.f32.mrb[0].mxu0
    %v8047 = vadd.f32 %v7994, %v8046
    %v8048 = vpop.f32.mrb[0].mxu0
    %v8049 = vadd.f32 %v7996, %v8048
    %8050 = vmatprep.mubr.bf16.mxu0 %v6641
    %8051 = vmatmul.mubr.bf16.gmra.mrb[0].mxu0 %v6640
    %v8052 = vpop.f32.mrb[0].mxu0
    %v8053 = vadd.f32 %v8000, %v8052
    %v8054 = vpop.f32.mrb[0].mxu0
    %v8055 = vadd.f32 %v8002, %v8054
    %v8056 = vpop.f32.mrb[0].mxu0
    %v8057 = vadd.f32 %v8004, %v8056
    %v8058 = vpop.f32.mrb[0].mxu0
    %v8059 = vadd.f32 %v8006, %v8058
    %8060 = vdwg.mxu0
    %8061 = vmatprep.subr.bf16.mxu0 %v7573
    %8062 = vmatpush1.bf16.msra.mxu0 %v7572
    %8063 = vmatprep.subr.bf16.mxu0 %v7575
    %8064 = vmatpush1.bf16.msra.mxu0 %v7574
    %8065 = vmatprep.subr.bf16.mxu0 %v7577
    %8066 = vmatpush1.bf16.msra.mxu0 %v7576
    %8067 = vmatprep.subr.bf16.mxu0 %v7579
    %8068 = vmatpush1.bf16.msra.mxu0 %v7578
    %8069 = vmatprep.subr.bf16.mxu0 %v7581
    %8070 = vmatpush1.bf16.msra.mxu0 %v7580
    %8071 = vmatprep.subr.bf16.mxu0 %v7583
    %8072 = vmatpush1.bf16.msra.mxu0 %v7582
    %8073 = vmatprep.subr.bf16.mxu0 %v7585
    %8074 = vmatpush1.bf16.msra.mxu0 %v7584
    %8075 = vmatprep.subr.bf16.mxu0 %v7587
    %8076 = vmatpush1.bf16.msra.mxu0 %v7586
    %8077 = vmatprep.subr.bf16.mxu0 %v7589
    %8078 = vmatpush1.bf16.msra.mxu0 %v7588
    %8079 = vmatprep.subr.bf16.mxu0 %v7591
    %8080 = vmatpush1.bf16.msra.mxu0 %v7590
    %8081 = vmatprep.subr.bf16.mxu0 %v7593
    %8082 = vmatpush1.bf16.msra.mxu0 %v7592
    %8083 = vmatprep.subr.bf16.mxu0 %v7595
    %8084 = vmatpush1.bf16.msra.mxu0 %v7594
    %8085 = vmatprep.subr.bf16.mxu0 %v7597
    %8086 = vmatpush1.bf16.msra.mxu0 %v7596
    %8087 = vmatprep.subr.bf16.mxu0 %v7599
    %8088 = vmatpush1.bf16.msra.mxu0 %v7598
    %8089 = vmatprep.subr.bf16.mxu0 %v7601
    %8090 = vmatpush1.bf16.msra.mxu0 %v7600
    %8091 = vmatprep.subr.bf16.mxu0 %v7603
    %8092 = vmatpush1.bf16.msra.mxu0 %v7602
    %8093 = vmatprep.mubr.bf16.mxu0 %v6631
    %8094 = vmatmul.mubr.bf16.gmra.mrb[0].mxu0 %v6630
    %v8095 = vpop.f32.mrb[0].mxu0
    %v8096 = vadd.f32 %v8043, %v8095
    %v8097 = vpop.f32.mrb[0].mxu0
    %v8098 = vadd.f32 %v8045, %v8097
    %v8099 = vpop.f32.mrb[0].mxu0
    %v8100 = vadd.f32 %v8047, %v8099
    %v8101 = vpop.f32.mrb[0].mxu0
    %v8102 = vadd.f32 %v8049, %v8101
    %8103 = vmatprep.mubr.bf16.mxu0 %v6643
    %8104 = vmatmul.mubr.bf16.gmra.mrb[0].mxu0 %v6642
    %v8105 = vpop.f32.mrb[0].mxu0
    %v8106 = vadd.f32 %v8053, %v8105
    %v8107 = vpop.f32.mrb[0].mxu0
    %v8108 = vadd.f32 %v8055, %v8107
    %v8109 = vpop.f32.mrb[0].mxu0
    %v8110 = vadd.f32 %v8057, %v8109
    %v8111 = vpop.f32.mrb[0].mxu0
    %v8112 = vadd.f32 %v8059, %v8111
    %8113 = vdwg.mxu0
    %v8114 = vadd.f32 %v8096, %v8100
    %v8115 = vrot.slane %v8114, 4
    %v8116 = vadd.f32 %v8114, %v8115
    %v8117 = vrot.slane %v8116, 2
    %v8118 = vadd.f32 %v8116, %v8117
    %v8119 = vrot.slane %v8118, 1
    %v8120 = vadd.f32 %v8118, %v8119
    %v8121 = vadd.f32 %v8098, %v8102
    %v8122 = vrot.slane %v8121, 4
    %v8123 = vadd.f32 %v8121, %v8122
    %v8124 = vrot.slane %v8123, 2
    %v8125 = vadd.f32 %v8123, %v8124
    %v8126 = vrot.slane %v8125, 1
    %v8127 = vadd.f32 %v8125, %v8126
    %v8128 = vadd.f32 %v8106, %v8110
    %v8129 = vrot.slane %v8128, 4
    %v8130 = vadd.f32 %v8128, %v8129
    %v8131 = vrot.slane %v8130, 2
    %v8132 = vadd.f32 %v8130, %v8131
    %v8133 = vrot.slane %v8132, 1
    %v8134 = vadd.f32 %v8132, %v8133
    %v8135 = vadd.f32 %v8108, %v8112
    %v8136 = vrot.slane %v8135, 4
    %v8137 = vadd.f32 %v8135, %v8136
    %v8138 = vrot.slane %v8137, 2
    %v8139 = vadd.f32 %v8137, %v8138
    %v8140 = vrot.slane %v8139, 1
    %v8141 = vadd.f32 %v8139, %v8140
    %v8142 = vadd.f32 %v8120, %v8127
    %8143 = vadd.xlane.f32.xlu0 %v8142
    %v8144 = vpop.xlane.xlu0 %8143
    %v8145 = vadd.f32 %v8134, %v8141
    %8146 = vadd.xlane.f32.xlu0 %v8145
    %v8147 = vpop.xlane.xlu0 %8146
    %v8148 = vmul.f32 %v8144, %v1519
    %v8149 = vmul.f32 %v8147, %v1519
    %v8150 = vsub.f32 %v8096, %v8148
    %v8151 = vsub.f32 %v8098, %v8148
    %v8152 = vsub.f32 %v8100, %v8148
    %v8153 = vsub.f32 %v8102, %v8148
    %v8154 = vsub.f32 %v8106, %v8149
    %v8155 = vsub.f32 %v8108, %v8149
    %v8156 = vsub.f32 %v8110, %v8149
    %v8157 = vsub.f32 %v8112, %v8149
    %v8158 = vmul.f32 %v8150, %v8150
    %v8159 = vmul.f32 %v8151, %v8151
    %v8160 = vmul.f32 %v8152, %v8152
    %v8161 = vmul.f32 %v8153, %v8153
    %v8162 = vmul.f32 %v8154, %v8154
    %v8163 = vmul.f32 %v8155, %v8155
    %v8164 = vmul.f32 %v8156, %v8156
    %v8165 = vmul.f32 %v8157, %v8157
    %v8166 = vadd.f32 %v8158, %v8160
    %v8167 = vrot.slane %v8166, 4
    %v8168 = vadd.f32 %v8166, %v8167
    %v8169 = vrot.slane %v8168, 2
    %v8170 = vadd.f32 %v8168, %v8169
    %v8171 = vrot.slane %v8170, 1
    %v8172 = vadd.f32 %v8170, %v8171
    %v8173 = vadd.f32 %v8159, %v8161
    %v8174 = vrot.slane %v8173, 4
    %v8175 = vadd.f32 %v8173, %v8174
    %v8176 = vrot.slane %v8175, 2
    %v8177 = vadd.f32 %v8175, %v8176
    %v8178 = vrot.slane %v8177, 1
    %v8179 = vadd.f32 %v8177, %v8178
    %v8180 = vadd.f32 %v8162, %v8164
    %v8181 = vrot.slane %v8180, 4
    %v8182 = vadd.f32 %v8180, %v8181
    %v8183 = vrot.slane %v8182, 2
    %v8184 = vadd.f32 %v8182, %v8183
    %v8185 = vrot.slane %v8184, 1
    %v8186 = vadd.f32 %v8184, %v8185
    %v8187 = vadd.f32 %v8163, %v8165
    %v8188 = vrot.slane %v8187, 4
    %v8189 = vadd.f32 %v8187, %v8188
    %v8190 = vrot.slane %v8189, 2
    %v8191 = vadd.f32 %v8189, %v8190
    %v8192 = vrot.slane %v8191, 1
    %v8193 = vadd.f32 %v8191, %v8192
    %v8194 = vadd.f32 %v8172, %v8179
    %8195 = vadd.xlane.f32.xlu0 %v8194
    %v8196 = vpop.xlane.xlu0 %8195
    %v8197 = vadd.f32 %v8186, %v8193
    %8198 = vadd.xlane.f32.xlu0 %v8197
    %v8199 = vpop.xlane.xlu0 %8198
    %v8200 = vmul.f32 %v8196, %v1519
    %v8201 = vmul.f32 %v8199, %v1519
    %v8202 = vadd.f32 %v8200, 1e-05
    %v8203 = vadd.f32 %v8201, 1e-05
    %v8204 = vrsqrt.pop %v8202
    %v8205 = vrsqrt.pop %v8203
    %v8206 = vmul.f32 %v8150, %v8204
    %v8207 = vmul.f32 %v8151, %v8204
    %v8208 = vmul.f32 %v8152, %v8204
    %v8209 = vmul.f32 %v8153, %v8204
    %v8210 = vmul.f32 %v8154, %v8205
    %v8211 = vmul.f32 %v8155, %v8205
    %v8212 = vmul.f32 %v8156, %v8205
    %v8213 = vmul.f32 %v8157, %v8205
    %v8214 = vld [vmem:[%s17] sm:$0x3]
    %v8216 = vlaneseq
    %v8217 = vshrl.u32 %v8216, 7
    %v8218 = vsub.s32 0, %v8217
    %v8219 = vrot.slane %v8214, %v8218
    %v8220 = vlaneseq
    %v8221 = vshrl.u32 %v8220, 7
    %v8222 = vsub.s32 1, %v8221
    %v8223 = vrot.slane %v8214, %v8222
    %v8226 = vmul.f32 %v8206, %v8219
    %v8227 = vmul.f32 %v8207, %v8223
    %v8228 = vmul.f32 %v8208, %v8219
    %v8229 = vmul.f32 %v8209, %v8223
    %v8230 = vmul.f32 %v8210, %v8219
    %v8231 = vmul.f32 %v8211, %v8223
    %v8232 = vmul.f32 %v8212, %v8219
    %v8233 = vmul.f32 %v8213, %v8223
    %v8234 = vld [vmem:[%s18] sm:$0x3]
    %v8236 = vlaneseq
    %v8237 = vshrl.u32 %v8236, 7
    %v8238 = vsub.s32 0, %v8237
    %v8239 = vrot.slane %v8234, %v8238
    %v8240 = vlaneseq
    %v8241 = vshrl.u32 %v8240, 7
    %v8242 = vsub.s32 1, %v8241
    %v8243 = vrot.slane %v8234, %v8242
    %v8246 = vadd.f32 %v8226, %v8239
    %v8247 = vadd.f32 %v8227, %v8243
    %v8248 = vadd.f32 %v8228, %v8239
    %v8249 = vadd.f32 %v8229, %v8243
    %v8250 = vadd.f32 %v8230, %v8239
    %v8251 = vadd.f32 %v8231, %v8243
    %v8252 = vadd.f32 %v8232, %v8239
    %v8253 = vadd.f32 %v8233, %v8243
    %v8254 = vsub.f32 0.0, %v8246
    %v8255 = vsub.f32 0.0, %v8247
    %v8256 = vsub.f32 0.0, %v8248
    %v8257 = vsub.f32 0.0, %v8249
    %v8258 = vsub.f32 0.0, %v8250
    %v8259 = vsub.f32 0.0, %v8251
    %v8260 = vsub.f32 0.0, %v8252
    %v8261 = vsub.f32 0.0, %v8253
    %v8262 = vmul.f32 %v8254, 1.442695
    %v8263 = vpow.pop %v8262
    %v8264 = vmul.f32 %v8255, 1.442695
    %v8265 = vpow.pop %v8264
    %v8266 = vmul.f32 %v8256, 1.442695
    %v8267 = vpow.pop %v8266
    %v8268 = vmul.f32 %v8257, 1.442695
    %v8269 = vpow.pop %v8268
    %v8270 = vmul.f32 %v8258, 1.442695
    %v8271 = vpow.pop %v8270
    %v8272 = vmul.f32 %v8259, 1.442695
    %v8273 = vpow.pop %v8272
    %v8274 = vmul.f32 %v8260, 1.442695
    %v8275 = vpow.pop %v8274
    %v8276 = vmul.f32 %v8261, 1.442695
    %v8277 = vpow.pop %v8276
    %v8278 = vadd.f32 %v8263, 1.0
    %v8279 = vadd.f32 %v8265, 1.0
    %v8280 = vadd.f32 %v8267, 1.0
    %v8281 = vadd.f32 %v8269, 1.0
    %v8282 = vadd.f32 %v8271, 1.0
    %v8283 = vadd.f32 %v8273, 1.0
    %v8284 = vadd.f32 %v8275, 1.0
    %v8285 = vadd.f32 %v8277, 1.0
    %v8286 = vrcp.pop %v8278
    %v8287 = vmul.f32 1.0, %v8286
    %v8288 = vrcp.pop %v8279
    %v8289 = vmul.f32 1.0, %v8288
    %v8290 = vrcp.pop %v8280
    %v8291 = vmul.f32 1.0, %v8290
    %v8292 = vrcp.pop %v8281
    %v8293 = vmul.f32 1.0, %v8292
    %v8294 = vrcp.pop %v8282
    %v8295 = vmul.f32 1.0, %v8294
    %v8296 = vrcp.pop %v8283
    %v8297 = vmul.f32 1.0, %v8296
    %v8298 = vrcp.pop %v8284
    %v8299 = vmul.f32 1.0, %v8298
    %v8300 = vrcp.pop %v8285
    %v8301 = vmul.f32 1.0, %v8300
    %v8302 = vmul.f32 %v8246, %v8287
    %v8303 = vmul.f32 %v8247, %v8289
    %v8304 = vmul.f32 %v8248, %v8291
    %v8305 = vmul.f32 %v8249, %v8293
    %v8306 = vmul.f32 %v8250, %v8295
    %v8307 = vmul.f32 %v8251, %v8297
    %v8308 = vmul.f32 %v8252, %v8299
    %v8309 = vmul.f32 %v8253, %v8301
    %v8310 = vrot.slane %v8302, 7
    %v8311 = vrot.slane %v8303, 7
    %v8312 = vrot.slane %v8304, 7
    %v8313 = vrot.slane %v8305, 7
    %v8314 = vrot.slane %v8306, 7
    %v8315 = vrot.slane %v8307, 7
    %v8316 = vrot.slane %v8308, 7
    %v8317 = vrot.slane %v8309, 7
    %v8318 = vsel %vm2687, %v8314, %v8316
    %v8319 = vsel %vm2687, %v8315, %v8317
    %v8320 = vsel %vm2687, %v8312, %v8314
    %v8321 = vsel %vm2687, %v8313, %v8315
    %v8322 = vsel %vm2687, %v8310, %v8312
    %v8323 = vsel %vm2687, %v8311, %v8313
    %v8324 = vsel %vm2687, %v8316, %v8310
    %v8325 = vsel %vm2687, %v8317, %v8311
    %v8326 = vsel %vm6516, %v8324, 0.0
    %v8327 = vsel %vm6516, %v8325, 0.0
    %v8328 = vsel %vm6517, %v8322, 0.0
    %v8329 = vsel %vm6517, %v8323, 0.0
    %v8330 = vsel %vm6518, %v8320, 0.0
    %v8331 = vsel %vm6518, %v8321, 0.0
    %v8332 = vsel %vm6519, %v8318, 0.0
    %v8333 = vsel %vm6519, %v8319, 0.0
    %v8334 = vrot.slane %v8302, 1
    %v8335 = vrot.slane %v8303, 1
    %v8336 = vrot.slane %v8304, 1
    %v8337 = vrot.slane %v8305, 1
    %v8338 = vrot.slane %v8306, 1
    %v8339 = vrot.slane %v8307, 1
    %v8340 = vrot.slane %v8308, 1
    %v8341 = vrot.slane %v8309, 1
    %v8342 = vsel %vm2714, %v8338, %v8340
    %v8343 = vsel %vm2714, %v8339, %v8341
    %v8344 = vsel %vm2714, %v8336, %v8338
    %v8345 = vsel %vm2714, %v8337, %v8339
    %v8346 = vsel %vm2714, %v8334, %v8336
    %v8347 = vsel %vm2714, %v8335, %v8337
    %v8348 = vsel %vm2714, %v8340, %v8334
    %v8349 = vsel %vm2714, %v8341, %v8335
    %v8350 = vsel %vm6568, %v8346, 0.0
    %v8351 = vsel %vm6568, %v8347, 0.0
    %v8352 = vsel %vm6569, %v8344, 0.0
    %v8353 = vsel %vm6569, %v8345, 0.0
    %v8354 = vsel %vm6570, %v8342, 0.0
    %v8355 = vsel %vm6570, %v8343, 0.0
    %v8356 = vsel %vm6571, %v8348, 0.0
    %v8357 = vsel %vm6571, %v8349, 0.0
    %v8358 = vpack.c.bf16 %v8328, %v8326
    %v8359 = vpack.c.bf16 %v8329, %v8327
    %v8360 = vpack.c.bf16 %v8304, %v8302
    %v8361 = vpack.c.bf16 %v8305, %v8303
    %v8362 = vpack.c.bf16 %v8352, %v8350
    %v8363 = vpack.c.bf16 %v8353, %v8351
    %v8364 = vpack.c.bf16 %v8332, %v8330
    %v8365 = vpack.c.bf16 %v8333, %v8331
    %v8366 = vpack.c.bf16 %v8308, %v8306
    %v8367 = vpack.c.bf16 %v8309, %v8307
    %v8368 = vpack.c.bf16 %v8356, %v8354
    %v8369 = vpack.c.bf16 %v8357, %v8355
    %v8370 = vld [vmem:[#allocation18] sm:$0xff]
    %v8371 = vld [vmem:[#allocation18 + $0x8] sm:$0xff]
    %v8372 = vld [vmem:[#allocation18 + $0x10] sm:$0xff]
    %v8373 = vld [vmem:[#allocation18 + $0x18] sm:$0xff]
    %v8374 = vld [vmem:[#allocation18 + $0x20] sm:$0xff]
    %v8375 = vld [vmem:[#allocation18 + $0x28] sm:$0xff]
    %v8376 = vld [vmem:[#allocation18 + $0x30] sm:$0xff]
    %v8377 = vld [vmem:[#allocation18 + $0x38] sm:$0xff]
    %v8378 = vld [vmem:[#allocation18 + $0x40] sm:$0xff]
    %v8379 = vld [vmem:[#allocation18 + $0x48] sm:$0xff]
    %v8380 = vld [vmem:[#allocation18 + $0x50] sm:$0xff]
    %v8381 = vld [vmem:[#allocation18 + $0x58] sm:$0xff]
    %v8382 = vld [vmem:[#allocation18 + $0x60] sm:$0xff]
    %v8383 = vld [vmem:[#allocation18 + $0x68] sm:$0xff]
    %v8384 = vld [vmem:[#allocation18 + $0x70] sm:$0xff]
    %v8385 = vld [vmem:[#allocation18 + $0x78] sm:$0xff]
    %v8386 = vld [vmem:[#allocation18 + $0x80] sm:$0xff]
    %v8387 = vld [vmem:[#allocation18 + $0x88] sm:$0xff]
    %v8388 = vld [vmem:[#allocation18 + $0x90] sm:$0xff]
    %v8389 = vld [vmem:[#allocation18 + $0x98] sm:$0xff]
    %v8390 = vld [vmem:[#allocation18 + $0xa0] sm:$0xff]
    %v8391 = vld [vmem:[#allocation18 + $0xa8] sm:$0xff]
    %v8392 = vld [vmem:[#allocation18 + $0xb0] sm:$0xff]
    %v8393 = vld [vmem:[#allocation18 + $0xb8] sm:$0xff]
    %v8394 = vld [vmem:[#allocation18 + $0xc0] sm:$0xff]
    %v8395 = vld [vmem:[#allocation18 + $0xc8] sm:$0xff]
    %v8396 = vld [vmem:[#allocation18 + $0xd0] sm:$0xff]
    %v8397 = vld [vmem:[#allocation18 + $0xd8] sm:$0xff]
    %v8398 = vld [vmem:[#allocation18 + $0xe0] sm:$0xff]
    %v8399 = vld [vmem:[#allocation18 + $0xe8] sm:$0xff]
    %v8400 = vld [vmem:[#allocation18 + $0xf0] sm:$0xff]
    %v8401 = vld [vmem:[#allocation18 + $0xf8] sm:$0xff]
    %v8402 = vld [vmem:[#allocation18 + $0x100] sm:$0xff]
    %v8403 = vld [vmem:[#allocation18 + $0x108] sm:$0xff]
    %v8404 = vld [vmem:[#allocation18 + $0x110] sm:$0xff]
    %v8405 = vld [vmem:[#allocation18 + $0x118] sm:$0xff]
    %v8406 = vld [vmem:[#allocation18 + $0x120] sm:$0xff]
    %v8407 = vld [vmem:[#allocation18 + $0x128] sm:$0xff]
    %v8408 = vld [vmem:[#allocation18 + $0x130] sm:$0xff]
    %v8409 = vld [vmem:[#allocation18 + $0x138] sm:$0xff]
    %v8410 = vld [vmem:[#allocation18 + $0x140] sm:$0xff]
    %v8411 = vld [vmem:[#allocation18 + $0x148] sm:$0xff]
    %v8412 = vld [vmem:[#allocation18 + $0x150] sm:$0xff]
    %v8413 = vld [vmem:[#allocation18 + $0x158] sm:$0xff]
    %v8414 = vld [vmem:[#allocation18 + $0x160] sm:$0xff]
    %v8415 = vld [vmem:[#allocation18 + $0x168] sm:$0xff]
    %v8416 = vld [vmem:[#allocation18 + $0x170] sm:$0xff]
    %v8417 = vld [vmem:[#allocation18 + $0x178] sm:$0xff]
    %v8418 = vld [vmem:[#allocation18 + $0x180] sm:$0xff]
    %v8419 = vld [vmem:[#allocation18 + $0x188] sm:$0xff]
    %v8420 = vld [vmem:[#allocation18 + $0x190] sm:$0xff]
    %v8421 = vld [vmem:[#allocation18 + $0x198] sm:$0xff]
    %v8422 = vld [vmem:[#allocation18 + $0x1a0] sm:$0xff]
    %v8423 = vld [vmem:[#allocation18 + $0x1a8] sm:$0xff]
    %v8424 = vld [vmem:[#allocation18 + $0x1b0] sm:$0xff]
    %v8425 = vld [vmem:[#allocation18 + $0x1b8] sm:$0xff]
    %v8426 = vld [vmem:[#allocation18 + $0x1c0] sm:$0xff]
    %v8427 = vld [vmem:[#allocation18 + $0x1c8] sm:$0xff]
    %v8428 = vld [vmem:[#allocation18 + $0x1d0] sm:$0xff]
    %v8429 = vld [vmem:[#allocation18 + $0x1d8] sm:$0xff]
    %v8430 = vld [vmem:[#allocation18 + $0x1e0] sm:$0xff]
    %v8431 = vld [vmem:[#allocation18 + $0x1e8] sm:$0xff]
    %v8432 = vld [vmem:[#allocation18 + $0x1f0] sm:$0xff]
    %v8433 = vld [vmem:[#allocation18 + $0x1f8] sm:$0xff]
    %v8434 = vld [vmem:[#allocation18 + $0x200] sm:$0xff]
    %v8435 = vld [vmem:[#allocation18 + $0x208] sm:$0xff]
    %v8436 = vld [vmem:[#allocation18 + $0x210] sm:$0xff]
    %v8437 = vld [vmem:[#allocation18 + $0x218] sm:$0xff]
    %v8438 = vld [vmem:[#allocation18 + $0x220] sm:$0xff]
    %v8439 = vld [vmem:[#allocation18 + $0x228] sm:$0xff]
    %v8440 = vld [vmem:[#allocation18 + $0x230] sm:$0xff]
    %v8441 = vld [vmem:[#allocation18 + $0x238] sm:$0xff]
    %v8442 = vld [vmem:[#allocation18 + $0x240] sm:$0xff]
    %v8443 = vld [vmem:[#allocation18 + $0x248] sm:$0xff]
    %v8444 = vld [vmem:[#allocation18 + $0x250] sm:$0xff]
    %v8445 = vld [vmem:[#allocation18 + $0x258] sm:$0xff]
    %v8446 = vld [vmem:[#allocation18 + $0x260] sm:$0xff]
    %v8447 = vld [vmem:[#allocation18 + $0x268] sm:$0xff]
    %v8448 = vld [vmem:[#allocation18 + $0x270] sm:$0xff]
    %v8449 = vld [vmem:[#allocation18 + $0x278] sm:$0xff]
    %v8450 = vld [vmem:[#allocation18 + $0x280] sm:$0xff]
    %v8451 = vld [vmem:[#allocation18 + $0x288] sm:$0xff]
    %v8452 = vld [vmem:[#allocation18 + $0x290] sm:$0xff]
    %v8453 = vld [vmem:[#allocation18 + $0x298] sm:$0xff]
    %v8454 = vld [vmem:[#allocation18 + $0x2a0] sm:$0xff]
    %v8455 = vld [vmem:[#allocation18 + $0x2a8] sm:$0xff]
    %v8456 = vld [vmem:[#allocation18 + $0x2b0] sm:$0xff]
    %v8457 = vld [vmem:[#allocation18 + $0x2b8] sm:$0xff]
    %v8458 = vld [vmem:[#allocation18 + $0x2c0] sm:$0xff]
    %v8459 = vld [vmem:[#allocation18 + $0x2c8] sm:$0xff]
    %v8460 = vld [vmem:[#allocation18 + $0x2d0] sm:$0xff]
    %v8461 = vld [vmem:[#allocation18 + $0x2d8] sm:$0xff]
    %v8462 = vld [vmem:[#allocation18 + $0x2e0] sm:$0xff]
    %v8463 = vld [vmem:[#allocation18 + $0x2e8] sm:$0xff]
    %v8464 = vld [vmem:[#allocation18 + $0x2f0] sm:$0xff]
    %v8465 = vld [vmem:[#allocation18 + $0x2f8] sm:$0xff]
    %v8562 = vunpack.c.l.b16 %v8370
    %v8563 = vunpack.c.h.b16 %v8370
    %v8564 = vunpack.c.l.b16 %v8371
    %v8565 = vunpack.c.h.b16 %v8371
    %v8566 = vunpack.c.l.b16 %v8372
    %v8567 = vunpack.c.h.b16 %v8372
    %v8568 = vunpack.c.l.b16 %v8373
    %v8569 = vunpack.c.h.b16 %v8373
    %v8570 = vunpack.c.l.b16 %v8374
    %v8571 = vunpack.c.h.b16 %v8374
    %v8572 = vunpack.c.l.b16 %v8375
    %v8573 = vunpack.c.h.b16 %v8375
    %v8574 = vunpack.c.l.b16 %v8376
    %v8575 = vunpack.c.h.b16 %v8376
    %v8576 = vunpack.c.l.b16 %v8377
    %v8577 = vunpack.c.h.b16 %v8377
    %v8578 = vunpack.c.l.b16 %v8378
    %v8579 = vunpack.c.h.b16 %v8378
    %v8580 = vunpack.c.l.b16 %v8379
    %v8581 = vunpack.c.h.b16 %v8379
    %v8582 = vunpack.c.l.b16 %v8380
    %v8583 = vunpack.c.h.b16 %v8380
    %v8584 = vunpack.c.l.b16 %v8381
    %v8585 = vunpack.c.h.b16 %v8381
    %v8586 = vunpack.c.l.b16 %v8382
    %v8587 = vunpack.c.h.b16 %v8382
    %v8588 = vunpack.c.l.b16 %v8383
    %v8589 = vunpack.c.h.b16 %v8383
    %v8590 = vunpack.c.l.b16 %v8384
    %v8591 = vunpack.c.h.b16 %v8384
    %v8592 = vunpack.c.l.b16 %v8385
    %v8593 = vunpack.c.h.b16 %v8385
    %v8594 = vunpack.c.l.b16 %v8386
    %v8595 = vunpack.c.h.b16 %v8386
    %v8596 = vunpack.c.l.b16 %v8387
    %v8597 = vunpack.c.h.b16 %v8387
    %v8598 = vunpack.c.l.b16 %v8388
    %v8599 = vunpack.c.h.b16 %v8388
    %v8600 = vunpack.c.l.b16 %v8389
    %v8601 = vunpack.c.h.b16 %v8389
    %v8602 = vunpack.c.l.b16 %v8390
    %v8603 = vunpack.c.h.b16 %v8390
    %v8604 = vunpack.c.l.b16 %v8391
    %v8605 = vunpack.c.h.b16 %v8391
    %v8606 = vunpack.c.l.b16 %v8392
    %v8607 = vunpack.c.h.b16 %v8392
    %v8608 = vunpack.c.l.b16 %v8393
    %v8609 = vunpack.c.h.b16 %v8393
    %v8610 = vunpack.c.l.b16 %v8394
    %v8611 = vunpack.c.h.b16 %v8394
    %v8612 = vunpack.c.l.b16 %v8395
    %v8613 = vunpack.c.h.b16 %v8395
    %v8614 = vunpack.c.l.b16 %v8396
    %v8615 = vunpack.c.h.b16 %v8396
    %v8616 = vunpack.c.l.b16 %v8397
    %v8617 = vunpack.c.h.b16 %v8397
    %v8618 = vunpack.c.l.b16 %v8398
    %v8619 = vunpack.c.h.b16 %v8398
    %v8620 = vunpack.c.l.b16 %v8399
    %v8621 = vunpack.c.h.b16 %v8399
    %v8622 = vunpack.c.l.b16 %v8400
    %v8623 = vunpack.c.h.b16 %v8400
    %v8624 = vunpack.c.l.b16 %v8401
    %v8625 = vunpack.c.h.b16 %v8401
    %v8626 = vunpack.c.l.b16 %v8402
    %v8627 = vunpack.c.h.b16 %v8402
    %v8628 = vunpack.c.l.b16 %v8403
    %v8629 = vunpack.c.h.b16 %v8403
    %v8630 = vunpack.c.l.b16 %v8404
    %v8631 = vunpack.c.h.b16 %v8404
    %v8632 = vunpack.c.l.b16 %v8405
    %v8633 = vunpack.c.h.b16 %v8405
    %v8634 = vunpack.c.l.b16 %v8406
    %v8635 = vunpack.c.h.b16 %v8406
    %v8636 = vunpack.c.l.b16 %v8407
    %v8637 = vunpack.c.h.b16 %v8407
    %v8638 = vunpack.c.l.b16 %v8408
    %v8639 = vunpack.c.h.b16 %v8408
    %v8640 = vunpack.c.l.b16 %v8409
    %v8641 = vunpack.c.h.b16 %v8409
    %v8642 = vunpack.c.l.b16 %v8410
    %v8643 = vunpack.c.h.b16 %v8410
    %v8644 = vunpack.c.l.b16 %v8411
    %v8645 = vunpack.c.h.b16 %v8411
    %v8646 = vunpack.c.l.b16 %v8412
    %v8647 = vunpack.c.h.b16 %v8412
    %v8648 = vunpack.c.l.b16 %v8413
    %v8649 = vunpack.c.h.b16 %v8413
    %v8650 = vunpack.c.l.b16 %v8414
    %v8651 = vunpack.c.h.b16 %v8414
    %v8652 = vunpack.c.l.b16 %v8415
    %v8653 = vunpack.c.h.b16 %v8415
    %v8654 = vunpack.c.l.b16 %v8416
    %v8655 = vunpack.c.h.b16 %v8416
    %v8656 = vunpack.c.l.b16 %v8417
    %v8657 = vunpack.c.h.b16 %v8417
    %v8658 = vunpack.c.l.b16 %v8418
    %v8659 = vunpack.c.h.b16 %v8418
    %v8660 = vunpack.c.l.b16 %v8419
    %v8661 = vunpack.c.h.b16 %v8419
    %v8662 = vunpack.c.l.b16 %v8420
    %v8663 = vunpack.c.h.b16 %v8420
    %v8664 = vunpack.c.l.b16 %v8421
    %v8665 = vunpack.c.h.b16 %v8421
    %v8666 = vunpack.c.l.b16 %v8422
    %v8667 = vunpack.c.h.b16 %v8422
    %v8668 = vunpack.c.l.b16 %v8423
    %v8669 = vunpack.c.h.b16 %v8423
    %v8670 = vunpack.c.l.b16 %v8424
    %v8671 = vunpack.c.h.b16 %v8424
    %v8672 = vunpack.c.l.b16 %v8425
    %v8673 = vunpack.c.h.b16 %v8425
    %v8674 = vunpack.c.l.b16 %v8426
    %v8675 = vunpack.c.h.b16 %v8426
    %v8676 = vunpack.c.l.b16 %v8427
    %v8677 = vunpack.c.h.b16 %v8427
    %v8678 = vunpack.c.l.b16 %v8428
    %v8679 = vunpack.c.h.b16 %v8428
    %v8680 = vunpack.c.l.b16 %v8429
    %v8681 = vunpack.c.h.b16 %v8429
    %v8682 = vunpack.c.l.b16 %v8430
    %v8683 = vunpack.c.h.b16 %v8430
    %v8684 = vunpack.c.l.b16 %v8431
    %v8685 = vunpack.c.h.b16 %v8431
    %v8686 = vunpack.c.l.b16 %v8432
    %v8687 = vunpack.c.h.b16 %v8432
    %v8688 = vunpack.c.l.b16 %v8433
    %v8689 = vunpack.c.h.b16 %v8433
    %v8690 = vunpack.c.l.b16 %v8434
    %v8691 = vunpack.c.h.b16 %v8434
    %v8692 = vunpack.c.l.b16 %v8435
    %v8693 = vunpack.c.h.b16 %v8435
    %v8694 = vunpack.c.l.b16 %v8436
    %v8695 = vunpack.c.h.b16 %v8436
    %v8696 = vunpack.c.l.b16 %v8437
    %v8697 = vunpack.c.h.b16 %v8437
    %v8698 = vunpack.c.l.b16 %v8438
    %v8699 = vunpack.c.h.b16 %v8438
    %v8700 = vunpack.c.l.b16 %v8439
    %v8701 = vunpack.c.h.b16 %v8439
    %v8702 = vunpack.c.l.b16 %v8440
    %v8703 = vunpack.c.h.b16 %v8440
    %v8704 = vunpack.c.l.b16 %v8441
    %v8705 = vunpack.c.h.b16 %v8441
    %v8706 = vunpack.c.l.b16 %v8442
    %v8707 = vunpack.c.h.b16 %v8442
    %v8708 = vunpack.c.l.b16 %v8443
    %v8709 = vunpack.c.h.b16 %v8443
    %v8710 = vunpack.c.l.b16 %v8444
    %v8711 = vunpack.c.h.b16 %v8444
    %v8712 = vunpack.c.l.b16 %v8445
    %v8713 = vunpack.c.h.b16 %v8445
    %v8714 = vunpack.c.l.b16 %v8446
    %v8715 = vunpack.c.h.b16 %v8446
    %v8716 = vunpack.c.l.b16 %v8447
    %v8717 = vunpack.c.h.b16 %v8447
    %v8718 = vunpack.c.l.b16 %v8448
    %v8719 = vunpack.c.h.b16 %v8448
    %v8720 = vunpack.c.l.b16 %v8449
    %v8721 = vunpack.c.h.b16 %v8449
    %v8722 = vunpack.c.l.b16 %v8450
    %v8723 = vunpack.c.h.b16 %v8450
    %v8724 = vunpack.c.l.b16 %v8451
    %v8725 = vunpack.c.h.b16 %v8451
    %v8726 = vunpack.c.l.b16 %v8452
    %v8727 = vunpack.c.h.b16 %v8452
    %v8728 = vunpack.c.l.b16 %v8453
    %v8729 = vunpack.c.h.b16 %v8453
    %v8730 = vunpack.c.l.b16 %v8454
    %v8731 = vunpack.c.h.b16 %v8454
    %v8732 = vunpack.c.l.b16 %v8455
    %v8733 = vunpack.c.h.b16 %v8455
    %v8734 = vunpack.c.l.b16 %v8456
    %v8735 = vunpack.c.h.b16 %v8456
    %v8736 = vunpack.c.l.b16 %v8457
    %v8737 = vunpack.c.h.b16 %v8457
    %v8738 = vunpack.c.l.b16 %v8458
    %v8739 = vunpack.c.h.b16 %v8458
    %v8740 = vunpack.c.l.b16 %v8459
    %v8741 = vunpack.c.h.b16 %v8459
    %v8742 = vunpack.c.l.b16 %v8460
    %v8743 = vunpack.c.h.b16 %v8460
    %v8744 = vunpack.c.l.b16 %v8461
    %v8745 = vunpack.c.h.b16 %v8461
    %v8746 = vunpack.c.l.b16 %v8462
    %v8747 = vunpack.c.h.b16 %v8462
    %v8748 = vunpack.c.l.b16 %v8463
    %v8749 = vunpack.c.h.b16 %v8463
    %v8750 = vunpack.c.l.b16 %v8464
    %v8751 = vunpack.c.h.b16 %v8464
    %v8752 = vunpack.c.l.b16 %v8465
    %v8753 = vunpack.c.h.b16 %v8465
    %v8754 = vpack.c.b16 %v8564, %v8562
    %v8755 = vpack.c.b16 %v8565, %v8563
    %v8756 = vpack.c.b16 %v8568, %v8566
    %v8757 = vpack.c.b16 %v8569, %v8567
    %v8758 = vpack.c.b16 %v8572, %v8570
    %v8759 = vpack.c.b16 %v8573, %v8571
    %v8760 = vpack.c.b16 %v8576, %v8574
    %v8761 = vpack.c.b16 %v8577, %v8575
    %v8762 = vpack.c.b16 %v8580, %v8578
    %v8763 = vpack.c.b16 %v8581, %v8579
    %v8764 = vpack.c.b16 %v8584, %v8582
    %v8765 = vpack.c.b16 %v8585, %v8583
    %v8766 = vpack.c.b16 %v8588, %v8586
    %v8767 = vpack.c.b16 %v8589, %v8587
    %v8768 = vpack.c.b16 %v8592, %v8590
    %v8769 = vpack.c.b16 %v8593, %v8591
    %v8770 = vpack.c.b16 %v8596, %v8594
    %v8771 = vpack.c.b16 %v8597, %v8595
    %v8772 = vpack.c.b16 %v8600, %v8598
    %v8773 = vpack.c.b16 %v8601, %v8599
    %v8774 = vpack.c.b16 %v8604, %v8602
    %v8775 = vpack.c.b16 %v8605, %v8603
    %v8776 = vpack.c.b16 %v8608, %v8606
    %v8777 = vpack.c.b16 %v8609, %v8607
    %v8778 = vpack.c.b16 %v8612, %v8610
    %v8779 = vpack.c.b16 %v8613, %v8611
    %v8780 = vpack.c.b16 %v8616, %v8614
    %v8781 = vpack.c.b16 %v8617, %v8615
    %v8782 = vpack.c.b16 %v8620, %v8618
    %v8783 = vpack.c.b16 %v8621, %v8619
    %v8784 = vpack.c.b16 %v8624, %v8622
    %v8785 = vpack.c.b16 %v8625, %v8623
    %v8786 = vpack.c.b16 %v8628, %v8626
    %v8787 = vpack.c.b16 %v8629, %v8627
    %v8788 = vpack.c.b16 %v8632, %v8630
    %v8789 = vpack.c.b16 %v8633, %v8631
    %v8790 = vpack.c.b16 %v8636, %v8634
    %v8791 = vpack.c.b16 %v8637, %v8635
    %v8792 = vpack.c.b16 %v8640, %v8638
    %v8793 = vpack.c.b16 %v8641, %v8639
    %v8794 = vpack.c.b16 %v8644, %v8642
    %v8795 = vpack.c.b16 %v8645, %v8643
    %v8796 = vpack.c.b16 %v8648, %v8646
    %v8797 = vpack.c.b16 %v8649, %v8647
    %v8798 = vpack.c.b16 %v8652, %v8650
    %v8799 = vpack.c.b16 %v8653, %v8651
    %v8800 = vpack.c.b16 %v8656, %v8654
    %v8801 = vpack.c.b16 %v8657, %v8655
    %v8802 = vpack.c.b16 %v8660, %v8658
    %v8803 = vpack.c.b16 %v8661, %v8659
    %v8804 = vpack.c.b16 %v8664, %v8662
    %v8805 = vpack.c.b16 %v8665, %v8663
    %v8806 = vpack.c.b16 %v8668, %v8666
    %v8807 = vpack.c.b16 %v8669, %v8667
    %v8808 = vpack.c.b16 %v8672, %v8670
    %v8809 = vpack.c.b16 %v8673, %v8671
    %v8810 = vpack.c.b16 %v8676, %v8674
    %v8811 = vpack.c.b16 %v8677, %v8675
    %v8812 = vpack.c.b16 %v8680, %v8678
    %v8813 = vpack.c.b16 %v8681, %v8679
    %v8814 = vpack.c.b16 %v8684, %v8682
    %v8815 = vpack.c.b16 %v8685, %v8683
    %v8816 = vpack.c.b16 %v8688, %v8686
    %v8817 = vpack.c.b16 %v8689, %v8687
    %v8818 = vpack.c.b16 %v8692, %v8690
    %v8819 = vpack.c.b16 %v8693, %v8691
    %v8820 = vpack.c.b16 %v8696, %v8694
    %v8821 = vpack.c.b16 %v8697, %v8695
    %v8822 = vpack.c.b16 %v8700, %v8698
    %v8823 = vpack.c.b16 %v8701, %v8699
    %v8824 = vpack.c.b16 %v8704, %v8702
    %v8825 = vpack.c.b16 %v8705, %v8703
    %v8826 = vpack.c.b16 %v8708, %v8706
    %v8827 = vpack.c.b16 %v8709, %v8707
    %v8828 = vpack.c.b16 %v8712, %v8710
    %v8829 = vpack.c.b16 %v8713, %v8711
    %v8830 = vpack.c.b16 %v8716, %v8714
    %v8831 = vpack.c.b16 %v8717, %v8715
    %v8832 = vpack.c.b16 %v8720, %v8718
    %v8833 = vpack.c.b16 %v8721, %v8719
    %v8834 = vpack.c.b16 %v8724, %v8722
    %v8835 = vpack.c.b16 %v8725, %v8723
    %v8836 = vpack.c.b16 %v8728, %v8726
    %v8837 = vpack.c.b16 %v8729, %v8727
    %v8838 = vpack.c.b16 %v8732, %v8730
    %v8839 = vpack.c.b16 %v8733, %v8731
    %v8840 = vpack.c.b16 %v8736, %v8734
    %v8841 = vpack.c.b16 %v8737, %v8735
    %v8842 = vpack.c.b16 %v8740, %v8738
    %v8843 = vpack.c.b16 %v8741, %v8739
    %v8844 = vpack.c.b16 %v8744, %v8742
    %v8845 = vpack.c.b16 %v8745, %v8743
    %v8846 = vpack.c.b16 %v8748, %v8746
    %v8847 = vpack.c.b16 %v8749, %v8747
    %v8848 = vpack.c.b16 %v8752, %v8750
    %v8849 = vpack.c.b16 %v8753, %v8751
    %8946 = vmatprep.subr.bf16.mxu0 %v8755
    %8947 = vmatpush1.bf16.msra.mxu0 %v8754
    %8948 = vmatprep.subr.bf16.mxu0 %v8757
    %8949 = vmatpush1.bf16.msra.mxu0 %v8756
    %8950 = vmatprep.subr.bf16.mxu0 %v8759
    %8951 = vmatpush1.bf16.msra.mxu0 %v8758
    %8952 = vmatprep.subr.bf16.mxu0 %v8761
    %8953 = vmatpush1.bf16.msra.mxu0 %v8760
    %8954 = vmatprep.subr.bf16.mxu0 %v8763
    %8955 = vmatpush1.bf16.msra.mxu0 %v8762
    %8956 = vmatprep.subr.bf16.mxu0 %v8765
    %8957 = vmatpush1.bf16.msra.mxu0 %v8764
    %8958 = vmatprep.subr.bf16.mxu0 %v8767
    %8959 = vmatpush1.bf16.msra.mxu0 %v8766
    %8960 = vmatprep.subr.bf16.mxu0 %v8769
    %8961 = vmatpush1.bf16.msra.mxu0 %v8768
    %8962 = vmatprep.subr.bf16.mxu0 %v8771
    %8963 = vmatpush1.bf16.msra.mxu0 %v8770
    %8964 = vmatprep.subr.bf16.mxu0 %v8773
    %8965 = vmatpush1.bf16.msra.mxu0 %v8772
    %8966 = vmatprep.subr.bf16.mxu0 %v8775
    %8967 = vmatpush1.bf16.msra.mxu0 %v8774
    %8968 = vmatprep.subr.bf16.mxu0 %v8777
    %8969 = vmatpush1.bf16.msra.mxu0 %v8776
    %8970 = vmatprep.subr.bf16.mxu0 %v8779
    %8971 = vmatpush1.bf16.msra.mxu0 %v8778
    %8972 = vmatprep.subr.bf16.mxu0 %v8781
    %8973 = vmatpush1.bf16.msra.mxu0 %v8780
    %8974 = vmatprep.subr.bf16.mxu0 %v8783
    %8975 = vmatpush1.bf16.msra.mxu0 %v8782
    %8976 = vmatprep.subr.bf16.mxu0 %v8785
    %8977 = vmatpush1.bf16.msra.mxu0 %v8784
    %8978 = vmatprep.mubr.bf16.mxu0 %v8359
    %8979 = vmatmul.mubr.bf16.gmra.mrb[0].mxu0 %v8358
    %v8980 = vpop.f32.mrb[0].mxu0
    %v8981 = vadd.f32 0.0, %v8980
    %v8982 = vpop.f32.mrb[0].mxu0
    %v8983 = vadd.f32 0.0, %v8982
    %v8984 = vpop.f32.mrb[0].mxu0
    %v8985 = vadd.f32 0.0, %v8984
    %v8986 = vpop.f32.mrb[0].mxu0
    %v8987 = vadd.f32 0.0, %v8986
    %8988 = vmatprep.mubr.bf16.mxu0 %v8365
    %8989 = vmatmul.mubr.bf16.gmra.mrb[0].mxu0 %v8364
    %v8990 = vpop.f32.mrb[0].mxu0
    %v8991 = vadd.f32 0.0, %v8990
    %v8992 = vpop.f32.mrb[0].mxu0
    %v8993 = vadd.f32 0.0, %v8992
    %v8994 = vpop.f32.mrb[0].mxu0
    %v8995 = vadd.f32 0.0, %v8994
    %v8996 = vpop.f32.mrb[0].mxu0
    %v8997 = vadd.f32 0.0, %v8996
    %8998 = vdwg.mxu0
    %8999 = vmatprep.subr.bf16.mxu0 %v8787
    %9000 = vmatpush1.bf16.msra.mxu0 %v8786
    %9001 = vmatprep.subr.bf16.mxu0 %v8789
    %9002 = vmatpush1.bf16.msra.mxu0 %v8788
    %9003 = vmatprep.subr.bf16.mxu0 %v8791
    %9004 = vmatpush1.bf16.msra.mxu0 %v8790
    %9005 = vmatprep.subr.bf16.mxu0 %v8793
    %9006 = vmatpush1.bf16.msra.mxu0 %v8792
    %9007 = vmatprep.subr.bf16.mxu0 %v8795
    %9008 = vmatpush1.bf16.msra.mxu0 %v8794
    %9009 = vmatprep.subr.bf16.mxu0 %v8797
    %9010 = vmatpush1.bf16.msra.mxu0 %v8796
    %9011 = vmatprep.subr.bf16.mxu0 %v8799
    %9012 = vmatpush1.bf16.msra.mxu0 %v8798
    %9013 = vmatprep.subr.bf16.mxu0 %v8801
    %9014 = vmatpush1.bf16.msra.mxu0 %v8800
    %9015 = vmatprep.subr.bf16.mxu0 %v8803
    %9016 = vmatpush1.bf16.msra.mxu0 %v8802
    %9017 = vmatprep.subr.bf16.mxu0 %v8805
    %9018 = vmatpush1.bf16.msra.mxu0 %v8804
    %9019 = vmatprep.subr.bf16.mxu0 %v8807
    %9020 = vmatpush1.bf16.msra.mxu0 %v8806
    %9021 = vmatprep.subr.bf16.mxu0 %v8809
    %9022 = vmatpush1.bf16.msra.mxu0 %v8808
    %9023 = vmatprep.subr.bf16.mxu0 %v8811
    %9024 = vmatpush1.bf16.msra.mxu0 %v8810
    %9025 = vmatprep.subr.bf16.mxu0 %v8813
    %9026 = vmatpush1.bf16.msra.mxu0 %v8812
    %9027 = vmatprep.subr.bf16.mxu0 %v8815
    %9028 = vmatpush1.bf16.msra.mxu0 %v8814
    %9029 = vmatprep.subr.bf16.mxu0 %v8817
    %9030 = vmatpush1.bf16.msra.mxu0 %v8816
    %9031 = vmatprep.mubr.bf16.mxu0 %v8361
    %9032 = vmatmul.mubr.bf16.gmra.mrb[0].mxu0 %v8360
    %v9033 = vpop.f32.mrb[0].mxu0
    %v9034 = vadd.f32 %v8981, %v9033
    %v9035 = vpop.f32.mrb[0].mxu0
    %v9036 = vadd.f32 %v8983, %v9035
    %v9037 = vpop.f32.mrb[0].mxu0
    %v9038 = vadd.f32 %v8985, %v9037
    %v9039 = vpop.f32.mrb[0].mxu0
    %v9040 = vadd.f32 %v8987, %v9039
    %9041 = vmatprep.mubr.bf16.mxu0 %v8367
    %9042 = vmatmul.mubr.bf16.gmra.mrb[0].mxu0 %v8366
    %v9043 = vpop.f32.mrb[0].mxu0
    %v9044 = vadd.f32 %v8991, %v9043
    %v9045 = vpop.f32.mrb[0].mxu0
    %v9046 = vadd.f32 %v8993, %v9045
    %v9047 = vpop.f32.mrb[0].mxu0
    %v9048 = vadd.f32 %v8995, %v9047
    %v9049 = vpop.f32.mrb[0].mxu0
    %v9050 = vadd.f32 %v8997, %v9049
    %9051 = vdwg.mxu0
    %9052 = vmatprep.subr.bf16.mxu0 %v8819
    %9053 = vmatpush1.bf16.msra.mxu0 %v8818
    %9054 = vmatprep.subr.bf16.mxu0 %v8821
    %9055 = vmatpush1.bf16.msra.mxu0 %v8820
    %9056 = vmatprep.subr.bf16.mxu0 %v8823
    %9057 = vmatpush1.bf16.msra.mxu0 %v8822
    %9058 = vmatprep.subr.bf16.mxu0 %v8825
    %9059 = vmatpush1.bf16.msra.mxu0 %v8824
    %9060 = vmatprep.subr.bf16.mxu0 %v8827
    %9061 = vmatpush1.bf16.msra.mxu0 %v8826
    %9062 = vmatprep.subr.bf16.mxu0 %v8829
    %9063 = vmatpush1.bf16.msra.mxu0 %v8828
    %9064 = vmatprep.subr.bf16.mxu0 %v8831
    %9065 = vmatpush1.bf16.msra.mxu0 %v8830
    %9066 = vmatprep.subr.bf16.mxu0 %v8833
    %9067 = vmatpush1.bf16.msra.mxu0 %v8832
    %9068 = vmatprep.subr.bf16.mxu0 %v8835
    %9069 = vmatpush1.bf16.msra.mxu0 %v8834
    %9070 = vmatprep.subr.bf16.mxu0 %v8837
    %9071 = vmatpush1.bf16.msra.mxu0 %v8836
    %9072 = vmatprep.subr.bf16.mxu0 %v8839
    %9073 = vmatpush1.bf16.msra.mxu0 %v8838
    %9074 = vmatprep.subr.bf16.mxu0 %v8841
    %9075 = vmatpush1.bf16.msra.mxu0 %v8840
    %9076 = vmatprep.subr.bf16.mxu0 %v8843
    %9077 = vmatpush1.bf16.msra.mxu0 %v8842
    %9078 = vmatprep.subr.bf16.mxu0 %v8845
    %9079 = vmatpush1.bf16.msra.mxu0 %v8844
    %9080 = vmatprep.subr.bf16.mxu0 %v8847
    %9081 = vmatpush1.bf16.msra.mxu0 %v8846
    %9082 = vmatprep.subr.bf16.mxu0 %v8849
    %9083 = vmatpush1.bf16.msra.mxu0 %v8848
    %9084 = vmatprep.mubr.bf16.mxu0 %v8363
    %9085 = vmatmul.mubr.bf16.gmra.mrb[0].mxu0 %v8362
    %v9086 = vpop.f32.mrb[0].mxu0
    %v9087 = vadd.f32 %v9034, %v9086
    %v9088 = vpop.f32.mrb[0].mxu0
    %v9089 = vadd.f32 %v9036, %v9088
    %v9090 = vpop.f32.mrb[0].mxu0
    %v9091 = vadd.f32 %v9038, %v9090
    %v9092 = vpop.f32.mrb[0].mxu0
    %v9093 = vadd.f32 %v9040, %v9092
    %9094 = vmatprep.mubr.bf16.mxu0 %v8369
    %9095 = vmatmul.mubr.bf16.gmra.mrb[0].mxu0 %v8368
    %v9096 = vpop.f32.mrb[0].mxu0
    %v9097 = vadd.f32 %v9044, %v9096
    %v9098 = vpop.f32.mrb[0].mxu0
    %v9099 = vadd.f32 %v9046, %v9098
    %v9100 = vpop.f32.mrb[0].mxu0
    %v9101 = vadd.f32 %v9048, %v9100
    %v9102 = vpop.f32.mrb[0].mxu0
    %v9103 = vadd.f32 %v9050, %v9102
    %9104 = vdwg.mxu0
    %v9105 = vadd.f32 %v9087, %v9091
    %v9106 = vrot.slane %v9105, 4
    %v9107 = vadd.f32 %v9105, %v9106
    %v9108 = vrot.slane %v9107, 2
    %v9109 = vadd.f32 %v9107, %v9108
    %v9110 = vrot.slane %v9109, 1
    %v9111 = vadd.f32 %v9109, %v9110
    %v9112 = vadd.f32 %v9089, %v9093
    %v9113 = vrot.slane %v9112, 4
    %v9114 = vadd.f32 %v9112, %v9113
    %v9115 = vrot.slane %v9114, 2
    %v9116 = vadd.f32 %v9114, %v9115
    %v9117 = vrot.slane %v9116, 1
    %v9118 = vadd.f32 %v9116, %v9117
    %v9119 = vadd.f32 %v9097, %v9101
    %v9120 = vrot.slane %v9119, 4
    %v9121 = vadd.f32 %v9119, %v9120
    %v9122 = vrot.slane %v9121, 2
    %v9123 = vadd.f32 %v9121, %v9122
    %v9124 = vrot.slane %v9123, 1
    %v9125 = vadd.f32 %v9123, %v9124
    %v9126 = vadd.f32 %v9099, %v9103
    %v9127 = vrot.slane %v9126, 4
    %v9128 = vadd.f32 %v9126, %v9127
    %v9129 = vrot.slane %v9128, 2
    %v9130 = vadd.f32 %v9128, %v9129
    %v9131 = vrot.slane %v9130, 1
    %v9132 = vadd.f32 %v9130, %v9131
    %v9133 = vadd.f32 %v9111, %v9118
    %9134 = vadd.xlane.f32.xlu0 %v9133
    %v9135 = vpop.xlane.xlu0 %9134
    %v9136 = vadd.f32 %v9125, %v9132
    %9137 = vadd.xlane.f32.xlu0 %v9136
    %v9138 = vpop.xlane.xlu0 %9137
    %v9139 = vmul.f32 %v9135, %v1519
    %v9140 = vmul.f32 %v9138, %v1519
    %v9141 = vsub.f32 %v9087, %v9139
    %v9142 = vsub.f32 %v9089, %v9139
    %v9143 = vsub.f32 %v9091, %v9139
    %v9144 = vsub.f32 %v9093, %v9139
    %v9145 = vsub.f32 %v9097, %v9140
    %v9146 = vsub.f32 %v9099, %v9140
    %v9147 = vsub.f32 %v9101, %v9140
    %v9148 = vsub.f32 %v9103, %v9140
    %v9149 = vmul.f32 %v9141, %v9141
    %v9150 = vmul.f32 %v9142, %v9142
    %v9151 = vmul.f32 %v9143, %v9143
    %v9152 = vmul.f32 %v9144, %v9144
    %v9153 = vmul.f32 %v9145, %v9145
    %v9154 = vmul.f32 %v9146, %v9146
    %v9155 = vmul.f32 %v9147, %v9147
    %v9156 = vmul.f32 %v9148, %v9148
    %v9157 = vadd.f32 %v9149, %v9151
    %v9158 = vrot.slane %v9157, 4
    %v9159 = vadd.f32 %v9157, %v9158
    %v9160 = vrot.slane %v9159, 2
    %v9161 = vadd.f32 %v9159, %v9160
    %v9162 = vrot.slane %v9161, 1
    %v9163 = vadd.f32 %v9161, %v9162
    %v9164 = vadd.f32 %v9150, %v9152
    %v9165 = vrot.slane %v9164, 4
    %v9166 = vadd.f32 %v9164, %v9165
    %v9167 = vrot.slane %v9166, 2
    %v9168 = vadd.f32 %v9166, %v9167
    %v9169 = vrot.slane %v9168, 1
    %v9170 = vadd.f32 %v9168, %v9169
    %v9171 = vadd.f32 %v9153, %v9155
    %v9172 = vrot.slane %v9171, 4
    %v9173 = vadd.f32 %v9171, %v9172
    %v9174 = vrot.slane %v9173, 2
    %v9175 = vadd.f32 %v9173, %v9174
    %v9176 = vrot.slane %v9175, 1
    %v9177 = vadd.f32 %v9175, %v9176
    %v9178 = vadd.f32 %v9154, %v9156
    %v9179 = vrot.slane %v9178, 4
    %v9180 = vadd.f32 %v9178, %v9179
    %v9181 = vrot.slane %v9180, 2
    %v9182 = vadd.f32 %v9180, %v9181
    %v9183 = vrot.slane %v9182, 1
    %v9184 = vadd.f32 %v9182, %v9183
    %v9185 = vadd.f32 %v9163, %v9170
    %9186 = vadd.xlane.f32.xlu0 %v9185
    %v9187 = vpop.xlane.xlu0 %9186
    %v9188 = vadd.f32 %v9177, %v9184
    %9189 = vadd.xlane.f32.xlu0 %v9188
    %v9190 = vpop.xlane.xlu0 %9189
    %v9191 = vmul.f32 %v9187, %v1519
    %v9192 = vmul.f32 %v9190, %v1519
    %v9193 = vadd.f32 %v9191, 1e-05
    %v9194 = vadd.f32 %v9192, 1e-05
    %v9195 = vrsqrt.pop %v9193
    %v9196 = vrsqrt.pop %v9194
    %v9197 = vmul.f32 %v9141, %v9195
    %v9198 = vmul.f32 %v9142, %v9195
    %v9199 = vmul.f32 %v9143, %v9195
    %v9200 = vmul.f32 %v9144, %v9195
    %v9201 = vmul.f32 %v9145, %v9196
    %v9202 = vmul.f32 %v9146, %v9196
    %v9203 = vmul.f32 %v9147, %v9196
    %v9204 = vmul.f32 %v9148, %v9196
    %v9205 = vld [vmem:[%s20] sm:$0x3]
    %v9207 = vlaneseq
    %v9208 = vshrl.u32 %v9207, 7
    %v9209 = vsub.s32 0, %v9208
    %v9210 = vrot.slane %v9205, %v9209
    %v9211 = vlaneseq
    %v9212 = vshrl.u32 %v9211, 7
    %v9213 = vsub.s32 1, %v9212
    %v9214 = vrot.slane %v9205, %v9213
    %v9217 = vmul.f32 %v9197, %v9210
    %v9218 = vmul.f32 %v9198, %v9214
    %v9219 = vmul.f32 %v9199, %v9210
    %v9220 = vmul.f32 %v9200, %v9214
    %v9221 = vmul.f32 %v9201, %v9210
    %v9222 = vmul.f32 %v9202, %v9214
    %v9223 = vmul.f32 %v9203, %v9210
    %v9224 = vmul.f32 %v9204, %v9214
    %v9225 = vld [vmem:[%s21] sm:$0x3]
    %v9227 = vlaneseq
    %v9228 = vshrl.u32 %v9227, 7
    %v9229 = vsub.s32 0, %v9228
    %v9230 = vrot.slane %v9225, %v9229
    %v9231 = vlaneseq
    %v9232 = vshrl.u32 %v9231, 7
    %v9233 = vsub.s32 1, %v9232
    %v9234 = vrot.slane %v9225, %v9233
    %v9237 = vadd.f32 %v9217, %v9230
    %v9238 = vadd.f32 %v9218, %v9234
    %v9239 = vadd.f32 %v9219, %v9230
    %v9240 = vadd.f32 %v9220, %v9234
    %v9241 = vadd.f32 %v9221, %v9230
    %v9242 = vadd.f32 %v9222, %v9234
    %v9243 = vadd.f32 %v9223, %v9230
    %v9244 = vadd.f32 %v9224, %v9234
    %v9245 = vsub.f32 0.0, %v9237
    %v9246 = vsub.f32 0.0, %v9238
    %v9247 = vsub.f32 0.0, %v9239
    %v9248 = vsub.f32 0.0, %v9240
    %v9249 = vsub.f32 0.0, %v9241
    %v9250 = vsub.f32 0.0, %v9242
    %v9251 = vsub.f32 0.0, %v9243
    %v9252 = vsub.f32 0.0, %v9244
    %v9253 = vmul.f32 %v9245, 1.442695
    %v9254 = vpow.pop %v9253
    %v9255 = vmul.f32 %v9246, 1.442695
    %v9256 = vpow.pop %v9255
    %v9257 = vmul.f32 %v9247, 1.442695
    %v9258 = vpow.pop %v9257
    %v9259 = vmul.f32 %v9248, 1.442695
    %v9260 = vpow.pop %v9259
    %v9261 = vmul.f32 %v9249, 1.442695
    %v9262 = vpow.pop %v9261
    %v9263 = vmul.f32 %v9250, 1.442695
    %v9264 = vpow.pop %v9263
    %v9265 = vmul.f32 %v9251, 1.442695
    %v9266 = vpow.pop %v9265
    %v9267 = vmul.f32 %v9252, 1.442695
    %v9268 = vpow.pop %v9267
    %v9269 = vadd.f32 %v9254, 1.0
    %v9270 = vadd.f32 %v9256, 1.0
    %v9271 = vadd.f32 %v9258, 1.0
    %v9272 = vadd.f32 %v9260, 1.0
    %v9273 = vadd.f32 %v9262, 1.0
    %v9274 = vadd.f32 %v9264, 1.0
    %v9275 = vadd.f32 %v9266, 1.0
    %v9276 = vadd.f32 %v9268, 1.0
    %v9277 = vrcp.pop %v9269
    %v9278 = vmul.f32 1.0, %v9277
    %v9279 = vrcp.pop %v9270
    %v9280 = vmul.f32 1.0, %v9279
    %v9281 = vrcp.pop %v9271
    %v9282 = vmul.f32 1.0, %v9281
    %v9283 = vrcp.pop %v9272
    %v9284 = vmul.f32 1.0, %v9283
    %v9285 = vrcp.pop %v9273
    %v9286 = vmul.f32 1.0, %v9285
    %v9287 = vrcp.pop %v9274
    %v9288 = vmul.f32 1.0, %v9287
    %v9289 = vrcp.pop %v9275
    %v9290 = vmul.f32 1.0, %v9289
    %v9291 = vrcp.pop %v9276
    %v9292 = vmul.f32 1.0, %v9291
    %v9293 = vmul.f32 %v9237, %v9278
    %v9294 = vmul.f32 %v9238, %v9280
    %v9295 = vmul.f32 %v9239, %v9282
    %v9296 = vmul.f32 %v9240, %v9284
    %v9297 = vmul.f32 %v9241, %v9286
    %v9298 = vmul.f32 %v9242, %v9288
    %v9299 = vmul.f32 %v9243, %v9290
    %v9300 = vmul.f32 %v9244, %v9292
    %v9301 = vpack.c.bf16 %v9295, %v9293
    %v9302 = vpack.c.bf16 %v9296, %v9294
    %v9303 = vpack.c.bf16 %v9299, %v9297
    %v9304 = vpack.c.bf16 %v9300, %v9298
    %v9305 = vld [vmem:[#allocation20] sm:$0xff]
    %v9306 = vld [vmem:[#allocation20 + $0x8] sm:$0xff]
    %v9307 = vld [vmem:[#allocation20 + $0x10] sm:$0xff]
    %v9308 = vld [vmem:[#allocation20 + $0x18] sm:$0xff]
    %v9309 = vld [vmem:[#allocation20 + $0x20] sm:$0xff]
    %v9310 = vld [vmem:[#allocation20 + $0x28] sm:$0xff]
    %v9311 = vld [vmem:[#allocation20 + $0x30] sm:$0xff]
    %v9312 = vld [vmem:[#allocation20 + $0x38] sm:$0xff]
    %v9313 = vld [vmem:[#allocation20 + $0x40] sm:$0xff]
    %v9314 = vld [vmem:[#allocation20 + $0x48] sm:$0xff]
    %v9315 = vld [vmem:[#allocation20 + $0x50] sm:$0xff]
    %v9316 = vld [vmem:[#allocation20 + $0x58] sm:$0xff]
    %v9317 = vld [vmem:[#allocation20 + $0x60] sm:$0xff]
    %v9318 = vld [vmem:[#allocation20 + $0x68] sm:$0xff]
    %v9319 = vld [vmem:[#allocation20 + $0x70] sm:$0xff]
    %v9320 = vld [vmem:[#allocation20 + $0x78] sm:$0xff]
    %v9321 = vld [vmem:[#allocation20 + $0x80] sm:$0xff]
    %v9322 = vld [vmem:[#allocation20 + $0x88] sm:$0xff]
    %v9323 = vld [vmem:[#allocation20 + $0x90] sm:$0xff]
    %v9324 = vld [vmem:[#allocation20 + $0x98] sm:$0xff]
    %v9325 = vld [vmem:[#allocation20 + $0xa0] sm:$0xff]
    %v9326 = vld [vmem:[#allocation20 + $0xa8] sm:$0xff]
    %v9327 = vld [vmem:[#allocation20 + $0xb0] sm:$0xff]
    %v9328 = vld [vmem:[#allocation20 + $0xb8] sm:$0xff]
    %v9329 = vld [vmem:[#allocation20 + $0xc0] sm:$0xff]
    %v9330 = vld [vmem:[#allocation20 + $0xc8] sm:$0xff]
    %v9331 = vld [vmem:[#allocation20 + $0xd0] sm:$0xff]
    %v9332 = vld [vmem:[#allocation20 + $0xd8] sm:$0xff]
    %v9333 = vld [vmem:[#allocation20 + $0xe0] sm:$0xff]
    %v9334 = vld [vmem:[#allocation20 + $0xe8] sm:$0xff]
    %v9335 = vld [vmem:[#allocation20 + $0xf0] sm:$0xff]
    %v9336 = vld [vmem:[#allocation20 + $0xf8] sm:$0xff]
    %v9369 = vunpack.c.l.b16 %v9305
    %v9370 = vunpack.c.h.b16 %v9305
    %v9371 = vunpack.c.l.b16 %v9306
    %v9372 = vunpack.c.h.b16 %v9306
    %v9373 = vunpack.c.l.b16 %v9307
    %v9374 = vunpack.c.h.b16 %v9307
    %v9375 = vunpack.c.l.b16 %v9308
    %v9376 = vunpack.c.h.b16 %v9308
    %v9377 = vunpack.c.l.b16 %v9309
    %v9378 = vunpack.c.h.b16 %v9309
    %v9379 = vunpack.c.l.b16 %v9310
    %v9380 = vunpack.c.h.b16 %v9310
    %v9381 = vunpack.c.l.b16 %v9311
    %v9382 = vunpack.c.h.b16 %v9311
    %v9383 = vunpack.c.l.b16 %v9312
    %v9384 = vunpack.c.h.b16 %v9312
    %v9385 = vunpack.c.l.b16 %v9313
    %v9386 = vunpack.c.h.b16 %v9313
    %v9387 = vunpack.c.l.b16 %v9314
    %v9388 = vunpack.c.h.b16 %v9314
    %v9389 = vunpack.c.l.b16 %v9315
    %v9390 = vunpack.c.h.b16 %v9315
    %v9391 = vunpack.c.l.b16 %v9316
    %v9392 = vunpack.c.h.b16 %v9316
    %v9393 = vunpack.c.l.b16 %v9317
    %v9394 = vunpack.c.h.b16 %v9317
    %v9395 = vunpack.c.l.b16 %v9318
    %v9396 = vunpack.c.h.b16 %v9318
    %v9397 = vunpack.c.l.b16 %v9319
    %v9398 = vunpack.c.h.b16 %v9319
    %v9399 = vunpack.c.l.b16 %v9320
    %v9400 = vunpack.c.h.b16 %v9320
    %v9401 = vunpack.c.l.b16 %v9321
    %v9402 = vunpack.c.h.b16 %v9321
    %v9403 = vunpack.c.l.b16 %v9322
    %v9404 = vunpack.c.h.b16 %v9322
    %v9405 = vunpack.c.l.b16 %v9323
    %v9406 = vunpack.c.h.b16 %v9323
    %v9407 = vunpack.c.l.b16 %v9324
    %v9408 = vunpack.c.h.b16 %v9324
    %v9409 = vunpack.c.l.b16 %v9325
    %v9410 = vunpack.c.h.b16 %v9325
    %v9411 = vunpack.c.l.b16 %v9326
    %v9412 = vunpack.c.h.b16 %v9326
    %v9413 = vunpack.c.l.b16 %v9327
    %v9414 = vunpack.c.h.b16 %v9327
    %v9415 = vunpack.c.l.b16 %v9328
    %v9416 = vunpack.c.h.b16 %v9328
    %v9417 = vunpack.c.l.b16 %v9329
    %v9418 = vunpack.c.h.b16 %v9329
    %v9419 = vunpack.c.l.b16 %v9330
    %v9420 = vunpack.c.h.b16 %v9330
    %v9421 = vunpack.c.l.b16 %v9331
    %v9422 = vunpack.c.h.b16 %v9331
    %v9423 = vunpack.c.l.b16 %v9332
    %v9424 = vunpack.c.h.b16 %v9332
    %v9425 = vunpack.c.l.b16 %v9333
    %v9426 = vunpack.c.h.b16 %v9333
    %v9427 = vunpack.c.l.b16 %v9334
    %v9428 = vunpack.c.h.b16 %v9334
    %v9429 = vunpack.c.l.b16 %v9335
    %v9430 = vunpack.c.h.b16 %v9335
    %v9431 = vunpack.c.l.b16 %v9336
    %v9432 = vunpack.c.h.b16 %v9336
    %v9433 = vpack.c.b16 %v9371, %v9369
    %v9434 = vpack.c.b16 %v9372, %v9370
    %v9435 = vpack.c.b16 %v9375, %v9373
    %v9436 = vpack.c.b16 %v9376, %v9374
    %v9437 = vpack.c.b16 %v9379, %v9377
    %v9438 = vpack.c.b16 %v9380, %v9378
    %v9439 = vpack.c.b16 %v9383, %v9381
    %v9440 = vpack.c.b16 %v9384, %v9382
    %v9441 = vpack.c.b16 %v9387, %v9385
    %v9442 = vpack.c.b16 %v9388, %v9386
    %v9443 = vpack.c.b16 %v9391, %v9389
    %v9444 = vpack.c.b16 %v9392, %v9390
    %v9445 = vpack.c.b16 %v9395, %v9393
    %v9446 = vpack.c.b16 %v9396, %v9394
    %v9447 = vpack.c.b16 %v9399, %v9397
    %v9448 = vpack.c.b16 %v9400, %v9398
    %v9449 = vpack.c.b16 %v9403, %v9401
    %v9450 = vpack.c.b16 %v9404, %v9402
    %v9451 = vpack.c.b16 %v9407, %v9405
    %v9452 = vpack.c.b16 %v9408, %v9406
    %v9453 = vpack.c.b16 %v9411, %v9409
    %v9454 = vpack.c.b16 %v9412, %v9410
    %v9455 = vpack.c.b16 %v9415, %v9413
    %v9456 = vpack.c.b16 %v9416, %v9414
    %v9457 = vpack.c.b16 %v9419, %v9417
    %v9458 = vpack.c.b16 %v9420, %v9418
    %v9459 = vpack.c.b16 %v9423, %v9421
    %v9460 = vpack.c.b16 %v9424, %v9422
    %v9461 = vpack.c.b16 %v9427, %v9425
    %v9462 = vpack.c.b16 %v9428, %v9426
    %v9463 = vpack.c.b16 %v9431, %v9429
    %v9464 = vpack.c.b16 %v9432, %v9430
    %9497 = vmatprep.subr.bf16.mxu0 %v9434
    %9498 = vmatpush1.bf16.msra.mxu0 %v9433
    %9499 = vmatprep.subr.bf16.mxu0 %v9436
    %9500 = vmatpush1.bf16.msra.mxu0 %v9435
    %9501 = vmatprep.subr.bf16.mxu0 %v9438
    %9502 = vmatpush1.bf16.msra.mxu0 %v9437
    %9503 = vmatprep.subr.bf16.mxu0 %v9440
    %9504 = vmatpush1.bf16.msra.mxu0 %v9439
    %9505 = vmatprep.subr.bf16.mxu0 %v9442
    %9506 = vmatpush1.bf16.msra.mxu0 %v9441
    %9507 = vmatprep.subr.bf16.mxu0 %v9444
    %9508 = vmatpush1.bf16.msra.mxu0 %v9443
    %9509 = vmatprep.subr.bf16.mxu0 %v9446
    %9510 = vmatpush1.bf16.msra.mxu0 %v9445
    %9511 = vmatprep.subr.bf16.mxu0 %v9448
    %9512 = vmatpush1.bf16.msra.mxu0 %v9447
    %9513 = vmatprep.subr.bf16.mxu0 %v9450
    %9514 = vmatpush1.bf16.msra.mxu0 %v9449
    %9515 = vmatprep.subr.bf16.mxu0 %v9452
    %9516 = vmatpush1.bf16.msra.mxu0 %v9451
    %9517 = vmatprep.subr.bf16.mxu0 %v9454
    %9518 = vmatpush1.bf16.msra.mxu0 %v9453
    %9519 = vmatprep.subr.bf16.mxu0 %v9456
    %9520 = vmatpush1.bf16.msra.mxu0 %v9455
    %9521 = vmatprep.subr.bf16.mxu0 %v9458
    %9522 = vmatpush1.bf16.msra.mxu0 %v9457
    %9523 = vmatprep.subr.bf16.mxu0 %v9460
    %9524 = vmatpush1.bf16.msra.mxu0 %v9459
    %9525 = vmatprep.subr.bf16.mxu0 %v9462
    %9526 = vmatpush1.bf16.msra.mxu0 %v9461
    %9527 = vmatprep.subr.bf16.mxu0 %v9464
    %9528 = vmatpush1.bf16.msra.mxu0 %v9463
    %9529 = vmatprep.mubr.bf16.mxu0 %v9302
    %9530 = vmatmul.mubr.bf16.gmra.mrb[0].mxu0 %v9301
    %v9531 = vpop.f32.mrb[0].mxu0
    %v9532 = vadd.f32 0.0, %v9531
    %v9533 = vpop.f32.mrb[0].mxu0
    %v9534 = vadd.f32 0.0, %v9533
    %v9535 = vpop.f32.mrb[0].mxu0
    %v9536 = vadd.f32 0.0, %v9535
    %v9537 = vpop.f32.mrb[0].mxu0
    %v9538 = vadd.f32 0.0, %v9537
    %9539 = vmatprep.mubr.bf16.mxu0 %v9304
    %9540 = vmatmul.mubr.bf16.gmra.mrb[0].mxu0 %v9303
    %v9541 = vpop.f32.mrb[0].mxu0
    %v9542 = vadd.f32 0.0, %v9541
    %v9543 = vpop.f32.mrb[0].mxu0
    %v9544 = vadd.f32 0.0, %v9543
    %v9545 = vpop.f32.mrb[0].mxu0
    %v9546 = vadd.f32 0.0, %v9545
    %v9547 = vpop.f32.mrb[0].mxu0
    %v9548 = vadd.f32 0.0, %v9547
    %9549 = vdwg.mxu0
    %v9550 = vadd.f32 %v9532, %v9536
    %v9551 = vrot.slane %v9550, 4
    %v9552 = vadd.f32 %v9550, %v9551
    %v9553 = vrot.slane %v9552, 2
    %v9554 = vadd.f32 %v9552, %v9553
    %v9555 = vrot.slane %v9554, 1
    %v9556 = vadd.f32 %v9554, %v9555
    %v9557 = vadd.f32 %v9534, %v9538
    %v9558 = vrot.slane %v9557, 4
    %v9559 = vadd.f32 %v9557, %v9558
    %v9560 = vrot.slane %v9559, 2
    %v9561 = vadd.f32 %v9559, %v9560
    %v9562 = vrot.slane %v9561, 1
    %v9563 = vadd.f32 %v9561, %v9562
    %v9564 = vadd.f32 %v9542, %v9546
    %v9565 = vrot.slane %v9564, 4
    %v9566 = vadd.f32 %v9564, %v9565
    %v9567 = vrot.slane %v9566, 2
    %v9568 = vadd.f32 %v9566, %v9567
    %v9569 = vrot.slane %v9568, 1
    %v9570 = vadd.f32 %v9568, %v9569
    %v9571 = vadd.f32 %v9544, %v9548
    %v9572 = vrot.slane %v9571, 4
    %v9573 = vadd.f32 %v9571, %v9572
    %v9574 = vrot.slane %v9573, 2
    %v9575 = vadd.f32 %v9573, %v9574
    %v9576 = vrot.slane %v9575, 1
    %v9577 = vadd.f32 %v9575, %v9576
    %v9578 = vadd.f32 %v9556, %v9563
    %9579 = vadd.xlane.f32.xlu0 %v9578
    %v9580 = vpop.xlane.xlu0 %9579
    %v9581 = vadd.f32 %v9570, %v9577
    %9582 = vadd.xlane.f32.xlu0 %v9581
    %v9583 = vpop.xlane.xlu0 %9582
    %v9584 = vmul.f32 %v9580, %v1519
    %v9585 = vmul.f32 %v9583, %v1519
    %v9586 = vsub.f32 %v9532, %v9584
    %v9587 = vsub.f32 %v9534, %v9584
    %v9588 = vsub.f32 %v9536, %v9584
    %v9589 = vsub.f32 %v9538, %v9584
    %v9590 = vsub.f32 %v9542, %v9585
    %v9591 = vsub.f32 %v9544, %v9585
    %v9592 = vsub.f32 %v9546, %v9585
    %v9593 = vsub.f32 %v9548, %v9585
    %v9594 = vmul.f32 %v9586, %v9586
    %v9595 = vmul.f32 %v9587, %v9587
    %v9596 = vmul.f32 %v9588, %v9588
    %v9597 = vmul.f32 %v9589, %v9589
    %v9598 = vmul.f32 %v9590, %v9590
    %v9599 = vmul.f32 %v9591, %v9591
    %v9600 = vmul.f32 %v9592, %v9592
    %v9601 = vmul.f32 %v9593, %v9593
    %v9602 = vadd.f32 %v9594, %v9596
    %v9603 = vrot.slane %v9602, 4
    %v9604 = vadd.f32 %v9602, %v9603
    %v9605 = vrot.slane %v9604, 2
    %v9606 = vadd.f32 %v9604, %v9605
    %v9607 = vrot.slane %v9606, 1
    %v9608 = vadd.f32 %v9606, %v9607
    %v9609 = vadd.f32 %v9595, %v9597
    %v9610 = vrot.slane %v9609, 4
    %v9611 = vadd.f32 %v9609, %v9610
    %v9612 = vrot.slane %v9611, 2
    %v9613 = vadd.f32 %v9611, %v9612
    %v9614 = vrot.slane %v9613, 1
    %v9615 = vadd.f32 %v9613, %v9614
    %v9616 = vadd.f32 %v9598, %v9600
    %v9617 = vrot.slane %v9616, 4
    %v9618 = vadd.f32 %v9616, %v9617
    %v9619 = vrot.slane %v9618, 2
    %v9620 = vadd.f32 %v9618, %v9619
    %v9621 = vrot.slane %v9620, 1
    %v9622 = vadd.f32 %v9620, %v9621
    %v9623 = vadd.f32 %v9599, %v9601
    %v9624 = vrot.slane %v9623, 4
    %v9625 = vadd.f32 %v9623, %v9624
    %v9626 = vrot.slane %v9625, 2
    %v9627 = vadd.f32 %v9625, %v9626
    %v9628 = vrot.slane %v9627, 1
    %v9629 = vadd.f32 %v9627, %v9628
    %v9630 = vadd.f32 %v9608, %v9615
    %9631 = vadd.xlane.f32.xlu0 %v9630
    %v9632 = vpop.xlane.xlu0 %9631
    %v9633 = vadd.f32 %v9622, %v9629
    %9634 = vadd.xlane.f32.xlu0 %v9633
    %v9635 = vpop.xlane.xlu0 %9634
    %v9636 = vmul.f32 %v9632, %v1519
    %v9637 = vmul.f32 %v9635, %v1519
    %v9638 = vadd.f32 %v9636, 1e-05
    %v9639 = vadd.f32 %v9637, 1e-05
    %v9640 = vrsqrt.pop %v9638
    %v9641 = vrsqrt.pop %v9639
    %v9642 = vmul.f32 %v9586, %v9640
    %v9643 = vmul.f32 %v9587, %v9640
    %v9644 = vmul.f32 %v9588, %v9640
    %v9645 = vmul.f32 %v9589, %v9640
    %v9646 = vmul.f32 %v9590, %v9641
    %v9647 = vmul.f32 %v9591, %v9641
    %v9648 = vmul.f32 %v9592, %v9641
    %v9649 = vmul.f32 %v9593, %v9641
    %v9650 = vmax.f32 %v9642, 0.0
    %v9651 = vmax.f32 %v9643, 0.0
    %v9652 = vmax.f32 %v9644, 0.0
    %v9653 = vmax.f32 %v9645, 0.0
    %v9654 = vmax.f32 %v9646, 0.0
    %v9655 = vmax.f32 %v9647, 0.0
    %v9656 = vmax.f32 %v9648, 0.0
    %v9657 = vmax.f32 %v9649, 0.0
    %v9658 = vand.u32 2147483647, %v9642
    %v9659 = vand.u32 2147483647, %v9643
    %v9660 = vand.u32 2147483647, %v9644
    %v9661 = vand.u32 2147483647, %v9645
    %v9662 = vand.u32 2147483647, %v9646
    %v9663 = vand.u32 2147483647, %v9647
    %v9664 = vand.u32 2147483647, %v9648
    %v9665 = vand.u32 2147483647, %v9649
    %v9666 = vsub.f32 0.0, %v9658
    %v9667 = vsub.f32 0.0, %v9659
    %v9668 = vsub.f32 0.0, %v9660
    %v9669 = vsub.f32 0.0, %v9661
    %v9670 = vsub.f32 0.0, %v9662
    %v9671 = vsub.f32 0.0, %v9663
    %v9672 = vsub.f32 0.0, %v9664
    %v9673 = vsub.f32 0.0, %v9665
    %v9674 = vmul.f32 %v9666, 1.442695
    %v9675 = vpow.pop %v9674
    %v9676 = vmul.f32 %v9667, 1.442695
    %v9677 = vpow.pop %v9676
    %v9678 = vmul.f32 %v9668, 1.442695
    %v9679 = vpow.pop %v9678
    %v9680 = vmul.f32 %v9669, 1.442695
    %v9681 = vpow.pop %v9680
    %v9682 = vmul.f32 %v9670, 1.442695
    %v9683 = vpow.pop %v9682
    %v9684 = vmul.f32 %v9671, 1.442695
    %v9685 = vpow.pop %v9684
    %v9686 = vmul.f32 %v9672, 1.442695
    %v9687 = vpow.pop %v9686
    %v9688 = vmul.f32 %v9673, 1.442695
    %v9689 = vpow.pop %v9688
    %v9690 = vadd.f32 %v9675, 1.0
    %v9691 = vadd.f32 %v9677, 1.0
    %v9692 = vadd.f32 %v9679, 1.0
    %v9693 = vadd.f32 %v9681, 1.0
    %v9694 = vadd.f32 %v9683, 1.0
    %v9695 = vadd.f32 %v9685, 1.0
    %v9696 = vadd.f32 %v9687, 1.0
    %v9697 = vadd.f32 %v9689, 1.0
    %v9698 = vlog2.pop %v9690
    %v9699 = vmul.f32 %v9698, 0.6931472
    %v9700 = vlog2.pop %v9691
    %v9701 = vmul.f32 %v9700, 0.6931472
    %v9702 = vlog2.pop %v9692
    %v9703 = vmul.f32 %v9702, 0.6931472
    %v9704 = vlog2.pop %v9693
    %v9705 = vmul.f32 %v9704, 0.6931472
    %v9706 = vlog2.pop %v9694
    %v9707 = vmul.f32 %v9706, 0.6931472
    %v9708 = vlog2.pop %v9695
    %v9709 = vmul.f32 %v9708, 0.6931472
    %v9710 = vlog2.pop %v9696
    %v9711 = vmul.f32 %v9710, 0.6931472
    %v9712 = vlog2.pop %v9697
    %v9713 = vmul.f32 %v9712, 0.6931472
    %v9714 = vadd.f32 %v9650, %v9699
    %v9715 = vadd.f32 %v9651, %v9701
    %v9716 = vadd.f32 %v9652, %v9703
    %v9717 = vadd.f32 %v9653, %v9705
    %v9718 = vadd.f32 %v9654, %v9707
    %v9719 = vadd.f32 %v9655, %v9709
    %v9720 = vadd.f32 %v9656, %v9711
    %v9721 = vadd.f32 %v9657, %v9713
    %v9722 = vtanh.pop %v9714
    %v9723 = vtanh.pop %v9715
    %v9724 = vtanh.pop %v9716
    %v9725 = vtanh.pop %v9717
    %v9726 = vtanh.pop %v9718
    %v9727 = vtanh.pop %v9719
    %v9728 = vtanh.pop %v9720
    %v9729 = vtanh.pop %v9721
    %v9730 = vmul.f32 %v9642, %v9722
    %v9731 = vmul.f32 %v9643, %v9723
    %v9732 = vmul.f32 %v9644, %v9724
    %v9733 = vmul.f32 %v9645, %v9725
    %v9734 = vmul.f32 %v9646, %v9726
    %v9735 = vmul.f32 %v9647, %v9727
    %v9736 = vmul.f32 %v9648, %v9728
    %v9737 = vmul.f32 %v9649, %v9729
    %v9738 = vpack.c.bf16 %v9732, %v9730
    %v9739 = vpack.c.bf16 %v9733, %v9731
    %v9740 = vpack.c.bf16 %v9736, %v9734
    %v9741 = vpack.c.bf16 %v9737, %v9735
    %v9742 = vld [vmem:[#allocation21] sm:$0xff]
    %v9743 = vld [vmem:[#allocation21 + $0x8] sm:$0xff]
    %v9744 = vld [vmem:[#allocation21 + $0x10] sm:$0xff]
    %v9745 = vld [vmem:[#allocation21 + $0x18] sm:$0xff]
    %v9746 = vld [vmem:[#allocation21 + $0x20] sm:$0xff]
    %v9747 = vld [vmem:[#allocation21 + $0x28] sm:$0xff]
    %v9748 = vld [vmem:[#allocation21 + $0x30] sm:$0xff]
    %v9749 = vld [vmem:[#allocation21 + $0x38] sm:$0xff]
    %v9750 = vld [vmem:[#allocation21 + $0x40] sm:$0xff]
    %v9751 = vld [vmem:[#allocation21 + $0x48] sm:$0xff]
    %v9752 = vld [vmem:[#allocation21 + $0x50] sm:$0xff]
    %v9753 = vld [vmem:[#allocation21 + $0x58] sm:$0xff]
    %v9754 = vld [vmem:[#allocation21 + $0x60] sm:$0xff]
    %v9755 = vld [vmem:[#allocation21 + $0x68] sm:$0xff]
    %v9756 = vld [vmem:[#allocation21 + $0x70] sm:$0xff]
    %v9757 = vld [vmem:[#allocation21 + $0x78] sm:$0xff]
    %v9758 = vld [vmem:[#allocation21 + $0x80] sm:$0xff]
    %v9759 = vld [vmem:[#allocation21 + $0x88] sm:$0xff]
    %v9760 = vld [vmem:[#allocation21 + $0x90] sm:$0xff]
    %v9761 = vld [vmem:[#allocation21 + $0x98] sm:$0xff]
    %v9762 = vld [vmem:[#allocation21 + $0xa0] sm:$0xff]
    %v9763 = vld [vmem:[#allocation21 + $0xa8] sm:$0xff]
    %v9764 = vld [vmem:[#allocation21 + $0xb0] sm:$0xff]
    %v9765 = vld [vmem:[#allocation21 + $0xb8] sm:$0xff]
    %v9766 = vld [vmem:[#allocation21 + $0xc0] sm:$0xff]
    %v9767 = vld [vmem:[#allocation21 + $0xc8] sm:$0xff]
    %v9768 = vld [vmem:[#allocation21 + $0xd0] sm:$0xff]
    %v9769 = vld [vmem:[#allocation21 + $0xd8] sm:$0xff]
    %v9770 = vld [vmem:[#allocation21 + $0xe0] sm:$0xff]
    %v9771 = vld [vmem:[#allocation21 + $0xe8] sm:$0xff]
    %v9772 = vld [vmem:[#allocation21 + $0xf0] sm:$0xff]
    %v9773 = vld [vmem:[#allocation21 + $0xf8] sm:$0xff]
    %v9774 = vld [vmem:[#allocation21 + $0x100] sm:$0xff]
    %v9775 = vld [vmem:[#allocation21 + $0x108] sm:$0xff]
    %v9776 = vld [vmem:[#allocation21 + $0x110] sm:$0xff]
    %v9777 = vld [vmem:[#allocation21 + $0x118] sm:$0xff]
    %v9778 = vld [vmem:[#allocation21 + $0x120] sm:$0xff]
    %v9779 = vld [vmem:[#allocation21 + $0x128] sm:$0xff]
    %v9780 = vld [vmem:[#allocation21 + $0x130] sm:$0xff]
    %v9781 = vld [vmem:[#allocation21 + $0x138] sm:$0xff]
    %v9782 = vld [vmem:[#allocation21 + $0x140] sm:$0xff]
    %v9783 = vld [vmem:[#allocation21 + $0x148] sm:$0xff]
    %v9784 = vld [vmem:[#allocation21 + $0x150] sm:$0xff]
    %v9785 = vld [vmem:[#allocation21 + $0x158] sm:$0xff]
    %v9786 = vld [vmem:[#allocation21 + $0x160] sm:$0xff]
    %v9787 = vld [vmem:[#allocation21 + $0x168] sm:$0xff]
    %v9788 = vld [vmem:[#allocation21 + $0x170] sm:$0xff]
    %v9789 = vld [vmem:[#allocation21 + $0x178] sm:$0xff]
    %v9790 = vld [vmem:[#allocation21 + $0x180] sm:$0xff]
    %v9791 = vld [vmem:[#allocation21 + $0x188] sm:$0xff]
    %v9792 = vld [vmem:[#allocation21 + $0x190] sm:$0xff]
    %v9793 = vld [vmem:[#allocation21 + $0x198] sm:$0xff]
    %v9794 = vld [vmem:[#allocation21 + $0x1a0] sm:$0xff]
    %v9795 = vld [vmem:[#allocation21 + $0x1a8] sm:$0xff]
    %v9796 = vld [vmem:[#allocation21 + $0x1b0] sm:$0xff]
    %v9797 = vld [vmem:[#allocation21 + $0x1b8] sm:$0xff]
    %v9798 = vld [vmem:[#allocation21 + $0x1c0] sm:$0xff]
    %v9799 = vld [vmem:[#allocation21 + $0x1c8] sm:$0xff]
    %v9800 = vld [vmem:[#allocation21 + $0x1d0] sm:$0xff]
    %v9801 = vld [vmem:[#allocation21 + $0x1d8] sm:$0xff]
    %v9802 = vld [vmem:[#allocation21 + $0x1e0] sm:$0xff]
    %v9803 = vld [vmem:[#allocation21 + $0x1e8] sm:$0xff]
    %v9804 = vld [vmem:[#allocation21 + $0x1f0] sm:$0xff]
    %v9805 = vld [vmem:[#allocation21 + $0x1f8] sm:$0xff]
    %v9870 = vunpack.c.l.b16 %v9742
    %v9871 = vunpack.c.h.b16 %v9742
    %v9872 = vunpack.c.l.b16 %v9743
    %v9873 = vunpack.c.h.b16 %v9743
    %v9874 = vunpack.c.l.b16 %v9744
    %v9875 = vunpack.c.h.b16 %v9744
    %v9876 = vunpack.c.l.b16 %v9745
    %v9877 = vunpack.c.h.b16 %v9745
    %v9878 = vunpack.c.l.b16 %v9746
    %v9879 = vunpack.c.h.b16 %v9746
    %v9880 = vunpack.c.l.b16 %v9747
    %v9881 = vunpack.c.h.b16 %v9747
    %v9882 = vunpack.c.l.b16 %v9748
    %v9883 = vunpack.c.h.b16 %v9748
    %v9884 = vunpack.c.l.b16 %v9749
    %v9885 = vunpack.c.h.b16 %v9749
    %v9886 = vunpack.c.l.b16 %v9750
    %v9887 = vunpack.c.h.b16 %v9750
    %v9888 = vunpack.c.l.b16 %v9751
    %v9889 = vunpack.c.h.b16 %v9751
    %v9890 = vunpack.c.l.b16 %v9752
    %v9891 = vunpack.c.h.b16 %v9752
    %v9892 = vunpack.c.l.b16 %v9753
    %v9893 = vunpack.c.h.b16 %v9753
    %v9894 = vunpack.c.l.b16 %v9754
    %v9895 = vunpack.c.h.b16 %v9754
    %v9896 = vunpack.c.l.b16 %v9755
    %v9897 = vunpack.c.h.b16 %v9755
    %v9898 = vunpack.c.l.b16 %v9756
    %v9899 = vunpack.c.h.b16 %v9756
    %v9900 = vunpack.c.l.b16 %v9757
    %v9901 = vunpack.c.h.b16 %v9757
    %v9902 = vunpack.c.l.b16 %v9758
    %v9903 = vunpack.c.h.b16 %v9758
    %v9904 = vunpack.c.l.b16 %v9759
    %v9905 = vunpack.c.h.b16 %v9759
    %v9906 = vunpack.c.l.b16 %v9760
    %v9907 = vunpack.c.h.b16 %v9760
    %v9908 = vunpack.c.l.b16 %v9761
    %v9909 = vunpack.c.h.b16 %v9761
    %v9910 = vunpack.c.l.b16 %v9762
    %v9911 = vunpack.c.h.b16 %v9762
    %v9912 = vunpack.c.l.b16 %v9763
    %v9913 = vunpack.c.h.b16 %v9763
    %v9914 = vunpack.c.l.b16 %v9764
    %v9915 = vunpack.c.h.b16 %v9764
    %v9916 = vunpack.c.l.b16 %v9765
    %v9917 = vunpack.c.h.b16 %v9765
    %v9918 = vunpack.c.l.b16 %v9766
    %v9919 = vunpack.c.h.b16 %v9766
    %v9920 = vunpack.c.l.b16 %v9767
    %v9921 = vunpack.c.h.b16 %v9767
    %v9922 = vunpack.c.l.b16 %v9768
    %v9923 = vunpack.c.h.b16 %v9768
    %v9924 = vunpack.c.l.b16 %v9769
    %v9925 = vunpack.c.h.b16 %v9769
    %v9926 = vunpack.c.l.b16 %v9770
    %v9927 = vunpack.c.h.b16 %v9770
    %v9928 = vunpack.c.l.b16 %v9771
    %v9929 = vunpack.c.h.b16 %v9771
    %v9930 = vunpack.c.l.b16 %v9772
    %v9931 = vunpack.c.h.b16 %v9772
    %v9932 = vunpack.c.l.b16 %v9773
    %v9933 = vunpack.c.h.b16 %v9773
    %v9934 = vunpack.c.l.b16 %v9774
    %v9935 = vunpack.c.h.b16 %v9774
    %v9936 = vunpack.c.l.b16 %v9775
    %v9937 = vunpack.c.h.b16 %v9775
    %v9938 = vunpack.c.l.b16 %v9776
    %v9939 = vunpack.c.h.b16 %v9776
    %v9940 = vunpack.c.l.b16 %v9777
    %v9941 = vunpack.c.h.b16 %v9777
    %v9942 = vunpack.c.l.b16 %v9778
    %v9943 = vunpack.c.h.b16 %v9778
    %v9944 = vunpack.c.l.b16 %v9779
    %v9945 = vunpack.c.h.b16 %v9779
    %v9946 = vunpack.c.l.b16 %v9780
    %v9947 = vunpack.c.h.b16 %v9780
    %v9948 = vunpack.c.l.b16 %v9781
    %v9949 = vunpack.c.h.b16 %v9781
    %v9950 = vunpack.c.l.b16 %v9782
    %v9951 = vunpack.c.h.b16 %v9782
    %v9952 = vunpack.c.l.b16 %v9783
    %v9953 = vunpack.c.h.b16 %v9783
    %v9954 = vunpack.c.l.b16 %v9784
    %v9955 = vunpack.c.h.b16 %v9784
    %v9956 = vunpack.c.l.b16 %v9785
    %v9957 = vunpack.c.h.b16 %v9785
    %v9958 = vunpack.c.l.b16 %v9786
    %v9959 = vunpack.c.h.b16 %v9786
    %v9960 = vunpack.c.l.b16 %v9787
    %v9961 = vunpack.c.h.b16 %v9787
    %v9962 = vunpack.c.l.b16 %v9788
    %v9963 = vunpack.c.h.b16 %v9788
    %v9964 = vunpack.c.l.b16 %v9789
    %v9965 = vunpack.c.h.b16 %v9789
    %v9966 = vunpack.c.l.b16 %v9790
    %v9967 = vunpack.c.h.b16 %v9790
    %v9968 = vunpack.c.l.b16 %v9791
    %v9969 = vunpack.c.h.b16 %v9791
    %v9970 = vunpack.c.l.b16 %v9792
    %v9971 = vunpack.c.h.b16 %v9792
    %v9972 = vunpack.c.l.b16 %v9793
    %v9973 = vunpack.c.h.b16 %v9793
    %v9974 = vunpack.c.l.b16 %v9794
    %v9975 = vunpack.c.h.b16 %v9794
    %v9976 = vunpack.c.l.b16 %v9795
    %v9977 = vunpack.c.h.b16 %v9795
    %v9978 = vunpack.c.l.b16 %v9796
    %v9979 = vunpack.c.h.b16 %v9796
    %v9980 = vunpack.c.l.b16 %v9797
    %v9981 = vunpack.c.h.b16 %v9797
    %v9982 = vunpack.c.l.b16 %v9798
    %v9983 = vunpack.c.h.b16 %v9798
    %v9984 = vunpack.c.l.b16 %v9799
    %v9985 = vunpack.c.h.b16 %v9799
    %v9986 = vunpack.c.l.b16 %v9800
    %v9987 = vunpack.c.h.b16 %v9800
    %v9988 = vunpack.c.l.b16 %v9801
    %v9989 = vunpack.c.h.b16 %v9801
    %v9990 = vunpack.c.l.b16 %v9802
    %v9991 = vunpack.c.h.b16 %v9802
    %v9992 = vunpack.c.l.b16 %v9803
    %v9993 = vunpack.c.h.b16 %v9803
    %v9994 = vunpack.c.l.b16 %v9804
    %v9995 = vunpack.c.h.b16 %v9804
    %v9996 = vunpack.c.l.b16 %v9805
    %v9997 = vunpack.c.h.b16 %v9805
    %v9998 = vpack.c.b16 %v9874, %v9870
    %v9999 = vpack.c.b16 %v9875, %v9871
    %v10000 = vpack.c.b16 %v9876, %v9872
    %v10001 = vpack.c.b16 %v9877, %v9873
    %v10002 = vpack.c.b16 %v9882, %v9878
    %v10003 = vpack.c.b16 %v9883, %v9879
    %v10004 = vpack.c.b16 %v9884, %v9880
    %v10005 = vpack.c.b16 %v9885, %v9881
    %v10006 = vpack.c.b16 %v9890, %v9886
    %v10007 = vpack.c.b16 %v9891, %v9887
    %v10008 = vpack.c.b16 %v9892, %v9888
    %v10009 = vpack.c.b16 %v9893, %v9889
    %v10010 = vpack.c.b16 %v9898, %v9894
    %v10011 = vpack.c.b16 %v9899, %v9895
    %v10012 = vpack.c.b16 %v9900, %v9896
    %v10013 = vpack.c.b16 %v9901, %v9897
    %v10014 = vpack.c.b16 %v9906, %v9902
    %v10015 = vpack.c.b16 %v9907, %v9903
    %v10016 = vpack.c.b16 %v9908, %v9904
    %v10017 = vpack.c.b16 %v9909, %v9905
    %v10018 = vpack.c.b16 %v9914, %v9910
    %v10019 = vpack.c.b16 %v9915, %v9911
    %v10020 = vpack.c.b16 %v9916, %v9912
    %v10021 = vpack.c.b16 %v9917, %v9913
    %v10022 = vpack.c.b16 %v9922, %v9918
    %v10023 = vpack.c.b16 %v9923, %v9919
    %v10024 = vpack.c.b16 %v9924, %v9920
    %v10025 = vpack.c.b16 %v9925, %v9921
    %v10026 = vpack.c.b16 %v9930, %v9926
    %v10027 = vpack.c.b16 %v9931, %v9927
    %v10028 = vpack.c.b16 %v9932, %v9928
    %v10029 = vpack.c.b16 %v9933, %v9929
    %v10030 = vpack.c.b16 %v9938, %v9934
    %v10031 = vpack.c.b16 %v9939, %v9935
    %v10032 = vpack.c.b16 %v9940, %v9936
    %v10033 = vpack.c.b16 %v9941, %v9937
    %v10034 = vpack.c.b16 %v9946, %v9942
    %v10035 = vpack.c.b16 %v9947, %v9943
    %v10036 = vpack.c.b16 %v9948, %v9944
    %v10037 = vpack.c.b16 %v9949, %v9945
    %v10038 = vpack.c.b16 %v9954, %v9950
    %v10039 = vpack.c.b16 %v9955, %v9951
    %v10040 = vpack.c.b16 %v9956, %v9952
    %v10041 = vpack.c.b16 %v9957, %v9953
    %v10042 = vpack.c.b16 %v9962, %v9958
    %v10043 = vpack.c.b16 %v9963, %v9959
    %v10044 = vpack.c.b16 %v9964, %v9960
    %v10045 = vpack.c.b16 %v9965, %v9961
    %v10046 = vpack.c.b16 %v9970, %v9966
    %v10047 = vpack.c.b16 %v9971, %v9967
    %v10048 = vpack.c.b16 %v9972, %v9968
    %v10049 = vpack.c.b16 %v9973, %v9969
    %v10050 = vpack.c.b16 %v9978, %v9974
    %v10051 = vpack.c.b16 %v9979, %v9975
    %v10052 = vpack.c.b16 %v9980, %v9976
    %v10053 = vpack.c.b16 %v9981, %v9977
    %v10054 = vpack.c.b16 %v9986, %v9982
    %v10055 = vpack.c.b16 %v9987, %v9983
    %v10056 = vpack.c.b16 %v9988, %v9984
    %v10057 = vpack.c.b16 %v9989, %v9985
    %v10058 = vpack.c.b16 %v9994, %v9990
    %v10059 = vpack.c.b16 %v9995, %v9991
    %v10060 = vpack.c.b16 %v9996, %v9992
    %v10061 = vpack.c.b16 %v9997, %v9993
    %10126 = vmatprep.subr.bf16.mxu0 %v9999
    %10127 = vmatpush1.bf16.msra.mxu0 %v9998
    %10128 = vmatprep.subr.bf16.mxu0 %v10003
    %10129 = vmatpush1.bf16.msra.mxu0 %v10002
    %10130 = vmatprep.subr.bf16.mxu0 %v10007
    %10131 = vmatpush1.bf16.msra.mxu0 %v10006
    %10132 = vmatprep.subr.bf16.mxu0 %v10011
    %10133 = vmatpush1.bf16.msra.mxu0 %v10010
    %10134 = vmatprep.subr.bf16.mxu0 %v10015
    %10135 = vmatpush1.bf16.msra.mxu0 %v10014
    %10136 = vmatprep.subr.bf16.mxu0 %v10019
    %10137 = vmatpush1.bf16.msra.mxu0 %v10018
    %10138 = vmatprep.subr.bf16.mxu0 %v10023
    %10139 = vmatpush1.bf16.msra.mxu0 %v10022
    %10140 = vmatprep.subr.bf16.mxu0 %v10027
    %10141 = vmatpush1.bf16.msra.mxu0 %v10026
    %10142 = vmatprep.subr.bf16.mxu0 %v10031
    %10143 = vmatpush1.bf16.msra.mxu0 %v10030
    %10144 = vmatprep.subr.bf16.mxu0 %v10035
    %10145 = vmatpush1.bf16.msra.mxu0 %v10034
    %10146 = vmatprep.subr.bf16.mxu0 %v10039
    %10147 = vmatpush1.bf16.msra.mxu0 %v10038
    %10148 = vmatprep.subr.bf16.mxu0 %v10043
    %10149 = vmatpush1.bf16.msra.mxu0 %v10042
    %10150 = vmatprep.subr.bf16.mxu0 %v10047
    %10151 = vmatpush1.bf16.msra.mxu0 %v10046
    %10152 = vmatprep.subr.bf16.mxu0 %v10051
    %10153 = vmatpush1.bf16.msra.mxu0 %v10050
    %10154 = vmatprep.subr.bf16.mxu0 %v10055
    %10155 = vmatpush1.bf16.msra.mxu0 %v10054
    %10156 = vmatprep.subr.bf16.mxu0 %v10059
    %10157 = vmatpush1.bf16.msra.mxu0 %v10058
    %10158 = vmatprep.mubr.bf16.mxu0 %v9739
    %10159 = vmatmul.mubr.bf16.gmra.mrb[0].mxu0 %v9738
    %v10160 = vpop.f32.mrb[0].mxu0
    %v10161 = vadd.f32 0.0, %v10160
    %v10162 = vpop.f32.mrb[0].mxu0
    %v10163 = vadd.f32 0.0, %v10162
    %v10164 = vpop.f32.mrb[0].mxu0
    %v10165 = vadd.f32 0.0, %v10164
    %v10166 = vpop.f32.mrb[0].mxu0
    %v10167 = vadd.f32 0.0, %v10166
    %10168 = vmatprep.mubr.bf16.mxu0 %v9741
    %10169 = vmatmul.mubr.bf16.gmra.mrb[0].mxu0 %v9740
    %v10170 = vpop.f32.mrb[0].mxu0
    %v10171 = vadd.f32 0.0, %v10170
    %v10172 = vpop.f32.mrb[0].mxu0
    %v10173 = vadd.f32 0.0, %v10172
    %v10174 = vpop.f32.mrb[0].mxu0
    %v10175 = vadd.f32 0.0, %v10174
    %v10176 = vpop.f32.mrb[0].mxu0
    %v10177 = vadd.f32 0.0, %v10176
    %10178 = vdwg.mxu0
    %10179 = vmatprep.subr.bf16.mxu0 %v10001
    %10180 = vmatpush1.bf16.msra.mxu0 %v10000
    %10181 = vmatprep.subr.bf16.mxu0 %v10005
    %10182 = vmatpush1.bf16.msra.mxu0 %v10004
    %10183 = vmatprep.subr.bf16.mxu0 %v10009
    %10184 = vmatpush1.bf16.msra.mxu0 %v10008
    %10185 = vmatprep.subr.bf16.mxu0 %v10013
    %10186 = vmatpush1.bf16.msra.mxu0 %v10012
    %10187 = vmatprep.subr.bf16.mxu0 %v10017
    %10188 = vmatpush1.bf16.msra.mxu0 %v10016
    %10189 = vmatprep.subr.bf16.mxu0 %v10021
    %10190 = vmatpush1.bf16.msra.mxu0 %v10020
    %10191 = vmatprep.subr.bf16.mxu0 %v10025
    %10192 = vmatpush1.bf16.msra.mxu0 %v10024
    %10193 = vmatprep.subr.bf16.mxu0 %v10029
    %10194 = vmatpush1.bf16.msra.mxu0 %v10028
    %10195 = vmatprep.subr.bf16.mxu0 %v10033
    %10196 = vmatpush1.bf16.msra.mxu0 %v10032
    %10197 = vmatprep.subr.bf16.mxu0 %v10037
    %10198 = vmatpush1.bf16.msra.mxu0 %v10036
    %10199 = vmatprep.subr.bf16.mxu0 %v10041
    %10200 = vmatpush1.bf16.msra.mxu0 %v10040
    %10201 = vmatprep.subr.bf16.mxu0 %v10045
    %10202 = vmatpush1.bf16.msra.mxu0 %v10044
    %10203 = vmatprep.subr.bf16.mxu0 %v10049
    %10204 = vmatpush1.bf16.msra.mxu0 %v10048
    %10205 = vmatprep.subr.bf16.mxu0 %v10053
    %10206 = vmatpush1.bf16.msra.mxu0 %v10052
    %10207 = vmatprep.subr.bf16.mxu0 %v10057
    %10208 = vmatpush1.bf16.msra.mxu0 %v10056
    %10209 = vmatprep.subr.bf16.mxu0 %v10061
    %10210 = vmatpush1.bf16.msra.mxu0 %v10060
    %10211 = vmatprep.mubr.bf16.mxu0 %v9739
    %10212 = vmatmul.mubr.bf16.gmra.mrb[0].mxu0 %v9738
    %v10213 = vpop.f32.mrb[0].mxu0
    %v10214 = vadd.f32 0.0, %v10213
    %v10215 = vpop.f32.mrb[0].mxu0
    %v10216 = vadd.f32 0.0, %v10215
    %v10217 = vpop.f32.mrb[0].mxu0
    %v10218 = vadd.f32 0.0, %v10217
    %v10219 = vpop.f32.mrb[0].mxu0
    %v10220 = vadd.f32 0.0, %v10219
    %10221 = vmatprep.mubr.bf16.mxu0 %v9741
    %10222 = vmatmul.mubr.bf16.gmra.mrb[0].mxu0 %v9740
    %v10223 = vpop.f32.mrb[0].mxu0
    %v10224 = vadd.f32 0.0, %v10223
    %v10225 = vpop.f32.mrb[0].mxu0
    %v10226 = vadd.f32 0.0, %v10225
    %v10227 = vpop.f32.mrb[0].mxu0
    %v10228 = vadd.f32 0.0, %v10227
    %v10229 = vpop.f32.mrb[0].mxu0
    %v10230 = vadd.f32 0.0, %v10229
    %10231 = vdwg.mxu0
    %v10232 = vld [vmem:[%s24] sm:$0xf]
    %v10233 = vld [vmem:[%s24 + $0x4] sm:$0xf]
    %v10234 = vld [vmem:[%s24 + $0x8] sm:$0xf]
    %v10235 = vld [vmem:[%s24 + $0xc] sm:$0xf]
    %v10236 = vld [vmem:[%s24 + $0x10] sm:$0xf]
    %v10237 = vld [vmem:[%s24 + $0x14] sm:$0xf]
    %v10238 = vld [vmem:[%s24 + $0x18] sm:$0xf]
    %v10239 = vld [vmem:[%s24 + $0x1c] sm:$0xf]
    %v10240 = vpack.c.bf16 %v10165, %v10161
    %v10241 = vpack.c.bf16 %v10167, %v10163
    %v10242 = vpack.c.bf16 %v10218, %v10214
    %v10243 = vpack.c.bf16 %v10220, %v10216
    %v10244 = vpack.c.bf16 %v10175, %v10171
    %v10245 = vpack.c.bf16 %v10177, %v10173
    %v10246 = vpack.c.bf16 %v10228, %v10224
    %v10247 = vpack.c.bf16 %v10230, %v10226
    %v10256 = vunpack.c.l.b16 %v10232
    %v10257 = vunpack.c.l.b16 %v10233
    %v10258 = vunpack.c.l.b16 %v10234
    %v10259 = vunpack.c.l.b16 %v10235
    %v10260 = vunpack.c.l.b16 %v10236
    %v10261 = vunpack.c.l.b16 %v10237
    %v10262 = vunpack.c.l.b16 %v10238
    %v10263 = vunpack.c.l.b16 %v10239
    %v10264 = vpack.c.b16 %v10257, %v10256
    %v10265 = vpack.c.b16 %v10259, %v10258
    %v10266 = vpack.c.b16 %v10261, %v10260
    %v10267 = vpack.c.b16 %v10263, %v10262
    %v10269 = vsel %vm793, %v10264, 0
    %v10272 = vsel %vm793, %v10265, 0
    %v10275 = vsel %vm793, %v10266, 0
    %v10278 = vsel %vm793, %v10267, 0
    %10280 = vmatprep.subr.bf16.mxu0 %v10241
    %10281 = vmatpush1.bf16.msra.mxu0 %v10240
    %10282 = vmatprep.subr.bf16.mxu0 %v10245
    %10283 = vmatpush1.bf16.msra.mxu0 %v10244
    %10284 = vmatprep.subr.bf16.mxu0 0
    %10285 = vmatpush1.bf16.msra.mxu0 0
    %10286 = vmatprep.subr.bf16.mxu0 0
    %10287 = vmatpush1.bf16.msra.mxu0 0
    %10288 = vmatprep.subr.bf16.mxu0 0
    %10289 = vmatpush1.bf16.msra.mxu0 0
    %10290 = vmatprep.subr.bf16.mxu0 0
    %10291 = vmatpush1.bf16.msra.mxu0 0
    %10292 = vmatprep.subr.bf16.mxu0 0
    %10293 = vmatpush1.bf16.msra.mxu0 0
    %10294 = vmatprep.subr.bf16.mxu0 0
    %10295 = vmatpush1.bf16.msra.mxu0 0
    %10296 = vmatprep.subr.bf16.mxu0 0
    %10297 = vmatpush1.bf16.msra.mxu0 0
    %10298 = vmatprep.subr.bf16.mxu0 0
    %10299 = vmatpush1.bf16.msra.mxu0 0
    %10300 = vmatprep.subr.bf16.mxu0 0
    %10301 = vmatpush1.bf16.msra.mxu0 0
    %10302 = vmatprep.subr.bf16.mxu0 0
    %10303 = vmatpush1.bf16.msra.mxu0 0
    %10304 = vmatprep.subr.bf16.mxu0 0
    %10305 = vmatpush1.bf16.msra.mxu0 0
    %10306 = vmatprep.subr.bf16.mxu0 0
    %10307 = vmatpush1.bf16.msra.mxu0 0
    %10308 = vmatprep.subr.bf16.mxu0 0
    %10309 = vmatpush1.bf16.msra.mxu0 0
    %10310 = vmatprep.subr.bf16.mxu0 0
    %10311 = vmatpush1.bf16.msra.mxu0 0
    %10312 = vmatprep.mubr.bf16.mxu0 0
    %10313 = vmatmul.mubr.bf16.gmra.mrb[0].mxu0 %v10269
    %v10314 = vpop.f32.mrb[0].mxu0
    %v10315 = vadd.f32 0.0, %v10314
    %v10316 = vpop.f32.mrb[0].mxu0
    %v10317 = vadd.f32 0.0, %v10316
    %v10318 = vpop.f32.mrb[0].mxu0
    %v10319 = vadd.f32 0.0, %v10318
    %v10320 = vpop.f32.mrb[0].mxu0
    %v10321 = vadd.f32 0.0, %v10320
    %10322 = vmatprep.mubr.bf16.mxu0 0
    %10323 = vmatmul.mubr.bf16.gmra.mrb[0].mxu0 %v10272
    %v10324 = vpop.f32.mrb[0].mxu0
    %v10325 = vadd.f32 0.0, %v10324
    %v10326 = vpop.f32.mrb[0].mxu0
    %v10327 = vadd.f32 0.0, %v10326
    %v10328 = vpop.f32.mrb[0].mxu0
    %v10329 = vadd.f32 0.0, %v10328
    %v10330 = vpop.f32.mrb[0].mxu0
    %v10331 = vadd.f32 0.0, %v10330
    %10332 = vmatprep.mubr.bf16.mxu0 0
    %10333 = vmatmul.mubr.bf16.gmra.mrb[0].mxu0 %v10275
    %v10334 = vpop.f32.mrb[0].mxu0
    %v10335 = vadd.f32 0.0, %v10334
    %v10336 = vpop.f32.mrb[0].mxu0
    %v10337 = vadd.f32 0.0, %v10336
    %v10338 = vpop.f32.mrb[0].mxu0
    %v10339 = vadd.f32 0.0, %v10338
    %v10340 = vpop.f32.mrb[0].mxu0
    %v10341 = vadd.f32 0.0, %v10340
    %10342 = vmatprep.mubr.bf16.mxu0 0
    %10343 = vmatmul.mubr.bf16.gmra.mrb[0].mxu0 %v10278
    %v10344 = vpop.f32.mrb[0].mxu0
    %v10345 = vadd.f32 0.0, %v10344
    %v10346 = vpop.f32.mrb[0].mxu0
    %v10347 = vadd.f32 0.0, %v10346
    %v10348 = vpop.f32.mrb[0].mxu0
    %v10349 = vadd.f32 0.0, %v10348
    %v10350 = vpop.f32.mrb[0].mxu0
    %v10351 = vadd.f32 0.0, %v10350
    %10352 = vdwg.mxu0
    %10353 = vmatprep.subr.bf16.mxu0 %v10243
    %10354 = vmatpush1.bf16.msra.mxu0 %v10242
    %10355 = vmatprep.subr.bf16.mxu0 %v10247
    %10356 = vmatpush1.bf16.msra.mxu0 %v10246
    %10357 = vmatprep.subr.bf16.mxu0 0
    %10358 = vmatpush1.bf16.msra.mxu0 0
    %10359 = vmatprep.subr.bf16.mxu0 0
    %10360 = vmatpush1.bf16.msra.mxu0 0
    %10361 = vmatprep.subr.bf16.mxu0 0
    %10362 = vmatpush1.bf16.msra.mxu0 0
    %10363 = vmatprep.subr.bf16.mxu0 0
    %10364 = vmatpush1.bf16.msra.mxu0 0
    %10365 = vmatprep.subr.bf16.mxu0 0
    %10366 = vmatpush1.bf16.msra.mxu0 0
    %10367 = vmatprep.subr.bf16.mxu0 0
    %10368 = vmatpush1.bf16.msra.mxu0 0
    %10369 = vmatprep.subr.bf16.mxu0 0
    %10370 = vmatpush1.bf16.msra.mxu0 0
    %10371 = vmatprep.subr.bf16.mxu0 0
    %10372 = vmatpush1.bf16.msra.mxu0 0
    %10373 = vmatprep.subr.bf16.mxu0 0
    %10374 = vmatpush1.bf16.msra.mxu0 0
    %10375 = vmatprep.subr.bf16.mxu0 0
    %10376 = vmatpush1.bf16.msra.mxu0 0
    %10377 = vmatprep.subr.bf16.mxu0 0
    %10378 = vmatpush1.bf16.msra.mxu0 0
    %10379 = vmatprep.subr.bf16.mxu0 0
    %10380 = vmatpush1.bf16.msra.mxu0 0
    %10381 = vmatprep.subr.bf16.mxu0 0
    %10382 = vmatpush1.bf16.msra.mxu0 0
    %10383 = vmatprep.subr.bf16.mxu0 0
    %10384 = vmatpush1.bf16.msra.mxu0 0
    %10385 = vmatprep.mubr.bf16.mxu0 0
    %10386 = vmatmul.mubr.bf16.gmra.mrb[0].mxu0 %v10269
    %v10387 = vpop.f32.mrb[0].mxu0
    %v10388 = vadd.f32 0.0, %v10387
    %v10389 = vpop.f32.mrb[0].mxu0
    %v10390 = vadd.f32 0.0, %v10389
    %v10391 = vpop.f32.mrb[0].mxu0
    %v10392 = vadd.f32 0.0, %v10391
    %v10393 = vpop.f32.mrb[0].mxu0
    %v10394 = vadd.f32 0.0, %v10393
    %10395 = vmatprep.mubr.bf16.mxu0 0
    %10396 = vmatmul.mubr.bf16.gmra.mrb[0].mxu0 %v10272
    %v10397 = vpop.f32.mrb[0].mxu0
    %v10398 = vadd.f32 0.0, %v10397
    %v10399 = vpop.f32.mrb[0].mxu0
    %v10400 = vadd.f32 0.0, %v10399
    %v10401 = vpop.f32.mrb[0].mxu0
    %v10402 = vadd.f32 0.0, %v10401
    %v10403 = vpop.f32.mrb[0].mxu0
    %v10404 = vadd.f32 0.0, %v10403
    %10405 = vmatprep.mubr.bf16.mxu0 0
    %10406 = vmatmul.mubr.bf16.gmra.mrb[0].mxu0 %v10275
    %v10407 = vpop.f32.mrb[0].mxu0
    %v10408 = vadd.f32 0.0, %v10407
    %v10409 = vpop.f32.mrb[0].mxu0
    %v10410 = vadd.f32 0.0, %v10409
    %v10411 = vpop.f32.mrb[0].mxu0
    %v10412 = vadd.f32 0.0, %v10411
    %v10413 = vpop.f32.mrb[0].mxu0
    %v10414 = vadd.f32 0.0, %v10413
    %10415 = vmatprep.mubr.bf16.mxu0 0
    %10416 = vmatmul.mubr.bf16.gmra.mrb[0].mxu0 %v10278
    %v10417 = vpop.f32.mrb[0].mxu0
    %v10418 = vadd.f32 0.0, %v10417
    %v10419 = vpop.f32.mrb[0].mxu0
    %v10420 = vadd.f32 0.0, %v10419
    %v10421 = vpop.f32.mrb[0].mxu0
    %v10422 = vadd.f32 0.0, %v10421
    %v10423 = vpop.f32.mrb[0].mxu0
    %v10424 = vadd.f32 0.0, %v10423
    %10425 = vdwg.mxu0
    %10426 = vst [vmem:[#allocation23] sm:$0xff] %v10315
    %10427 = vst [vmem:[#allocation23 + $0x8] sm:$0xff] %v10317
    %10428 = vst [vmem:[#allocation23 + $0x10] sm:$0xff] %v10388
    %10429 = vst [vmem:[#allocation23 + $0x18] sm:$0xff] %v10390
    %10430 = vst [vmem:[#allocation23 + $0x20] sm:$0xff] %v10319
    %10431 = vst [vmem:[#allocation23 + $0x28] sm:$0xff] %v10321
    %10432 = vst [vmem:[#allocation23 + $0x30] sm:$0xff] %v10392
    %10433 = vst [vmem:[#allocation23 + $0x38] sm:$0xff] %v10394
    %10434 = vst [vmem:[#allocation23 + $0x40] sm:$0xff] %v10325
    %10435 = vst [vmem:[#allocation23 + $0x48] sm:$0xff] %v10327
    %10436 = vst [vmem:[#allocation23 + $0x50] sm:$0xff] %v10398
    %10437 = vst [vmem:[#allocation23 + $0x58] sm:$0xff] %v10400
    %10438 = vst [vmem:[#allocation23 + $0x60] sm:$0xff] %v10329
    %10439 = vst [vmem:[#allocation23 + $0x68] sm:$0xff] %v10331
    %10440 = vst [vmem:[#allocation23 + $0x70] sm:$0xff] %v10402
    %10441 = vst [vmem:[#allocation23 + $0x78] sm:$0xff] %v10404
    %10442 = vst [vmem:[#allocation23 + $0x80] sm:$0xff] %v10335
    %10443 = vst [vmem:[#allocation23 + $0x88] sm:$0xff] %v10337
    %10444 = vst [vmem:[#allocation23 + $0x90] sm:$0xff] %v10408
    %10445 = vst [vmem:[#allocation23 + $0x98] sm:$0xff] %v10410
    %10446 = vst [vmem:[#allocation23 + $0xa0] sm:$0xff] %v10339
    %10447 = vst [vmem:[#allocation23 + $0xa8] sm:$0xff] %v10341
    %10448 = vst [vmem:[#allocation23 + $0xb0] sm:$0xff] %v10412
    %10449 = vst [vmem:[#allocation23 + $0xb8] sm:$0xff] %v10414
    %10450 = vst [vmem:[#allocation23 + $0xc0] sm:$0xff] %v10345
    %10451 = vst [vmem:[#allocation23 + $0xc8] sm:$0xff] %v10347
    %10452 = vst [vmem:[#allocation23 + $0xd0] sm:$0xff] %v10418
    %10453 = vst [vmem:[#allocation23 + $0xd8] sm:$0xff] %v10420
    %10454 = vst [vmem:[#allocation23 + $0xe0] sm:$0xff] %v10349
    %10455 = vst [vmem:[#allocation23 + $0xe8] sm:$0xff] %v10351
    %10456 = vst [vmem:[#allocation23 + $0xf0] sm:$0xff] %v10422
    %10457 = vst [vmem:[#allocation23 + $0xf8] sm:$0xff] %v10424
    // Predicated region
    $region150: #{tpu_custom_call.1} parent=1 // pred_check
      _
    $region151: #{tpu_custom_call.1} parent=1 // pred_check_branch
      %10459 = sbr.rel (0) target = $region153
    $region152: #{tpu_custom_call.1} parent=1 // pred_region
      %s10461 = ssub.s32 4096, 4096
      %10462 = vsyncadd [#allocation5], %s10461
      %s10463 = sshll.u32 [#allocation23], 4
      %s10464 = int_to_ptr.vmem [resolvable:$true] %s10463
      %10469 = dma.vmem_to_hbm [thread:$0]  %s10464, 4096, %s25, [#allocation5], 512, 512, 32
    $region153: #{tpu_custom_call.1} parent=1 // pred_fallthru
      _
    // Predicated region
    $region154: #{tpu_custom_call.1} parent=1 // pred_check
      _
    $region155: #{tpu_custom_call.1} parent=1 // pred_check_branch
      %10471 = sbr.rel (0) target = $region157
    $region156: #{tpu_custom_call.1} parent=1 // pred_region
      %10472 = dma.done [#allocation5], 4096
    $region157: #{tpu_custom_call.1} parent=1 // pred_fallthru
      _
    %10473 = vsyncpa [#allocation4], 1
    %10474 = vsyncpa [#allocation7], 1
    %10475 = vsyncpa [#allocation10], 1
    %10476 = vsyncpa [#allocation13], 1
    %10477 = vsyncpa [#allocation16], 1
    %10478 = vsyncpa [#allocation19], 1
    %10479 = vsyncpa [#allocation22], 1
    %10480 = vsyncpa [#allocation5], 1

</llo_original>
